<compile_context>
chip_gen: v6e
topology: v6e:2x2x1
jax: 0.10.0
libtpu: 0.0.40
codegen_flags: <defaults>
</compile_context>

<pallas_src>
import functools

import jax
import jax.numpy as jnp
from jax.experimental import pallas as pl
from jax.experimental.pallas import tpu as pltpu


# ------------------------- config (small synthetic CLIP ViT-B/32) -------------------------
CFG = dict(
    hidden=256,     # embed dim (768 in the real model); chosen so head_dim == 128
    heads=2,        # -> head_dim = 128: every head slice is 128-lane aligned
    layers=2,
    mlp=512,
    proj=128,       # projection dim (512 real); multiple of 128 -> lane-dense output stores
    image_size=16,
    patch=8,        # -> 2x2 = 4 patches + CLS = 5 vision tokens, padded to 8
    channels=3,
    vocab=64,
    text_seq=8,
)

LAYER_KEYS = ("ln1", "wqkv", "bqkv", "wo", "bo", "ln2", "w1", "b1", "w2", "b2")
NEG_INF = -1e9
MM_DTYPE = jnp.bfloat16     # MXU operand dtype (f32 accumulation everywhere)


def _round_up(n, m):
    return ((n + m - 1) // m) * m


def _pick_tb(batch, max_tb=8):
    """Largest divisor of `batch` <= max_tb (batch tile folded into the matmul M dim)."""
    tb = 1
    for cand in range(1, min(batch, max_tb) + 1):
        if batch % cand == 0:
            tb = cand
    return tb


# ------------------------------- in-kernel building blocks --------------------------------
def _ln(x, g, b, eps=1e-5):
    mu = jnp.mean(x, axis=-1, keepdims=True)
    var = jnp.mean(jnp.square(x - mu), axis=-1, keepdims=True)
    return (x - mu) * jax.lax.rsqrt(var + eps) * g + b


def _layer_body(x, mask, ln1, wqkv, bqkv, wo, bo, ln2, w1, b1, w2, b2, *, heads, seq):
    """One fused pre-LN CLIP encoder layer on a (TB*S, D) activation slab.

    x:    (M, D) float32 activations, M = TB * seq.
    mask: (TB, S, S) float32 additive attention mask (built once, in VMEM scratch).
    Weight refs carry a leading size-1 layer-block dim.  wqkv is the fused lane-dense
    (D, 3D) projection ([q | k | v], head-major within each), wo the lane-dense (D, D)
    out-projection.  MXU operands are cast to bf16, accumulation stays f32.
    """
    M, D = x.shape
    TB = M // seq
    Dh = D // heads
    scale = float(Dh) ** -0.5

    # ---- attention block (pre-LN): one fused lane-dense QKV matmul ----
    h2 = _ln(x, ln1[0, 0:1], ln1[0, 1:2])                               # (M, D) f32
    qkv = jnp.dot(h2.astype(MM_DTYPE), wqkv[0],
                  preferred_element_type=jnp.float32) + bqkv[0]          # (M, 3D) f32
    qkv = qkv.reshape(TB, seq, 3 * D)

    ctx_heads = []
    for h in range(heads):                      # Dh == 128 -> every slice is lane-aligned
        q = qkv[:, :, h * Dh:(h + 1) * Dh] * scale
        k = qkv[:, :, D + h * Dh:D + (h + 1) * Dh]
        v = qkv[:, :, 2 * D + h * Dh:2 * D + (h + 1) * Dh]
        s = jnp.einsum("bqd,bkd->bqk", q.astype(MM_DTYPE), k.astype(MM_DTYPE),
                       preferred_element_type=jnp.float32) + mask        # (TB, S, S)
        s = s - jnp.max(s, axis=-1, keepdims=True)
        p = jnp.exp(s)
        p = p * pl.reciprocal(jnp.sum(p, axis=-1, keepdims=True), approx=True)
        ctx_heads.append(
            jnp.einsum("bqk,bkd->bqd", p.astype(MM_DTYPE), v.astype(MM_DTYPE),
                       preferred_element_type=jnp.float32))              # (TB, S, Dh)

    ctx = jnp.concatenate(ctx_heads, axis=-1).reshape(M, D)              # lane-aligned concat
    attn = jnp.dot(ctx.astype(MM_DTYPE), wo[0],
                   preferred_element_type=jnp.float32) + bo[0]           # one (M,D)x(D,D)
    x = x + attn

    # ---- MLP block (pre-LN, quick_gelu) ----
    hm = _ln(x, ln2[0, 0:1], ln2[0, 1:2])
    hm = jnp.dot(hm.astype(MM_DTYPE), w1[0], preferred_element_type=jnp.float32) + b1[0]
    hm = hm * jax.nn.sigmoid(1.702 * hm)                                 # quick_gelu (f32)
    hm = jnp.dot(hm.astype(MM_DTYPE), w2[0], preferred_element_type=jnp.float32) + b2[0]
    return x + hm


# ------------------------------------ tower kernels ----------------------------------------
def _vision_tower_kernel(x0_ref, ln1, wqkv, bqkv, wo, bo, ln2, w1, b1, w2, b2,
                         postln_ref, out_ref, xs, mask_sc, *, heads, seq_valid):
    l = pl.program_id(1)
    TB, S, D = xs.shape

    @pl.when(l == 0)
    def _():
        xs[...] = x0_ref[...]
        # Static key-padding mask for zero-padded vision tokens: built once into VMEM
        # scratch at the first layer of each batch tile and reused by every layer.
        ki = jax.lax.broadcasted_iota(jnp.int32, (S, S), 1)
        keymask = jnp.where(ki < seq_valid, 0.0, NEG_INF).astype(jnp.float32)
        mask_sc[...] = jnp.broadcast_to(keymask.reshape(1, S, S), (TB, S, S))

    x = _layer_body(xs[...].reshape(TB * S, D), mask_sc[...],
                    ln1, wqkv, bqkv, wo, bo, ln2, w1, b1, w2, b2,
                    heads=heads, seq=S)
    xs[...] = x.reshape(TB, S, D)

    @pl.when(l == pl.num_programs(1) - 1)
    def _():
        cls = x.reshape(TB, S, D)[:, 0:1, :].reshape(TB, D)      # CLS token per image
        out_ref[...] = _ln(cls, postln_ref[0:1], postln_ref[1:2]).reshape(TB, 1, D)


def _text_tower_kernel(x0_ref, amlane_ref, amsub_ref,
                       ln1, wqkv, bqkv, wo, bo, ln2, w1, b1, w2, b2,
                       finln_ref, out_ref, xs, mask_sc, *, heads):
    l = pl.program_id(1)
    TB, S, D = xs.shape

    @pl.when(l == 0)
    def _():
        xs[...] = x0_ref[...]
        # Causal + key-padding mask built ONCE into VMEM scratch (no per-layer iota/where,
        # no (B*H, S, S) HBM mask).
        qi = jax.lax.broadcasted_iota(jnp.int32, (S, S), 0)
        ki = jax.lax.broadcasted_iota(jnp.int32, (S, S), 1)
        causal = jnp.where(ki <= qi, 0.0, NEG_INF).astype(jnp.float32)   # (S, S)
        pad = (1.0 - amlane_ref[...]) * NEG_INF                          # (TB, 1, S)
        mask_sc[...] = causal.reshape(1, S, S) + pad                     # (TB, S, S)

    x = _layer_body(xs[...].reshape(TB * S, D), mask_sc[...],
                    ln1, wqkv, bqkv, wo, bo, ln2, w1, b1, w2, b2,
                    heads=heads, seq=S)
    xs[...] = x.reshape(TB, S, D)

    @pl.when(l == pl.num_programs(1) - 1)
    def _():
        xh = _ln(x, finln_ref[0:1], finln_ref[1:2]).reshape(TB, S, D)    # final_layer_norm
        m = amsub_ref[...]                                               # (TB, S, 1)
        num = jnp.sum(xh * m, axis=1)                                    # (TB, D)
        den = jnp.maximum(jnp.sum(m, axis=1), 1e-9)                      # clamp(min=1e-9)
        out_ref[...] = (num / den).reshape(TB, 1, D)


def _fusion_kernel(imgp_ref, txtp_ref, vproj_ref, tproj_ref, out_ref):
    # Batched pooled projections + multimodal fusion add, done once outside the towers.
    img = jnp.dot(imgp_ref[...].astype(MM_DTYPE), vproj_ref[...].astype(MM_DTYPE),
                  preferred_element_type=jnp.float32)
    txt = jnp.dot(txtp_ref[...].astype(MM_DTYPE), tproj_ref[...].astype(MM_DTYPE),
                  preferred_element_type=jnp.float32)
    out_ref[...] = img + txt


# ------------------------------------- spec helpers ----------------------------------------
def _const_spec(arr):
    zeros = (0,) * arr.ndim
    return pl.BlockSpec(tuple(arr.shape), lambda b, l: zeros)


def _stacked_spec(arr):
    tail = (0,) * (arr.ndim - 1)
    return pl.BlockSpec((1,) + tuple(arr.shape[1:]), lambda b, l: (l,) + tail)


def _batch_spec(arr, tb):
    tail = (0,) * (arr.ndim - 1)
    return pl.BlockSpec((tb,) + tuple(arr.shape[1:]), lambda b, l: (b,) + tail)


_PARAMS = pltpu.CompilerParams(
    dimension_semantics=("parallel", "arbitrary"),
    vmem_limit_bytes=32 * 1024 * 1024,
)


# --------------------------------------- model glue ----------------------------------------
def vision_pooled(params, pixel_values, cfg):
    """CLIP vision tower -> pooler_output (B, D).  Projection applied later (batched)."""
    vp, lp = params["vision"], params["vision"]["layers"]
    B, C, Himg, Wimg = pixel_values.shape
    P, D, L, H = cfg["patch"], cfg["hidden"], cfg["layers"], cfg["heads"]
    gh, gw = Himg // P, Wimg // P
    NP, CPP = gh * gw, C * P * P
    S_real = NP + 1
    S = _round_up(S_real, 8)          # pad seq to a sublane multiple (real: 50 -> 56)

    # Embedding stage in plain XLA: patchify conv-as-matmul, CLS, pos-emb, pre-LN.
    # One-shot weights stay OUT of the tower call so they never occupy tower VMEM.
    patches = pixel_values.reshape(B, C, gh, P, gw, P).transpose(0, 2, 4, 1, 3, 5)
    patches = patches.reshape(B, NP, CPP)
    pe = jnp.einsum("bnc,cd->bnd", patches, vp["patch_w"])
    cls = jnp.broadcast_to(vp["class_emb"].reshape(1, 1, D), (B, 1, D))
    x = jnp.concatenate([cls, pe], axis=1) + vp["pos_emb"][None]
    x = _ln(x, vp["pre_ln"][0], vp["pre_ln"][1])
    x0 = jnp.pad(x, ((0, 0), (0, S - S_real), (0, 0)))

    TB = _pick_tb(B)
    layer_args = [lp[k] for k in LAYER_KEYS]
    pooled = pl.pallas_call(
        functools.partial(_vision_tower_kernel, heads=H, seq_valid=S_real),
        out_shape=jax.ShapeDtypeStruct((B, 1, D), jnp.float32),
        grid=(B // TB, L),
        in_specs=([_batch_spec(x0, TB)]
                  + [_stacked_spec(lp[k]) for k in LAYER_KEYS]
                  + [_const_spec(vp["post_ln"])]),
        out_specs=pl.BlockSpec((TB, 1, D), lambda b, l: (b, 0, 0)),
        scratch_shapes=[pltpu.VMEM((TB, S, D), jnp.float32),     # resident activations
                        pltpu.VMEM((TB, S, S), jnp.float32)],    # attention mask
        compiler_params=_PARAMS,
    )(x0, *layer_args, vp["post_ln"])
    return pooled.reshape(B, D)


def text_pooled(params, input_ids, attention_mask, cfg):
    """CLIP text tower + masked mean pooling -> (B, D).  Projection applied later."""
    tp, lp = params["text"], params["text"]["layers"]
    B, S_real = input_ids.shape
    D, L, H = cfg["hidden"], cfg["layers"], cfg["heads"]
    S = _round_up(S_real, 8)          # real: 77 -> 80

    # Token + positional embedding (tiny gather left to XLA glue).
    x0 = jnp.take(tp["token_emb"], input_ids, axis=0) + tp["pos_emb"][:S_real][None]
    am = attention_mask.astype(jnp.float32)
    if S != S_real:
        x0 = jnp.pad(x0, ((0, 0), (0, S - S_real), (0, 0)))
        am = jnp.pad(am, ((0, 0), (0, S - S_real)))
    am_lane = am.reshape(B, 1, S)     # key-padding mask (keys on lanes) for attention
    am_sub = am.reshape(B, S, 1)      # pooling mask (seq on sublanes) for masked mean

    TB = _pick_tb(B)
    layer_args = [lp[k] for k in LAYER_KEYS]
    pooled = pl.pallas_call(
        functools.partial(_text_tower_kernel, heads=H),
        out_shape=jax.ShapeDtypeStruct((B, 1, D), jnp.float32),
        grid=(B // TB, L),
        in_specs=([_batch_spec(x0, TB), _batch_spec(am_lane, TB), _batch_spec(am_sub, TB)]
                  + [_stacked_spec(lp[k]) for k in LAYER_KEYS]
                  + [_const_spec(tp["final_ln"])]),
        out_specs=pl.BlockSpec((TB, 1, D), lambda b, l: (b, 0, 0)),
        scratch_shapes=[pltpu.VMEM((TB, S, D), jnp.float32),
                        pltpu.VMEM((TB, S, S), jnp.float32)],
        compiler_params=_PARAMS,
    )(x0, am_lane, am_sub, *layer_args, tp["final_ln"])
    return pooled.reshape(B, D)


def clip_multimodal_forward(params, pixel_values, input_ids, attention_mask, cfg=CFG):
    img_pooled = vision_pooled(params, pixel_values, cfg)                 # (B, D)
    txt_pooled = text_pooled(params, input_ids, attention_mask, cfg)      # (B, D)
    B = img_pooled.shape[0]
    fused = pl.pallas_call(
        _fusion_kernel,
        out_shape=jax.ShapeDtypeStruct((B, cfg["proj"]), jnp.float32),
    )(img_pooled, txt_pooled, params["visual_projection"], params["textual_projection"])
    return jnp.squeeze(fused)


# ------------------------------ deterministic parameter init -------------------------------
def init_params(key, cfg):
    d, mlp, proj, L = cfg["hidden"], cfg["mlp"], cfg["proj"], cfg["layers"]
    npatch = (cfg["image_size"] // cfg["patch"]) ** 2
    cpp = cfg["channels"] * cfg["patch"] ** 2
    keys = iter(jax.random.split(key, 64))

    def w(shape, dtype=jnp.float32):
        return (jax.random.normal(next(keys), shape, jnp.float32) * 0.02).astype(dtype)

    def ln_stack(n):  # (n, 2, d): [gamma; beta] per layer
        return jnp.stack([jnp.ones((n, d), jnp.float32),
                          jnp.zeros((n, d), jnp.float32)], axis=1)

    def ln2d():       # (2, d)
        return jnp.stack([jnp.ones((d,), jnp.float32), jnp.zeros((d,), jnp.float32)])

    def tower_layers():
        # MXU-facing weights in bf16 (f32 accumulation in-kernel); LN params / biases in f32.
        return dict(
            ln1=ln_stack(L),
            wqkv=w((L, d, 3 * d), MM_DTYPE),     # fused [q | k | v], head-major inside each
            bqkv=jnp.zeros((L, 1, 3 * d), jnp.float32),
            wo=w((L, d, d), MM_DTYPE),           # lane-dense out-projection
            bo=jnp.zeros((L, 1, d), jnp.float32),
            ln2=ln_stack(L),
            w1=w((L, d, mlp), MM_DTYPE), b1=jnp.zeros((L, 1, mlp), jnp.float32),
            w2=w((L, mlp, d), MM_DTYPE), b2=jnp.zeros((L, 1, d), jnp.float32),
        )

    vision = dict(
        patch_w=w((cpp, d)),          # Conv2d(kernel=stride=P, bias=False) as (C*P*P, D)
        class_emb=w((d,)),
        pos_emb=w((npatch + 1, d)),
        pre_ln=ln2d(),
        post_ln=ln2d(),
        layers=tower_layers(),
    )
    text = dict(
        token_emb=w((cfg["vocab"], d)),
        pos_emb=w((cfg["text_seq"], d)),
        final_ln=ln2d(),
        layers=tower_layers(),
    )
    return dict(vision=vision, text=text,
                visual_projection=w((d, proj)),
                textual_projection=w((d, proj)))


# -------------------------------------------- main -----------------------------------------
if __name__ == "__main__":
    # TODO(synk): HF CLIPTokenizer / CLIPImageProcessor preprocessing (load_input_example)
    # is host-side string/PIL handling with no kernel equivalent; inputs are synthesized.
    key = jax.random.PRNGKey(0)
    kp, kimg, kids = jax.random.split(key, 3)
    params = init_params(kp, CFG)

    B = 2
    pixel_values = jax.random.normal(
        kimg, (B, CFG["channels"], CFG["image_size"], CFG["image_size"]), jnp.float32)
    input_ids = jax.random.randint(kids, (B, CFG["text_seq"]), 0, CFG["vocab"])
    attention_mask = jnp.array([[1, 1, 1, 1, 1, 1, 1, 1],
                                [1, 1, 1, 1, 1, 0, 0, 0]], dtype=jnp.int32)

    fwd = jax.jit(clip_multimodal_forward)
    out = jax.block_until_ready(fwd(params, pixel_values, input_ids, attention_mask))
    assert out.shape == (B, CFG["proj"]) and out.dtype == jnp.float32
    print("KERNEL_OK")
</pallas_src>

<mosaic_0001>
module attributes {stable_mosaic.version = 11 : i64} {
  func.func @_vision_tower_kernel(%arg0: i32, %arg1: i32, %arg2: memref<2x8x256xf32, #tpu.memory_space<vmem>>, %arg3: memref<1x2x256xf32, #tpu.memory_space<vmem>>, %arg4: memref<1x256x768xbf16, #tpu.memory_space<vmem>>, %arg5: memref<1x1x768xf32, #tpu.memory_space<vmem>>, %arg6: memref<1x256x256xbf16, #tpu.memory_space<vmem>>, %arg7: memref<1x1x256xf32, #tpu.memory_space<vmem>>, %arg8: memref<1x2x256xf32, #tpu.memory_space<vmem>>, %arg9: memref<1x256x512xbf16, #tpu.memory_space<vmem>>, %arg10: memref<1x1x512xf32, #tpu.memory_space<vmem>>, %arg11: memref<1x512x256xbf16, #tpu.memory_space<vmem>>, %arg12: memref<1x1x256xf32, #tpu.memory_space<vmem>>, %arg13: memref<2x256xf32, #tpu.memory_space<vmem>>, %arg14: memref<2x1x256xf32, #tpu.memory_space<vmem>>, %arg15: memref<2x8x256xf32, #tpu.memory_space<vmem>>, %arg16: memref<2x8x8xf32, #tpu.memory_space<vmem>>) attributes {dimension_semantics = [#tpu.dimension_semantics<parallel>, #tpu.dimension_semantics<arbitrary>], iteration_bounds = array<i64: 1, 2>, scalar_prefetch = 0 : i64, scratch_operands = 2 : i64, tpu.core_type = #tpu.core_type<tc>, window_params = [{transform_indices = @transform_0, window_bounds = array<i64: 2, 8, 256>}, {transform_indices = @transform_1, window_bounds = array<i64: 1, 2, 256>}, {transform_indices = @transform_2, window_bounds = array<i64: 1, 256, 768>}, {transform_indices = @transform_3, window_bounds = array<i64: 1, 1, 768>}, {transform_indices = @transform_4, window_bounds = array<i64: 1, 256, 256>}, {transform_indices = @transform_5, window_bounds = array<i64: 1, 1, 256>}, {transform_indices = @transform_6, window_bounds = array<i64: 1, 2, 256>}, {transform_indices = @transform_7, window_bounds = array<i64: 1, 256, 512>}, {transform_indices = @transform_8, window_bounds = array<i64: 1, 1, 512>}, {transform_indices = @transform_9, window_bounds = array<i64: 1, 512, 256>}, {transform_indices = @transform_10, window_bounds = array<i64: 1, 1, 256>}, {pipeline_mode = #tpu.pipeline_mode<synchronous>, transform_indices = @transform_11, window_bounds = array<i64: 2, 256>}, {transform_indices = @transform_12, window_bounds = array<i64: 2, 1, 256>}]} {
    %c0_i32 = arith.constant 0 : i32
    %0 = arith.cmpi eq, %arg1, %c0_i32 : i32
    %1 = arith.extui %0 : i1 to i32
    %c0_i32_0 = arith.constant 0 : i32
    %2 = arith.cmpi ne, %1, %c0_i32_0 : i32
    scf.if %2 {
      %c0_70 = arith.constant 0 : index
      %c0_71 = arith.constant 0 : index
      %c0_72 = arith.constant 0 : index
      %152 = vector.load %arg2[%c0_70, %c0_71, %c0_72] : memref<2x8x256xf32, #tpu.memory_space<vmem>>, vector<2x8x256xf32>
      %c0_73 = arith.constant 0 : index
      %c0_74 = arith.constant 0 : index
      %c0_75 = arith.constant 0 : index
      %153 = vector.load %arg15[%c0_73, %c0_74, %c0_75] : memref<2x8x256xf32, #tpu.memory_space<vmem>>, vector<2x8x256xf32>
      tpu.vector_store %arg15[%c0_73, %c0_74, %c0_75], %152 {strides = array<i32>} : memref<2x8x256xf32, #tpu.memory_space<vmem>>, vector<2x8x256xf32>,
      %154 = tpu.iota {dimensions = array<i32: 1>} : vector<8x8xi32>
      %c5_i32 = arith.constant 5 : i32
      %155 = vector.broadcast %c5_i32 : i32 to vector<8x8xi32>
      %156 = arith.cmpi slt, %154, %155 : vector<8x8xi32>
      %cst_76 = arith.constant 0.000000e+00 : f32
      %cst_77 = arith.constant -1.000000e+09 : f32
      %157 = vector.broadcast %cst_76 : f32 to vector<8x8xf32>
      %158 = vector.broadcast %cst_77 : f32 to vector<8x8xf32>
      %159 = arith.select %156, %157, %158 : vector<8x8xi1>, vector<8x8xf32>
      %160 = vector.shape_cast %159 : vector<8x8xf32> to vector<1x8x8xf32>
      %161 = vector.shape_cast %160 : vector<1x8x8xf32> to vector<1x8x8xf32>
      %162 = vector.broadcast %161 : vector<1x8x8xf32> to vector<2x8x8xf32>
      %c0_78 = arith.constant 0 : index
      %c0_79 = arith.constant 0 : index
      %c0_80 = arith.constant 0 : index
      %163 = vector.load %arg16[%c0_78, %c0_79, %c0_80] : memref<2x8x8xf32, #tpu.memory_space<vmem>>, vector<2x8x8xf32>
      tpu.vector_store %arg16[%c0_78, %c0_79, %c0_80], %162 {strides = array<i32>} : memref<2x8x8xf32, #tpu.memory_space<vmem>>, vector<2x8x8xf32>,
    } else {
    }
    %c0 = arith.constant 0 : index
    %c0_1 = arith.constant 0 : index
    %c0_2 = arith.constant 0 : index
    %3 = vector.load %arg15[%c0, %c0_1, %c0_2] : memref<2x8x256xf32, #tpu.memory_space<vmem>>, vector<2x8x256xf32>
    %4 = vector.shape_cast %3 : vector<2x8x256xf32> to vector<16x256xf32>
    %c0_3 = arith.constant 0 : index
    %c0_4 = arith.constant 0 : index
    %c0_5 = arith.constant 0 : index
    %5 = vector.load %arg16[%c0_3, %c0_4, %c0_5] : memref<2x8x8xf32, #tpu.memory_space<vmem>>, vector<2x8x8xf32>
    %c0_6 = arith.constant 0 : index
    %c0_7 = arith.constant 0 : index
    %c0_8 = arith.constant 0 : index
    %6 = vector.load %arg3[%c0_6, %c0_7, %c0_8] : memref<1x2x256xf32, #tpu.memory_space<vmem>>, vector<1x1x256xf32>
    %7 = vector.shape_cast %6 : vector<1x1x256xf32> to vector<1x256xf32>
    %c0_9 = arith.constant 0 : index
    %c1 = arith.constant 1 : index
    %c0_10 = arith.constant 0 : index
    %8 = vector.load %arg3[%c0_9, %c1, %c0_10] : memref<1x2x256xf32, #tpu.memory_space<vmem>>, vector<1x1x256xf32>
    %9 = vector.shape_cast %8 : vector<1x1x256xf32> to vector<1x256xf32>
    %cst = arith.constant dense<0.000000e+00> : vector<16xf32>
    %10 = vector.multi_reduction <add>, %4, %cst [1] : vector<16x256xf32> to vector<16xf32>
    %11 = vector.shape_cast %10 : vector<16xf32> to vector<16x1xf32>
    %cst_11 = arith.constant 2.560000e+02 : f32
    %12 = vector.broadcast %cst_11 : f32 to vector<16x1xf32>
    %13 = arith.divf %11, %12 : vector<16x1xf32>
    %14 = vector.broadcast %13 : vector<16x1xf32> to vector<16x256xf32>
    %15 = arith.subf %4, %14 : vector<16x256xf32>
    %16 = arith.mulf %15, %15 : vector<16x256xf32>
    %cst_12 = arith.constant dense<0.000000e+00> : vector<16xf32>
    %17 = vector.multi_reduction <add>, %16, %cst_12 [1] : vector<16x256xf32> to vector<16xf32>
    %18 = vector.shape_cast %17 : vector<16xf32> to vector<16x1xf32>
    %cst_13 = arith.constant 2.560000e+02 : f32
    %19 = vector.broadcast %cst_13 : f32 to vector<16x1xf32>
    %20 = arith.divf %18, %19 : vector<16x1xf32>
    %21 = vector.broadcast %13 : vector<16x1xf32> to vector<16x256xf32>
    %22 = arith.subf %4, %21 : vector<16x256xf32>
    %cst_14 = arith.constant 9.99999974E-6 : f32
    %23 = vector.broadcast %cst_14 : f32 to vector<16x1xf32>
    %24 = arith.addf %20, %23 : vector<16x1xf32>
    %25 = math.rsqrt %24 : vector<16x1xf32>
    %26 = vector.broadcast %25 : vector<16x1xf32> to vector<16x256xf32>
    %27 = arith.mulf %22, %26 : vector<16x256xf32>
    %28 = vector.broadcast %7 : vector<1x256xf32> to vector<16x256xf32>
    %29 = arith.mulf %27, %28 : vector<16x256xf32>
    %30 = vector.broadcast %9 : vector<1x256xf32> to vector<16x256xf32>
    %31 = arith.addf %29, %30 : vector<16x256xf32>
    %32 = arith.truncf %31 : vector<16x256xf32> to vector<16x256xbf16>
    %c0_15 = arith.constant 0 : index
    %c0_16 = arith.constant 0 : index
    %c0_17 = arith.constant 0 : index
    %33 = vector.load %arg4[%c0_15, %c0_16, %c0_17] : memref<1x256x768xbf16, #tpu.memory_space<vmem>>, vector<1x256x768xbf16>
    %34 = vector.shape_cast %33 : vector<1x256x768xbf16> to vector<256x768xbf16>
    %cst_18 = arith.constant dense<0.000000e+00> : vector<16x768xf32>
    %35 = tpu.matmul %32, %34, %cst_18 {dimension_numbers = #tpu.dot_dimension_numbers<[1], [0], [0], [1], [0, 0, 1, 1], [], []>} : vector<16x256xbf16>, vector<256x768xbf16>, vector<16x768xf32> -> vector<16x768xf32>
    %c0_19 = arith.constant 0 : index
    %c0_20 = arith.constant 0 : index
    %c0_21 = arith.constant 0 : index
    %36 = vector.load %arg5[%c0_19, %c0_20, %c0_21] : memref<1x1x768xf32, #tpu.memory_space<vmem>>, vector<1x1x768xf32>
    %37 = vector.shape_cast %36 : vector<1x1x768xf32> to vector<1x768xf32>
    %38 = vector.broadcast %37 : vector<1x768xf32> to vector<16x768xf32>
    %39 = arith.addf %35, %38 : vector<16x768xf32>
    %40 = vector.shape_cast %39 : vector<16x768xf32> to vector<2x8x768xf32>
    %41 = vector.extract_strided_slice %40 {offsets = [0, 0, 0], sizes = [2, 8, 128], strides = [1, 1, 1]} : vector<2x8x768xf32> to vector<2x8x128xf32>
    %cst_22 = arith.constant 0.0883883461 : f32
    %42 = vector.broadcast %cst_22 : f32 to vector<2x8x128xf32>
    %43 = arith.mulf %41, %42 : vector<2x8x128xf32>
    %44 = vector.extract_strided_slice %40 {offsets = [0, 0, 256], sizes = [2, 8, 128], strides = [1, 1, 1]} : vector<2x8x768xf32> to vector<2x8x128xf32>
    %45 = vector.extract_strided_slice %40 {offsets = [0, 0, 512], sizes = [2, 8, 128], strides = [1, 1, 1]} : vector<2x8x768xf32> to vector<2x8x128xf32>
    %46 = arith.truncf %43 : vector<2x8x128xf32> to vector<2x8x128xbf16>
    %47 = arith.truncf %44 : vector<2x8x128xf32> to vector<2x8x128xbf16>
    "tpu.trace_start"() <{level = 10 : i32, message = "bqd,bkd->bqk"}> : () -> ()
    %cst_23 = arith.constant dense<0.000000e+00> : vector<2x8x8xf32>
    %48 = tpu.matmul %46, %47, %cst_23 {dimension_numbers = #tpu.dot_dimension_numbers<[2], [2], [1], [1], [0, 0, 0, 1, 1, 1], [0], [0]>} : vector<2x8x128xbf16>, vector<2x8x128xbf16>, vector<2x8x8xf32> -> vector<2x8x8xf32>
    "tpu.trace_stop"() : () -> ()
    %49 = arith.addf %48, %5 : vector<2x8x8xf32>
    %cst_24 = arith.constant dense<0xFF800000> : vector<2x8xf32>
    %50 = vector.multi_reduction <maximumf>, %49, %cst_24 [2] : vector<2x8x8xf32> to vector<2x8xf32>
    %51 = vector.shape_cast %50 : vector<2x8xf32> to vector<2x8x1xf32>
    %52 = vector.broadcast %51 : vector<2x8x1xf32> to vector<2x8x8xf32>
    %53 = arith.subf %49, %52 : vector<2x8x8xf32>
    %54 = math.exp %53 : vector<2x8x8xf32>
    %cst_25 = arith.constant dense<0.000000e+00> : vector<2x8xf32>
    %55 = vector.multi_reduction <add>, %54, %cst_25 [2] : vector<2x8x8xf32> to vector<2x8xf32>
    %56 = vector.shape_cast %55 : vector<2x8xf32> to vector<2x8x1xf32>
    %57 = tpu.reciprocal %56 {approx = true} : vector<2x8x1xf32> -> vector<2x8x1xf32>
    %58 = vector.broadcast %57 : vector<2x8x1xf32> to vector<2x8x8xf32>
    %59 = arith.mulf %54, %58 : vector<2x8x8xf32>
    %60 = arith.truncf %59 : vector<2x8x8xf32> to vector<2x8x8xbf16>
    %61 = arith.truncf %45 : vector<2x8x128xf32> to vector<2x8x128xbf16>
    "tpu.trace_start"() <{level = 10 : i32, message = "bqk,bkd->bqd"}> : () -> ()
    %cst_26 = arith.constant dense<0.000000e+00> : vector<2x8x128xf32>
    %62 = tpu.matmul %60, %61, %cst_26 {dimension_numbers = #tpu.dot_dimension_numbers<[2], [1], [1], [2], [0, 0, 0, 1, 1, 2], [0], [0]>} : vector<2x8x8xbf16>, vector<2x8x128xbf16>, vector<2x8x128xf32> -> vector<2x8x128xf32>
    "tpu.trace_stop"() : () -> ()
    %63 = vector.extract_strided_slice %40 {offsets = [0, 0, 128], sizes = [2, 8, 128], strides = [1, 1, 1]} : vector<2x8x768xf32> to vector<2x8x128xf32>
    %cst_27 = arith.constant 0.0883883461 : f32
    %64 = vector.broadcast %cst_27 : f32 to vector<2x8x128xf32>
    %65 = arith.mulf %63, %64 : vector<2x8x128xf32>
    %66 = vector.extract_strided_slice %40 {offsets = [0, 0, 384], sizes = [2, 8, 128], strides = [1, 1, 1]} : vector<2x8x768xf32> to vector<2x8x128xf32>
    %67 = vector.extract_strided_slice %40 {offsets = [0, 0, 640], sizes = [2, 8, 128], strides = [1, 1, 1]} : vector<2x8x768xf32> to vector<2x8x128xf32>
    %68 = arith.truncf %65 : vector<2x8x128xf32> to vector<2x8x128xbf16>
    %69 = arith.truncf %66 : vector<2x8x128xf32> to vector<2x8x128xbf16>
    "tpu.trace_start"() <{level = 10 : i32, message = "bqd,bkd->bqk"}> : () -> ()
    %cst_28 = arith.constant dense<0.000000e+00> : vector<2x8x8xf32>
    %70 = tpu.matmul %68, %69, %cst_28 {dimension_numbers = #tpu.dot_dimension_numbers<[2], [2], [1], [1], [0, 0, 0, 1, 1, 1], [0], [0]>} : vector<2x8x128xbf16>, vector<2x8x128xbf16>, vector<2x8x8xf32> -> vector<2x8x8xf32>
    "tpu.trace_stop"() : () -> ()
    %71 = arith.addf %70, %5 : vector<2x8x8xf32>
    %cst_29 = arith.constant dense<0xFF800000> : vector<2x8xf32>
    %72 = vector.multi_reduction <maximumf>, %71, %cst_29 [2] : vector<2x8x8xf32> to vector<2x8xf32>
    %73 = vector.shape_cast %72 : vector<2x8xf32> to vector<2x8x1xf32>
    %74 = vector.broadcast %73 : vector<2x8x1xf32> to vector<2x8x8xf32>
    %75 = arith.subf %71, %74 : vector<2x8x8xf32>
    %76 = math.exp %75 : vector<2x8x8xf32>
    %cst_30 = arith.constant dense<0.000000e+00> : vector<2x8xf32>
    %77 = vector.multi_reduction <add>, %76, %cst_30 [2] : vector<2x8x8xf32> to vector<2x8xf32>
    %78 = vector.shape_cast %77 : vector<2x8xf32> to vector<2x8x1xf32>
    %79 = tpu.reciprocal %78 {approx = true} : vector<2x8x1xf32> -> vector<2x8x1xf32>
    %80 = vector.broadcast %79 : vector<2x8x1xf32> to vector<2x8x8xf32>
    %81 = arith.mulf %76, %80 : vector<2x8x8xf32>
    %82 = arith.truncf %81 : vector<2x8x8xf32> to vector<2x8x8xbf16>
    %83 = arith.truncf %67 : vector<2x8x128xf32> to vector<2x8x128xbf16>
    "tpu.trace_start"() <{level = 10 : i32, message = "bqk,bkd->bqd"}> : () -> ()
    %cst_31 = arith.constant dense<0.000000e+00> : vector<2x8x128xf32>
    %84 = tpu.matmul %82, %83, %cst_31 {dimension_numbers = #tpu.dot_dimension_numbers<[2], [1], [1], [2], [0, 0, 0, 1, 1, 2], [0], [0]>} : vector<2x8x8xbf16>, vector<2x8x128xbf16>, vector<2x8x128xf32> -> vector<2x8x128xf32>
    "tpu.trace_stop"() : () -> ()
    %85 = tpu.concatenate %62, %84 in 2 : vector<2x8x128xf32>, vector<2x8x128xf32> -> vector<2x8x256xf32>
    %86 = vector.shape_cast %85 : vector<2x8x256xf32> to vector<16x256xf32>
    %87 = arith.truncf %86 : vector<16x256xf32> to vector<16x256xbf16>
    %c0_32 = arith.constant 0 : index
    %c0_33 = arith.constant 0 : index
    %c0_34 = arith.constant 0 : index
    %88 = vector.load %arg6[%c0_32, %c0_33, %c0_34] : memref<1x256x256xbf16, #tpu.memory_space<vmem>>, vector<1x256x256xbf16>
    %89 = vector.shape_cast %88 : vector<1x256x256xbf16> to vector<256x256xbf16>
    %cst_35 = arith.constant dense<0.000000e+00> : vector<16x256xf32>
    %90 = tpu.matmul %87, %89, %cst_35 {dimension_numbers = #tpu.dot_dimension_numbers<[1], [0], [0], [1], [0, 0, 1, 1], [], []>} : vector<16x256xbf16>, vector<256x256xbf16>, vector<16x256xf32> -> vector<16x256xf32>
    %c0_36 = arith.constant 0 : index
    %c0_37 = arith.constant 0 : index
    %c0_38 = arith.constant 0 : index
    %91 = vector.load %arg7[%c0_36, %c0_37, %c0_38] : memref<1x1x256xf32, #tpu.memory_space<vmem>>, vector<1x1x256xf32>
    %92 = vector.shape_cast %91 : vector<1x1x256xf32> to vector<1x256xf32>
    %93 = vector.broadcast %92 : vector<1x256xf32> to vector<16x256xf32>
    %94 = arith.addf %90, %93 : vector<16x256xf32>
    %95 = arith.addf %4, %94 : vector<16x256xf32>
    %c0_39 = arith.constant 0 : index
    %c0_40 = arith.constant 0 : index
    %c0_41 = arith.constant 0 : index
    %96 = vector.load %arg8[%c0_39, %c0_40, %c0_41] : memref<1x2x256xf32, #tpu.memory_space<vmem>>, vector<1x1x256xf32>
    %97 = vector.shape_cast %96 : vector<1x1x256xf32> to vector<1x256xf32>
    %c0_42 = arith.constant 0 : index
    %c1_43 = arith.constant 1 : index
    %c0_44 = arith.constant 0 : index
    %98 = vector.load %arg8[%c0_42, %c1_43, %c0_44] : memref<1x2x256xf32, #tpu.memory_space<vmem>>, vector<1x1x256xf32>
    %99 = vector.shape_cast %98 : vector<1x1x256xf32> to vector<1x256xf32>
    %cst_45 = arith.constant dense<0.000000e+00> : vector<16xf32>
    %100 = vector.multi_reduction <add>, %95, %cst_45 [1] : vector<16x256xf32> to vector<16xf32>
    %101 = vector.shape_cast %100 : vector<16xf32> to vector<16x1xf32>
    %cst_46 = arith.constant 2.560000e+02 : f32
    %102 = vector.broadcast %cst_46 : f32 to vector<16x1xf32>
    %103 = arith.divf %101, %102 : vector<16x1xf32>
    %104 = vector.broadcast %103 : vector<16x1xf32> to vector<16x256xf32>
    %105 = arith.subf %95, %104 : vector<16x256xf32>
    %106 = arith.mulf %105, %105 : vector<16x256xf32>
    %cst_47 = arith.constant dense<0.000000e+00> : vector<16xf32>
    %107 = vector.multi_reduction <add>, %106, %cst_47 [1] : vector<16x256xf32> to vector<16xf32>
    %108 = vector.shape_cast %107 : vector<16xf32> to vector<16x1xf32>
    %cst_48 = arith.constant 2.560000e+02 : f32
    %109 = vector.broadcast %cst_48 : f32 to vector<16x1xf32>
    %110 = arith.divf %108, %109 : vector<16x1xf32>
    %111 = vector.broadcast %103 : vector<16x1xf32> to vector<16x256xf32>
    %112 = arith.subf %95, %111 : vector<16x256xf32>
    %cst_49 = arith.constant 9.99999974E-6 : f32
    %113 = vector.broadcast %cst_49 : f32 to vector<16x1xf32>
    %114 = arith.addf %110, %113 : vector<16x1xf32>
    %115 = math.rsqrt %114 : vector<16x1xf32>
    %116 = vector.broadcast %115 : vector<16x1xf32> to vector<16x256xf32>
    %117 = arith.mulf %112, %116 : vector<16x256xf32>
    %118 = vector.broadcast %97 : vector<1x256xf32> to vector<16x256xf32>
    %119 = arith.mulf %117, %118 : vector<16x256xf32>
    %120 = vector.broadcast %99 : vector<1x256xf32> to vector<16x256xf32>
    %121 = arith.addf %119, %120 : vector<16x256xf32>
    %122 = arith.truncf %121 : vector<16x256xf32> to vector<16x256xbf16>
    %c0_50 = arith.constant 0 : index
    %c0_51 = arith.constant 0 : index
    %c0_52 = arith.constant 0 : index
    %123 = vector.load %arg9[%c0_50, %c0_51, %c0_52] : memref<1x256x512xbf16, #tpu.memory_space<vmem>>, vector<1x256x512xbf16>
    %124 = vector.shape_cast %123 : vector<1x256x512xbf16> to vector<256x512xbf16>
    %cst_53 = arith.constant dense<0.000000e+00> : vector<16x512xf32>
    %125 = tpu.matmul %122, %124, %cst_53 {dimension_numbers = #tpu.dot_dimension_numbers<[1], [0], [0], [1], [0, 0, 1, 1], [], []>} : vector<16x256xbf16>, vector<256x512xbf16>, vector<16x512xf32> -> vector<16x512xf32>
    %c0_54 = arith.constant 0 : index
    %c0_55 = arith.constant 0 : index
    %c0_56 = arith.constant 0 : index
    %126 = vector.load %arg10[%c0_54, %c0_55, %c0_56] : memref<1x1x512xf32, #tpu.memory_space<vmem>>, vector<1x1x512xf32>
    %127 = vector.shape_cast %126 : vector<1x1x512xf32> to vector<1x512xf32>
    %128 = vector.broadcast %127 : vector<1x512xf32> to vector<16x512xf32>
    %129 = arith.addf %125, %128 : vector<16x512xf32>
    %cst_57 = arith.constant 1.702000e+00 : f32
    %130 = vector.broadcast %cst_57 : f32 to vector<16x512xf32>
    %131 = arith.mulf %130, %129 : vector<16x512xf32>
    %132 = arith.negf %131 : vector<16x512xf32>
    %133 = math.exp %132 : vector<16x512xf32>
    %cst_58 = arith.constant 1.000000e+00 : f32
    %134 = vector.broadcast %cst_58 : f32 to vector<16x512xf32>
    %135 = arith.addf %134, %133 : vector<16x512xf32>
    %136 = arith.divf %134, %135 : vector<16x512xf32>
    %137 = arith.mulf %129, %136 : vector<16x512xf32>
    %138 = arith.truncf %137 : vector<16x512xf32> to vector<16x512xbf16>
    %c0_59 = arith.constant 0 : index
    %c0_60 = arith.constant 0 : index
    %c0_61 = arith.constant 0 : index
    %139 = vector.load %arg11[%c0_59, %c0_60, %c0_61] : memref<1x512x256xbf16, #tpu.memory_space<vmem>>, vector<1x512x256xbf16>
    %140 = vector.shape_cast %139 : vector<1x512x256xbf16> to vector<512x256xbf16>
    %cst_62 = arith.constant dense<0.000000e+00> : vector<16x256xf32>
    %141 = tpu.matmul %138, %140, %cst_62 {dimension_numbers = #tpu.dot_dimension_numbers<[1], [0], [0], [1], [0, 0, 1, 1], [], []>} : vector<16x512xbf16>, vector<512x256xbf16>, vector<16x256xf32> -> vector<16x256xf32>
    %c0_63 = arith.constant 0 : index
    %c0_64 = arith.constant 0 : index
    %c0_65 = arith.constant 0 : index
    %142 = vector.load %arg12[%c0_63, %c0_64, %c0_65] : memref<1x1x256xf32, #tpu.memory_space<vmem>>, vector<1x1x256xf32>
    %143 = vector.shape_cast %142 : vector<1x1x256xf32> to vector<1x256xf32>
    %144 = vector.broadcast %143 : vector<1x256xf32> to vector<16x256xf32>
    %145 = arith.addf %141, %144 : vector<16x256xf32>
    %146 = arith.addf %95, %145 : vector<16x256xf32>
    %147 = vector.shape_cast %146 : vector<16x256xf32> to vector<2x8x256xf32>
    %c0_66 = arith.constant 0 : index
    %c0_67 = arith.constant 0 : index
    %c0_68 = arith.constant 0 : index
    %148 = vector.load %arg15[%c0_66, %c0_67, %c0_68] : memref<2x8x256xf32, #tpu.memory_space<vmem>>, vector<2x8x256xf32>
    tpu.vector_store %arg15[%c0_66, %c0_67, %c0_68], %147 {strides = array<i32>} : memref<2x8x256xf32, #tpu.memory_space<vmem>>, vector<2x8x256xf32>,
    %c1_i32 = arith.constant 1 : i32
    %149 = arith.cmpi eq, %arg1, %c1_i32 : i32
    %150 = arith.extui %149 : i1 to i32
    %c0_i32_69 = arith.constant 0 : i32
    %151 = arith.cmpi ne, %150, %c0_i32_69 : i32
    scf.if %151 {
      %152 = vector.shape_cast %146 : vector<16x256xf32> to vector<2x8x256xf32>
      %153 = vector.extract_strided_slice %152 {offsets = [0, 0, 0], sizes = [2, 1, 256], strides = [1, 1, 1]} : vector<2x8x256xf32> to vector<2x1x256xf32>
      %154 = vector.shape_cast %153 : vector<2x1x256xf32> to vector<2x256xf32>
      %c0_70 = arith.constant 0 : index
      %c0_71 = arith.constant 0 : index
      %155 = vector.load %arg13[%c0_70, %c0_71] : memref<2x256xf32, #tpu.memory_space<vmem>>, vector<1x256xf32>
      %c1_72 = arith.constant 1 : index
      %c0_73 = arith.constant 0 : index
      %156 = vector.load %arg13[%c1_72, %c0_73] : memref<2x256xf32, #tpu.memory_space<vmem>>, vector<1x256xf32>
      %cst_74 = arith.constant dense<0.000000e+00> : vector<2xf32>
      %157 = vector.multi_reduction <add>, %154, %cst_74 [1] : vector<2x256xf32> to vector<2xf32>
      %158 = vector.shape_cast %157 : vector<2xf32> to vector<2x1xf32>
      %cst_75 = arith.constant 2.560000e+02 : f32
      %159 = vector.broadcast %cst_75 : f32 to vector<2x1xf32>
      %160 = arith.divf %158, %159 : vector<2x1xf32>
      %161 = vector.broadcast %160 : vector<2x1xf32> to vector<2x256xf32>
      %162 = arith.subf %154, %161 : vector<2x256xf32>
      %163 = arith.mulf %162, %162 : vector<2x256xf32>
      %cst_76 = arith.constant dense<0.000000e+00> : vector<2xf32>
      %164 = vector.multi_reduction <add>, %163, %cst_76 [1] : vector<2x256xf32> to vector<2xf32>
      %165 = vector.shape_cast %164 : vector<2xf32> to vector<2x1xf32>
      %cst_77 = arith.constant 2.560000e+02 : f32
      %166 = vector.broadcast %cst_77 : f32 to vector<2x1xf32>
      %167 = arith.divf %165, %166 : vector<2x1xf32>
      %168 = vector.broadcast %160 : vector<2x1xf32> to vector<2x256xf32>
      %169 = arith.subf %154, %168 : vector<2x256xf32>
      %cst_78 = arith.constant 9.99999974E-6 : f32
      %170 = vector.broadcast %cst_78 : f32 to vector<2x1xf32>
      %171 = arith.addf %167, %170 : vector<2x1xf32>
      %172 = math.rsqrt %171 : vector<2x1xf32>
      %173 = vector.broadcast %172 : vector<2x1xf32> to vector<2x256xf32>
      %174 = arith.mulf %169, %173 : vector<2x256xf32>
      %175 = vector.broadcast %155 : vector<1x256xf32> to vector<2x256xf32>
      %176 = arith.mulf %174, %175 : vector<2x256xf32>
      %177 = vector.broadcast %156 : vector<1x256xf32> to vector<2x256xf32>
      %178 = arith.addf %176, %177 : vector<2x256xf32>
      %179 = vector.shape_cast %178 : vector<2x256xf32> to vector<2x1x256xf32>
      %c0_79 = arith.constant 0 : index
      %c0_80 = arith.constant 0 : index
      %c0_81 = arith.constant 0 : index
      %180 = vector.load %arg14[%c0_79, %c0_80, %c0_81] : memref<2x1x256xf32, #tpu.memory_space<vmem>>, vector<2x1x256xf32>
      tpu.vector_store %arg14[%c0_79, %c0_80, %c0_81], %179 {strides = array<i32>} : memref<2x1x256xf32, #tpu.memory_space<vmem>>, vector<2x1x256xf32>,
    } else {
    }
    return
  }
  func.func @transform_0(%arg0: i32, %arg1: i32) -> (i32, i32, i32) {
    %c0_i32 = arith.constant 0 : i32
    %c0_i32_0 = arith.constant 0 : i32
    %c0_i32_1 = arith.constant 0 : i32
    return %arg0, %c0_i32, %c0_i32_0 : i32, i32, i32
  }
  func.func @transform_1(%arg0: i32, %arg1: i32) -> (i32, i32, i32) {
    %c0_i32 = arith.constant 0 : i32
    %c0_i32_0 = arith.constant 0 : i32
    %c0_i32_1 = arith.constant 0 : i32
    return %arg1, %c0_i32, %c0_i32_0 : i32, i32, i32
  }
  func.func @transform_2(%arg0: i32, %arg1: i32) -> (i32, i32, i32) {
    %c0_i32 = arith.constant 0 : i32
    %c0_i32_0 = arith.constant 0 : i32
    %c0_i32_1 = arith.constant 0 : i32
    return %arg1, %c0_i32, %c0_i32_0 : i32, i32, i32
  }
  func.func @transform_3(%arg0: i32, %arg1: i32) -> (i32, i32, i32) {
    %c0_i32 = arith.constant 0 : i32
    %c0_i32_0 = arith.constant 0 : i32
    %c0_i32_1 = arith.constant 0 : i32
    return %arg1, %c0_i32, %c0_i32_0 : i32, i32, i32
  }
  func.func @transform_4(%arg0: i32, %arg1: i32) -> (i32, i32, i32) {
    %c0_i32 = arith.constant 0 : i32
    %c0_i32_0 = arith.constant 0 : i32
    %c0_i32_1 = arith.constant 0 : i32
    return %arg1, %c0_i32, %c0_i32_0 : i32, i32, i32
  }
  func.func @transform_5(%arg0: i32, %arg1: i32) -> (i32, i32, i32) {
    %c0_i32 = arith.constant 0 : i32
    %c0_i32_0 = arith.constant 0 : i32
    %c0_i32_1 = arith.constant 0 : i32
    return %arg1, %c0_i32, %c0_i32_0 : i32, i32, i32
  }
  func.func @transform_6(%arg0: i32, %arg1: i32) -> (i32, i32, i32) {
    %c0_i32 = arith.constant 0 : i32
    %c0_i32_0 = arith.constant 0 : i32
    %c0_i32_1 = arith.constant 0 : i32
    return %arg1, %c0_i32, %c0_i32_0 : i32, i32, i32
  }
  func.func @transform_7(%arg0: i32, %arg1: i32) -> (i32, i32, i32) {
    %c0_i32 = arith.constant 0 : i32
    %c0_i32_0 = arith.constant 0 : i32
    %c0_i32_1 = arith.constant 0 : i32
    return %arg1, %c0_i32, %c0_i32_0 : i32, i32, i32
  }
  func.func @transform_8(%arg0: i32, %arg1: i32) -> (i32, i32, i32) {
    %c0_i32 = arith.constant 0 : i32
    %c0_i32_0 = arith.constant 0 : i32
    %c0_i32_1 = arith.constant 0 : i32
    return %arg1, %c0_i32, %c0_i32_0 : i32, i32, i32
  }
  func.func @transform_9(%arg0: i32, %arg1: i32) -> (i32, i32, i32) {
    %c0_i32 = arith.constant 0 : i32
    %c0_i32_0 = arith.constant 0 : i32
    %c0_i32_1 = arith.constant 0 : i32
    return %arg1, %c0_i32, %c0_i32_0 : i32, i32, i32
  }
  func.func @transform_10(%arg0: i32, %arg1: i32) -> (i32, i32, i32) {
    %c0_i32 = arith.constant 0 : i32
    %c0_i32_0 = arith.constant 0 : i32
    %c0_i32_1 = arith.constant 0 : i32
    return %arg1, %c0_i32, %c0_i32_0 : i32, i32, i32
  }
  func.func @transform_11(%arg0: i32, %arg1: i32) -> (i32, i32) {
    %c0_i32 = arith.constant 0 : i32
    %c0_i32_0 = arith.constant 0 : i32
    %c0_i32_1 = arith.constant 0 : i32
    return %c0_i32, %c0_i32_0 : i32, i32
  }
  func.func @transform_12(%arg0: i32, %arg1: i32) -> (i32, i32, i32) {
    %c0_i32 = arith.constant 0 : i32
    %c0_i32_0 = arith.constant 0 : i32
    %c0_i32_1 = arith.constant 0 : i32
    return %arg0, %c0_i32, %c0_i32_0 : i32, i32, i32
  }
}

module attributes {stable_mosaic.version = 11 : i64} {
  func.func @_text_tower_kernel(%arg0: i32, %arg1: i32, %arg2: memref<2x8x256xf32, #tpu.memory_space<vmem>>, %arg3: memref<2x1x8xf32, #tpu.memory_space<vmem>>, %arg4: memref<2x8x1xf32, #tpu.memory_space<vmem>>, %arg5: memref<1x2x256xf32, #tpu.memory_space<vmem>>, %arg6: memref<1x256x768xbf16, #tpu.memory_space<vmem>>, %arg7: memref<1x1x768xf32, #tpu.memory_space<vmem>>, %arg8: memref<1x256x256xbf16, #tpu.memory_space<vmem>>, %arg9: memref<1x1x256xf32, #tpu.memory_space<vmem>>, %arg10: memref<1x2x256xf32, #tpu.memory_space<vmem>>, %arg11: memref<1x256x512xbf16, #tpu.memory_space<vmem>>, %arg12: memref<1x1x512xf32, #tpu.memory_space<vmem>>, %arg13: memref<1x512x256xbf16, #tpu.memory_space<vmem>>, %arg14: memref<1x1x256xf32, #tpu.memory_space<vmem>>, %arg15: memref<2x256xf32, #tpu.memory_space<vmem>>, %arg16: memref<2x1x256xf32, #tpu.memory_space<vmem>>, %arg17: memref<2x8x256xf32, #tpu.memory_space<vmem>>, %arg18: memref<2x8x8xf32, #tpu.memory_space<vmem>>) attributes {dimension_semantics = [#tpu.dimension_semantics<parallel>, #tpu.dimension_semantics<arbitrary>], iteration_bounds = array<i64: 1, 2>, scalar_prefetch = 0 : i64, scratch_operands = 2 : i64, tpu.core_type = #tpu.core_type<tc>, window_params = [{transform_indices = @transform_0, window_bounds = array<i64: 2, 8, 256>}, {transform_indices = @transform_1, window_bounds = array<i64: 2, 1, 8>}, {transform_indices = @transform_2, window_bounds = array<i64: 2, 8, 1>}, {transform_indices = @transform_3, window_bounds = array<i64: 1, 2, 256>}, {transform_indices = @transform_4, window_bounds = array<i64: 1, 256, 768>}, {transform_indices = @transform_5, window_bounds = array<i64: 1, 1, 768>}, {transform_indices = @transform_6, window_bounds = array<i64: 1, 256, 256>}, {transform_indices = @transform_7, window_bounds = array<i64: 1, 1, 256>}, {transform_indices = @transform_8, window_bounds = array<i64: 1, 2, 256>}, {transform_indices = @transform_9, window_bounds = array<i64: 1, 256, 512>}, {transform_indices = @transform_10, window_bounds = array<i64: 1, 1, 512>}, {transform_indices = @transform_11, window_bounds = array<i64: 1, 512, 256>}, {transform_indices = @transform_12, window_bounds = array<i64: 1, 1, 256>}, {pipeline_mode = #tpu.pipeline_mode<synchronous>, transform_indices = @transform_13, window_bounds = array<i64: 2, 256>}, {transform_indices = @transform_14, window_bounds = array<i64: 2, 1, 256>}]} {
    %c0_i32 = arith.constant 0 : i32
    %0 = arith.cmpi eq, %arg1, %c0_i32 : i32
    %1 = arith.extui %0 : i1 to i32
    %c0_i32_0 = arith.constant 0 : i32
    %2 = arith.cmpi ne, %1, %c0_i32_0 : i32
    scf.if %2 {
      %c0_70 = arith.constant 0 : index
      %c0_71 = arith.constant 0 : index
      %c0_72 = arith.constant 0 : index
      %152 = vector.load %arg2[%c0_70, %c0_71, %c0_72] : memref<2x8x256xf32, #tpu.memory_space<vmem>>, vector<2x8x256xf32>
      %c0_73 = arith.constant 0 : index
      %c0_74 = arith.constant 0 : index
      %c0_75 = arith.constant 0 : index
      %153 = vector.load %arg17[%c0_73, %c0_74, %c0_75] : memref<2x8x256xf32, #tpu.memory_space<vmem>>, vector<2x8x256xf32>
      tpu.vector_store %arg17[%c0_73, %c0_74, %c0_75], %152 {strides = array<i32>} : memref<2x8x256xf32, #tpu.memory_space<vmem>>, vector<2x8x256xf32>,
      %154 = tpu.iota {dimensions = array<i32: 0>} : vector<8x8xi32>
      %155 = tpu.iota {dimensions = array<i32: 1>} : vector<8x8xi32>
      %156 = arith.cmpi sle, %155, %154 : vector<8x8xi32>
      %cst_76 = arith.constant 0.000000e+00 : f32
      %cst_77 = arith.constant -1.000000e+09 : f32
      %157 = vector.broadcast %cst_76 : f32 to vector<8x8xf32>
      %158 = vector.broadcast %cst_77 : f32 to vector<8x8xf32>
      %159 = arith.select %156, %157, %158 : vector<8x8xi1>, vector<8x8xf32>
      %c0_78 = arith.constant 0 : index
      %c0_79 = arith.constant 0 : index
      %c0_80 = arith.constant 0 : index
      %160 = vector.load %arg3[%c0_78, %c0_79, %c0_80] : memref<2x1x8xf32, #tpu.memory_space<vmem>>, vector<2x1x8xf32>
      %cst_81 = arith.constant 1.000000e+00 : f32
      %161 = vector.broadcast %cst_81 : f32 to vector<2x1x8xf32>
      %162 = arith.subf %161, %160 : vector<2x1x8xf32>
      %cst_82 = arith.constant -1.000000e+09 : f32
      %163 = vector.broadcast %cst_82 : f32 to vector<2x1x8xf32>
      %164 = arith.mulf %162, %163 : vector<2x1x8xf32>
      %165 = vector.shape_cast %159 : vector<8x8xf32> to vector<1x8x8xf32>
      %166 = vector.broadcast %165 : vector<1x8x8xf32> to vector<2x8x8xf32>
      %167 = vector.broadcast %164 : vector<2x1x8xf32> to vector<2x8x8xf32>
      %168 = arith.addf %166, %167 : vector<2x8x8xf32>
      %c0_83 = arith.constant 0 : index
      %c0_84 = arith.constant 0 : index
      %c0_85 = arith.constant 0 : index
      %169 = vector.load %arg18[%c0_83, %c0_84, %c0_85] : memref<2x8x8xf32, #tpu.memory_space<vmem>>, vector<2x8x8xf32>
      tpu.vector_store %arg18[%c0_83, %c0_84, %c0_85], %168 {strides = array<i32>} : memref<2x8x8xf32, #tpu.memory_space<vmem>>, vector<2x8x8xf32>,
    } else {
    }
    %c0 = arith.constant 0 : index
    %c0_1 = arith.constant 0 : index
    %c0_2 = arith.constant 0 : index
    %3 = vector.load %arg17[%c0, %c0_1, %c0_2] : memref<2x8x256xf32, #tpu.memory_space<vmem>>, vector<2x8x256xf32>
    %4 = vector.shape_cast %3 : vector<2x8x256xf32> to vector<16x256xf32>
    %c0_3 = arith.constant 0 : index
    %c0_4 = arith.constant 0 : index
    %c0_5 = arith.constant 0 : index
    %5 = vector.load %arg18[%c0_3, %c0_4, %c0_5] : memref<2x8x8xf32, #tpu.memory_space<vmem>>, vector<2x8x8xf32>
    %c0_6 = arith.constant 0 : index
    %c0_7 = arith.constant 0 : index
    %c0_8 = arith.constant 0 : index
    %6 = vector.load %arg5[%c0_6, %c0_7, %c0_8] : memref<1x2x256xf32, #tpu.memory_space<vmem>>, vector<1x1x256xf32>
    %7 = vector.shape_cast %6 : vector<1x1x256xf32> to vector<1x256xf32>
    %c0_9 = arith.constant 0 : index
    %c1 = arith.constant 1 : index
    %c0_10 = arith.constant 0 : index
    %8 = vector.load %arg5[%c0_9, %c1, %c0_10] : memref<1x2x256xf32, #tpu.memory_space<vmem>>, vector<1x1x256xf32>
    %9 = vector.shape_cast %8 : vector<1x1x256xf32> to vector<1x256xf32>
    %cst = arith.constant dense<0.000000e+00> : vector<16xf32>
    %10 = vector.multi_reduction <add>, %4, %cst [1] : vector<16x256xf32> to vector<16xf32>
    %11 = vector.shape_cast %10 : vector<16xf32> to vector<16x1xf32>
    %cst_11 = arith.constant 2.560000e+02 : f32
    %12 = vector.broadcast %cst_11 : f32 to vector<16x1xf32>
    %13 = arith.divf %11, %12 : vector<16x1xf32>
    %14 = vector.broadcast %13 : vector<16x1xf32> to vector<16x256xf32>
    %15 = arith.subf %4, %14 : vector<16x256xf32>
    %16 = arith.mulf %15, %15 : vector<16x256xf32>
    %cst_12 = arith.constant dense<0.000000e+00> : vector<16xf32>
    %17 = vector.multi_reduction <add>, %16, %cst_12 [1] : vector<16x256xf32> to vector<16xf32>
    %18 = vector.shape_cast %17 : vector<16xf32> to vector<16x1xf32>
    %cst_13 = arith.constant 2.560000e+02 : f32
    %19 = vector.broadcast %cst_13 : f32 to vector<16x1xf32>
    %20 = arith.divf %18, %19 : vector<16x1xf32>
    %21 = vector.broadcast %13 : vector<16x1xf32> to vector<16x256xf32>
    %22 = arith.subf %4, %21 : vector<16x256xf32>
    %cst_14 = arith.constant 9.99999974E-6 : f32
    %23 = vector.broadcast %cst_14 : f32 to vector<16x1xf32>
    %24 = arith.addf %20, %23 : vector<16x1xf32>
    %25 = math.rsqrt %24 : vector<16x1xf32>
    %26 = vector.broadcast %25 : vector<16x1xf32> to vector<16x256xf32>
    %27 = arith.mulf %22, %26 : vector<16x256xf32>
    %28 = vector.broadcast %7 : vector<1x256xf32> to vector<16x256xf32>
    %29 = arith.mulf %27, %28 : vector<16x256xf32>
    %30 = vector.broadcast %9 : vector<1x256xf32> to vector<16x256xf32>
    %31 = arith.addf %29, %30 : vector<16x256xf32>
    %32 = arith.truncf %31 : vector<16x256xf32> to vector<16x256xbf16>
    %c0_15 = arith.constant 0 : index
    %c0_16 = arith.constant 0 : index
    %c0_17 = arith.constant 0 : index
    %33 = vector.load %arg6[%c0_15, %c0_16, %c0_17] : memref<1x256x768xbf16, #tpu.memory_space<vmem>>, vector<1x256x768xbf16>
    %34 = vector.shape_cast %33 : vector<1x256x768xbf16> to vector<256x768xbf16>
    %cst_18 = arith.constant dense<0.000000e+00> : vector<16x768xf32>
    %35 = tpu.matmul %32, %34, %cst_18 {dimension_numbers = #tpu.dot_dimension_numbers<[1], [0], [0], [1], [0, 0, 1, 1], [], []>} : vector<16x256xbf16>, vector<256x768xbf16>, vector<16x768xf32> -> vector<16x768xf32>
    %c0_19 = arith.constant 0 : index
    %c0_20 = arith.constant 0 : index
    %c0_21 = arith.constant 0 : index
    %36 = vector.load %arg7[%c0_19, %c0_20, %c0_21] : memref<1x1x768xf32, #tpu.memory_space<vmem>>, vector<1x1x768xf32>
    %37 = vector.shape_cast %36 : vector<1x1x768xf32> to vector<1x768xf32>
    %38 = vector.broadcast %37 : vector<1x768xf32> to vector<16x768xf32>
    %39 = arith.addf %35, %38 : vector<16x768xf32>
    %40 = vector.shape_cast %39 : vector<16x768xf32> to vector<2x8x768xf32>
    %41 = vector.extract_strided_slice %40 {offsets = [0, 0, 0], sizes = [2, 8, 128], strides = [1, 1, 1]} : vector<2x8x768xf32> to vector<2x8x128xf32>
    %cst_22 = arith.constant 0.0883883461 : f32
    %42 = vector.broadcast %cst_22 : f32 to vector<2x8x128xf32>
    %43 = arith.mulf %41, %42 : vector<2x8x128xf32>
    %44 = vector.extract_strided_slice %40 {offsets = [0, 0, 256], sizes = [2, 8, 128], strides = [1, 1, 1]} : vector<2x8x768xf32> to vector<2x8x128xf32>
    %45 = vector.extract_strided_slice %40 {offsets = [0, 0, 512], sizes = [2, 8, 128], strides = [1, 1, 1]} : vector<2x8x768xf32> to vector<2x8x128xf32>
    %46 = arith.truncf %43 : vector<2x8x128xf32> to vector<2x8x128xbf16>
    %47 = arith.truncf %44 : vector<2x8x128xf32> to vector<2x8x128xbf16>
    "tpu.trace_start"() <{level = 10 : i32, message = "bqd,bkd->bqk"}> : () -> ()
    %cst_23 = arith.constant dense<0.000000e+00> : vector<2x8x8xf32>
    %48 = tpu.matmul %46, %47, %cst_23 {dimension_numbers = #tpu.dot_dimension_numbers<[2], [2], [1], [1], [0, 0, 0, 1, 1, 1], [0], [0]>} : vector<2x8x128xbf16>, vector<2x8x128xbf16>, vector<2x8x8xf32> -> vector<2x8x8xf32>
    "tpu.trace_stop"() : () -> ()
    %49 = arith.addf %48, %5 : vector<2x8x8xf32>
    %cst_24 = arith.constant dense<0xFF800000> : vector<2x8xf32>
    %50 = vector.multi_reduction <maximumf>, %49, %cst_24 [2] : vector<2x8x8xf32> to vector<2x8xf32>
    %51 = vector.shape_cast %50 : vector<2x8xf32> to vector<2x8x1xf32>
    %52 = vector.broadcast %51 : vector<2x8x1xf32> to vector<2x8x8xf32>
    %53 = arith.subf %49, %52 : vector<2x8x8xf32>
    %54 = math.exp %53 : vector<2x8x8xf32>
    %cst_25 = arith.constant dense<0.000000e+00> : vector<2x8xf32>
    %55 = vector.multi_reduction <add>, %54, %cst_25 [2] : vector<2x8x8xf32> to vector<2x8xf32>
    %56 = vector.shape_cast %55 : vector<2x8xf32> to vector<2x8x1xf32>
    %57 = tpu.reciprocal %56 {approx = true} : vector<2x8x1xf32> -> vector<2x8x1xf32>
    %58 = vector.broadcast %57 : vector<2x8x1xf32> to vector<2x8x8xf32>
    %59 = arith.mulf %54, %58 : vector<2x8x8xf32>
    %60 = arith.truncf %59 : vector<2x8x8xf32> to vector<2x8x8xbf16>
    %61 = arith.truncf %45 : vector<2x8x128xf32> to vector<2x8x128xbf16>
    "tpu.trace_start"() <{level = 10 : i32, message = "bqk,bkd->bqd"}> : () -> ()
    %cst_26 = arith.constant dense<0.000000e+00> : vector<2x8x128xf32>
    %62 = tpu.matmul %60, %61, %cst_26 {dimension_numbers = #tpu.dot_dimension_numbers<[2], [1], [1], [2], [0, 0, 0, 1, 1, 2], [0], [0]>} : vector<2x8x8xbf16>, vector<2x8x128xbf16>, vector<2x8x128xf32> -> vector<2x8x128xf32>
    "tpu.trace_stop"() : () -> ()
    %63 = vector.extract_strided_slice %40 {offsets = [0, 0, 128], sizes = [2, 8, 128], strides = [1, 1, 1]} : vector<2x8x768xf32> to vector<2x8x128xf32>
    %cst_27 = arith.constant 0.0883883461 : f32
    %64 = vector.broadcast %cst_27 : f32 to vector<2x8x128xf32>
    %65 = arith.mulf %63, %64 : vector<2x8x128xf32>
    %66 = vector.extract_strided_slice %40 {offsets = [0, 0, 384], sizes = [2, 8, 128], strides = [1, 1, 1]} : vector<2x8x768xf32> to vector<2x8x128xf32>
    %67 = vector.extract_strided_slice %40 {offsets = [0, 0, 640], sizes = [2, 8, 128], strides = [1, 1, 1]} : vector<2x8x768xf32> to vector<2x8x128xf32>
    %68 = arith.truncf %65 : vector<2x8x128xf32> to vector<2x8x128xbf16>
    %69 = arith.truncf %66 : vector<2x8x128xf32> to vector<2x8x128xbf16>
    "tpu.trace_start"() <{level = 10 : i32, message = "bqd,bkd->bqk"}> : () -> ()
    %cst_28 = arith.constant dense<0.000000e+00> : vector<2x8x8xf32>
    %70 = tpu.matmul %68, %69, %cst_28 {dimension_numbers = #tpu.dot_dimension_numbers<[2], [2], [1], [1], [0, 0, 0, 1, 1, 1], [0], [0]>} : vector<2x8x128xbf16>, vector<2x8x128xbf16>, vector<2x8x8xf32> -> vector<2x8x8xf32>
    "tpu.trace_stop"() : () -> ()
    %71 = arith.addf %70, %5 : vector<2x8x8xf32>
    %cst_29 = arith.constant dense<0xFF800000> : vector<2x8xf32>
    %72 = vector.multi_reduction <maximumf>, %71, %cst_29 [2] : vector<2x8x8xf32> to vector<2x8xf32>
    %73 = vector.shape_cast %72 : vector<2x8xf32> to vector<2x8x1xf32>
    %74 = vector.broadcast %73 : vector<2x8x1xf32> to vector<2x8x8xf32>
    %75 = arith.subf %71, %74 : vector<2x8x8xf32>
    %76 = math.exp %75 : vector<2x8x8xf32>
    %cst_30 = arith.constant dense<0.000000e+00> : vector<2x8xf32>
    %77 = vector.multi_reduction <add>, %76, %cst_30 [2] : vector<2x8x8xf32> to vector<2x8xf32>
    %78 = vector.shape_cast %77 : vector<2x8xf32> to vector<2x8x1xf32>
    %79 = tpu.reciprocal %78 {approx = true} : vector<2x8x1xf32> -> vector<2x8x1xf32>
    %80 = vector.broadcast %79 : vector<2x8x1xf32> to vector<2x8x8xf32>
    %81 = arith.mulf %76, %80 : vector<2x8x8xf32>
    %82 = arith.truncf %81 : vector<2x8x8xf32> to vector<2x8x8xbf16>
    %83 = arith.truncf %67 : vector<2x8x128xf32> to vector<2x8x128xbf16>
    "tpu.trace_start"() <{level = 10 : i32, message = "bqk,bkd->bqd"}> : () -> ()
    %cst_31 = arith.constant dense<0.000000e+00> : vector<2x8x128xf32>
    %84 = tpu.matmul %82, %83, %cst_31 {dimension_numbers = #tpu.dot_dimension_numbers<[2], [1], [1], [2], [0, 0, 0, 1, 1, 2], [0], [0]>} : vector<2x8x8xbf16>, vector<2x8x128xbf16>, vector<2x8x128xf32> -> vector<2x8x128xf32>
    "tpu.trace_stop"() : () -> ()
    %85 = tpu.concatenate %62, %84 in 2 : vector<2x8x128xf32>, vector<2x8x128xf32> -> vector<2x8x256xf32>
    %86 = vector.shape_cast %85 : vector<2x8x256xf32> to vector<16x256xf32>
    %87 = arith.truncf %86 : vector<16x256xf32> to vector<16x256xbf16>
    %c0_32 = arith.constant 0 : index
    %c0_33 = arith.constant 0 : index
    %c0_34 = arith.constant 0 : index
    %88 = vector.load %arg8[%c0_32, %c0_33, %c0_34] : memref<1x256x256xbf16, #tpu.memory_space<vmem>>, vector<1x256x256xbf16>
    %89 = vector.shape_cast %88 : vector<1x256x256xbf16> to vector<256x256xbf16>
    %cst_35 = arith.constant dense<0.000000e+00> : vector<16x256xf32>
    %90 = tpu.matmul %87, %89, %cst_35 {dimension_numbers = #tpu.dot_dimension_numbers<[1], [0], [0], [1], [0, 0, 1, 1], [], []>} : vector<16x256xbf16>, vector<256x256xbf16>, vector<16x256xf32> -> vector<16x256xf32>
    %c0_36 = arith.constant 0 : index
    %c0_37 = arith.constant 0 : index
    %c0_38 = arith.constant 0 : index
    %91 = vector.load %arg9[%c0_36, %c0_37, %c0_38] : memref<1x1x256xf32, #tpu.memory_space<vmem>>, vector<1x1x256xf32>
    %92 = vector.shape_cast %91 : vector<1x1x256xf32> to vector<1x256xf32>
    %93 = vector.broadcast %92 : vector<1x256xf32> to vector<16x256xf32>
    %94 = arith.addf %90, %93 : vector<16x256xf32>
    %95 = arith.addf %4, %94 : vector<16x256xf32>
    %c0_39 = arith.constant 0 : index
    %c0_40 = arith.constant 0 : index
    %c0_41 = arith.constant 0 : index
    %96 = vector.load %arg10[%c0_39, %c0_40, %c0_41] : memref<1x2x256xf32, #tpu.memory_space<vmem>>, vector<1x1x256xf32>
    %97 = vector.shape_cast %96 : vector<1x1x256xf32> to vector<1x256xf32>
    %c0_42 = arith.constant 0 : index
    %c1_43 = arith.constant 1 : index
    %c0_44 = arith.constant 0 : index
    %98 = vector.load %arg10[%c0_42, %c1_43, %c0_44] : memref<1x2x256xf32, #tpu.memory_space<vmem>>, vector<1x1x256xf32>
    %99 = vector.shape_cast %98 : vector<1x1x256xf32> to vector<1x256xf32>
    %cst_45 = arith.constant dense<0.000000e+00> : vector<16xf32>
    %100 = vector.multi_reduction <add>, %95, %cst_45 [1] : vector<16x256xf32> to vector<16xf32>
    %101 = vector.shape_cast %100 : vector<16xf32> to vector<16x1xf32>
    %cst_46 = arith.constant 2.560000e+02 : f32
    %102 = vector.broadcast %cst_46 : f32 to vector<16x1xf32>
    %103 = arith.divf %101, %102 : vector<16x1xf32>
    %104 = vector.broadcast %103 : vector<16x1xf32> to vector<16x256xf32>
    %105 = arith.subf %95, %104 : vector<16x256xf32>
    %106 = arith.mulf %105, %105 : vector<16x256xf32>
    %cst_47 = arith.constant dense<0.000000e+00> : vector<16xf32>
    %107 = vector.multi_reduction <add>, %106, %cst_47 [1] : vector<16x256xf32> to vector<16xf32>
    %108 = vector.shape_cast %107 : vector<16xf32> to vector<16x1xf32>
    %cst_48 = arith.constant 2.560000e+02 : f32
    %109 = vector.broadcast %cst_48 : f32 to vector<16x1xf32>
    %110 = arith.divf %108, %109 : vector<16x1xf32>
    %111 = vector.broadcast %103 : vector<16x1xf32> to vector<16x256xf32>
    %112 = arith.subf %95, %111 : vector<16x256xf32>
    %cst_49 = arith.constant 9.99999974E-6 : f32
    %113 = vector.broadcast %cst_49 : f32 to vector<16x1xf32>
    %114 = arith.addf %110, %113 : vector<16x1xf32>
    %115 = math.rsqrt %114 : vector<16x1xf32>
    %116 = vector.broadcast %115 : vector<16x1xf32> to vector<16x256xf32>
    %117 = arith.mulf %112, %116 : vector<16x256xf32>
    %118 = vector.broadcast %97 : vector<1x256xf32> to vector<16x256xf32>
    %119 = arith.mulf %117, %118 : vector<16x256xf32>
    %120 = vector.broadcast %99 : vector<1x256xf32> to vector<16x256xf32>
    %121 = arith.addf %119, %120 : vector<16x256xf32>
    %122 = arith.truncf %121 : vector<16x256xf32> to vector<16x256xbf16>
    %c0_50 = arith.constant 0 : index
    %c0_51 = arith.constant 0 : index
    %c0_52 = arith.constant 0 : index
    %123 = vector.load %arg11[%c0_50, %c0_51, %c0_52] : memref<1x256x512xbf16, #tpu.memory_space<vmem>>, vector<1x256x512xbf16>
    %124 = vector.shape_cast %123 : vector<1x256x512xbf16> to vector<256x512xbf16>
    %cst_53 = arith.constant dense<0.000000e+00> : vector<16x512xf32>
    %125 = tpu.matmul %122, %124, %cst_53 {dimension_numbers = #tpu.dot_dimension_numbers<[1], [0], [0], [1], [0, 0, 1, 1], [], []>} : vector<16x256xbf16>, vector<256x512xbf16>, vector<16x512xf32> -> vector<16x512xf32>
    %c0_54 = arith.constant 0 : index
    %c0_55 = arith.constant 0 : index
    %c0_56 = arith.constant 0 : index
    %126 = vector.load %arg12[%c0_54, %c0_55, %c0_56] : memref<1x1x512xf32, #tpu.memory_space<vmem>>, vector<1x1x512xf32>
    %127 = vector.shape_cast %126 : vector<1x1x512xf32> to vector<1x512xf32>
    %128 = vector.broadcast %127 : vector<1x512xf32> to vector<16x512xf32>
    %129 = arith.addf %125, %128 : vector<16x512xf32>
    %cst_57 = arith.constant 1.702000e+00 : f32
    %130 = vector.broadcast %cst_57 : f32 to vector<16x512xf32>
    %131 = arith.mulf %130, %129 : vector<16x512xf32>
    %132 = arith.negf %131 : vector<16x512xf32>
    %133 = math.exp %132 : vector<16x512xf32>
    %cst_58 = arith.constant 1.000000e+00 : f32
    %134 = vector.broadcast %cst_58 : f32 to vector<16x512xf32>
    %135 = arith.addf %134, %133 : vector<16x512xf32>
    %136 = arith.divf %134, %135 : vector<16x512xf32>
    %137 = arith.mulf %129, %136 : vector<16x512xf32>
    %138 = arith.truncf %137 : vector<16x512xf32> to vector<16x512xbf16>
    %c0_59 = arith.constant 0 : index
    %c0_60 = arith.constant 0 : index
    %c0_61 = arith.constant 0 : index
    %139 = vector.load %arg13[%c0_59, %c0_60, %c0_61] : memref<1x512x256xbf16, #tpu.memory_space<vmem>>, vector<1x512x256xbf16>
    %140 = vector.shape_cast %139 : vector<1x512x256xbf16> to vector<512x256xbf16>
    %cst_62 = arith.constant dense<0.000000e+00> : vector<16x256xf32>
    %141 = tpu.matmul %138, %140, %cst_62 {dimension_numbers = #tpu.dot_dimension_numbers<[1], [0], [0], [1], [0, 0, 1, 1], [], []>} : vector<16x512xbf16>, vector<512x256xbf16>, vector<16x256xf32> -> vector<16x256xf32>
    %c0_63 = arith.constant 0 : index
    %c0_64 = arith.constant 0 : index
    %c0_65 = arith.constant 0 : index
    %142 = vector.load %arg14[%c0_63, %c0_64, %c0_65] : memref<1x1x256xf32, #tpu.memory_space<vmem>>, vector<1x1x256xf32>
    %143 = vector.shape_cast %142 : vector<1x1x256xf32> to vector<1x256xf32>
    %144 = vector.broadcast %143 : vector<1x256xf32> to vector<16x256xf32>
    %145 = arith.addf %141, %144 : vector<16x256xf32>
    %146 = arith.addf %95, %145 : vector<16x256xf32>
    %147 = vector.shape_cast %146 : vector<16x256xf32> to vector<2x8x256xf32>
    %c0_66 = arith.constant 0 : index
    %c0_67 = arith.constant 0 : index
    %c0_68 = arith.constant 0 : index
    %148 = vector.load %arg17[%c0_66, %c0_67, %c0_68] : memref<2x8x256xf32, #tpu.memory_space<vmem>>, vector<2x8x256xf32>
    tpu.vector_store %arg17[%c0_66, %c0_67, %c0_68], %147 {strides = array<i32>} : memref<2x8x256xf32, #tpu.memory_space<vmem>>, vector<2x8x256xf32>,
    %c1_i32 = arith.constant 1 : i32
    %149 = arith.cmpi eq, %arg1, %c1_i32 : i32
    %150 = arith.extui %149 : i1 to i32
    %c0_i32_69 = arith.constant 0 : i32
    %151 = arith.cmpi ne, %150, %c0_i32_69 : i32
    scf.if %151 {
      %c0_70 = arith.constant 0 : index
      %c0_71 = arith.constant 0 : index
      %152 = vector.load %arg15[%c0_70, %c0_71] : memref<2x256xf32, #tpu.memory_space<vmem>>, vector<1x256xf32>
      %c1_72 = arith.constant 1 : index
      %c0_73 = arith.constant 0 : index
      %153 = vector.load %arg15[%c1_72, %c0_73] : memref<2x256xf32, #tpu.memory_space<vmem>>, vector<1x256xf32>
      %cst_74 = arith.constant dense<0.000000e+00> : vector<16xf32>
      %154 = vector.multi_reduction <add>, %146, %cst_74 [1] : vector<16x256xf32> to vector<16xf32>
      %155 = vector.shape_cast %154 : vector<16xf32> to vector<16x1xf32>
      %cst_75 = arith.constant 2.560000e+02 : f32
      %156 = vector.broadcast %cst_75 : f32 to vector<16x1xf32>
      %157 = arith.divf %155, %156 : vector<16x1xf32>
      %158 = vector.broadcast %157 : vector<16x1xf32> to vector<16x256xf32>
      %159 = arith.subf %146, %158 : vector<16x256xf32>
      %160 = arith.mulf %159, %159 : vector<16x256xf32>
      %cst_76 = arith.constant dense<0.000000e+00> : vector<16xf32>
      %161 = vector.multi_reduction <add>, %160, %cst_76 [1] : vector<16x256xf32> to vector<16xf32>
      %162 = vector.shape_cast %161 : vector<16xf32> to vector<16x1xf32>
      %cst_77 = arith.constant 2.560000e+02 : f32
      %163 = vector.broadcast %cst_77 : f32 to vector<16x1xf32>
      %164 = arith.divf %162, %163 : vector<16x1xf32>
      %165 = vector.broadcast %157 : vector<16x1xf32> to vector<16x256xf32>
      %166 = arith.subf %146, %165 : vector<16x256xf32>
      %cst_78 = arith.constant 9.99999974E-6 : f32
      %167 = vector.broadcast %cst_78 : f32 to vector<16x1xf32>
      %168 = arith.addf %164, %167 : vector<16x1xf32>
      %169 = math.rsqrt %168 : vector<16x1xf32>
      %170 = vector.broadcast %169 : vector<16x1xf32> to vector<16x256xf32>
      %171 = arith.mulf %166, %170 : vector<16x256xf32>
      %172 = vector.broadcast %152 : vector<1x256xf32> to vector<16x256xf32>
      %173 = arith.mulf %171, %172 : vector<16x256xf32>
      %174 = vector.broadcast %153 : vector<1x256xf32> to vector<16x256xf32>
      %175 = arith.addf %173, %174 : vector<16x256xf32>
      %176 = vector.shape_cast %175 : vector<16x256xf32> to vector<2x8x256xf32>
      %c0_79 = arith.constant 0 : index
      %c0_80 = arith.constant 0 : index
      %c0_81 = arith.constant 0 : index
      %177 = vector.load %arg4[%c0_79, %c0_80, %c0_81] : memref<2x8x1xf32, #tpu.memory_space<vmem>>, vector<2x8x1xf32>
      %178 = vector.broadcast %177 : vector<2x8x1xf32> to vector<2x8x256xf32>
      %179 = arith.mulf %176, %178 : vector<2x8x256xf32>
      %cst_82 = arith.constant dense<0.000000e+00> : vector<2x256xf32>
      %180 = vector.multi_reduction <add>, %179, %cst_82 [1] : vector<2x8x256xf32> to vector<2x256xf32>
      %cst_83 = arith.constant dense<0.000000e+00> : vector<2x1xf32>
      %181 = vector.multi_reduction <add>, %177, %cst_83 [1] : vector<2x8x1xf32> to vector<2x1xf32>
      %cst_84 = arith.constant 9.99999971E-10 : f32
      %182 = vector.broadcast %cst_84 : f32 to vector<2x1xf32>
      %183 = arith.maximumf %181, %182 : vector<2x1xf32>
      %184 = vector.broadcast %183 : vector<2x1xf32> to vector<2x256xf32>
      %185 = arith.divf %180, %184 : vector<2x256xf32>
      %186 = vector.shape_cast %185 : vector<2x256xf32> to vector<2x1x256xf32>
      %c0_85 = arith.constant 0 : index
      %c0_86 = arith.constant 0 : index
      %c0_87 = arith.constant 0 : index
      %187 = vector.load %arg16[%c0_85, %c0_86, %c0_87] : memref<2x1x256xf32, #tpu.memory_space<vmem>>, vector<2x1x256xf32>
      tpu.vector_store %arg16[%c0_85, %c0_86, %c0_87], %186 {strides = array<i32>} : memref<2x1x256xf32, #tpu.memory_space<vmem>>, vector<2x1x256xf32>,
    } else {
    }
    return
  }
  func.func @transform_0(%arg0: i32, %arg1: i32) -> (i32, i32, i32) {
    %c0_i32 = arith.constant 0 : i32
    %c0_i32_0 = arith.constant 0 : i32
    %c0_i32_1 = arith.constant 0 : i32
    return %arg0, %c0_i32, %c0_i32_0 : i32, i32, i32
  }
  func.func @transform_1(%arg0: i32, %arg1: i32) -> (i32, i32, i32) {
    %c0_i32 = arith.constant 0 : i32
    %c0_i32_0 = arith.constant 0 : i32
    %c0_i32_1 = arith.constant 0 : i32
    return %arg0, %c0_i32, %c0_i32_0 : i32, i32, i32
  }
  func.func @transform_2(%arg0: i32, %arg1: i32) -> (i32, i32, i32) {
    %c0_i32 = arith.constant 0 : i32
    %c0_i32_0 = arith.constant 0 : i32
    %c0_i32_1 = arith.constant 0 : i32
    return %arg0, %c0_i32, %c0_i32_0 : i32, i32, i32
  }
  func.func @transform_3(%arg0: i32, %arg1: i32) -> (i32, i32, i32) {
    %c0_i32 = arith.constant 0 : i32
    %c0_i32_0 = arith.constant 0 : i32
    %c0_i32_1 = arith.constant 0 : i32
    return %arg1, %c0_i32, %c0_i32_0 : i32, i32, i32
  }
  func.func @transform_4(%arg0: i32, %arg1: i32) -> (i32, i32, i32) {
    %c0_i32 = arith.constant 0 : i32
    %c0_i32_0 = arith.constant 0 : i32
    %c0_i32_1 = arith.constant 0 : i32
    return %arg1, %c0_i32, %c0_i32_0 : i32, i32, i32
  }
  func.func @transform_5(%arg0: i32, %arg1: i32) -> (i32, i32, i32) {
    %c0_i32 = arith.constant 0 : i32
    %c0_i32_0 = arith.constant 0 : i32
    %c0_i32_1 = arith.constant 0 : i32
    return %arg1, %c0_i32, %c0_i32_0 : i32, i32, i32
  }
  func.func @transform_6(%arg0: i32, %arg1: i32) -> (i32, i32, i32) {
    %c0_i32 = arith.constant 0 : i32
    %c0_i32_0 = arith.constant 0 : i32
    %c0_i32_1 = arith.constant 0 : i32
    return %arg1, %c0_i32, %c0_i32_0 : i32, i32, i32
  }
  func.func @transform_7(%arg0: i32, %arg1: i32) -> (i32, i32, i32) {
    %c0_i32 = arith.constant 0 : i32
    %c0_i32_0 = arith.constant 0 : i32
    %c0_i32_1 = arith.constant 0 : i32
    return %arg1, %c0_i32, %c0_i32_0 : i32, i32, i32
  }
  func.func @transform_8(%arg0: i32, %arg1: i32) -> (i32, i32, i32) {
    %c0_i32 = arith.constant 0 : i32
    %c0_i32_0 = arith.constant 0 : i32
    %c0_i32_1 = arith.constant 0 : i32
    return %arg1, %c0_i32, %c0_i32_0 : i32, i32, i32
  }
  func.func @transform_9(%arg0: i32, %arg1: i32) -> (i32, i32, i32) {
    %c0_i32 = arith.constant 0 : i32
    %c0_i32_0 = arith.constant 0 : i32
    %c0_i32_1 = arith.constant 0 : i32
    return %arg1, %c0_i32, %c0_i32_0 : i32, i32, i32
  }
  func.func @transform_10(%arg0: i32, %arg1: i32) -> (i32, i32, i32) {
    %c0_i32 = arith.constant 0 : i32
    %c0_i32_0 = arith.constant 0 : i32
    %c0_i32_1 = arith.constant 0 : i32
    return %arg1, %c0_i32, %c0_i32_0 : i32, i32, i32
  }
  func.func @transform_11(%arg0: i32, %arg1: i32) -> (i32, i32, i32) {
    %c0_i32 = arith.constant 0 : i32
    %c0_i32_0 = arith.constant 0 : i32
    %c0_i32_1 = arith.constant 0 : i32
    return %arg1, %c0_i32, %c0_i32_0 : i32, i32, i32
  }
  func.func @transform_12(%arg0: i32, %arg1: i32) -> (i32, i32, i32) {
    %c0_i32 = arith.constant 0 : i32
    %c0_i32_0 = arith.constant 0 : i32
    %c0_i32_1 = arith.constant 0 : i32
    return %arg1, %c0_i32, %c0_i32_0 : i32, i32, i32
  }
  func.func @transform_13(%arg0: i32, %arg1: i32) -> (i32, i32) {
    %c0_i32 = arith.constant 0 : i32
    %c0_i32_0 = arith.constant 0 : i32
    %c0_i32_1 = arith.constant 0 : i32
    return %c0_i32, %c0_i32_0 : i32, i32
  }
  func.func @transform_14(%arg0: i32, %arg1: i32) -> (i32, i32, i32) {
    %c0_i32 = arith.constant 0 : i32
    %c0_i32_0 = arith.constant 0 : i32
    %c0_i32_1 = arith.constant 0 : i32
    return %arg0, %c0_i32, %c0_i32_0 : i32, i32, i32
  }
}

module attributes {stable_mosaic.version = 11 : i64} {
  func.func @_fusion_kernel(%arg0: memref<2x256xf32, #tpu.memory_space<vmem>>, %arg1: memref<2x256xf32, #tpu.memory_space<vmem>>, %arg2: memref<256x128xf32, #tpu.memory_space<vmem>>, %arg3: memref<256x128xf32, #tpu.memory_space<vmem>>, %arg4: memref<2x128xf32, #tpu.memory_space<vmem>>) attributes {dimension_semantics = [], scalar_prefetch = 0 : i64, scratch_operands = 0 : i64, tpu.core_type = #tpu.core_type<tc>} {
    %c0 = arith.constant 0 : index
    %c0_0 = arith.constant 0 : index
    %0 = vector.load %arg0[%c0, %c0_0] : memref<2x256xf32, #tpu.memory_space<vmem>>, vector<2x256xf32>
    %1 = arith.truncf %0 : vector<2x256xf32> to vector<2x256xbf16>
    %c0_1 = arith.constant 0 : index
    %c0_2 = arith.constant 0 : index
    %2 = vector.load %arg2[%c0_1, %c0_2] : memref<256x128xf32, #tpu.memory_space<vmem>>, vector<256x128xf32>
    %3 = arith.truncf %2 : vector<256x128xf32> to vector<256x128xbf16>
    %cst = arith.constant dense<0.000000e+00> : vector<2x128xf32>
    %4 = tpu.matmul %1, %3, %cst {dimension_numbers = #tpu.dot_dimension_numbers<[1], [0], [0], [1], [0, 0, 1, 1], [], []>} : vector<2x256xbf16>, vector<256x128xbf16>, vector<2x128xf32> -> vector<2x128xf32>
    %c0_3 = arith.constant 0 : index
    %c0_4 = arith.constant 0 : index
    %5 = vector.load %arg1[%c0_3, %c0_4] : memref<2x256xf32, #tpu.memory_space<vmem>>, vector<2x256xf32>
    %6 = arith.truncf %5 : vector<2x256xf32> to vector<2x256xbf16>
    %c0_5 = arith.constant 0 : index
    %c0_6 = arith.constant 0 : index
    %7 = vector.load %arg3[%c0_5, %c0_6] : memref<256x128xf32, #tpu.memory_space<vmem>>, vector<256x128xf32>
    %8 = arith.truncf %7 : vector<256x128xf32> to vector<256x128xbf16>
    %cst_7 = arith.constant dense<0.000000e+00> : vector<2x128xf32>
    %9 = tpu.matmul %6, %8, %cst_7 {dimension_numbers = #tpu.dot_dimension_numbers<[1], [0], [0], [1], [0, 0, 1, 1], [], []>} : vector<2x256xbf16>, vector<256x128xbf16>, vector<2x128xf32> -> vector<2x128xf32>
    %10 = arith.addf %4, %9 : vector<2x128xf32>
    %c0_8 = arith.constant 0 : index
    %c0_9 = arith.constant 0 : index
    %11 = vector.load %arg4[%c0_8, %c0_9] : memref<2x128xf32, #tpu.memory_space<vmem>>, vector<2x128xf32>
    tpu.vector_store %arg4[%c0_8, %c0_9], %10 {strides = array<i32>} : memref<2x128xf32, #tpu.memory_space<vmem>>, vector<2x128xf32>,
    return
  }
}

</mosaic_0001>

<llo_original>
// kernel: clip_multimodal_forward.5
$region0: #{clip_multimodal_forward.5}
  #allocation0 [shape = 'u32[]', space=smem, size = 0x4, offset = 0x4, fixed_abs, tag = 'smem constant byte address 0x4 - core index']
  #allocation1 [shape = 'u32[144,128]{1,0:T(1,128)}', space=vmem, size = 0x12000, scoped, tag = 'internal scratch']
  %s0 = inlined_call_operand.vmem [shape: f32[2,256], index: 0, kind: input, shape index: {}]
  %s1 = inlined_call_operand.vmem [shape: f32[2,256], index: 1, kind: input, shape index: {}]
  %s2 = inlined_call_operand.vmem [shape: f32[256,128], index: 2, kind: input, shape index: {}]
  %s3 = inlined_call_operand.vmem [shape: f32[256,128], index: 3, kind: input, shape index: {}]
  %s4 = inlined_call_operand.hbm [shape: f32[2,128], index: 4, kind: output, shape index: {}]
  %s5 = sld [smem:[#allocation0]]
  $region26: #{clip_multimodal_forward.5} parent=0
    _
  %s7 = ssub.s32 1, %s5
  %s8 = scalar_select 0, %s7, %s5
  $region1: #{clip_multimodal_forward.5} parent=0
    #allocation2 [shape = 'u8[1024]{0}', space=vmem, size = 0x400, scoped, tag = 'output window, operand 0, single buffered']
    #allocation3 [shape = 's32[1]{0}', space=sflag, size = 0x4, scoped, tag = 'scoped memory for clip_multimodal_forward.5']
    %9 = vsyncpa [#allocation3], 0
    // Predicated region
    $region2: #{clip_multimodal_forward.5} parent=1 // pred_check
      _
    $region3: #{clip_multimodal_forward.5} parent=1 // pred_check_branch
      %11 = sbr.rel (0) target = $region5
    $region4: #{clip_multimodal_forward.5} parent=1 // pred_region
      _
    $region5: #{clip_multimodal_forward.5} parent=1 // pred_fallthru
      _
    // Predicated region
    $region6: #{clip_multimodal_forward.5} parent=1 // pred_check
      _
    $region7: #{clip_multimodal_forward.5} parent=1 // pred_check_branch
      %13 = sbr.rel (0) target = $region9
    $region8: #{clip_multimodal_forward.5} parent=1 // pred_region
      _
    $region9: #{clip_multimodal_forward.5} parent=1 // pred_fallthru
      _
    // Predicated region
    $region10: #{clip_multimodal_forward.5} parent=1 // pred_check
      _
    $region11: #{clip_multimodal_forward.5} parent=1 // pred_check_branch
      %15 = sbr.rel (0) target = $region13
    $region12: #{clip_multimodal_forward.5} parent=1 // pred_region
      _
    $region13: #{clip_multimodal_forward.5} parent=1 // pred_fallthru
      _
    // Predicated region
    $region14: #{clip_multimodal_forward.5} parent=1 // pred_check
      _
    $region15: #{clip_multimodal_forward.5} parent=1 // pred_check_branch
      %17 = sbr.rel (0) target = $region17
    $region16: #{clip_multimodal_forward.5} parent=1 // pred_region
      _
    $region17: #{clip_multimodal_forward.5} parent=1 // pred_fallthru
      _
    %v19 = vld [vmem:[%s0] sm:$0xf]
    %v22 = vunpack.c.l.s4 1983009808
    %v23 = vunpack.c.0.s8 %v22
    %v24 = vlaneseq
    %v25 = vshrl.u32 %v24, 7
    %v26 = vsub.s32 %v23, %v25
    %v27 = vrot.slane %v19, %v26
    %v28 = vcombine.high %v27, %v27
    %v31 = vpack.c.bf16 %v27, %v27
    %v32 = vpack.c.bf16 %v28, %v28
    %v33 = vld [vmem:[%s2] sm:$0xff]
    %v34 = vld [vmem:[%s2 + $0x8] sm:$0xff]
    %v35 = vld [vmem:[%s2 + $0x10] sm:$0xff]
    %v36 = vld [vmem:[%s2 + $0x18] sm:$0xff]
    %v37 = vld [vmem:[%s2 + $0x20] sm:$0xff]
    %v38 = vld [vmem:[%s2 + $0x28] sm:$0xff]
    %v39 = vld [vmem:[%s2 + $0x30] sm:$0xff]
    %v40 = vld [vmem:[%s2 + $0x38] sm:$0xff]
    %v41 = vld [vmem:[%s2 + $0x40] sm:$0xff]
    %v42 = vld [vmem:[%s2 + $0x48] sm:$0xff]
    %v43 = vld [vmem:[%s2 + $0x50] sm:$0xff]
    %v44 = vld [vmem:[%s2 + $0x58] sm:$0xff]
    %v45 = vld [vmem:[%s2 + $0x60] sm:$0xff]
    %v46 = vld [vmem:[%s2 + $0x68] sm:$0xff]
    %v47 = vld [vmem:[%s2 + $0x70] sm:$0xff]
    %v48 = vld [vmem:[%s2 + $0x78] sm:$0xff]
    %v49 = vld [vmem:[%s2 + $0x80] sm:$0xff]
    %v50 = vld [vmem:[%s2 + $0x88] sm:$0xff]
    %v51 = vld [vmem:[%s2 + $0x90] sm:$0xff]
    %v52 = vld [vmem:[%s2 + $0x98] sm:$0xff]
    %v53 = vld [vmem:[%s2 + $0xa0] sm:$0xff]
    %v54 = vld [vmem:[%s2 + $0xa8] sm:$0xff]
    %v55 = vld [vmem:[%s2 + $0xb0] sm:$0xff]
    %v56 = vld [vmem:[%s2 + $0xb8] sm:$0xff]
    %v57 = vld [vmem:[%s2 + $0xc0] sm:$0xff]
    %v58 = vld [vmem:[%s2 + $0xc8] sm:$0xff]
    %v59 = vld [vmem:[%s2 + $0xd0] sm:$0xff]
    %v60 = vld [vmem:[%s2 + $0xd8] sm:$0xff]
    %v61 = vld [vmem:[%s2 + $0xe0] sm:$0xff]
    %v62 = vld [vmem:[%s2 + $0xe8] sm:$0xff]
    %v63 = vld [vmem:[%s2 + $0xf0] sm:$0xff]
    %v64 = vld [vmem:[%s2 + $0xf8] sm:$0xff]
    %v65 = vpack.c.bf16 %v34, %v33
    %v66 = vpack.c.bf16 %v36, %v35
    %v67 = vpack.c.bf16 %v38, %v37
    %v68 = vpack.c.bf16 %v40, %v39
    %v69 = vpack.c.bf16 %v42, %v41
    %v70 = vpack.c.bf16 %v44, %v43
    %v71 = vpack.c.bf16 %v46, %v45
    %v72 = vpack.c.bf16 %v48, %v47
    %v73 = vpack.c.bf16 %v50, %v49
    %v74 = vpack.c.bf16 %v52, %v51
    %v75 = vpack.c.bf16 %v54, %v53
    %v76 = vpack.c.bf16 %v56, %v55
    %v77 = vpack.c.bf16 %v58, %v57
    %v78 = vpack.c.bf16 %v60, %v59
    %v79 = vpack.c.bf16 %v62, %v61
    %v80 = vpack.c.bf16 %v64, %v63
    %v81 = vld [vmem:[%s1] sm:$0xf]
    %v84 = vunpack.c.l.s4 1983009808
    %v85 = vunpack.c.0.s8 %v84
    %v86 = vlaneseq
    %v87 = vshrl.u32 %v86, 7
    %v88 = vsub.s32 %v85, %v87
    %v89 = vrot.slane %v81, %v88
    %v90 = vcombine.high %v89, %v89
    %v93 = vpack.c.bf16 %v89, %v89
    %v94 = vpack.c.bf16 %v90, %v90
    %v95 = vld [vmem:[%s3] sm:$0xff]
    %v96 = vld [vmem:[%s3 + $0x8] sm:$0xff]
    %v97 = vld [vmem:[%s3 + $0x10] sm:$0xff]
    %v98 = vld [vmem:[%s3 + $0x18] sm:$0xff]
    %v99 = vld [vmem:[%s3 + $0x20] sm:$0xff]
    %v100 = vld [vmem:[%s3 + $0x28] sm:$0xff]
    %v101 = vld [vmem:[%s3 + $0x30] sm:$0xff]
    %v102 = vld [vmem:[%s3 + $0x38] sm:$0xff]
    %v103 = vld [vmem:[%s3 + $0x40] sm:$0xff]
    %v104 = vld [vmem:[%s3 + $0x48] sm:$0xff]
    %v105 = vld [vmem:[%s3 + $0x50] sm:$0xff]
    %v106 = vld [vmem:[%s3 + $0x58] sm:$0xff]
    %v107 = vld [vmem:[%s3 + $0x60] sm:$0xff]
    %v108 = vld [vmem:[%s3 + $0x68] sm:$0xff]
    %v109 = vld [vmem:[%s3 + $0x70] sm:$0xff]
    %v110 = vld [vmem:[%s3 + $0x78] sm:$0xff]
    %v111 = vld [vmem:[%s3 + $0x80] sm:$0xff]
    %v112 = vld [vmem:[%s3 + $0x88] sm:$0xff]
    %v113 = vld [vmem:[%s3 + $0x90] sm:$0xff]
    %v114 = vld [vmem:[%s3 + $0x98] sm:$0xff]
    %v115 = vld [vmem:[%s3 + $0xa0] sm:$0xff]
    %v116 = vld [vmem:[%s3 + $0xa8] sm:$0xff]
    %v117 = vld [vmem:[%s3 + $0xb0] sm:$0xff]
    %v118 = vld [vmem:[%s3 + $0xb8] sm:$0xff]
    %v119 = vld [vmem:[%s3 + $0xc0] sm:$0xff]
    %v120 = vld [vmem:[%s3 + $0xc8] sm:$0xff]
    %v121 = vld [vmem:[%s3 + $0xd0] sm:$0xff]
    %v122 = vld [vmem:[%s3 + $0xd8] sm:$0xff]
    %v123 = vld [vmem:[%s3 + $0xe0] sm:$0xff]
    %v124 = vld [vmem:[%s3 + $0xe8] sm:$0xff]
    %v125 = vld [vmem:[%s3 + $0xf0] sm:$0xff]
    %v126 = vld [vmem:[%s3 + $0xf8] sm:$0xff]
    %v127 = vpack.c.bf16 %v96, %v95
    %v128 = vpack.c.bf16 %v98, %v97
    %v129 = vpack.c.bf16 %v100, %v99
    %v130 = vpack.c.bf16 %v102, %v101
    %v131 = vpack.c.bf16 %v104, %v103
    %v132 = vpack.c.bf16 %v106, %v105
    %v133 = vpack.c.bf16 %v108, %v107
    %v134 = vpack.c.bf16 %v110, %v109
    %v135 = vpack.c.bf16 %v112, %v111
    %v136 = vpack.c.bf16 %v114, %v113
    %v137 = vpack.c.bf16 %v116, %v115
    %v138 = vpack.c.bf16 %v118, %v117
    %v139 = vpack.c.bf16 %v120, %v119
    %v140 = vpack.c.bf16 %v122, %v121
    %v141 = vpack.c.bf16 %v124, %v123
    %v142 = vpack.c.bf16 %v126, %v125
    %143 = vmatprep.subr.bf16.mxu0 0
    %144 = vmatpush1.bf16.msra.mxu0 %v134
    %145 = vmatprep.subr.bf16.mxu0 0
    %146 = vmatpush1.bf16.msra.mxu0 %v133
    %147 = vmatprep.subr.bf16.mxu0 0
    %148 = vmatpush1.bf16.msra.mxu0 %v132
    %149 = vmatprep.subr.bf16.mxu0 0
    %150 = vmatpush1.bf16.msra.mxu0 %v131
    %151 = vmatprep.subr.bf16.mxu0 0
    %152 = vmatpush1.bf16.msra.mxu0 %v130
    %153 = vmatprep.subr.bf16.mxu0 0
    %154 = vmatpush1.bf16.msra.mxu0 %v129
    %155 = vmatprep.subr.bf16.mxu0 0
    %156 = vmatpush1.bf16.msra.mxu0 %v128
    %157 = vmatprep.subr.bf16.mxu0 0
    %158 = vmatpush1.bf16.msra.mxu0 %v127
    %159 = vmatprep.subr.bf16.mxu0 0
    %160 = vmatpush2.bf16.msra.mxu0 %v142
    %161 = vmatprep.subr.bf16.mxu0 0
    %162 = vmatpush2.bf16.msra.mxu0 %v141
    %163 = vmatprep.subr.bf16.mxu0 0
    %164 = vmatpush2.bf16.msra.mxu0 %v140
    %165 = vmatprep.subr.bf16.mxu0 0
    %166 = vmatpush2.bf16.msra.mxu0 %v139
    %167 = vmatprep.subr.bf16.mxu0 0
    %168 = vmatpush2.bf16.msra.mxu0 %v138
    %169 = vmatprep.subr.bf16.mxu0 0
    %170 = vmatpush2.bf16.msra.mxu0 %v137
    %171 = vmatprep.subr.bf16.mxu0 0
    %172 = vmatpush2.bf16.msra.mxu0 %v136
    %173 = vmatprep.subr.bf16.mxu0 0
    %174 = vmatpush2.bf16.msra.mxu0 %v135
    %175 = vmatprep.mubr.bf16.mxu0 %v94
    %176 = vmatmul.mubr.bf16.gmra.mxu0 %v93
    %v177 = vpop.f32.mrf.mxu0
    %v178 = vadd.f32 0.0, %v177
    %v179 = vpop.f32.mrf.mxu0
    %v180 = vpop.f32.mrf.mxu0
    %v181 = vpop.f32.mrf.mxu0
    %182 = vdwg.mxu0
    %183 = vmatprep.subr.bf16.mxu0 0
    %184 = vmatpush1.bf16.msra.mxu0 %v72
    %185 = vmatprep.subr.bf16.mxu0 0
    %186 = vmatpush1.bf16.msra.mxu0 %v71
    %187 = vmatprep.subr.bf16.mxu0 0
    %188 = vmatpush1.bf16.msra.mxu0 %v70
    %189 = vmatprep.subr.bf16.mxu0 0
    %190 = vmatpush1.bf16.msra.mxu0 %v69
    %191 = vmatprep.subr.bf16.mxu0 0
    %192 = vmatpush1.bf16.msra.mxu0 %v68
    %193 = vmatprep.subr.bf16.mxu0 0
    %194 = vmatpush1.bf16.msra.mxu0 %v67
    %195 = vmatprep.subr.bf16.mxu0 0
    %196 = vmatpush1.bf16.msra.mxu0 %v66
    %197 = vmatprep.subr.bf16.mxu0 0
    %198 = vmatpush1.bf16.msra.mxu0 %v65
    %199 = vmatprep.subr.bf16.mxu0 0
    %200 = vmatpush2.bf16.msra.mxu0 %v80
    %201 = vmatprep.subr.bf16.mxu0 0
    %202 = vmatpush2.bf16.msra.mxu0 %v79
    %203 = vmatprep.subr.bf16.mxu0 0
    %204 = vmatpush2.bf16.msra.mxu0 %v78
    %205 = vmatprep.subr.bf16.mxu0 0
    %206 = vmatpush2.bf16.msra.mxu0 %v77
    %207 = vmatprep.subr.bf16.mxu0 0
    %208 = vmatpush2.bf16.msra.mxu0 %v76
    %209 = vmatprep.subr.bf16.mxu0 0
    %210 = vmatpush2.bf16.msra.mxu0 %v75
    %211 = vmatprep.subr.bf16.mxu0 0
    %212 = vmatpush2.bf16.msra.mxu0 %v74
    %213 = vmatprep.subr.bf16.mxu0 0
    %214 = vmatpush2.bf16.msra.mxu0 %v73
    %215 = vmatprep.mubr.bf16.mxu0 %v32
    %216 = vmatmul.mubr.bf16.gmra.mxu0 %v31
    %v217 = vpop.f32.mrf.mxu0
    %v218 = vadd.f32 %v178, %v217
    %v219 = vpop.f32.mrf.mxu0
    %v220 = vpop.f32.mrf.mxu0
    %v221 = vpop.f32.mrf.mxu0
    %222 = vdwg.mxu0
    %223 = vst [vmem:[#allocation2] sm:$0x3] %v218
    // Predicated region
    $region18: #{clip_multimodal_forward.5} parent=1 // pred_check
      _
    $region19: #{clip_multimodal_forward.5} parent=1 // pred_check_branch
      %225 = sbr.rel (0) target = $region21
    $region20: #{clip_multimodal_forward.5} parent=1 // pred_region
      %s227 = ssub.s32 32, 32
      %228 = vsyncadd [#allocation3], %s227
      %s230 = sshll.u32 [#allocation2], 4
      %s231 = int_to_ptr.vmem [resolvable:$true] %s230
      %233 = dma.vmem_to_hbm [thread:$0]  %s231, 32, %s4, [#allocation3]
    $region21: #{clip_multimodal_forward.5} parent=1 // pred_fallthru
      _
    // Predicated region
    $region22: #{clip_multimodal_forward.5} parent=1 // pred_check
      _
    $region23: #{clip_multimodal_forward.5} parent=1 // pred_check_branch
      %235 = sbr.rel (0) target = $region25
    $region24: #{clip_multimodal_forward.5} parent=1 // pred_region
      %236 = dma.done [#allocation3], 32
    $region25: #{clip_multimodal_forward.5} parent=1 // pred_fallthru
      _
    %237 = vsyncpa [#allocation3], 1

// kernel: clip_multimodal_forward.3
$region0: #{clip_multimodal_forward.3}
  #allocation0 [shape = 'u32[]', space=smem, size = 0x4, offset = 0x4, fixed_abs, tag = 'smem constant byte address 0x4 - core index']
  #allocation1 [shape = 'u32[144,128]{1,0:T(1,128)}', space=vmem, size = 0x12000, scoped, tag = 'internal scratch']
  #allocation2 [shape = 'f32[2,8,256]{2,1,0:T(8,128)}', space=vmem, size = 0x4000, scoped, tag = 'scratch operand']
  #allocation3 [shape = 'f32[2,8,8]{2,1,0:T(8,128)}', space=vmem, size = 0x2000, scoped, tag = 'scratch operand']
  %s0 = inlined_call_operand.vmem [shape: f32[2,8,256], index: 0, kind: input, shape index: {}]
  %s1 = inlined_call_operand.vmem [shape: f32[2,2,256], index: 1, kind: input, shape index: {}]
  %s2 = inlined_call_operand.hbm [shape: bf16[2,256,768], index: 2, kind: input, shape index: {}]
  %s3 = inlined_call_operand.vmem [shape: f32[2,1,768], index: 3, kind: input, shape index: {}]
  %s4 = inlined_call_operand.hbm [shape: bf16[2,256,256], index: 4, kind: input, shape index: {}]
  %s5 = inlined_call_operand.vmem [shape: f32[2,1,256], index: 5, kind: input, shape index: {}]
  %s6 = inlined_call_operand.vmem [shape: f32[2,2,256], index: 6, kind: input, shape index: {}]
  %s7 = inlined_call_operand.vmem [shape: bf16[2,256,512], index: 7, kind: input, shape index: {}]
  %s8 = inlined_call_operand.vmem [shape: f32[2,1,512], index: 8, kind: input, shape index: {}]
  %s9 = inlined_call_operand.hbm [shape: bf16[2,512,256], index: 9, kind: input, shape index: {}]
  %s10 = inlined_call_operand.vmem [shape: f32[2,1,256], index: 10, kind: input, shape index: {}]
  %s11 = inlined_call_operand.vmem [shape: f32[2,256], index: 11, kind: input, shape index: {}]
  %s12 = inlined_call_operand.vmem [shape: f32[2,1,256], index: 12, kind: output, shape index: {}]
  %s13 = sld [smem:[#allocation0]]
  $region101: #{clip_multimodal_forward.3} parent=0
    _
  %s15 = ssub.s32 1, %s13
  %s16 = scalar_select 0, %s15, %s13
  $region1: #{clip_multimodal_forward.3} parent=0
    #allocation4 [shape = 'u8[786432]{0}', space=vmem, size = 0xc0000, scoped, tag = 'input window, operand 2']
    #allocation5 [shape = 's32[2]{0}', space=sflag, size = 0x8, scoped, tag = 'scoped memory for clip_multimodal_forward.3']
    #allocation6 [shape = 'u8[262144]{0}', space=vmem, size = 0x40000, scoped, tag = 'input window, operand 4']
    #allocation7 [shape = 's32[2]{0}', space=sflag, size = 0x8, scoped, tag = 'scoped memory for clip_multimodal_forward.3']
    #allocation8 [shape = 'u8[524288]{0}', space=vmem, size = 0x80000, scoped, tag = 'input window, operand 9']
    %17 = vsyncpa [#allocation5], 0
    %s18 = scalar_lea.sflag [#allocation5], 1
    %19 = vsyncpa %s18, 0
    %20 = vsyncpa [#allocation7], 0
    %s21 = scalar_lea.sflag [#allocation7], 1
    %22 = vsyncpa %s21, 0
    loop: start=0, step=1, limit=4
    $region2: #{clip_multimodal_forward.3} parent=1 // loop_pre_header
      _
    $region3: #{clip_multimodal_forward.3} parent=1 // loop_header
      %s24 = sphi 0, %s28
      %p25 = scmp.ge.s32.totalorder %s24, 4
      %s31 = sphi 0, %s43
      %s32 = sphi 0, %s39
      %s33 = sphi 0, %s31
      %s34 = sphi 0, %s32
      %s35 = sphi 0, %s33
      %s36 = sphi 0, %s34
      %s46 = sphi 0, %s48
      %s49 = sphi 0, %s46
      %s50 = sphi 0, %s49
      %s66 = sphi 0, %s50
      %s72 = sphi 0, %s74
      %s75 = sphi 0, %s72
      %s76 = sphi 0, %s75
      %s92 = sphi 0, %s76
      %s98 = sphi 0, %s100
      %s101 = sphi 0, %s98
      %s102 = sphi 0, %s101
      %s118 = sphi 0, %s102
      %s124 = sphi 0, %s126
      %s127 = sphi 0, %s124
      %s128 = sphi 0, %s127
      %s144 = sphi 0, %s128
      %s150 = sphi 0, %s152
      %s153 = sphi 0, %s150
      %s154 = sphi 0, %s153
      %s170 = sphi 0, %s154
      %s176 = sphi 0, %s178
      %s179 = sphi 0, %s176
      %s180 = sphi 0, %s179
      %s196 = sphi 0, %s180
      %s202 = sphi 0, %s204
      %s205 = sphi 0, %s202
      %s206 = sphi 0, %s205
      %s222 = sphi 0, %s206
      %s228 = sphi 0, %s230
      %s231 = sphi 0, %s228
      %s232 = sphi 0, %s231
      %s248 = sphi 0, %s232
      %s254 = sphi 0, %s256
      %s257 = sphi 0, %s254
      %s258 = sphi 0, %s257
      %s274 = sphi 0, %s258
      %s280 = sphi 0, %s282
      %s283 = sphi 0, %s280
      %s284 = sphi 0, %s283
      %s300 = sphi 0, %s284
      %s306 = sphi 0, %s308
      %s309 = sphi 0, %s306
      %s310 = sphi 0, %s309
      %s326 = sphi 0, %s310
      %s330 = sphi 0, %s330
      %s332 = sphi 0, %s330
      %s333 = sphi 0, %s332
      %s347 = sphi 0, %s333
      %s353 = sphi 0, %s355
      %s356 = sphi 0, %s353
      %s357 = sphi 0, %s356
      %s373 = sphi 0, %s357
    $region4: #{clip_multimodal_forward.3} parent=1 // loop_header_branch
      %27 = sbr.rel (%p25) target = $region8
    $region5: #{clip_multimodal_forward.3} parent=1 // loop_body
      %s29 = ssub.s32 %s24, 1
      %s30 = ssub.s32 %s24, 2
      %s37 = sadd.s32 1, %s32
      %p38 = scmp.ge.s32.totalorder %s37, 2
      %s39 = scalar_select %p38, 0, %s37
      %s40 = sadd.s32 1, %s31
      %s41 = scalar_select %p38, %s40, %s31
      %p42 = scmp.ge.s32.totalorder %s41, 1
      %s43 = scalar_select %p42, 0, %s41
      %s44 = ssub.s32 %s31, %s43
      %p45 = scmp.eq.s32.totalorder %s44, 0
      %s47 = sadd.s32 %s46, 1
      %s48 = scalar_select %p45, %s46, %s47
      %p51 = pneg %p45
      %p52 = scmp.eq.s32.totalorder %s24, 1
      %p53 = por %p51, %p52
      %p54 = scmp.ne.s32.totalorder %s46, %s49
      %p55 = scmp.eq.s32.totalorder %s24, 0
      %p56 = por %p54, %p55
      %p57 = scmp.ne.s32.totalorder %s46, %s49
      %p58 = scmp.eq.s32.totalorder %s29, 1
      %p59 = por %p57, %p58
      %p60 = scmp.ne.s32.totalorder %s49, %s50
      %p61 = scmp.eq.s32.totalorder %s29, 0
      %p62 = por %p60, %p61
      %p63 = scmp.ne.s32.totalorder %s49, %s50
      %p64 = scmp.eq.s32.totalorder %s30, 1
      %p65 = por %p63, %p64
      %p67 = scmp.ne.s32.totalorder %s50, %s66
      %p68 = scmp.eq.s32.totalorder %s30, 0
      %p69 = por %p67, %p68
      %s70 = ssub.s32 %s32, %s39
      %p71 = scmp.eq.s32.totalorder %s70, 0
      %s73 = sadd.s32 %s72, 1
      %s74 = scalar_select %p71, %s72, %s73
      %p77 = pneg %p71
      %p78 = scmp.eq.s32.totalorder %s24, 1
      %p79 = por %p77, %p78
      %p80 = scmp.ne.s32.totalorder %s72, %s75
      %p81 = scmp.eq.s32.totalorder %s24, 0
      %p82 = por %p80, %p81
      %p83 = scmp.ne.s32.totalorder %s72, %s75
      %p84 = scmp.eq.s32.totalorder %s29, 1
      %p85 = por %p83, %p84
      %p86 = scmp.ne.s32.totalorder %s75, %s76
      %p87 = scmp.eq.s32.totalorder %s29, 0
      %p88 = por %p86, %p87
      %p89 = scmp.ne.s32.totalorder %s75, %s76
      %p90 = scmp.eq.s32.totalorder %s30, 1
      %p91 = por %p89, %p90
      %p93 = scmp.ne.s32.totalorder %s76, %s92
      %p94 = scmp.eq.s32.totalorder %s30, 0
      %p95 = por %p93, %p94
      %s96 = ssub.s32 %s32, %s39
      %p97 = scmp.eq.s32.totalorder %s96, 0
      %s99 = sadd.s32 %s98, 1
      %s100 = scalar_select %p97, %s98, %s99
      %p103 = pneg %p97
      %p104 = scmp.eq.s32.totalorder %s24, 1
      %p105 = por %p103, %p104
      %p106 = scmp.ne.s32.totalorder %s98, %s101
      %p107 = scmp.eq.s32.totalorder %s24, 0
      %p108 = por %p106, %p107
      %p109 = scmp.ne.s32.totalorder %s98, %s101
      %p110 = scmp.eq.s32.totalorder %s29, 1
      %p111 = por %p109, %p110
      %p112 = scmp.ne.s32.totalorder %s101, %s102
      %p113 = scmp.eq.s32.totalorder %s29, 0
      %p114 = por %p112, %p113
      %p115 = scmp.ne.s32.totalorder %s101, %s102
      %p116 = scmp.eq.s32.totalorder %s30, 1
      %p117 = por %p115, %p116
      %p119 = scmp.ne.s32.totalorder %s102, %s118
      %p120 = scmp.eq.s32.totalorder %s30, 0
      %p121 = por %p119, %p120
      %s122 = ssub.s32 %s32, %s39
      %p123 = scmp.eq.s32.totalorder %s122, 0
      %s125 = sadd.s32 %s124, 1
      %s126 = scalar_select %p123, %s124, %s125
      %p129 = pneg %p123
      %p130 = scmp.eq.s32.totalorder %s24, 1
      %p131 = por %p129, %p130
      %p132 = scmp.ne.s32.totalorder %s124, %s127
      %p133 = scmp.eq.s32.totalorder %s24, 0
      %p134 = por %p132, %p133
      %p135 = scmp.ne.s32.totalorder %s124, %s127
      %p136 = scmp.eq.s32.totalorder %s29, 1
      %p137 = por %p135, %p136
      %p138 = scmp.ne.s32.totalorder %s127, %s128
      %p139 = scmp.eq.s32.totalorder %s29, 0
      %p140 = por %p138, %p139
      %p141 = scmp.ne.s32.totalorder %s127, %s128
      %p142 = scmp.eq.s32.totalorder %s30, 1
      %p143 = por %p141, %p142
      %p145 = scmp.ne.s32.totalorder %s128, %s144
      %p146 = scmp.eq.s32.totalorder %s30, 0
      %p147 = por %p145, %p146
      %s148 = ssub.s32 %s32, %s39
      %p149 = scmp.eq.s32.totalorder %s148, 0
      %s151 = sadd.s32 %s150, 1
      %s152 = scalar_select %p149, %s150, %s151
      %p155 = pneg %p149
      %p156 = scmp.eq.s32.totalorder %s24, 1
      %p157 = por %p155, %p156
      %p158 = scmp.ne.s32.totalorder %s150, %s153
      %p159 = scmp.eq.s32.totalorder %s24, 0
      %p160 = por %p158, %p159
      %p161 = scmp.ne.s32.totalorder %s150, %s153
      %p162 = scmp.eq.s32.totalorder %s29, 1
      %p163 = por %p161, %p162
      %p164 = scmp.ne.s32.totalorder %s153, %s154
      %p165 = scmp.eq.s32.totalorder %s29, 0
      %p166 = por %p164, %p165
      %p167 = scmp.ne.s32.totalorder %s153, %s154
      %p168 = scmp.eq.s32.totalorder %s30, 1
      %p169 = por %p167, %p168
      %p171 = scmp.ne.s32.totalorder %s154, %s170
      %p172 = scmp.eq.s32.totalorder %s30, 0
      %p173 = por %p171, %p172
      %s174 = ssub.s32 %s32, %s39
      %p175 = scmp.eq.s32.totalorder %s174, 0
      %s177 = sadd.s32 %s176, 1
      %s178 = scalar_select %p175, %s176, %s177
      %p181 = pneg %p175
      %p182 = scmp.eq.s32.totalorder %s24, 1
      %p183 = por %p181, %p182
      %p184 = scmp.ne.s32.totalorder %s176, %s179
      %p185 = scmp.eq.s32.totalorder %s24, 0
      %p186 = por %p184, %p185
      %p187 = scmp.ne.s32.totalorder %s176, %s179
      %p188 = scmp.eq.s32.totalorder %s29, 1
      %p189 = por %p187, %p188
      %p190 = scmp.ne.s32.totalorder %s179, %s180
      %p191 = scmp.eq.s32.totalorder %s29, 0
      %p192 = por %p190, %p191
      %p193 = scmp.ne.s32.totalorder %s179, %s180
      %p194 = scmp.eq.s32.totalorder %s30, 1
      %p195 = por %p193, %p194
      %p197 = scmp.ne.s32.totalorder %s180, %s196
      %p198 = scmp.eq.s32.totalorder %s30, 0
      %p199 = por %p197, %p198
      %s200 = ssub.s32 %s32, %s39
      %p201 = scmp.eq.s32.totalorder %s200, 0
      %s203 = sadd.s32 %s202, 1
      %s204 = scalar_select %p201, %s202, %s203
      %p207 = pneg %p201
      %p208 = scmp.eq.s32.totalorder %s24, 1
      %p209 = por %p207, %p208
      %p210 = scmp.ne.s32.totalorder %s202, %s205
      %p211 = scmp.eq.s32.totalorder %s24, 0
      %p212 = por %p210, %p211
      %p213 = scmp.ne.s32.totalorder %s202, %s205
      %p214 = scmp.eq.s32.totalorder %s29, 1
      %p215 = por %p213, %p214
      %p216 = scmp.ne.s32.totalorder %s205, %s206
      %p217 = scmp.eq.s32.totalorder %s29, 0
      %p218 = por %p216, %p217
      %p219 = scmp.ne.s32.totalorder %s205, %s206
      %p220 = scmp.eq.s32.totalorder %s30, 1
      %p221 = por %p219, %p220
      %p223 = scmp.ne.s32.totalorder %s206, %s222
      %p224 = scmp.eq.s32.totalorder %s30, 0
      %p225 = por %p223, %p224
      %s226 = ssub.s32 %s32, %s39
      %p227 = scmp.eq.s32.totalorder %s226, 0
      %s229 = sadd.s32 %s228, 1
      %s230 = scalar_select %p227, %s228, %s229
      %p233 = pneg %p227
      %p234 = scmp.eq.s32.totalorder %s24, 1
      %p235 = por %p233, %p234
      %p236 = scmp.ne.s32.totalorder %s228, %s231
      %p237 = scmp.eq.s32.totalorder %s24, 0
      %p238 = por %p236, %p237
      %p239 = scmp.ne.s32.totalorder %s228, %s231
      %p240 = scmp.eq.s32.totalorder %s29, 1
      %p241 = por %p239, %p240
      %p242 = scmp.ne.s32.totalorder %s231, %s232
      %p243 = scmp.eq.s32.totalorder %s29, 0
      %p244 = por %p242, %p243
      %p245 = scmp.ne.s32.totalorder %s231, %s232
      %p246 = scmp.eq.s32.totalorder %s30, 1
      %p247 = por %p245, %p246
      %p249 = scmp.ne.s32.totalorder %s232, %s248
      %p250 = scmp.eq.s32.totalorder %s30, 0
      %p251 = por %p249, %p250
      %s252 = ssub.s32 %s32, %s39
      %p253 = scmp.eq.s32.totalorder %s252, 0
      %s255 = sadd.s32 %s254, 1
      %s256 = scalar_select %p253, %s254, %s255
      %p259 = pneg %p253
      %p260 = scmp.eq.s32.totalorder %s24, 1
      %p261 = por %p259, %p260
      %p262 = scmp.ne.s32.totalorder %s254, %s257
      %p263 = scmp.eq.s32.totalorder %s24, 0
      %p264 = por %p262, %p263
      %p265 = scmp.ne.s32.totalorder %s254, %s257
      %p266 = scmp.eq.s32.totalorder %s29, 1
      %p267 = por %p265, %p266
      %p268 = scmp.ne.s32.totalorder %s257, %s258
      %p269 = scmp.eq.s32.totalorder %s29, 0
      %p270 = por %p268, %p269
      %p271 = scmp.ne.s32.totalorder %s257, %s258
      %p272 = scmp.eq.s32.totalorder %s30, 1
      %p273 = por %p271, %p272
      %p275 = scmp.ne.s32.totalorder %s258, %s274
      %p276 = scmp.eq.s32.totalorder %s30, 0
      %p277 = por %p275, %p276
      %s278 = ssub.s32 %s32, %s39
      %p279 = scmp.eq.s32.totalorder %s278, 0
      %s281 = sadd.s32 %s280, 1
      %s282 = scalar_select %p279, %s280, %s281
      %p285 = pneg %p279
      %p286 = scmp.eq.s32.totalorder %s24, 1
      %p287 = por %p285, %p286
      %p288 = scmp.ne.s32.totalorder %s280, %s283
      %p289 = scmp.eq.s32.totalorder %s24, 0
      %p290 = por %p288, %p289
      %p291 = scmp.ne.s32.totalorder %s280, %s283
      %p292 = scmp.eq.s32.totalorder %s29, 1
      %p293 = por %p291, %p292
      %p294 = scmp.ne.s32.totalorder %s283, %s284
      %p295 = scmp.eq.s32.totalorder %s29, 0
      %p296 = por %p294, %p295
      %p297 = scmp.ne.s32.totalorder %s283, %s284
      %p298 = scmp.eq.s32.totalorder %s30, 1
      %p299 = por %p297, %p298
      %p301 = scmp.ne.s32.totalorder %s284, %s300
      %p302 = scmp.eq.s32.totalorder %s30, 0
      %p303 = por %p301, %p302
      %s304 = ssub.s32 %s32, %s39
      %p305 = scmp.eq.s32.totalorder %s304, 0
      %s307 = sadd.s32 %s306, 1
      %s308 = scalar_select %p305, %s306, %s307
      %p311 = pneg %p305
      %p312 = scmp.eq.s32.totalorder %s24, 1
      %p313 = por %p311, %p312
      %p314 = scmp.ne.s32.totalorder %s306, %s309
      %p315 = scmp.eq.s32.totalorder %s24, 0
      %p316 = por %p314, %p315
      %p317 = scmp.ne.s32.totalorder %s306, %s309
      %p318 = scmp.eq.s32.totalorder %s29, 1
      %p319 = por %p317, %p318
      %p320 = scmp.ne.s32.totalorder %s309, %s310
      %p321 = scmp.eq.s32.totalorder %s29, 0
      %p322 = por %p320, %p321
      %p323 = scmp.ne.s32.totalorder %s309, %s310
      %p324 = scmp.eq.s32.totalorder %s30, 1
      %p325 = por %p323, %p324
      %p327 = scmp.ne.s32.totalorder %s310, %s326
      %p328 = scmp.eq.s32.totalorder %s30, 0
      %p329 = por %p327, %p328
      %s331 = sadd.s32 %s330, 1
      %p334 = scmp.eq.s32.totalorder %s24, 1
      %p335 = scmp.ne.s32.totalorder %s330, %s332
      %p336 = scmp.eq.s32.totalorder %s24, 0
      %p337 = por %p335, %p336
      %p338 = scmp.ne.s32.totalorder %s330, %s332
      %p339 = scmp.eq.s32.totalorder %s29, 1
      %p340 = por %p338, %p339
      %p341 = scmp.ne.s32.totalorder %s332, %s333
      %p342 = scmp.eq.s32.totalorder %s29, 0
      %p343 = por %p341, %p342
      %p344 = scmp.ne.s32.totalorder %s332, %s333
      %p345 = scmp.eq.s32.totalorder %s30, 1
      %p346 = por %p344, %p345
      %p348 = scmp.ne.s32.totalorder %s333, %s347
      %p349 = scmp.eq.s32.totalorder %s30, 0
      %p350 = por %p348, %p349
      %s351 = ssub.s32 %s31, %s43
      %p352 = scmp.eq.s32.totalorder %s351, 0
      %s354 = sadd.s32 %s353, 1
      %s355 = scalar_select %p352, %s353, %s354
      %p358 = pneg %p352
      %p359 = scmp.eq.s32.totalorder %s24, 1
      %p360 = por %p358, %p359
      %p361 = scmp.ne.s32.totalorder %s353, %s356
      %p362 = scmp.eq.s32.totalorder %s24, 0
      %p363 = por %p361, %p362
      %p364 = scmp.ne.s32.totalorder %s353, %s356
      %p365 = scmp.eq.s32.totalorder %s29, 1
      %p366 = por %p364, %p365
      %p367 = scmp.ne.s32.totalorder %s356, %s357
      %p368 = scmp.eq.s32.totalorder %s29, 0
      %p369 = por %p367, %p368
      %p370 = scmp.ne.s32.totalorder %s356, %s357
      %p371 = scmp.eq.s32.totalorder %s30, 1
      %p372 = por %p370, %p371
      %p374 = scmp.ne.s32.totalorder %s357, %s373
      %p375 = scmp.eq.s32.totalorder %s30, 0
      %p376 = por %p374, %p375
      %p377 = scmp.le.s32.totalorder 1, %s24
      %p378 = scmp.lt.s32.totalorder %s24, 3
      %p379 = pnand %p377, %p378
      %p380 = pneg %p379
      // Predicated region
      $region9: #{clip_multimodal_forward.3} parent=5 // pred_check
        _
      $region10: #{clip_multimodal_forward.3} parent=5 // pred_check_branch
        %382 = sbr.rel (%p379) target = $region12
      $region11: #{clip_multimodal_forward.3} parent=5 // pred_region
        %s383 = ssub.s32 %s24, 1
        // Predicated region
        $region13: #{clip_multimodal_forward.3} parent=11 // pred_check
          %p384 = pneg %p62
        $region14: #{clip_multimodal_forward.3} parent=11 // pred_check_branch
          %386 = sbr.rel (%p384) target = $region16
        $region15: #{clip_multimodal_forward.3} parent=11 // pred_region
          %s387 = smul.u32 2, %s33
          %p388 = scmp.lt.s32.totalorder %s387, 1
          %s389 = scalar_select %p388, %s387, 1
          %s390 = smul.addr %s389, 2
          %s391 = smul.addr %s390, 8
          %s392 = scalar_lea.vmem %s0, %s391
          %s393 = smul.u32 2, %s33
        $region16: #{clip_multimodal_forward.3} parent=11 // pred_fallthru
          _
        // Predicated region
        $region17: #{clip_multimodal_forward.3} parent=11 // pred_check
          %p394 = pneg %p343
        $region18: #{clip_multimodal_forward.3} parent=11 // pred_check_branch
          %396 = sbr.rel (%p394) target = $region20
        $region19: #{clip_multimodal_forward.3} parent=11 // pred_region
          _
        $region20: #{clip_multimodal_forward.3} parent=11 // pred_fallthru
          _
      $region12: #{clip_multimodal_forward.3} parent=5 // pred_fallthru
        _
      %p397 = scmp.lt.s32.totalorder %s24, 2
      // Predicated region
      $region21: #{clip_multimodal_forward.3} parent=5 // pred_check
        %p398 = pneg %p397
      $region22: #{clip_multimodal_forward.3} parent=5 // pred_check_branch
        %400 = sbr.rel (%p398) target = $region24
      $region23: #{clip_multimodal_forward.3} parent=5 // pred_region
        // Predicated region
        $region25: #{clip_multimodal_forward.3} parent=23 // pred_check
          %p401 = pneg %p82
        $region26: #{clip_multimodal_forward.3} parent=23 // pred_check_branch
          %403 = sbr.rel (%p401) target = $region28
        $region27: #{clip_multimodal_forward.3} parent=23 // pred_region
          %p404 = scmp.lt.s32.totalorder %s32, 1
          %s405 = scalar_select %p404, %s32, 1
          %s406 = smul.addr %s405, 2
          %s407 = smul.addr %s406, 2
          %s408 = scalar_lea.vmem %s1, %s407
        $region28: #{clip_multimodal_forward.3} parent=23 // pred_fallthru
          _
        // Predicated region
        $region29: #{clip_multimodal_forward.3} parent=23 // pred_check
          %p409 = pneg %p108
        $region30: #{clip_multimodal_forward.3} parent=23 // pred_check_branch
          %411 = sbr.rel (%p409) target = $region32
        $region31: #{clip_multimodal_forward.3} parent=23 // pred_region
          %s412 = sand.u32 %s98, 1
          %s413 = scalar_lea.sflag [#allocation5], %s412
          %s414 = sand.u32 %s98, 1
          %s415 = smul.addr %s414, 768
          %s416 = scalar_lea.vmem [#allocation4], %s415
          %s418 = ssub.s32 12288, 12288
          %419 = vsyncadd %s413, %s418
          %s420 = smul.addr %s32, 192
          %s421 = smul.addr %s420, 64
          %s422 = scalar_lea.hbm %s2, %s421
          %s423 = sshll.u32 %s416, 4
          %s424 = int_to_ptr.vmem [resolvable:$true] %s423
          %429 = dma.hbm_to_vmem [thread:$0]  %s422, 12288, %s424, %s413, 384, 384, 24
        $region32: #{clip_multimodal_forward.3} parent=23 // pred_fallthru
          _
        // Predicated region
        $region33: #{clip_multimodal_forward.3} parent=23 // pred_check
          %p430 = pneg %p134
        $region34: #{clip_multimodal_forward.3} parent=23 // pred_check_branch
          %432 = sbr.rel (%p430) target = $region36
        $region35: #{clip_multimodal_forward.3} parent=23 // pred_region
          %p433 = scmp.lt.s32.totalorder %s32, 1
          %s434 = scalar_select %p433, %s32, 1
          %s435 = smul.addr %s434, 6
          %s436 = scalar_lea.vmem %s3, %s435
        $region36: #{clip_multimodal_forward.3} parent=23 // pred_fallthru
          _
        // Predicated region
        $region37: #{clip_multimodal_forward.3} parent=23 // pred_check
          %p437 = pneg %p160
        $region38: #{clip_multimodal_forward.3} parent=23 // pred_check_branch
          %439 = sbr.rel (%p437) target = $region40
        $region39: #{clip_multimodal_forward.3} parent=23 // pred_region
          %s440 = sand.u32 %s24, 1
          %s441 = scalar_lea.sflag [#allocation7], %s440
          %s442 = sand.u32 %s150, 1
          %s443 = smul.addr %s442, 256
          %s444 = scalar_lea.vmem [#allocation6], %s443
          %s446 = ssub.s32 4096, 4096
          %447 = vsyncadd %s441, %s446
          %s448 = smul.addr %s32, 64
          %s449 = smul.addr %s448, 64
          %s450 = scalar_lea.hbm %s4, %s449
          %s451 = sshll.u32 %s444, 4
          %s452 = int_to_ptr.vmem [resolvable:$true] %s451
          %457 = dma.hbm_to_vmem [thread:$0]  %s450, 4096, %s452, %s441, 128, 128, 8
        $region40: #{clip_multimodal_forward.3} parent=23 // pred_fallthru
          _
        // Predicated region
        $region41: #{clip_multimodal_forward.3} parent=23 // pred_check
          %p458 = pneg %p186
        $region42: #{clip_multimodal_forward.3} parent=23 // pred_check_branch
          %460 = sbr.rel (%p458) target = $region44
        $region43: #{clip_multimodal_forward.3} parent=23 // pred_region
          %p461 = scmp.lt.s32.totalorder %s32, 1
          %s462 = scalar_select %p461, %s32, 1
          %s463 = smul.addr %s462, 2
          %s464 = scalar_lea.vmem %s5, %s463
        $region44: #{clip_multimodal_forward.3} parent=23 // pred_fallthru
          _
        // Predicated region
        $region45: #{clip_multimodal_forward.3} parent=23 // pred_check
          %p465 = pneg %p212
        $region46: #{clip_multimodal_forward.3} parent=23 // pred_check_branch
          %467 = sbr.rel (%p465) target = $region48
        $region47: #{clip_multimodal_forward.3} parent=23 // pred_region
          %p468 = scmp.lt.s32.totalorder %s32, 1
          %s469 = scalar_select %p468, %s32, 1
          %s470 = smul.addr %s469, 2
          %s471 = smul.addr %s470, 2
          %s472 = scalar_lea.vmem %s6, %s471
        $region48: #{clip_multimodal_forward.3} parent=23 // pred_fallthru
          _
        // Predicated region
        $region49: #{clip_multimodal_forward.3} parent=23 // pred_check
          %p473 = pneg %p238
        $region50: #{clip_multimodal_forward.3} parent=23 // pred_check_branch
          %475 = sbr.rel (%p473) target = $region52
        $region51: #{clip_multimodal_forward.3} parent=23 // pred_region
          %p476 = scmp.lt.s32.totalorder %s32, 1
          %s477 = scalar_select %p476, %s32, 1
          %s478 = smul.addr %s477, 128
          %s479 = smul.addr %s478, 4
          %s480 = scalar_lea.vmem %s7, %s479
        $region52: #{clip_multimodal_forward.3} parent=23 // pred_fallthru
          _
        // Predicated region
        $region53: #{clip_multimodal_forward.3} parent=23 // pred_check
          %p481 = pneg %p264
        $region54: #{clip_multimodal_forward.3} parent=23 // pred_check_branch
          %483 = sbr.rel (%p481) target = $region56
        $region55: #{clip_multimodal_forward.3} parent=23 // pred_region
          %p484 = scmp.lt.s32.totalorder %s32, 1
          %s485 = scalar_select %p484, %s32, 1
          %s486 = smul.addr %s485, 4
          %s487 = scalar_lea.vmem %s8, %s486
        $region56: #{clip_multimodal_forward.3} parent=23 // pred_fallthru
          _
        // Predicated region
        $region57: #{clip_multimodal_forward.3} parent=23 // pred_check
          %p488 = pneg %p290
        $region58: #{clip_multimodal_forward.3} parent=23 // pred_check_branch
          %490 = sbr.rel (%p488) target = $region60
        $region59: #{clip_multimodal_forward.3} parent=23 // pred_region
          %s491 = sand.u32 %s24, 1
          %s492 = scalar_lea.sflag [#allocation7], %s491
          %s493 = sand.u32 %s280, 1
          %s494 = smul.addr %s493, 512
          %s495 = scalar_lea.vmem [#allocation8], %s494
          %s497 = ssub.s32 8192, 8192
          %498 = vsyncadd %s492, %s497
          %s499 = smul.addr %s32, 128
          %s500 = smul.addr %s499, 64
          %s501 = scalar_lea.hbm %s9, %s500
          %s502 = sshll.u32 %s495, 4
          %s503 = int_to_ptr.vmem [resolvable:$true] %s502
          %508 = dma.hbm_to_vmem [thread:$0]  %s501, 8192, %s503, %s492, 128, 128, 8
        $region60: #{clip_multimodal_forward.3} parent=23 // pred_fallthru
          _
        // Predicated region
        $region61: #{clip_multimodal_forward.3} parent=23 // pred_check
          %p509 = pneg %p316
        $region62: #{clip_multimodal_forward.3} parent=23 // pred_check_branch
          %511 = sbr.rel (%p509) target = $region64
        $region63: #{clip_multimodal_forward.3} parent=23 // pred_region
          %p512 = scmp.lt.s32.totalorder %s32, 1
          %s513 = scalar_select %p512, %s32, 1
          %s514 = smul.addr %s513, 2
          %s515 = scalar_lea.vmem %s10, %s514
        $region64: #{clip_multimodal_forward.3} parent=23 // pred_fallthru
          _
      $region24: #{clip_multimodal_forward.3} parent=5 // pred_fallthru
        _
      %p516 = scmp.le.s32.totalorder 1, %s24
      %p517 = scmp.lt.s32.totalorder %s24, 3
      %p518 = pnand %p516, %p517
      %p519 = pneg %p518
      // Predicated region
      $region65: #{clip_multimodal_forward.3} parent=5 // pred_check
        _
      $region66: #{clip_multimodal_forward.3} parent=5 // pred_check_branch
        %521 = sbr.rel (%p518) target = $region68
      $region67: #{clip_multimodal_forward.3} parent=5 // pred_region
        %s522 = ssub.s32 %s24, 1
        %s523 = sand.u32 %s101, 1
        %s524 = scalar_lea.sflag [#allocation5], %s523
        %s525 = sand.u32 %s101, 1
        %s526 = smul.addr %s525, 768
        %s527 = scalar_lea.vmem [#allocation4], %s526
        // Predicated region
        $region69: #{clip_multimodal_forward.3} parent=67 // pred_check
          %p528 = pneg %p114
        $region70: #{clip_multimodal_forward.3} parent=67 // pred_check_branch
          %530 = sbr.rel (%p528) target = $region72
        $region71: #{clip_multimodal_forward.3} parent=67 // pred_region
          %531 = dma.done %s524, 12288
        $region72: #{clip_multimodal_forward.3} parent=67 // pred_fallthru
          _
        %s532 = sand.u32 %s29, 1
        %s533 = scalar_lea.sflag [#allocation7], %s532
        %s534 = sand.u32 %s153, 1
        %s535 = smul.addr %s534, 256
        %s536 = scalar_lea.vmem [#allocation6], %s535
        // Predicated region
        $region73: #{clip_multimodal_forward.3} parent=67 // pred_check
          %p537 = pneg %p166
        $region74: #{clip_multimodal_forward.3} parent=67 // pred_check_branch
          %539 = sbr.rel (%p537) target = $region76
        $region75: #{clip_multimodal_forward.3} parent=67 // pred_region
          %540 = dma.done %s533, 4096
        $region76: #{clip_multimodal_forward.3} parent=67 // pred_fallthru
          _
        %s541 = sand.u32 %s29, 1
        %s542 = scalar_lea.sflag [#allocation7], %s541
        %s543 = sand.u32 %s283, 1
        %s544 = smul.addr %s543, 512
        %s545 = scalar_lea.vmem [#allocation8], %s544
        // Predicated region
        $region77: #{clip_multimodal_forward.3} parent=67 // pred_check
          %p546 = pneg %p296
        $region78: #{clip_multimodal_forward.3} parent=67 // pred_check_branch
          %548 = sbr.rel (%p546) target = $region80
        $region79: #{clip_multimodal_forward.3} parent=67 // pred_region
          %549 = dma.done %s542, 8192
        $region80: #{clip_multimodal_forward.3} parent=67 // pred_fallthru
          _
        %s550 = smul.u32 2, %s33
        %p551 = scmp.lt.s32.totalorder %s550, 1
        %s552 = scalar_select %p551, %s550, 1
        %s553 = smul.addr %s552, 2
        %s554 = smul.addr %s553, 8
        %s555 = scalar_lea.vmem %s0, %s554
        %p556 = pneg %p62
        %p557 = pneg %p59
        %p558 = scmp.lt.s32.totalorder %s34, 1
        %s559 = scalar_select %p558, %s34, 1
        %s560 = smul.addr %s559, 2
        %s561 = smul.addr %s560, 2
        %s562 = scalar_lea.vmem %s1, %s561
        %p563 = pneg %p88
        %p564 = pneg %p85
        %s565 = sand.u32 %s101, 1
        %s566 = scalar_lea.sflag [#allocation5], %s565
        %s567 = sand.u32 %s101, 1
        %s568 = smul.addr %s567, 768
        %s569 = scalar_lea.vmem [#allocation4], %s568
        %p570 = pneg %p114
        %p571 = pneg %p111
        %p572 = scmp.lt.s32.totalorder %s34, 1
        %s573 = scalar_select %p572, %s34, 1
        %s574 = smul.addr %s573, 6
        %s575 = scalar_lea.vmem %s3, %s574
        %p576 = pneg %p140
        %p577 = pneg %p137
        %s578 = sand.u32 %s29, 1
        %s579 = scalar_lea.sflag [#allocation7], %s578
        %s580 = sand.u32 %s153, 1
        %s581 = smul.addr %s580, 256
        %s582 = scalar_lea.vmem [#allocation6], %s581
        %p583 = pneg %p166
        %p584 = pneg %p163
        %p585 = scmp.lt.s32.totalorder %s34, 1
        %s586 = scalar_select %p585, %s34, 1
        %s587 = smul.addr %s586, 2
        %s588 = scalar_lea.vmem %s5, %s587
        %p589 = pneg %p192
        %p590 = pneg %p189
        %p591 = scmp.lt.s32.totalorder %s34, 1
        %s592 = scalar_select %p591, %s34, 1
        %s593 = smul.addr %s592, 2
        %s594 = smul.addr %s593, 2
        %s595 = scalar_lea.vmem %s6, %s594
        %p596 = pneg %p218
        %p597 = pneg %p215
        %p598 = scmp.lt.s32.totalorder %s34, 1
        %s599 = scalar_select %p598, %s34, 1
        %s600 = smul.addr %s599, 128
        %s601 = smul.addr %s600, 4
        %s602 = scalar_lea.vmem %s7, %s601
        %p603 = pneg %p244
        %p604 = pneg %p241
        %p605 = scmp.lt.s32.totalorder %s34, 1
        %s606 = scalar_select %p605, %s34, 1
        %s607 = smul.addr %s606, 4
        %s608 = scalar_lea.vmem %s8, %s607
        %p609 = pneg %p270
        %p610 = pneg %p267
        %s611 = sand.u32 %s29, 1
        %s612 = scalar_lea.sflag [#allocation7], %s611
        %s613 = sand.u32 %s283, 1
        %s614 = smul.addr %s613, 512
        %s615 = scalar_lea.vmem [#allocation8], %s614
        %p616 = pneg %p296
        %p617 = pneg %p293
        %p618 = scmp.lt.s32.totalorder %s34, 1
        %s619 = scalar_select %p618, %s34, 1
        %s620 = smul.addr %s619, 2
        %s621 = scalar_lea.vmem %s10, %s620
        %p622 = pneg %p322
        %p623 = pneg %p319
        %p624 = pneg %p343
        %p625 = pneg %p340
        %p626 = pneg %p369
        %p627 = pneg %p366
        %s628 = smul.u32 2, %s33
        %p629 = scmp.lt.s32.totalorder %s628, 1
        %s630 = scalar_select %p629, %s628, 1
        %s631 = smul.addr %s630, 2
        %s632 = scalar_lea.vmem %s12, %s631
        %s633 = smul.u32 2, %s33
        %p634 = scmp.lt.s32.totalorder %s633, 1
        %s635 = scalar_select %p634, %s633, 1
        %s636 = smul.addr %s635, 2
        %s637 = smul.addr %s636, 8
        %s638 = scalar_lea.vmem %s0, %s637
        %s639 = smul.u32 2, %s33
        %p640 = scmp.lt.s32.totalorder %s34, 1
        %s641 = scalar_select %p640, %s34, 1
        %s642 = smul.addr %s641, 2
        %s643 = smul.addr %s642, 2
        %s644 = scalar_lea.vmem %s1, %s643
        %p645 = scmp.lt.s32.totalorder %s34, 1
        %s646 = scalar_select %p645, %s34, 1
        %s647 = smul.addr %s646, 6
        %s648 = scalar_lea.vmem %s3, %s647
        %p649 = scmp.lt.s32.totalorder %s34, 1
        %s650 = scalar_select %p649, %s34, 1
        %s651 = smul.addr %s650, 2
        %s652 = scalar_lea.vmem %s5, %s651
        %p653 = scmp.lt.s32.totalorder %s34, 1
        %s654 = scalar_select %p653, %s34, 1
        %s655 = smul.addr %s654, 2
        %s656 = smul.addr %s655, 2
        %s657 = scalar_lea.vmem %s6, %s656
        %p658 = scmp.lt.s32.totalorder %s34, 1
        %s659 = scalar_select %p658, %s34, 1
        %s660 = smul.addr %s659, 128
        %s661 = smul.addr %s660, 4
        %s662 = scalar_lea.vmem %s7, %s661
        %p663 = scmp.lt.s32.totalorder %s34, 1
        %s664 = scalar_select %p663, %s34, 1
        %s665 = smul.addr %s664, 4
        %s666 = scalar_lea.vmem %s8, %s665
        %p667 = scmp.lt.s32.totalorder %s34, 1
        %s668 = scalar_select %p667, %s34, 1
        %s669 = smul.addr %s668, 2
        %s670 = scalar_lea.vmem %s10, %s669
        %s671 = smul.u32 2, %s33
        %p672 = scmp.lt.s32.totalorder %s671, 1
        %s673 = scalar_select %p672, %s671, 1
        %s674 = smul.addr %s673, 2
        %s675 = scalar_lea.vmem %s12, %s674
        %s676 = smul.u32 2, %s33
        %p678 = scmp.eq.s32.totalorder %s34, 0
        // Predicated region
        $region81: #{clip_multimodal_forward.3} parent=67 // pred_check
          %p679 = pneg %p678
        $region82: #{clip_multimodal_forward.3} parent=67 // pred_check_branch
          %681 = sbr.rel (%p679) target = $region84
        $region83: #{clip_multimodal_forward.3} parent=67 // pred_region
          %v682 = vld [vmem:[%s638] sm:$0xff]
          %v683 = vld [vmem:[%s638 + $0x8] sm:$0xff]
          %v684 = vld [vmem:[%s638 + $0x10] sm:$0xff]
          %v685 = vld [vmem:[%s638 + $0x18] sm:$0xff]
          %686 = vst [vmem:[#allocation2] sm:$0xff] %v682
          %687 = vst [vmem:[#allocation2 + $0x8] sm:$0xff] %v683
          %688 = vst [vmem:[#allocation2 + $0x10] sm:$0xff] %v684
          %689 = vst [vmem:[#allocation2 + $0x18] sm:$0xff] %v685
          %v690 = vlaneseq
          %v691 = vand.u32 %v690, 127
          %vm692 = vcmp.lt.s32.totalorder %v691, 5
          %v693 = vsel %vm692, 0.0, -1e+09
          %vm694 = vcmask 64512
          %695 = vst.msk [vmem:[#allocation3] sm:$0xff] %vm694, %v693
          %696 = vst.msk [vmem:[#allocation3 + $0x8] sm:$0xff] %vm694, %v693
        $region84: #{clip_multimodal_forward.3} parent=67 // pred_fallthru
          _
        %v697 = vld [vmem:[#allocation2] sm:$0xff]
        %v698 = vld [vmem:[#allocation2 + $0x8] sm:$0xff]
        %v699 = vld [vmem:[#allocation2 + $0x10] sm:$0xff]
        %v700 = vld [vmem:[#allocation2 + $0x18] sm:$0xff]
        %v701 = vld [vmem:[#allocation3] sm:$0xff]
        %v702 = vld [vmem:[#allocation3 + $0x8] sm:$0xff]
        %v703 = vld [vmem:[%s644] ss:$2 sm:$0x3]
        %s704 = scalar_lea.vmem %s644, 1
        %v705 = vld [vmem:[%s704] ss:$2 sm:$0x3]
        %v706 = vadd.f32 %v697, %v698
        %707 = vadd.xlane.f32.xlu0 %v706
        %v708 = vpop.xlane.xlu0 %707
        %v709 = vadd.f32 %v699, %v700
        %710 = vadd.xlane.f32.xlu0 %v709
        %v711 = vpop.xlane.xlu0 %710
        %v712 = vrcp.pop 256.0
        %v713 = vmul.f32 %v708, %v712
        %v714 = vmul.f32 %v711, %v712
        %v715 = vsub.f32 %v697, %v713
        %v716 = vsub.f32 %v698, %v713
        %v717 = vsub.f32 %v699, %v714
        %v718 = vsub.f32 %v700, %v714
        %v719 = vmul.f32 %v715, %v715
        %v720 = vmul.f32 %v716, %v716
        %v721 = vmul.f32 %v717, %v717
        %v722 = vmul.f32 %v718, %v718
        %v723 = vadd.f32 %v719, %v720
        %724 = vadd.xlane.f32.xlu0 %v723
        %v725 = vpop.xlane.xlu0 %724
        %v726 = vadd.f32 %v721, %v722
        %727 = vadd.xlane.f32.xlu0 %v726
        %v728 = vpop.xlane.xlu0 %727
        %v729 = vmul.f32 %v725, %v712
        %v730 = vmul.f32 %v728, %v712
        %v731 = vadd.f32 %v729, 1e-05
        %v732 = vadd.f32 %v730, 1e-05
        %v733 = vrsqrt.pop %v731
        %v734 = vrsqrt.pop %v732
        %v735 = vmul.f32 %v715, %v733
        %v736 = vmul.f32 %v716, %v733
        %v737 = vmul.f32 %v717, %v734
        %v738 = vmul.f32 %v718, %v734
        %v740 = vlaneseq
        %v741 = vshrl.u32 %v740, 7
        %v742 = vsub.s32 0, %v741
        %v743 = vrot.slane %v703, %v742
        %v744 = vlaneseq
        %v745 = vshrl.u32 %v744, 7
        %v746 = vsub.s32 1, %v745
        %v747 = vrot.slane %v703, %v746
        %v750 = vmul.f32 %v735, %v743
        %v751 = vmul.f32 %v736, %v747
        %v752 = vmul.f32 %v737, %v743
        %v753 = vmul.f32 %v738, %v747
        %v755 = vlaneseq
        %v756 = vshrl.u32 %v755, 7
        %v757 = vsub.s32 0, %v756
        %v758 = vrot.slane %v705, %v757
        %v759 = vlaneseq
        %v760 = vshrl.u32 %v759, 7
        %v761 = vsub.s32 1, %v760
        %v762 = vrot.slane %v705, %v761
        %v765 = vadd.f32 %v750, %v758
        %v766 = vadd.f32 %v751, %v762
        %v767 = vadd.f32 %v752, %v758
        %v768 = vadd.f32 %v753, %v762
        %v769 = vpack.c.bf16 %v767, %v765
        %v770 = vpack.c.bf16 %v768, %v766
        %v771 = vld [vmem:[%s527] sm:$0xff]
        %v772 = vld [vmem:[%s527 + $0x8] sm:$0xff]
        %v773 = vld [vmem:[%s527 + $0x10] sm:$0xff]
        %v774 = vld [vmem:[%s527 + $0x18] sm:$0xff]
        %v775 = vld [vmem:[%s527 + $0x20] sm:$0xff]
        %v776 = vld [vmem:[%s527 + $0x28] sm:$0xff]
        %v777 = vld [vmem:[%s527 + $0x30] sm:$0xff]
        %v778 = vld [vmem:[%s527 + $0x38] sm:$0xff]
        %v779 = vld [vmem:[%s527 + $0x40] sm:$0xff]
        %v780 = vld [vmem:[%s527 + $0x48] sm:$0xff]
        %v781 = vld [vmem:[%s527 + $0x50] sm:$0xff]
        %v782 = vld [vmem:[%s527 + $0x58] sm:$0xff]
        %v783 = vld [vmem:[%s527 + $0x60] sm:$0xff]
        %v784 = vld [vmem:[%s527 + $0x68] sm:$0xff]
        %v785 = vld [vmem:[%s527 + $0x70] sm:$0xff]
        %v786 = vld [vmem:[%s527 + $0x78] sm:$0xff]
        %v787 = vld [vmem:[%s527 + $0x80] sm:$0xff]
        %v788 = vld [vmem:[%s527 + $0x88] sm:$0xff]
        %v789 = vld [vmem:[%s527 + $0x90] sm:$0xff]
        %v790 = vld [vmem:[%s527 + $0x98] sm:$0xff]
        %v791 = vld [vmem:[%s527 + $0xa0] sm:$0xff]
        %v792 = vld [vmem:[%s527 + $0xa8] sm:$0xff]
        %v793 = vld [vmem:[%s527 + $0xb0] sm:$0xff]
        %v794 = vld [vmem:[%s527 + $0xb8] sm:$0xff]
        %v795 = vld [vmem:[%s527 + $0xc0] sm:$0xff]
        %v796 = vld [vmem:[%s527 + $0xc8] sm:$0xff]
        %v797 = vld [vmem:[%s527 + $0xd0] sm:$0xff]
        %v798 = vld [vmem:[%s527 + $0xd8] sm:$0xff]
        %v799 = vld [vmem:[%s527 + $0xe0] sm:$0xff]
        %v800 = vld [vmem:[%s527 + $0xe8] sm:$0xff]
        %v801 = vld [vmem:[%s527 + $0xf0] sm:$0xff]
        %v802 = vld [vmem:[%s527 + $0xf8] sm:$0xff]
        %v803 = vld [vmem:[%s527 + $0x100] sm:$0xff]
        %v804 = vld [vmem:[%s527 + $0x108] sm:$0xff]
        %v805 = vld [vmem:[%s527 + $0x110] sm:$0xff]
        %v806 = vld [vmem:[%s527 + $0x118] sm:$0xff]
        %v807 = vld [vmem:[%s527 + $0x120] sm:$0xff]
        %v808 = vld [vmem:[%s527 + $0x128] sm:$0xff]
        %v809 = vld [vmem:[%s527 + $0x130] sm:$0xff]
        %v810 = vld [vmem:[%s527 + $0x138] sm:$0xff]
        %v811 = vld [vmem:[%s527 + $0x140] sm:$0xff]
        %v812 = vld [vmem:[%s527 + $0x148] sm:$0xff]
        %v813 = vld [vmem:[%s527 + $0x150] sm:$0xff]
        %v814 = vld [vmem:[%s527 + $0x158] sm:$0xff]
        %v815 = vld [vmem:[%s527 + $0x160] sm:$0xff]
        %v816 = vld [vmem:[%s527 + $0x168] sm:$0xff]
        %v817 = vld [vmem:[%s527 + $0x170] sm:$0xff]
        %v818 = vld [vmem:[%s527 + $0x178] sm:$0xff]
        %v819 = vld [vmem:[%s527 + $0x180] sm:$0xff]
        %v820 = vld [vmem:[%s527 + $0x188] sm:$0xff]
        %v821 = vld [vmem:[%s527 + $0x190] sm:$0xff]
        %v822 = vld [vmem:[%s527 + $0x198] sm:$0xff]
        %v823 = vld [vmem:[%s527 + $0x1a0] sm:$0xff]
        %v824 = vld [vmem:[%s527 + $0x1a8] sm:$0xff]
        %v825 = vld [vmem:[%s527 + $0x1b0] sm:$0xff]
        %v826 = vld [vmem:[%s527 + $0x1b8] sm:$0xff]
        %v827 = vld [vmem:[%s527 + $0x1c0] sm:$0xff]
        %v828 = vld [vmem:[%s527 + $0x1c8] sm:$0xff]
        %v829 = vld [vmem:[%s527 + $0x1d0] sm:$0xff]
        %v830 = vld [vmem:[%s527 + $0x1d8] sm:$0xff]
        %v831 = vld [vmem:[%s527 + $0x1e0] sm:$0xff]
        %v832 = vld [vmem:[%s527 + $0x1e8] sm:$0xff]
        %v833 = vld [vmem:[%s527 + $0x1f0] sm:$0xff]
        %v834 = vld [vmem:[%s527 + $0x1f8] sm:$0xff]
        %v835 = vld [vmem:[%s527 + $0x200] sm:$0xff]
        %v836 = vld [vmem:[%s527 + $0x208] sm:$0xff]
        %v837 = vld [vmem:[%s527 + $0x210] sm:$0xff]
        %v838 = vld [vmem:[%s527 + $0x218] sm:$0xff]
        %v839 = vld [vmem:[%s527 + $0x220] sm:$0xff]
        %v840 = vld [vmem:[%s527 + $0x228] sm:$0xff]
        %v841 = vld [vmem:[%s527 + $0x230] sm:$0xff]
        %v842 = vld [vmem:[%s527 + $0x238] sm:$0xff]
        %v843 = vld [vmem:[%s527 + $0x240] sm:$0xff]
        %v844 = vld [vmem:[%s527 + $0x248] sm:$0xff]
        %v845 = vld [vmem:[%s527 + $0x250] sm:$0xff]
        %v846 = vld [vmem:[%s527 + $0x258] sm:$0xff]
        %v847 = vld [vmem:[%s527 + $0x260] sm:$0xff]
        %v848 = vld [vmem:[%s527 + $0x268] sm:$0xff]
        %v849 = vld [vmem:[%s527 + $0x270] sm:$0xff]
        %v850 = vld [vmem:[%s527 + $0x278] sm:$0xff]
        %v851 = vld [vmem:[%s527 + $0x280] sm:$0xff]
        %v852 = vld [vmem:[%s527 + $0x288] sm:$0xff]
        %v853 = vld [vmem:[%s527 + $0x290] sm:$0xff]
        %v854 = vld [vmem:[%s527 + $0x298] sm:$0xff]
        %v855 = vld [vmem:[%s527 + $0x2a0] sm:$0xff]
        %v856 = vld [vmem:[%s527 + $0x2a8] sm:$0xff]
        %v857 = vld [vmem:[%s527 + $0x2b0] sm:$0xff]
        %v858 = vld [vmem:[%s527 + $0x2b8] sm:$0xff]
        %v859 = vld [vmem:[%s527 + $0x2c0] sm:$0xff]
        %v860 = vld [vmem:[%s527 + $0x2c8] sm:$0xff]
        %v861 = vld [vmem:[%s527 + $0x2d0] sm:$0xff]
        %v862 = vld [vmem:[%s527 + $0x2d8] sm:$0xff]
        %v863 = vld [vmem:[%s527 + $0x2e0] sm:$0xff]
        %v864 = vld [vmem:[%s527 + $0x2e8] sm:$0xff]
        %v865 = vld [vmem:[%s527 + $0x2f0] sm:$0xff]
        %v866 = vld [vmem:[%s527 + $0x2f8] sm:$0xff]
        %v867 = vld [vmem:[%s648] sm:$0x3f]
        %v869 = vlaneseq
        %v870 = vshrl.u32 %v869, 7
        %v871 = vsub.s32 0, %v870
        %v872 = vrot.slane %v867, %v871
        %v873 = vlaneseq
        %v874 = vshrl.u32 %v873, 7
        %v875 = vsub.s32 1, %v874
        %v876 = vrot.slane %v867, %v875
        %v877 = vlaneseq
        %v878 = vshrl.u32 %v877, 7
        %v879 = vsub.s32 2, %v878
        %v880 = vrot.slane %v867, %v879
        %v881 = vlaneseq
        %v882 = vshrl.u32 %v881, 7
        %v883 = vsub.s32 3, %v882
        %v884 = vrot.slane %v867, %v883
        %v885 = vlaneseq
        %v886 = vshrl.u32 %v885, 7
        %v887 = vsub.s32 4, %v886
        %v888 = vrot.slane %v867, %v887
        %v889 = vlaneseq
        %v890 = vshrl.u32 %v889, 7
        %v891 = vsub.s32 5, %v890
        %v892 = vrot.slane %v867, %v891
        %v995 = vunpack.c.l.b16 %v771
        %v996 = vunpack.c.h.b16 %v771
        %v997 = vunpack.c.l.b16 %v772
        %v998 = vunpack.c.h.b16 %v772
        %v999 = vunpack.c.l.b16 %v773
        %v1000 = vunpack.c.h.b16 %v773
        %v1001 = vunpack.c.l.b16 %v774
        %v1002 = vunpack.c.h.b16 %v774
        %v1003 = vunpack.c.l.b16 %v775
        %v1004 = vunpack.c.h.b16 %v775
        %v1005 = vunpack.c.l.b16 %v776
        %v1006 = vunpack.c.h.b16 %v776
        %v1007 = vunpack.c.l.b16 %v777
        %v1008 = vunpack.c.h.b16 %v777
        %v1009 = vunpack.c.l.b16 %v778
        %v1010 = vunpack.c.h.b16 %v778
        %v1011 = vunpack.c.l.b16 %v779
        %v1012 = vunpack.c.h.b16 %v779
        %v1013 = vunpack.c.l.b16 %v780
        %v1014 = vunpack.c.h.b16 %v780
        %v1015 = vunpack.c.l.b16 %v781
        %v1016 = vunpack.c.h.b16 %v781
        %v1017 = vunpack.c.l.b16 %v782
        %v1018 = vunpack.c.h.b16 %v782
        %v1019 = vunpack.c.l.b16 %v783
        %v1020 = vunpack.c.h.b16 %v783
        %v1021 = vunpack.c.l.b16 %v784
        %v1022 = vunpack.c.h.b16 %v784
        %v1023 = vunpack.c.l.b16 %v785
        %v1024 = vunpack.c.h.b16 %v785
        %v1025 = vunpack.c.l.b16 %v786
        %v1026 = vunpack.c.h.b16 %v786
        %v1027 = vunpack.c.l.b16 %v787
        %v1028 = vunpack.c.h.b16 %v787
        %v1029 = vunpack.c.l.b16 %v788
        %v1030 = vunpack.c.h.b16 %v788
        %v1031 = vunpack.c.l.b16 %v789
        %v1032 = vunpack.c.h.b16 %v789
        %v1033 = vunpack.c.l.b16 %v790
        %v1034 = vunpack.c.h.b16 %v790
        %v1035 = vunpack.c.l.b16 %v791
        %v1036 = vunpack.c.h.b16 %v791
        %v1037 = vunpack.c.l.b16 %v792
        %v1038 = vunpack.c.h.b16 %v792
        %v1039 = vunpack.c.l.b16 %v793
        %v1040 = vunpack.c.h.b16 %v793
        %v1041 = vunpack.c.l.b16 %v794
        %v1042 = vunpack.c.h.b16 %v794
        %v1043 = vunpack.c.l.b16 %v795
        %v1044 = vunpack.c.h.b16 %v795
        %v1045 = vunpack.c.l.b16 %v796
        %v1046 = vunpack.c.h.b16 %v796
        %v1047 = vunpack.c.l.b16 %v797
        %v1048 = vunpack.c.h.b16 %v797
        %v1049 = vunpack.c.l.b16 %v798
        %v1050 = vunpack.c.h.b16 %v798
        %v1051 = vunpack.c.l.b16 %v799
        %v1052 = vunpack.c.h.b16 %v799
        %v1053 = vunpack.c.l.b16 %v800
        %v1054 = vunpack.c.h.b16 %v800
        %v1055 = vunpack.c.l.b16 %v801
        %v1056 = vunpack.c.h.b16 %v801
        %v1057 = vunpack.c.l.b16 %v802
        %v1058 = vunpack.c.h.b16 %v802
        %v1059 = vunpack.c.l.b16 %v803
        %v1060 = vunpack.c.h.b16 %v803
        %v1061 = vunpack.c.l.b16 %v804
        %v1062 = vunpack.c.h.b16 %v804
        %v1063 = vunpack.c.l.b16 %v805
        %v1064 = vunpack.c.h.b16 %v805
        %v1065 = vunpack.c.l.b16 %v806
        %v1066 = vunpack.c.h.b16 %v806
        %v1067 = vunpack.c.l.b16 %v807
        %v1068 = vunpack.c.h.b16 %v807
        %v1069 = vunpack.c.l.b16 %v808
        %v1070 = vunpack.c.h.b16 %v808
        %v1071 = vunpack.c.l.b16 %v809
        %v1072 = vunpack.c.h.b16 %v809
        %v1073 = vunpack.c.l.b16 %v810
        %v1074 = vunpack.c.h.b16 %v810
        %v1075 = vunpack.c.l.b16 %v811
        %v1076 = vunpack.c.h.b16 %v811
        %v1077 = vunpack.c.l.b16 %v812
        %v1078 = vunpack.c.h.b16 %v812
        %v1079 = vunpack.c.l.b16 %v813
        %v1080 = vunpack.c.h.b16 %v813
        %v1081 = vunpack.c.l.b16 %v814
        %v1082 = vunpack.c.h.b16 %v814
        %v1083 = vunpack.c.l.b16 %v815
        %v1084 = vunpack.c.h.b16 %v815
        %v1085 = vunpack.c.l.b16 %v816
        %v1086 = vunpack.c.h.b16 %v816
        %v1087 = vunpack.c.l.b16 %v817
        %v1088 = vunpack.c.h.b16 %v817
        %v1089 = vunpack.c.l.b16 %v818
        %v1090 = vunpack.c.h.b16 %v818
        %v1091 = vunpack.c.l.b16 %v819
        %v1092 = vunpack.c.h.b16 %v819
        %v1093 = vunpack.c.l.b16 %v820
        %v1094 = vunpack.c.h.b16 %v820
        %v1095 = vunpack.c.l.b16 %v821
        %v1096 = vunpack.c.h.b16 %v821
        %v1097 = vunpack.c.l.b16 %v822
        %v1098 = vunpack.c.h.b16 %v822
        %v1099 = vunpack.c.l.b16 %v823
        %v1100 = vunpack.c.h.b16 %v823
        %v1101 = vunpack.c.l.b16 %v824
        %v1102 = vunpack.c.h.b16 %v824
        %v1103 = vunpack.c.l.b16 %v825
        %v1104 = vunpack.c.h.b16 %v825
        %v1105 = vunpack.c.l.b16 %v826
        %v1106 = vunpack.c.h.b16 %v826
        %v1107 = vunpack.c.l.b16 %v827
        %v1108 = vunpack.c.h.b16 %v827
        %v1109 = vunpack.c.l.b16 %v828
        %v1110 = vunpack.c.h.b16 %v828
        %v1111 = vunpack.c.l.b16 %v829
        %v1112 = vunpack.c.h.b16 %v829
        %v1113 = vunpack.c.l.b16 %v830
        %v1114 = vunpack.c.h.b16 %v830
        %v1115 = vunpack.c.l.b16 %v831
        %v1116 = vunpack.c.h.b16 %v831
        %v1117 = vunpack.c.l.b16 %v832
        %v1118 = vunpack.c.h.b16 %v832
        %v1119 = vunpack.c.l.b16 %v833
        %v1120 = vunpack.c.h.b16 %v833
        %v1121 = vunpack.c.l.b16 %v834
        %v1122 = vunpack.c.h.b16 %v834
        %v1123 = vunpack.c.l.b16 %v835
        %v1124 = vunpack.c.h.b16 %v835
        %v1125 = vunpack.c.l.b16 %v836
        %v1126 = vunpack.c.h.b16 %v836
        %v1127 = vunpack.c.l.b16 %v837
        %v1128 = vunpack.c.h.b16 %v837
        %v1129 = vunpack.c.l.b16 %v838
        %v1130 = vunpack.c.h.b16 %v838
        %v1131 = vunpack.c.l.b16 %v839
        %v1132 = vunpack.c.h.b16 %v839
        %v1133 = vunpack.c.l.b16 %v840
        %v1134 = vunpack.c.h.b16 %v840
        %v1135 = vunpack.c.l.b16 %v841
        %v1136 = vunpack.c.h.b16 %v841
        %v1137 = vunpack.c.l.b16 %v842
        %v1138 = vunpack.c.h.b16 %v842
        %v1139 = vunpack.c.l.b16 %v843
        %v1140 = vunpack.c.h.b16 %v843
        %v1141 = vunpack.c.l.b16 %v844
        %v1142 = vunpack.c.h.b16 %v844
        %v1143 = vunpack.c.l.b16 %v845
        %v1144 = vunpack.c.h.b16 %v845
        %v1145 = vunpack.c.l.b16 %v846
        %v1146 = vunpack.c.h.b16 %v846
        %v1147 = vunpack.c.l.b16 %v847
        %v1148 = vunpack.c.h.b16 %v847
        %v1149 = vunpack.c.l.b16 %v848
        %v1150 = vunpack.c.h.b16 %v848
        %v1151 = vunpack.c.l.b16 %v849
        %v1152 = vunpack.c.h.b16 %v849
        %v1153 = vunpack.c.l.b16 %v850
        %v1154 = vunpack.c.h.b16 %v850
        %v1155 = vunpack.c.l.b16 %v851
        %v1156 = vunpack.c.h.b16 %v851
        %v1157 = vunpack.c.l.b16 %v852
        %v1158 = vunpack.c.h.b16 %v852
        %v1159 = vunpack.c.l.b16 %v853
        %v1160 = vunpack.c.h.b16 %v853
        %v1161 = vunpack.c.l.b16 %v854
        %v1162 = vunpack.c.h.b16 %v854
        %v1163 = vunpack.c.l.b16 %v855
        %v1164 = vunpack.c.h.b16 %v855
        %v1165 = vunpack.c.l.b16 %v856
        %v1166 = vunpack.c.h.b16 %v856
        %v1167 = vunpack.c.l.b16 %v857
        %v1168 = vunpack.c.h.b16 %v857
        %v1169 = vunpack.c.l.b16 %v858
        %v1170 = vunpack.c.h.b16 %v858
        %v1171 = vunpack.c.l.b16 %v859
        %v1172 = vunpack.c.h.b16 %v859
        %v1173 = vunpack.c.l.b16 %v860
        %v1174 = vunpack.c.h.b16 %v860
        %v1175 = vunpack.c.l.b16 %v861
        %v1176 = vunpack.c.h.b16 %v861
        %v1177 = vunpack.c.l.b16 %v862
        %v1178 = vunpack.c.h.b16 %v862
        %v1179 = vunpack.c.l.b16 %v863
        %v1180 = vunpack.c.h.b16 %v863
        %v1181 = vunpack.c.l.b16 %v864
        %v1182 = vunpack.c.h.b16 %v864
        %v1183 = vunpack.c.l.b16 %v865
        %v1184 = vunpack.c.h.b16 %v865
        %v1185 = vunpack.c.l.b16 %v866
        %v1186 = vunpack.c.h.b16 %v866
        %v1187 = vpack.c.b16 %v1001, %v995
        %v1188 = vpack.c.b16 %v1002, %v996
        %v1189 = vpack.c.b16 %v1003, %v997
        %v1190 = vpack.c.b16 %v1004, %v998
        %v1191 = vpack.c.b16 %v1005, %v999
        %v1192 = vpack.c.b16 %v1006, %v1000
        %v1193 = vpack.c.b16 %v1013, %v1007
        %v1194 = vpack.c.b16 %v1014, %v1008
        %v1195 = vpack.c.b16 %v1015, %v1009
        %v1196 = vpack.c.b16 %v1016, %v1010
        %v1197 = vpack.c.b16 %v1017, %v1011
        %v1198 = vpack.c.b16 %v1018, %v1012
        %v1199 = vpack.c.b16 %v1025, %v1019
        %v1200 = vpack.c.b16 %v1026, %v1020
        %v1201 = vpack.c.b16 %v1027, %v1021
        %v1202 = vpack.c.b16 %v1028, %v1022
        %v1203 = vpack.c.b16 %v1029, %v1023
        %v1204 = vpack.c.b16 %v1030, %v1024
        %v1205 = vpack.c.b16 %v1037, %v1031
        %v1206 = vpack.c.b16 %v1038, %v1032
        %v1207 = vpack.c.b16 %v1039, %v1033
        %v1208 = vpack.c.b16 %v1040, %v1034
        %v1209 = vpack.c.b16 %v1041, %v1035
        %v1210 = vpack.c.b16 %v1042, %v1036
        %v1211 = vpack.c.b16 %v1049, %v1043
        %v1212 = vpack.c.b16 %v1050, %v1044
        %v1213 = vpack.c.b16 %v1051, %v1045
        %v1214 = vpack.c.b16 %v1052, %v1046
        %v1215 = vpack.c.b16 %v1053, %v1047
        %v1216 = vpack.c.b16 %v1054, %v1048
        %v1217 = vpack.c.b16 %v1061, %v1055
        %v1218 = vpack.c.b16 %v1062, %v1056
        %v1219 = vpack.c.b16 %v1063, %v1057
        %v1220 = vpack.c.b16 %v1064, %v1058
        %v1221 = vpack.c.b16 %v1065, %v1059
        %v1222 = vpack.c.b16 %v1066, %v1060
        %v1223 = vpack.c.b16 %v1073, %v1067
        %v1224 = vpack.c.b16 %v1074, %v1068
        %v1225 = vpack.c.b16 %v1075, %v1069
        %v1226 = vpack.c.b16 %v1076, %v1070
        %v1227 = vpack.c.b16 %v1077, %v1071
        %v1228 = vpack.c.b16 %v1078, %v1072
        %v1229 = vpack.c.b16 %v1085, %v1079
        %v1230 = vpack.c.b16 %v1086, %v1080
        %v1231 = vpack.c.b16 %v1087, %v1081
        %v1232 = vpack.c.b16 %v1088, %v1082
        %v1233 = vpack.c.b16 %v1089, %v1083
        %v1234 = vpack.c.b16 %v1090, %v1084
        %v1235 = vpack.c.b16 %v1097, %v1091
        %v1236 = vpack.c.b16 %v1098, %v1092
        %v1237 = vpack.c.b16 %v1099, %v1093
        %v1238 = vpack.c.b16 %v1100, %v1094
        %v1239 = vpack.c.b16 %v1101, %v1095
        %v1240 = vpack.c.b16 %v1102, %v1096
        %v1241 = vpack.c.b16 %v1109, %v1103
        %v1242 = vpack.c.b16 %v1110, %v1104
        %v1243 = vpack.c.b16 %v1111, %v1105
        %v1244 = vpack.c.b16 %v1112, %v1106
        %v1245 = vpack.c.b16 %v1113, %v1107
        %v1246 = vpack.c.b16 %v1114, %v1108
        %v1247 = vpack.c.b16 %v1121, %v1115
        %v1248 = vpack.c.b16 %v1122, %v1116
        %v1249 = vpack.c.b16 %v1123, %v1117
        %v1250 = vpack.c.b16 %v1124, %v1118
        %v1251 = vpack.c.b16 %v1125, %v1119
        %v1252 = vpack.c.b16 %v1126, %v1120
        %v1253 = vpack.c.b16 %v1133, %v1127
        %v1254 = vpack.c.b16 %v1134, %v1128
        %v1255 = vpack.c.b16 %v1135, %v1129
        %v1256 = vpack.c.b16 %v1136, %v1130
        %v1257 = vpack.c.b16 %v1137, %v1131
        %v1258 = vpack.c.b16 %v1138, %v1132
        %v1259 = vpack.c.b16 %v1145, %v1139
        %v1260 = vpack.c.b16 %v1146, %v1140
        %v1261 = vpack.c.b16 %v1147, %v1141
        %v1262 = vpack.c.b16 %v1148, %v1142
        %v1263 = vpack.c.b16 %v1149, %v1143
        %v1264 = vpack.c.b16 %v1150, %v1144
        %v1265 = vpack.c.b16 %v1157, %v1151
        %v1266 = vpack.c.b16 %v1158, %v1152
        %v1267 = vpack.c.b16 %v1159, %v1153
        %v1268 = vpack.c.b16 %v1160, %v1154
        %v1269 = vpack.c.b16 %v1161, %v1155
        %v1270 = vpack.c.b16 %v1162, %v1156
        %v1271 = vpack.c.b16 %v1169, %v1163
        %v1272 = vpack.c.b16 %v1170, %v1164
        %v1273 = vpack.c.b16 %v1171, %v1165
        %v1274 = vpack.c.b16 %v1172, %v1166
        %v1275 = vpack.c.b16 %v1173, %v1167
        %v1276 = vpack.c.b16 %v1174, %v1168
        %v1277 = vpack.c.b16 %v1181, %v1175
        %v1278 = vpack.c.b16 %v1182, %v1176
        %v1279 = vpack.c.b16 %v1183, %v1177
        %v1280 = vpack.c.b16 %v1184, %v1178
        %v1281 = vpack.c.b16 %v1185, %v1179
        %v1282 = vpack.c.b16 %v1186, %v1180
        %1379 = vmatprep.subr.bf16.mxu0 %v1230
        %1380 = vmatpush1.bf16.msra.mxu0 %v1229
        %1381 = vmatprep.subr.bf16.mxu0 %v1224
        %1382 = vmatpush1.bf16.msra.mxu0 %v1223
        %1383 = vmatprep.subr.bf16.mxu0 %v1218
        %1384 = vmatpush1.bf16.msra.mxu0 %v1217
        %1385 = vmatprep.subr.bf16.mxu0 %v1212
        %1386 = vmatpush1.bf16.msra.mxu0 %v1211
        %1387 = vmatprep.subr.bf16.mxu0 %v1206
        %1388 = vmatpush1.bf16.msra.mxu0 %v1205
        %1389 = vmatprep.subr.bf16.mxu0 %v1200
        %1390 = vmatpush1.bf16.msra.mxu0 %v1199
        %1391 = vmatprep.subr.bf16.mxu0 %v1194
        %1392 = vmatpush1.bf16.msra.mxu0 %v1193
        %1393 = vmatprep.subr.bf16.mxu0 %v1188
        %1394 = vmatpush1.bf16.msra.mxu0 %v1187
        %1395 = vmatprep.subr.bf16.mxu0 %v1278
        %1396 = vmatpush2.bf16.msra.mxu0 %v1277
        %1397 = vmatprep.subr.bf16.mxu0 %v1272
        %1398 = vmatpush2.bf16.msra.mxu0 %v1271
        %1399 = vmatprep.subr.bf16.mxu0 %v1266
        %1400 = vmatpush2.bf16.msra.mxu0 %v1265
        %1401 = vmatprep.subr.bf16.mxu0 %v1260
        %1402 = vmatpush2.bf16.msra.mxu0 %v1259
        %1403 = vmatprep.subr.bf16.mxu0 %v1254
        %1404 = vmatpush2.bf16.msra.mxu0 %v1253
        %1405 = vmatprep.subr.bf16.mxu0 %v1248
        %1406 = vmatpush2.bf16.msra.mxu0 %v1247
        %1407 = vmatprep.subr.bf16.mxu0 %v1242
        %1408 = vmatpush2.bf16.msra.mxu0 %v1241
        %1409 = vmatprep.subr.bf16.mxu0 %v1236
        %1410 = vmatpush2.bf16.msra.mxu0 %v1235
        %1411 = vmatprep.mubr.bf16.mxu0 %v770
        %1412 = vmatmul.mubr.bf16.gmra.mxu0 %v769
        %v1413 = vpop.f32.mrf.mxu0
        %v1414 = vadd.f32 %v872, %v1413
        %v1415 = vpop.f32.mrf.mxu0
        %v1416 = vadd.f32 %v876, %v1415
        %v1417 = vpop.f32.mrf.mxu0
        %v1418 = vadd.f32 %v872, %v1417
        %v1419 = vpop.f32.mrf.mxu0
        %v1420 = vadd.f32 %v876, %v1419
        %1421 = vdwg.mxu0
        %1422 = vmatprep.subr.bf16.mxu0 %v1232
        %1423 = vmatpush1.bf16.msra.mxu0 %v1231
        %1424 = vmatprep.subr.bf16.mxu0 %v1226
        %1425 = vmatpush1.bf16.msra.mxu0 %v1225
        %1426 = vmatprep.subr.bf16.mxu0 %v1220
        %1427 = vmatpush1.bf16.msra.mxu0 %v1219
        %1428 = vmatprep.subr.bf16.mxu0 %v1214
        %1429 = vmatpush1.bf16.msra.mxu0 %v1213
        %1430 = vmatprep.subr.bf16.mxu0 %v1208
        %1431 = vmatpush1.bf16.msra.mxu0 %v1207
        %1432 = vmatprep.subr.bf16.mxu0 %v1202
        %1433 = vmatpush1.bf16.msra.mxu0 %v1201
        %1434 = vmatprep.subr.bf16.mxu0 %v1196
        %1435 = vmatpush1.bf16.msra.mxu0 %v1195
        %1436 = vmatprep.subr.bf16.mxu0 %v1190
        %1437 = vmatpush1.bf16.msra.mxu0 %v1189
        %1438 = vmatprep.subr.bf16.mxu0 %v1280
        %1439 = vmatpush2.bf16.msra.mxu0 %v1279
        %1440 = vmatprep.subr.bf16.mxu0 %v1274
        %1441 = vmatpush2.bf16.msra.mxu0 %v1273
        %1442 = vmatprep.subr.bf16.mxu0 %v1268
        %1443 = vmatpush2.bf16.msra.mxu0 %v1267
        %1444 = vmatprep.subr.bf16.mxu0 %v1262
        %1445 = vmatpush2.bf16.msra.mxu0 %v1261
        %1446 = vmatprep.subr.bf16.mxu0 %v1256
        %1447 = vmatpush2.bf16.msra.mxu0 %v1255
        %1448 = vmatprep.subr.bf16.mxu0 %v1250
        %1449 = vmatpush2.bf16.msra.mxu0 %v1249
        %1450 = vmatprep.subr.bf16.mxu0 %v1244
        %1451 = vmatpush2.bf16.msra.mxu0 %v1243
        %1452 = vmatprep.subr.bf16.mxu0 %v1238
        %1453 = vmatpush2.bf16.msra.mxu0 %v1237
        %1454 = vmatprep.mubr.bf16.mxu0 %v770
        %1455 = vmatmul.mubr.bf16.gmra.mxu0 %v769
        %v1456 = vpop.f32.mrf.mxu0
        %v1457 = vadd.f32 %v880, %v1456
        %v1458 = vpop.f32.mrf.mxu0
        %v1459 = vadd.f32 %v884, %v1458
        %v1460 = vpop.f32.mrf.mxu0
        %v1461 = vadd.f32 %v880, %v1460
        %v1462 = vpop.f32.mrf.mxu0
        %v1463 = vadd.f32 %v884, %v1462
        %1464 = vdwg.mxu0
        %1465 = vmatprep.subr.bf16.mxu0 %v1234
        %1466 = vmatpush1.bf16.msra.mxu0 %v1233
        %1467 = vmatprep.subr.bf16.mxu0 %v1228
        %1468 = vmatpush1.bf16.msra.mxu0 %v1227
        %1469 = vmatprep.subr.bf16.mxu0 %v1222
        %1470 = vmatpush1.bf16.msra.mxu0 %v1221
        %1471 = vmatprep.subr.bf16.mxu0 %v1216
        %1472 = vmatpush1.bf16.msra.mxu0 %v1215
        %1473 = vmatprep.subr.bf16.mxu0 %v1210
        %1474 = vmatpush1.bf16.msra.mxu0 %v1209
        %1475 = vmatprep.subr.bf16.mxu0 %v1204
        %1476 = vmatpush1.bf16.msra.mxu0 %v1203
        %1477 = vmatprep.subr.bf16.mxu0 %v1198
        %1478 = vmatpush1.bf16.msra.mxu0 %v1197
        %1479 = vmatprep.subr.bf16.mxu0 %v1192
        %1480 = vmatpush1.bf16.msra.mxu0 %v1191
        %1481 = vmatprep.subr.bf16.mxu0 %v1282
        %1482 = vmatpush2.bf16.msra.mxu0 %v1281
        %1483 = vmatprep.subr.bf16.mxu0 %v1276
        %1484 = vmatpush2.bf16.msra.mxu0 %v1275
        %1485 = vmatprep.subr.bf16.mxu0 %v1270
        %1486 = vmatpush2.bf16.msra.mxu0 %v1269
        %1487 = vmatprep.subr.bf16.mxu0 %v1264
        %1488 = vmatpush2.bf16.msra.mxu0 %v1263
        %1489 = vmatprep.subr.bf16.mxu0 %v1258
        %1490 = vmatpush2.bf16.msra.mxu0 %v1257
        %1491 = vmatprep.subr.bf16.mxu0 %v1252
        %1492 = vmatpush2.bf16.msra.mxu0 %v1251
        %1493 = vmatprep.subr.bf16.mxu0 %v1246
        %1494 = vmatpush2.bf16.msra.mxu0 %v1245
        %1495 = vmatprep.subr.bf16.mxu0 %v1240
        %1496 = vmatpush2.bf16.msra.mxu0 %v1239
        %1497 = vmatprep.mubr.bf16.mxu0 %v770
        %1498 = vmatmul.mubr.bf16.gmra.mxu0 %v769
        %v1499 = vpop.f32.mrf.mxu0
        %v1500 = vadd.f32 %v888, %v1499
        %v1501 = vpop.f32.mrf.mxu0
        %v1502 = vadd.f32 %v892, %v1501
        %v1503 = vpop.f32.mrf.mxu0
        %v1504 = vadd.f32 %v888, %v1503
        %v1505 = vpop.f32.mrf.mxu0
        %v1506 = vadd.f32 %v892, %v1505
        %1507 = vdwg.mxu0
        %v1508 = vmul.f32 %v1414, 0.088388346
        %v1509 = vmul.f32 %v1418, 0.088388346
        %v1510 = vpack.c.bf16 %v1508, %v1508
        %v1511 = vpack.c.bf16 %v1509, %v1509
        %v1512 = vpack.c.bf16 %v1457, %v1457
        %v1513 = vpack.c.bf16 %v1461, %v1461
        %1514 = vmatprep.subr.bf16.mxu0 0
        %1515 = vmatpush1.bf16.xpose.msra.mxu0 0
        %1516 = vmatprep.subr.bf16.mxu0 0
        %1517 = vmatpush1.bf16.xpose.msra.mxu0 0
        %1518 = vmatprep.subr.bf16.mxu0 0
        %1519 = vmatpush1.bf16.xpose.msra.mxu0 0
        %1520 = vmatprep.subr.bf16.mxu0 0
        %1521 = vmatpush1.bf16.xpose.msra.mxu0 0
        %1522 = vmatprep.subr.bf16.mxu0 0
        %1523 = vmatpush1.bf16.xpose.msra.mxu0 0
        %1524 = vmatprep.subr.bf16.mxu0 0
        %1525 = vmatpush1.bf16.xpose.msra.mxu0 0
        %1526 = vmatprep.subr.bf16.mxu0 0
        %1527 = vmatpush1.bf16.xpose.msra.mxu0 0
        %1528 = vmatprep.subr.bf16.mxu0 0
        %1529 = vmatpush1.bf16.xpose.msra.mxu0 %v1512
        %1530 = vmatprep.subr.bf16.mxu0 0
        %1531 = vmatpush2.bf16.xpose.msra.mxu0 0
        %1532 = vmatprep.subr.bf16.mxu0 0
        %1533 = vmatpush2.bf16.xpose.msra.mxu0 0
        %1534 = vmatprep.subr.bf16.mxu0 0
        %1535 = vmatpush2.bf16.xpose.msra.mxu0 0
        %1536 = vmatprep.subr.bf16.mxu0 0
        %1537 = vmatpush2.bf16.xpose.msra.mxu0 0
        %1538 = vmatprep.subr.bf16.mxu0 0
        %1539 = vmatpush2.bf16.xpose.msra.mxu0 0
        %1540 = vmatprep.subr.bf16.mxu0 0
        %1541 = vmatpush2.bf16.xpose.msra.mxu0 0
        %1542 = vmatprep.subr.bf16.mxu0 0
        %1543 = vmatpush2.bf16.xpose.msra.mxu0 0
        %1544 = vmatprep.subr.bf16.mxu0 0
        %1545 = vmatpush2.bf16.xpose.msra.mxu0 0
        %1546 = vmatprep.mubr.bf16.mxu0 0
        %1547 = vmatmul.mubr.bf16.gmra.mxu0 %v1510
        %v1548 = vpop.f32.mrf.mxu0
        %v1549 = vadd.f32 %v701, %v1548
        %v1550 = vpop.f32.mrf.mxu0
        %v1551 = vpop.f32.mrf.mxu0
        %v1552 = vpop.f32.mrf.mxu0
        %1553 = vdwg.mxu0
        %1554 = vmatprep.subr.bf16.mxu0 0
        %1555 = vmatpush1.bf16.xpose.msra.mxu0 0
        %1556 = vmatprep.subr.bf16.mxu0 0
        %1557 = vmatpush1.bf16.xpose.msra.mxu0 0
        %1558 = vmatprep.subr.bf16.mxu0 0
        %1559 = vmatpush1.bf16.xpose.msra.mxu0 0
        %1560 = vmatprep.subr.bf16.mxu0 0
        %1561 = vmatpush1.bf16.xpose.msra.mxu0 0
        %1562 = vmatprep.subr.bf16.mxu0 0
        %1563 = vmatpush1.bf16.xpose.msra.mxu0 0
        %1564 = vmatprep.subr.bf16.mxu0 0
        %1565 = vmatpush1.bf16.xpose.msra.mxu0 0
        %1566 = vmatprep.subr.bf16.mxu0 0
        %1567 = vmatpush1.bf16.xpose.msra.mxu0 0
        %1568 = vmatprep.subr.bf16.mxu0 0
        %1569 = vmatpush1.bf16.xpose.msra.mxu0 %v1513
        %1570 = vmatprep.subr.bf16.mxu0 0
        %1571 = vmatpush2.bf16.xpose.msra.mxu0 0
        %1572 = vmatprep.subr.bf16.mxu0 0
        %1573 = vmatpush2.bf16.xpose.msra.mxu0 0
        %1574 = vmatprep.subr.bf16.mxu0 0
        %1575 = vmatpush2.bf16.xpose.msra.mxu0 0
        %1576 = vmatprep.subr.bf16.mxu0 0
        %1577 = vmatpush2.bf16.xpose.msra.mxu0 0
        %1578 = vmatprep.subr.bf16.mxu0 0
        %1579 = vmatpush2.bf16.xpose.msra.mxu0 0
        %1580 = vmatprep.subr.bf16.mxu0 0
        %1581 = vmatpush2.bf16.xpose.msra.mxu0 0
        %1582 = vmatprep.subr.bf16.mxu0 0
        %1583 = vmatpush2.bf16.xpose.msra.mxu0 0
        %1584 = vmatprep.subr.bf16.mxu0 0
        %1585 = vmatpush2.bf16.xpose.msra.mxu0 0
        %1586 = vmatprep.mubr.bf16.mxu0 0
        %1587 = vmatmul.mubr.bf16.gmra.mxu0 %v1511
        %v1588 = vpop.f32.mrf.mxu0
        %v1589 = vadd.f32 %v702, %v1588
        %v1590 = vpop.f32.mrf.mxu0
        %v1591 = vpop.f32.mrf.mxu0
        %v1592 = vpop.f32.mrf.mxu0
        %1593 = vdwg.mxu0
        %vm1594 = vcmask 64512
        %v1595 = vsel %vm1594, %v1549, -inf
        %1596 = vmax.xlane.f32.xlu0 %v1595
        %v1597 = vpop.xlane.xlu0 %1596
        %v1598 = vsel %vm1594, %v1589, -inf
        %1599 = vmax.xlane.f32.xlu0 %v1598
        %v1600 = vpop.xlane.xlu0 %1599
        %v1601 = vsub.f32 %v1549, %v1597
        %v1602 = vsub.f32 %v1589, %v1600
        %v1603 = vmul.f32 %v1601, 1.442695
        %v1604 = vpow.pop %v1603
        %v1605 = vmul.f32 %v1602, 1.442695
        %v1606 = vpow.pop %v1605
        %v1607 = vsel %vm1594, %v1604, 0.0
        %1608 = vadd.xlane.f32.xlu0 %v1607
        %v1609 = vpop.xlane.xlu0 %1608
        %v1610 = vsel %vm1594, %v1606, 0.0
        %1611 = vadd.xlane.f32.xlu0 %v1610
        %v1612 = vpop.xlane.xlu0 %1611
        %v1613 = vrcp.pop %v1609
        %v1614 = vrcp.pop %v1612
        %v1615 = vmul.f32 %v1604, %v1613
        %v1616 = vmul.f32 %v1606, %v1614
        %v1617 = vpack.c.bf16 %v1615, %v1615
        %v1618 = vpack.c.bf16 %v1616, %v1616
        %v1619 = vpack.c.bf16 %v1500, %v1500
        %v1620 = vpack.c.bf16 %v1504, %v1504
        %v1622 = vsel %vm1594, %v1617, 0
        %vm1624 = vcmask 1043456
        %v1626 = vsel %vm1624, %v1619, 0
        %1628 = vmatprep.subr.bf16.mxu0 0
        %1629 = vmatpush1.bf16.msra.mxu0 0
        %1630 = vmatprep.subr.bf16.mxu0 0
        %1631 = vmatpush1.bf16.msra.mxu0 0
        %1632 = vmatprep.subr.bf16.mxu0 0
        %1633 = vmatpush1.bf16.msra.mxu0 0
        %1634 = vmatprep.subr.bf16.mxu0 0
        %1635 = vmatpush1.bf16.msra.mxu0 0
        %1636 = vmatprep.subr.bf16.mxu0 0
        %1637 = vmatpush1.bf16.msra.mxu0 0
        %1638 = vmatprep.subr.bf16.mxu0 0
        %1639 = vmatpush1.bf16.msra.mxu0 0
        %1640 = vmatprep.subr.bf16.mxu0 0
        %1641 = vmatpush1.bf16.msra.mxu0 0
        %1642 = vmatprep.subr.bf16.mxu0 0
        %1643 = vmatpush1.bf16.msra.mxu0 %v1626
        %1644 = vmatprep.subr.bf16.mxu0 0
        %1645 = vmatpush2.bf16.msra.mxu0 0
        %1646 = vmatprep.subr.bf16.mxu0 0
        %1647 = vmatpush2.bf16.msra.mxu0 0
        %1648 = vmatprep.subr.bf16.mxu0 0
        %1649 = vmatpush2.bf16.msra.mxu0 0
        %1650 = vmatprep.subr.bf16.mxu0 0
        %1651 = vmatpush2.bf16.msra.mxu0 0
        %1652 = vmatprep.subr.bf16.mxu0 0
        %1653 = vmatpush2.bf16.msra.mxu0 0
        %1654 = vmatprep.subr.bf16.mxu0 0
        %1655 = vmatpush2.bf16.msra.mxu0 0
        %1656 = vmatprep.subr.bf16.mxu0 0
        %1657 = vmatpush2.bf16.msra.mxu0 0
        %1658 = vmatprep.subr.bf16.mxu0 0
        %1659 = vmatpush2.bf16.msra.mxu0 0
        %1660 = vmatprep.mubr.bf16.mxu0 0
        %1661 = vmatmul.mubr.bf16.gmra.mxu0 %v1622
        %v1662 = vpop.f32.mrf.mxu0
        %v1663 = vadd.f32 0.0, %v1662
        %v1664 = vpop.f32.mrf.mxu0
        %v1665 = vpop.f32.mrf.mxu0
        %v1666 = vpop.f32.mrf.mxu0
        %1667 = vdwg.mxu0
        %v1669 = vsel %vm1594, %v1618, 0
        %v1672 = vsel %vm1624, %v1620, 0
        %1674 = vmatprep.subr.bf16.mxu0 0
        %1675 = vmatpush1.bf16.msra.mxu0 0
        %1676 = vmatprep.subr.bf16.mxu0 0
        %1677 = vmatpush1.bf16.msra.mxu0 0
        %1678 = vmatprep.subr.bf16.mxu0 0
        %1679 = vmatpush1.bf16.msra.mxu0 0
        %1680 = vmatprep.subr.bf16.mxu0 0
        %1681 = vmatpush1.bf16.msra.mxu0 0
        %1682 = vmatprep.subr.bf16.mxu0 0
        %1683 = vmatpush1.bf16.msra.mxu0 0
        %1684 = vmatprep.subr.bf16.mxu0 0
        %1685 = vmatpush1.bf16.msra.mxu0 0
        %1686 = vmatprep.subr.bf16.mxu0 0
        %1687 = vmatpush1.bf16.msra.mxu0 0
        %1688 = vmatprep.subr.bf16.mxu0 0
        %1689 = vmatpush1.bf16.msra.mxu0 %v1672
        %1690 = vmatprep.subr.bf16.mxu0 0
        %1691 = vmatpush2.bf16.msra.mxu0 0
        %1692 = vmatprep.subr.bf16.mxu0 0
        %1693 = vmatpush2.bf16.msra.mxu0 0
        %1694 = vmatprep.subr.bf16.mxu0 0
        %1695 = vmatpush2.bf16.msra.mxu0 0
        %1696 = vmatprep.subr.bf16.mxu0 0
        %1697 = vmatpush2.bf16.msra.mxu0 0
        %1698 = vmatprep.subr.bf16.mxu0 0
        %1699 = vmatpush2.bf16.msra.mxu0 0
        %1700 = vmatprep.subr.bf16.mxu0 0
        %1701 = vmatpush2.bf16.msra.mxu0 0
        %1702 = vmatprep.subr.bf16.mxu0 0
        %1703 = vmatpush2.bf16.msra.mxu0 0
        %1704 = vmatprep.subr.bf16.mxu0 0
        %1705 = vmatpush2.bf16.msra.mxu0 0
        %1706 = vmatprep.mubr.bf16.mxu0 0
        %1707 = vmatmul.mubr.bf16.gmra.mxu0 %v1669
        %v1708 = vpop.f32.mrf.mxu0
        %v1709 = vadd.f32 0.0, %v1708
        %v1710 = vpop.f32.mrf.mxu0
        %v1711 = vpop.f32.mrf.mxu0
        %v1712 = vpop.f32.mrf.mxu0
        %1713 = vdwg.mxu0
        %v1714 = vmul.f32 %v1416, 0.088388346
        %v1715 = vmul.f32 %v1420, 0.088388346
        %v1716 = vpack.c.bf16 %v1714, %v1714
        %v1717 = vpack.c.bf16 %v1715, %v1715
        %v1718 = vpack.c.bf16 %v1459, %v1459
        %v1719 = vpack.c.bf16 %v1463, %v1463
        %1720 = vmatprep.subr.bf16.mxu0 0
        %1721 = vmatpush1.bf16.xpose.msra.mxu0 0
        %1722 = vmatprep.subr.bf16.mxu0 0
        %1723 = vmatpush1.bf16.xpose.msra.mxu0 0
        %1724 = vmatprep.subr.bf16.mxu0 0
        %1725 = vmatpush1.bf16.xpose.msra.mxu0 0
        %1726 = vmatprep.subr.bf16.mxu0 0
        %1727 = vmatpush1.bf16.xpose.msra.mxu0 0
        %1728 = vmatprep.subr.bf16.mxu0 0
        %1729 = vmatpush1.bf16.xpose.msra.mxu0 0
        %1730 = vmatprep.subr.bf16.mxu0 0
        %1731 = vmatpush1.bf16.xpose.msra.mxu0 0
        %1732 = vmatprep.subr.bf16.mxu0 0
        %1733 = vmatpush1.bf16.xpose.msra.mxu0 0
        %1734 = vmatprep.subr.bf16.mxu0 0
        %1735 = vmatpush1.bf16.xpose.msra.mxu0 %v1718
        %1736 = vmatprep.subr.bf16.mxu0 0
        %1737 = vmatpush2.bf16.xpose.msra.mxu0 0
        %1738 = vmatprep.subr.bf16.mxu0 0
        %1739 = vmatpush2.bf16.xpose.msra.mxu0 0
        %1740 = vmatprep.subr.bf16.mxu0 0
        %1741 = vmatpush2.bf16.xpose.msra.mxu0 0
        %1742 = vmatprep.subr.bf16.mxu0 0
        %1743 = vmatpush2.bf16.xpose.msra.mxu0 0
        %1744 = vmatprep.subr.bf16.mxu0 0
        %1745 = vmatpush2.bf16.xpose.msra.mxu0 0
        %1746 = vmatprep.subr.bf16.mxu0 0
        %1747 = vmatpush2.bf16.xpose.msra.mxu0 0
        %1748 = vmatprep.subr.bf16.mxu0 0
        %1749 = vmatpush2.bf16.xpose.msra.mxu0 0
        %1750 = vmatprep.subr.bf16.mxu0 0
        %1751 = vmatpush2.bf16.xpose.msra.mxu0 0
        %1752 = vmatprep.mubr.bf16.mxu0 0
        %1753 = vmatmul.mubr.bf16.gmra.mxu0 %v1716
        %v1754 = vpop.f32.mrf.mxu0
        %v1755 = vadd.f32 %v701, %v1754
        %v1756 = vpop.f32.mrf.mxu0
        %v1757 = vpop.f32.mrf.mxu0
        %v1758 = vpop.f32.mrf.mxu0
        %1759 = vdwg.mxu0
        %1760 = vmatprep.subr.bf16.mxu0 0
        %1761 = vmatpush1.bf16.xpose.msra.mxu0 0
        %1762 = vmatprep.subr.bf16.mxu0 0
        %1763 = vmatpush1.bf16.xpose.msra.mxu0 0
        %1764 = vmatprep.subr.bf16.mxu0 0
        %1765 = vmatpush1.bf16.xpose.msra.mxu0 0
        %1766 = vmatprep.subr.bf16.mxu0 0
        %1767 = vmatpush1.bf16.xpose.msra.mxu0 0
        %1768 = vmatprep.subr.bf16.mxu0 0
        %1769 = vmatpush1.bf16.xpose.msra.mxu0 0
        %1770 = vmatprep.subr.bf16.mxu0 0
        %1771 = vmatpush1.bf16.xpose.msra.mxu0 0
        %1772 = vmatprep.subr.bf16.mxu0 0
        %1773 = vmatpush1.bf16.xpose.msra.mxu0 0
        %1774 = vmatprep.subr.bf16.mxu0 0
        %1775 = vmatpush1.bf16.xpose.msra.mxu0 %v1719
        %1776 = vmatprep.subr.bf16.mxu0 0
        %1777 = vmatpush2.bf16.xpose.msra.mxu0 0
        %1778 = vmatprep.subr.bf16.mxu0 0
        %1779 = vmatpush2.bf16.xpose.msra.mxu0 0
        %1780 = vmatprep.subr.bf16.mxu0 0
        %1781 = vmatpush2.bf16.xpose.msra.mxu0 0
        %1782 = vmatprep.subr.bf16.mxu0 0
        %1783 = vmatpush2.bf16.xpose.msra.mxu0 0
        %1784 = vmatprep.subr.bf16.mxu0 0
        %1785 = vmatpush2.bf16.xpose.msra.mxu0 0
        %1786 = vmatprep.subr.bf16.mxu0 0
        %1787 = vmatpush2.bf16.xpose.msra.mxu0 0
        %1788 = vmatprep.subr.bf16.mxu0 0
        %1789 = vmatpush2.bf16.xpose.msra.mxu0 0
        %1790 = vmatprep.subr.bf16.mxu0 0
        %1791 = vmatpush2.bf16.xpose.msra.mxu0 0
        %1792 = vmatprep.mubr.bf16.mxu0 0
        %1793 = vmatmul.mubr.bf16.gmra.mxu0 %v1717
        %v1794 = vpop.f32.mrf.mxu0
        %v1795 = vadd.f32 %v702, %v1794
        %v1796 = vpop.f32.mrf.mxu0
        %v1797 = vpop.f32.mrf.mxu0
        %v1798 = vpop.f32.mrf.mxu0
        %1799 = vdwg.mxu0
        %v1800 = vsel %vm1594, %v1755, -inf
        %1801 = vmax.xlane.f32.xlu0 %v1800
        %v1802 = vpop.xlane.xlu0 %1801
        %v1803 = vsel %vm1594, %v1795, -inf
        %1804 = vmax.xlane.f32.xlu0 %v1803
        %v1805 = vpop.xlane.xlu0 %1804
        %v1806 = vsub.f32 %v1755, %v1802
        %v1807 = vsub.f32 %v1795, %v1805
        %v1808 = vmul.f32 %v1806, 1.442695
        %v1809 = vpow.pop %v1808
        %v1810 = vmul.f32 %v1807, 1.442695
        %v1811 = vpow.pop %v1810
        %v1812 = vsel %vm1594, %v1809, 0.0
        %1813 = vadd.xlane.f32.xlu0 %v1812
        %v1814 = vpop.xlane.xlu0 %1813
        %v1815 = vsel %vm1594, %v1811, 0.0
        %1816 = vadd.xlane.f32.xlu0 %v1815
        %v1817 = vpop.xlane.xlu0 %1816
        %v1818 = vrcp.pop %v1814
        %v1819 = vrcp.pop %v1817
        %v1820 = vmul.f32 %v1809, %v1818
        %v1821 = vmul.f32 %v1811, %v1819
        %v1822 = vpack.c.bf16 %v1820, %v1820
        %v1823 = vpack.c.bf16 %v1821, %v1821
        %v1824 = vpack.c.bf16 %v1502, %v1502
        %v1825 = vpack.c.bf16 %v1506, %v1506
        %v1827 = vsel %vm1594, %v1822, 0
        %v1830 = vsel %vm1624, %v1824, 0
        %1832 = vmatprep.subr.bf16.mxu0 0
        %1833 = vmatpush1.bf16.msra.mxu0 0
        %1834 = vmatprep.subr.bf16.mxu0 0
        %1835 = vmatpush1.bf16.msra.mxu0 0
        %1836 = vmatprep.subr.bf16.mxu0 0
        %1837 = vmatpush1.bf16.msra.mxu0 0
        %1838 = vmatprep.subr.bf16.mxu0 0
        %1839 = vmatpush1.bf16.msra.mxu0 0
        %1840 = vmatprep.subr.bf16.mxu0 0
        %1841 = vmatpush1.bf16.msra.mxu0 0
        %1842 = vmatprep.subr.bf16.mxu0 0
        %1843 = vmatpush1.bf16.msra.mxu0 0
        %1844 = vmatprep.subr.bf16.mxu0 0
        %1845 = vmatpush1.bf16.msra.mxu0 0
        %1846 = vmatprep.subr.bf16.mxu0 0
        %1847 = vmatpush1.bf16.msra.mxu0 %v1830
        %1848 = vmatprep.subr.bf16.mxu0 0
        %1849 = vmatpush2.bf16.msra.mxu0 0
        %1850 = vmatprep.subr.bf16.mxu0 0
        %1851 = vmatpush2.bf16.msra.mxu0 0
        %1852 = vmatprep.subr.bf16.mxu0 0
        %1853 = vmatpush2.bf16.msra.mxu0 0
        %1854 = vmatprep.subr.bf16.mxu0 0
        %1855 = vmatpush2.bf16.msra.mxu0 0
        %1856 = vmatprep.subr.bf16.mxu0 0
        %1857 = vmatpush2.bf16.msra.mxu0 0
        %1858 = vmatprep.subr.bf16.mxu0 0
        %1859 = vmatpush2.bf16.msra.mxu0 0
        %1860 = vmatprep.subr.bf16.mxu0 0
        %1861 = vmatpush2.bf16.msra.mxu0 0
        %1862 = vmatprep.subr.bf16.mxu0 0
        %1863 = vmatpush2.bf16.msra.mxu0 0
        %1864 = vmatprep.mubr.bf16.mxu0 0
        %1865 = vmatmul.mubr.bf16.gmra.mxu0 %v1827
        %v1866 = vpop.f32.mrf.mxu0
        %v1867 = vadd.f32 0.0, %v1866
        %v1868 = vpop.f32.mrf.mxu0
        %v1869 = vpop.f32.mrf.mxu0
        %v1870 = vpop.f32.mrf.mxu0
        %1871 = vdwg.mxu0
        %v1873 = vsel %vm1594, %v1823, 0
        %v1876 = vsel %vm1624, %v1825, 0
        %1878 = vmatprep.subr.bf16.mxu0 0
        %1879 = vmatpush1.bf16.msra.mxu0 0
        %1880 = vmatprep.subr.bf16.mxu0 0
        %1881 = vmatpush1.bf16.msra.mxu0 0
        %1882 = vmatprep.subr.bf16.mxu0 0
        %1883 = vmatpush1.bf16.msra.mxu0 0
        %1884 = vmatprep.subr.bf16.mxu0 0
        %1885 = vmatpush1.bf16.msra.mxu0 0
        %1886 = vmatprep.subr.bf16.mxu0 0
        %1887 = vmatpush1.bf16.msra.mxu0 0
        %1888 = vmatprep.subr.bf16.mxu0 0
        %1889 = vmatpush1.bf16.msra.mxu0 0
        %1890 = vmatprep.subr.bf16.mxu0 0
        %1891 = vmatpush1.bf16.msra.mxu0 0
        %1892 = vmatprep.subr.bf16.mxu0 0
        %1893 = vmatpush1.bf16.msra.mxu0 %v1876
        %1894 = vmatprep.subr.bf16.mxu0 0
        %1895 = vmatpush2.bf16.msra.mxu0 0
        %1896 = vmatprep.subr.bf16.mxu0 0
        %1897 = vmatpush2.bf16.msra.mxu0 0
        %1898 = vmatprep.subr.bf16.mxu0 0
        %1899 = vmatpush2.bf16.msra.mxu0 0
        %1900 = vmatprep.subr.bf16.mxu0 0
        %1901 = vmatpush2.bf16.msra.mxu0 0
        %1902 = vmatprep.subr.bf16.mxu0 0
        %1903 = vmatpush2.bf16.msra.mxu0 0
        %1904 = vmatprep.subr.bf16.mxu0 0
        %1905 = vmatpush2.bf16.msra.mxu0 0
        %1906 = vmatprep.subr.bf16.mxu0 0
        %1907 = vmatpush2.bf16.msra.mxu0 0
        %1908 = vmatprep.subr.bf16.mxu0 0
        %1909 = vmatpush2.bf16.msra.mxu0 0
        %1910 = vmatprep.mubr.bf16.mxu0 0
        %1911 = vmatmul.mubr.bf16.gmra.mxu0 %v1873
        %v1912 = vpop.f32.mrf.mxu0
        %v1913 = vadd.f32 0.0, %v1912
        %v1914 = vpop.f32.mrf.mxu0
        %v1915 = vpop.f32.mrf.mxu0
        %v1916 = vpop.f32.mrf.mxu0
        %1917 = vdwg.mxu0
        %v1918 = vpack.c.bf16 %v1709, %v1663
        %v1919 = vpack.c.bf16 %v1913, %v1867
        %v1920 = vld [vmem:[%s536] sm:$0xff]
        %v1921 = vld [vmem:[%s536 + $0x8] sm:$0xff]
        %v1922 = vld [vmem:[%s536 + $0x10] sm:$0xff]
        %v1923 = vld [vmem:[%s536 + $0x18] sm:$0xff]
        %v1924 = vld [vmem:[%s536 + $0x20] sm:$0xff]
        %v1925 = vld [vmem:[%s536 + $0x28] sm:$0xff]
        %v1926 = vld [vmem:[%s536 + $0x30] sm:$0xff]
        %v1927 = vld [vmem:[%s536 + $0x38] sm:$0xff]
        %v1928 = vld [vmem:[%s536 + $0x40] sm:$0xff]
        %v1929 = vld [vmem:[%s536 + $0x48] sm:$0xff]
        %v1930 = vld [vmem:[%s536 + $0x50] sm:$0xff]
        %v1931 = vld [vmem:[%s536 + $0x58] sm:$0xff]
        %v1932 = vld [vmem:[%s536 + $0x60] sm:$0xff]
        %v1933 = vld [vmem:[%s536 + $0x68] sm:$0xff]
        %v1934 = vld [vmem:[%s536 + $0x70] sm:$0xff]
        %v1935 = vld [vmem:[%s536 + $0x78] sm:$0xff]
        %v1936 = vld [vmem:[%s536 + $0x80] sm:$0xff]
        %v1937 = vld [vmem:[%s536 + $0x88] sm:$0xff]
        %v1938 = vld [vmem:[%s536 + $0x90] sm:$0xff]
        %v1939 = vld [vmem:[%s536 + $0x98] sm:$0xff]
        %v1940 = vld [vmem:[%s536 + $0xa0] sm:$0xff]
        %v1941 = vld [vmem:[%s536 + $0xa8] sm:$0xff]
        %v1942 = vld [vmem:[%s536 + $0xb0] sm:$0xff]
        %v1943 = vld [vmem:[%s536 + $0xb8] sm:$0xff]
        %v1944 = vld [vmem:[%s536 + $0xc0] sm:$0xff]
        %v1945 = vld [vmem:[%s536 + $0xc8] sm:$0xff]
        %v1946 = vld [vmem:[%s536 + $0xd0] sm:$0xff]
        %v1947 = vld [vmem:[%s536 + $0xd8] sm:$0xff]
        %v1948 = vld [vmem:[%s536 + $0xe0] sm:$0xff]
        %v1949 = vld [vmem:[%s536 + $0xe8] sm:$0xff]
        %v1950 = vld [vmem:[%s536 + $0xf0] sm:$0xff]
        %v1951 = vld [vmem:[%s536 + $0xf8] sm:$0xff]
        %v1952 = vld [vmem:[%s652] sm:$0x3]
        %v1954 = vlaneseq
        %v1955 = vshrl.u32 %v1954, 7
        %v1956 = vsub.s32 0, %v1955
        %v1957 = vrot.slane %v1952, %v1956
        %v1958 = vlaneseq
        %v1959 = vshrl.u32 %v1958, 7
        %v1960 = vsub.s32 1, %v1959
        %v1961 = vrot.slane %v1952, %v1960
        %v1996 = vunpack.c.l.b16 %v1920
        %v1997 = vunpack.c.h.b16 %v1920
        %v1998 = vunpack.c.l.b16 %v1921
        %v1999 = vunpack.c.h.b16 %v1921
        %v2000 = vunpack.c.l.b16 %v1922
        %v2001 = vunpack.c.h.b16 %v1922
        %v2002 = vunpack.c.l.b16 %v1923
        %v2003 = vunpack.c.h.b16 %v1923
        %v2004 = vunpack.c.l.b16 %v1924
        %v2005 = vunpack.c.h.b16 %v1924
        %v2006 = vunpack.c.l.b16 %v1925
        %v2007 = vunpack.c.h.b16 %v1925
        %v2008 = vunpack.c.l.b16 %v1926
        %v2009 = vunpack.c.h.b16 %v1926
        %v2010 = vunpack.c.l.b16 %v1927
        %v2011 = vunpack.c.h.b16 %v1927
        %v2012 = vunpack.c.l.b16 %v1928
        %v2013 = vunpack.c.h.b16 %v1928
        %v2014 = vunpack.c.l.b16 %v1929
        %v2015 = vunpack.c.h.b16 %v1929
        %v2016 = vunpack.c.l.b16 %v1930
        %v2017 = vunpack.c.h.b16 %v1930
        %v2018 = vunpack.c.l.b16 %v1931
        %v2019 = vunpack.c.h.b16 %v1931
        %v2020 = vunpack.c.l.b16 %v1932
        %v2021 = vunpack.c.h.b16 %v1932
        %v2022 = vunpack.c.l.b16 %v1933
        %v2023 = vunpack.c.h.b16 %v1933
        %v2024 = vunpack.c.l.b16 %v1934
        %v2025 = vunpack.c.h.b16 %v1934
        %v2026 = vunpack.c.l.b16 %v1935
        %v2027 = vunpack.c.h.b16 %v1935
        %v2028 = vunpack.c.l.b16 %v1936
        %v2029 = vunpack.c.h.b16 %v1936
        %v2030 = vunpack.c.l.b16 %v1937
        %v2031 = vunpack.c.h.b16 %v1937
        %v2032 = vunpack.c.l.b16 %v1938
        %v2033 = vunpack.c.h.b16 %v1938
        %v2034 = vunpack.c.l.b16 %v1939
        %v2035 = vunpack.c.h.b16 %v1939
        %v2036 = vunpack.c.l.b16 %v1940
        %v2037 = vunpack.c.h.b16 %v1940
        %v2038 = vunpack.c.l.b16 %v1941
        %v2039 = vunpack.c.h.b16 %v1941
        %v2040 = vunpack.c.l.b16 %v1942
        %v2041 = vunpack.c.h.b16 %v1942
        %v2042 = vunpack.c.l.b16 %v1943
        %v2043 = vunpack.c.h.b16 %v1943
        %v2044 = vunpack.c.l.b16 %v1944
        %v2045 = vunpack.c.h.b16 %v1944
        %v2046 = vunpack.c.l.b16 %v1945
        %v2047 = vunpack.c.h.b16 %v1945
        %v2048 = vunpack.c.l.b16 %v1946
        %v2049 = vunpack.c.h.b16 %v1946
        %v2050 = vunpack.c.l.b16 %v1947
        %v2051 = vunpack.c.h.b16 %v1947
        %v2052 = vunpack.c.l.b16 %v1948
        %v2053 = vunpack.c.h.b16 %v1948
        %v2054 = vunpack.c.l.b16 %v1949
        %v2055 = vunpack.c.h.b16 %v1949
        %v2056 = vunpack.c.l.b16 %v1950
        %v2057 = vunpack.c.h.b16 %v1950
        %v2058 = vunpack.c.l.b16 %v1951
        %v2059 = vunpack.c.h.b16 %v1951
        %v2060 = vpack.c.b16 %v1998, %v1996
        %v2061 = vpack.c.b16 %v1999, %v1997
        %v2062 = vpack.c.b16 %v2002, %v2000
        %v2063 = vpack.c.b16 %v2003, %v2001
        %v2064 = vpack.c.b16 %v2006, %v2004
        %v2065 = vpack.c.b16 %v2007, %v2005
        %v2066 = vpack.c.b16 %v2010, %v2008
        %v2067 = vpack.c.b16 %v2011, %v2009
        %v2068 = vpack.c.b16 %v2014, %v2012
        %v2069 = vpack.c.b16 %v2015, %v2013
        %v2070 = vpack.c.b16 %v2018, %v2016
        %v2071 = vpack.c.b16 %v2019, %v2017
        %v2072 = vpack.c.b16 %v2022, %v2020
        %v2073 = vpack.c.b16 %v2023, %v2021
        %v2074 = vpack.c.b16 %v2026, %v2024
        %v2075 = vpack.c.b16 %v2027, %v2025
        %v2076 = vpack.c.b16 %v2030, %v2028
        %v2077 = vpack.c.b16 %v2031, %v2029
        %v2078 = vpack.c.b16 %v2034, %v2032
        %v2079 = vpack.c.b16 %v2035, %v2033
        %v2080 = vpack.c.b16 %v2038, %v2036
        %v2081 = vpack.c.b16 %v2039, %v2037
        %v2082 = vpack.c.b16 %v2042, %v2040
        %v2083 = vpack.c.b16 %v2043, %v2041
        %v2084 = vpack.c.b16 %v2046, %v2044
        %v2085 = vpack.c.b16 %v2047, %v2045
        %v2086 = vpack.c.b16 %v2050, %v2048
        %v2087 = vpack.c.b16 %v2051, %v2049
        %v2088 = vpack.c.b16 %v2054, %v2052
        %v2089 = vpack.c.b16 %v2055, %v2053
        %v2090 = vpack.c.b16 %v2058, %v2056
        %v2091 = vpack.c.b16 %v2059, %v2057
        %2124 = vmatprep.subr.bf16.mxu0 %v2075
        %2125 = vmatpush1.bf16.msra.mxu0 %v2074
        %2126 = vmatprep.subr.bf16.mxu0 %v2073
        %2127 = vmatpush1.bf16.msra.mxu0 %v2072
        %2128 = vmatprep.subr.bf16.mxu0 %v2071
        %2129 = vmatpush1.bf16.msra.mxu0 %v2070
        %2130 = vmatprep.subr.bf16.mxu0 %v2069
        %2131 = vmatpush1.bf16.msra.mxu0 %v2068
        %2132 = vmatprep.subr.bf16.mxu0 %v2067
        %2133 = vmatpush1.bf16.msra.mxu0 %v2066
        %2134 = vmatprep.subr.bf16.mxu0 %v2065
        %2135 = vmatpush1.bf16.msra.mxu0 %v2064
        %2136 = vmatprep.subr.bf16.mxu0 %v2063
        %2137 = vmatpush1.bf16.msra.mxu0 %v2062
        %2138 = vmatprep.subr.bf16.mxu0 %v2061
        %2139 = vmatpush1.bf16.msra.mxu0 %v2060
        %2140 = vmatprep.subr.bf16.mxu0 %v2091
        %2141 = vmatpush2.bf16.msra.mxu0 %v2090
        %2142 = vmatprep.subr.bf16.mxu0 %v2089
        %2143 = vmatpush2.bf16.msra.mxu0 %v2088
        %2144 = vmatprep.subr.bf16.mxu0 %v2087
        %2145 = vmatpush2.bf16.msra.mxu0 %v2086
        %2146 = vmatprep.subr.bf16.mxu0 %v2085
        %2147 = vmatpush2.bf16.msra.mxu0 %v2084
        %2148 = vmatprep.subr.bf16.mxu0 %v2083
        %2149 = vmatpush2.bf16.msra.mxu0 %v2082
        %2150 = vmatprep.subr.bf16.mxu0 %v2081
        %2151 = vmatpush2.bf16.msra.mxu0 %v2080
        %2152 = vmatprep.subr.bf16.mxu0 %v2079
        %2153 = vmatpush2.bf16.msra.mxu0 %v2078
        %2154 = vmatprep.subr.bf16.mxu0 %v2077
        %2155 = vmatpush2.bf16.msra.mxu0 %v2076
        %2156 = vmatprep.mubr.bf16.mxu0 %v1919
        %2157 = vmatmul.mubr.bf16.gmra.mxu0 %v1918
        %v2158 = vpop.f32.mrf.mxu0
        %v2159 = vadd.f32 %v1957, %v2158
        %v2160 = vpop.f32.mrf.mxu0
        %v2161 = vadd.f32 %v1961, %v2160
        %v2162 = vpop.f32.mrf.mxu0
        %v2163 = vadd.f32 %v1957, %v2162
        %v2164 = vpop.f32.mrf.mxu0
        %v2165 = vadd.f32 %v1961, %v2164
        %2166 = vdwg.mxu0
        %v2167 = vadd.f32 %v697, %v2159
        %v2168 = vadd.f32 %v698, %v2161
        %v2169 = vadd.f32 %v699, %v2163
        %v2170 = vadd.f32 %v700, %v2165
        %v2171 = vld [vmem:[%s657] ss:$2 sm:$0x3]
        %s2172 = scalar_lea.vmem %s657, 1
        %v2173 = vld [vmem:[%s2172] ss:$2 sm:$0x3]
        %v2174 = vadd.f32 %v2167, %v2168
        %2175 = vadd.xlane.f32.xlu0 %v2174
        %v2176 = vpop.xlane.xlu0 %2175
        %v2177 = vadd.f32 %v2169, %v2170
        %2178 = vadd.xlane.f32.xlu0 %v2177
        %v2179 = vpop.xlane.xlu0 %2178
        %v2180 = vmul.f32 %v2176, %v712
        %v2181 = vmul.f32 %v2179, %v712
        %v2182 = vsub.f32 %v2167, %v2180
        %v2183 = vsub.f32 %v2168, %v2180
        %v2184 = vsub.f32 %v2169, %v2181
        %v2185 = vsub.f32 %v2170, %v2181
        %v2186 = vmul.f32 %v2182, %v2182
        %v2187 = vmul.f32 %v2183, %v2183
        %v2188 = vmul.f32 %v2184, %v2184
        %v2189 = vmul.f32 %v2185, %v2185
        %v2190 = vadd.f32 %v2186, %v2187
        %2191 = vadd.xlane.f32.xlu0 %v2190
        %v2192 = vpop.xlane.xlu0 %2191
        %v2193 = vadd.f32 %v2188, %v2189
        %2194 = vadd.xlane.f32.xlu0 %v2193
        %v2195 = vpop.xlane.xlu0 %2194
        %v2196 = vmul.f32 %v2192, %v712
        %v2197 = vmul.f32 %v2195, %v712
        %v2198 = vadd.f32 %v2196, 1e-05
        %v2199 = vadd.f32 %v2197, 1e-05
        %v2200 = vrsqrt.pop %v2198
        %v2201 = vrsqrt.pop %v2199
        %v2202 = vmul.f32 %v2182, %v2200
        %v2203 = vmul.f32 %v2183, %v2200
        %v2204 = vmul.f32 %v2184, %v2201
        %v2205 = vmul.f32 %v2185, %v2201
        %v2207 = vlaneseq
        %v2208 = vshrl.u32 %v2207, 7
        %v2209 = vsub.s32 0, %v2208
        %v2210 = vrot.slane %v2171, %v2209
        %v2211 = vlaneseq
        %v2212 = vshrl.u32 %v2211, 7
        %v2213 = vsub.s32 1, %v2212
        %v2214 = vrot.slane %v2171, %v2213
        %v2217 = vmul.f32 %v2202, %v2210
        %v2218 = vmul.f32 %v2203, %v2214
        %v2219 = vmul.f32 %v2204, %v2210
        %v2220 = vmul.f32 %v2205, %v2214
        %v2222 = vlaneseq
        %v2223 = vshrl.u32 %v2222, 7
        %v2224 = vsub.s32 0, %v2223
        %v2225 = vrot.slane %v2173, %v2224
        %v2226 = vlaneseq
        %v2227 = vshrl.u32 %v2226, 7
        %v2228 = vsub.s32 1, %v2227
        %v2229 = vrot.slane %v2173, %v2228
        %v2232 = vadd.f32 %v2217, %v2225
        %v2233 = vadd.f32 %v2218, %v2229
        %v2234 = vadd.f32 %v2219, %v2225
        %v2235 = vadd.f32 %v2220, %v2229
        %v2236 = vpack.c.bf16 %v2234, %v2232
        %v2237 = vpack.c.bf16 %v2235, %v2233
        %v2238 = vld [vmem:[%s662] sm:$0xff]
        %v2239 = vld [vmem:[%s662 + $0x8] sm:$0xff]
        %v2240 = vld [vmem:[%s662 + $0x10] sm:$0xff]
        %v2241 = vld [vmem:[%s662 + $0x18] sm:$0xff]
        %v2242 = vld [vmem:[%s662 + $0x20] sm:$0xff]
        %v2243 = vld [vmem:[%s662 + $0x28] sm:$0xff]
        %v2244 = vld [vmem:[%s662 + $0x30] sm:$0xff]
        %v2245 = vld [vmem:[%s662 + $0x38] sm:$0xff]
        %v2246 = vld [vmem:[%s662 + $0x40] sm:$0xff]
        %v2247 = vld [vmem:[%s662 + $0x48] sm:$0xff]
        %v2248 = vld [vmem:[%s662 + $0x50] sm:$0xff]
        %v2249 = vld [vmem:[%s662 + $0x58] sm:$0xff]
        %v2250 = vld [vmem:[%s662 + $0x60] sm:$0xff]
        %v2251 = vld [vmem:[%s662 + $0x68] sm:$0xff]
        %v2252 = vld [vmem:[%s662 + $0x70] sm:$0xff]
        %v2253 = vld [vmem:[%s662 + $0x78] sm:$0xff]
        %v2254 = vld [vmem:[%s662 + $0x80] sm:$0xff]
        %v2255 = vld [vmem:[%s662 + $0x88] sm:$0xff]
        %v2256 = vld [vmem:[%s662 + $0x90] sm:$0xff]
        %v2257 = vld [vmem:[%s662 + $0x98] sm:$0xff]
        %v2258 = vld [vmem:[%s662 + $0xa0] sm:$0xff]
        %v2259 = vld [vmem:[%s662 + $0xa8] sm:$0xff]
        %v2260 = vld [vmem:[%s662 + $0xb0] sm:$0xff]
        %v2261 = vld [vmem:[%s662 + $0xb8] sm:$0xff]
        %v2262 = vld [vmem:[%s662 + $0xc0] sm:$0xff]
        %v2263 = vld [vmem:[%s662 + $0xc8] sm:$0xff]
        %v2264 = vld [vmem:[%s662 + $0xd0] sm:$0xff]
        %v2265 = vld [vmem:[%s662 + $0xd8] sm:$0xff]
        %v2266 = vld [vmem:[%s662 + $0xe0] sm:$0xff]
        %v2267 = vld [vmem:[%s662 + $0xe8] sm:$0xff]
        %v2268 = vld [vmem:[%s662 + $0xf0] sm:$0xff]
        %v2269 = vld [vmem:[%s662 + $0xf8] sm:$0xff]
        %v2270 = vld [vmem:[%s662 + $0x100] sm:$0xff]
        %v2271 = vld [vmem:[%s662 + $0x108] sm:$0xff]
        %v2272 = vld [vmem:[%s662 + $0x110] sm:$0xff]
        %v2273 = vld [vmem:[%s662 + $0x118] sm:$0xff]
        %v2274 = vld [vmem:[%s662 + $0x120] sm:$0xff]
        %v2275 = vld [vmem:[%s662 + $0x128] sm:$0xff]
        %v2276 = vld [vmem:[%s662 + $0x130] sm:$0xff]
        %v2277 = vld [vmem:[%s662 + $0x138] sm:$0xff]
        %v2278 = vld [vmem:[%s662 + $0x140] sm:$0xff]
        %v2279 = vld [vmem:[%s662 + $0x148] sm:$0xff]
        %v2280 = vld [vmem:[%s662 + $0x150] sm:$0xff]
        %v2281 = vld [vmem:[%s662 + $0x158] sm:$0xff]
        %v2282 = vld [vmem:[%s662 + $0x160] sm:$0xff]
        %v2283 = vld [vmem:[%s662 + $0x168] sm:$0xff]
        %v2284 = vld [vmem:[%s662 + $0x170] sm:$0xff]
        %v2285 = vld [vmem:[%s662 + $0x178] sm:$0xff]
        %v2286 = vld [vmem:[%s662 + $0x180] sm:$0xff]
        %v2287 = vld [vmem:[%s662 + $0x188] sm:$0xff]
        %v2288 = vld [vmem:[%s662 + $0x190] sm:$0xff]
        %v2289 = vld [vmem:[%s662 + $0x198] sm:$0xff]
        %v2290 = vld [vmem:[%s662 + $0x1a0] sm:$0xff]
        %v2291 = vld [vmem:[%s662 + $0x1a8] sm:$0xff]
        %v2292 = vld [vmem:[%s662 + $0x1b0] sm:$0xff]
        %v2293 = vld [vmem:[%s662 + $0x1b8] sm:$0xff]
        %v2294 = vld [vmem:[%s662 + $0x1c0] sm:$0xff]
        %v2295 = vld [vmem:[%s662 + $0x1c8] sm:$0xff]
        %v2296 = vld [vmem:[%s662 + $0x1d0] sm:$0xff]
        %v2297 = vld [vmem:[%s662 + $0x1d8] sm:$0xff]
        %v2298 = vld [vmem:[%s662 + $0x1e0] sm:$0xff]
        %v2299 = vld [vmem:[%s662 + $0x1e8] sm:$0xff]
        %v2300 = vld [vmem:[%s662 + $0x1f0] sm:$0xff]
        %v2301 = vld [vmem:[%s662 + $0x1f8] sm:$0xff]
        %v2302 = vld [vmem:[%s666] sm:$0xf]
        %v2304 = vlaneseq
        %v2305 = vshrl.u32 %v2304, 7
        %v2306 = vsub.s32 0, %v2305
        %v2307 = vrot.slane %v2302, %v2306
        %v2308 = vlaneseq
        %v2309 = vshrl.u32 %v2308, 7
        %v2310 = vsub.s32 1, %v2309
        %v2311 = vrot.slane %v2302, %v2310
        %v2312 = vlaneseq
        %v2313 = vshrl.u32 %v2312, 7
        %v2314 = vsub.s32 2, %v2313
        %v2315 = vrot.slane %v2302, %v2314
        %v2316 = vlaneseq
        %v2317 = vshrl.u32 %v2316, 7
        %v2318 = vsub.s32 3, %v2317
        %v2319 = vrot.slane %v2302, %v2318
        %v2388 = vunpack.c.l.b16 %v2238
        %v2389 = vunpack.c.h.b16 %v2238
        %v2390 = vunpack.c.l.b16 %v2239
        %v2391 = vunpack.c.h.b16 %v2239
        %v2392 = vunpack.c.l.b16 %v2240
        %v2393 = vunpack.c.h.b16 %v2240
        %v2394 = vunpack.c.l.b16 %v2241
        %v2395 = vunpack.c.h.b16 %v2241
        %v2396 = vunpack.c.l.b16 %v2242
        %v2397 = vunpack.c.h.b16 %v2242
        %v2398 = vunpack.c.l.b16 %v2243
        %v2399 = vunpack.c.h.b16 %v2243
        %v2400 = vunpack.c.l.b16 %v2244
        %v2401 = vunpack.c.h.b16 %v2244
        %v2402 = vunpack.c.l.b16 %v2245
        %v2403 = vunpack.c.h.b16 %v2245
        %v2404 = vunpack.c.l.b16 %v2246
        %v2405 = vunpack.c.h.b16 %v2246
        %v2406 = vunpack.c.l.b16 %v2247
        %v2407 = vunpack.c.h.b16 %v2247
        %v2408 = vunpack.c.l.b16 %v2248
        %v2409 = vunpack.c.h.b16 %v2248
        %v2410 = vunpack.c.l.b16 %v2249
        %v2411 = vunpack.c.h.b16 %v2249
        %v2412 = vunpack.c.l.b16 %v2250
        %v2413 = vunpack.c.h.b16 %v2250
        %v2414 = vunpack.c.l.b16 %v2251
        %v2415 = vunpack.c.h.b16 %v2251
        %v2416 = vunpack.c.l.b16 %v2252
        %v2417 = vunpack.c.h.b16 %v2252
        %v2418 = vunpack.c.l.b16 %v2253
        %v2419 = vunpack.c.h.b16 %v2253
        %v2420 = vunpack.c.l.b16 %v2254
        %v2421 = vunpack.c.h.b16 %v2254
        %v2422 = vunpack.c.l.b16 %v2255
        %v2423 = vunpack.c.h.b16 %v2255
        %v2424 = vunpack.c.l.b16 %v2256
        %v2425 = vunpack.c.h.b16 %v2256
        %v2426 = vunpack.c.l.b16 %v2257
        %v2427 = vunpack.c.h.b16 %v2257
        %v2428 = vunpack.c.l.b16 %v2258
        %v2429 = vunpack.c.h.b16 %v2258
        %v2430 = vunpack.c.l.b16 %v2259
        %v2431 = vunpack.c.h.b16 %v2259
        %v2432 = vunpack.c.l.b16 %v2260
        %v2433 = vunpack.c.h.b16 %v2260
        %v2434 = vunpack.c.l.b16 %v2261
        %v2435 = vunpack.c.h.b16 %v2261
        %v2436 = vunpack.c.l.b16 %v2262
        %v2437 = vunpack.c.h.b16 %v2262
        %v2438 = vunpack.c.l.b16 %v2263
        %v2439 = vunpack.c.h.b16 %v2263
        %v2440 = vunpack.c.l.b16 %v2264
        %v2441 = vunpack.c.h.b16 %v2264
        %v2442 = vunpack.c.l.b16 %v2265
        %v2443 = vunpack.c.h.b16 %v2265
        %v2444 = vunpack.c.l.b16 %v2266
        %v2445 = vunpack.c.h.b16 %v2266
        %v2446 = vunpack.c.l.b16 %v2267
        %v2447 = vunpack.c.h.b16 %v2267
        %v2448 = vunpack.c.l.b16 %v2268
        %v2449 = vunpack.c.h.b16 %v2268
        %v2450 = vunpack.c.l.b16 %v2269
        %v2451 = vunpack.c.h.b16 %v2269
        %v2452 = vunpack.c.l.b16 %v2270
        %v2453 = vunpack.c.h.b16 %v2270
        %v2454 = vunpack.c.l.b16 %v2271
        %v2455 = vunpack.c.h.b16 %v2271
        %v2456 = vunpack.c.l.b16 %v2272
        %v2457 = vunpack.c.h.b16 %v2272
        %v2458 = vunpack.c.l.b16 %v2273
        %v2459 = vunpack.c.h.b16 %v2273
        %v2460 = vunpack.c.l.b16 %v2274
        %v2461 = vunpack.c.h.b16 %v2274
        %v2462 = vunpack.c.l.b16 %v2275
        %v2463 = vunpack.c.h.b16 %v2275
        %v2464 = vunpack.c.l.b16 %v2276
        %v2465 = vunpack.c.h.b16 %v2276
        %v2466 = vunpack.c.l.b16 %v2277
        %v2467 = vunpack.c.h.b16 %v2277
        %v2468 = vunpack.c.l.b16 %v2278
        %v2469 = vunpack.c.h.b16 %v2278
        %v2470 = vunpack.c.l.b16 %v2279
        %v2471 = vunpack.c.h.b16 %v2279
        %v2472 = vunpack.c.l.b16 %v2280
        %v2473 = vunpack.c.h.b16 %v2280
        %v2474 = vunpack.c.l.b16 %v2281
        %v2475 = vunpack.c.h.b16 %v2281
        %v2476 = vunpack.c.l.b16 %v2282
        %v2477 = vunpack.c.h.b16 %v2282
        %v2478 = vunpack.c.l.b16 %v2283
        %v2479 = vunpack.c.h.b16 %v2283
        %v2480 = vunpack.c.l.b16 %v2284
        %v2481 = vunpack.c.h.b16 %v2284
        %v2482 = vunpack.c.l.b16 %v2285
        %v2483 = vunpack.c.h.b16 %v2285
        %v2484 = vunpack.c.l.b16 %v2286
        %v2485 = vunpack.c.h.b16 %v2286
        %v2486 = vunpack.c.l.b16 %v2287
        %v2487 = vunpack.c.h.b16 %v2287
        %v2488 = vunpack.c.l.b16 %v2288
        %v2489 = vunpack.c.h.b16 %v2288
        %v2490 = vunpack.c.l.b16 %v2289
        %v2491 = vunpack.c.h.b16 %v2289
        %v2492 = vunpack.c.l.b16 %v2290
        %v2493 = vunpack.c.h.b16 %v2290
        %v2494 = vunpack.c.l.b16 %v2291
        %v2495 = vunpack.c.h.b16 %v2291
        %v2496 = vunpack.c.l.b16 %v2292
        %v2497 = vunpack.c.h.b16 %v2292
        %v2498 = vunpack.c.l.b16 %v2293
        %v2499 = vunpack.c.h.b16 %v2293
        %v2500 = vunpack.c.l.b16 %v2294
        %v2501 = vunpack.c.h.b16 %v2294
        %v2502 = vunpack.c.l.b16 %v2295
        %v2503 = vunpack.c.h.b16 %v2295
        %v2504 = vunpack.c.l.b16 %v2296
        %v2505 = vunpack.c.h.b16 %v2296
        %v2506 = vunpack.c.l.b16 %v2297
        %v2507 = vunpack.c.h.b16 %v2297
        %v2508 = vunpack.c.l.b16 %v2298
        %v2509 = vunpack.c.h.b16 %v2298
        %v2510 = vunpack.c.l.b16 %v2299
        %v2511 = vunpack.c.h.b16 %v2299
        %v2512 = vunpack.c.l.b16 %v2300
        %v2513 = vunpack.c.h.b16 %v2300
        %v2514 = vunpack.c.l.b16 %v2301
        %v2515 = vunpack.c.h.b16 %v2301
        %v2516 = vpack.c.b16 %v2392, %v2388
        %v2517 = vpack.c.b16 %v2393, %v2389
        %v2518 = vpack.c.b16 %v2394, %v2390
        %v2519 = vpack.c.b16 %v2395, %v2391
        %v2520 = vpack.c.b16 %v2400, %v2396
        %v2521 = vpack.c.b16 %v2401, %v2397
        %v2522 = vpack.c.b16 %v2402, %v2398
        %v2523 = vpack.c.b16 %v2403, %v2399
        %v2524 = vpack.c.b16 %v2408, %v2404
        %v2525 = vpack.c.b16 %v2409, %v2405
        %v2526 = vpack.c.b16 %v2410, %v2406
        %v2527 = vpack.c.b16 %v2411, %v2407
        %v2528 = vpack.c.b16 %v2416, %v2412
        %v2529 = vpack.c.b16 %v2417, %v2413
        %v2530 = vpack.c.b16 %v2418, %v2414
        %v2531 = vpack.c.b16 %v2419, %v2415
        %v2532 = vpack.c.b16 %v2424, %v2420
        %v2533 = vpack.c.b16 %v2425, %v2421
        %v2534 = vpack.c.b16 %v2426, %v2422
        %v2535 = vpack.c.b16 %v2427, %v2423
        %v2536 = vpack.c.b16 %v2432, %v2428
        %v2537 = vpack.c.b16 %v2433, %v2429
        %v2538 = vpack.c.b16 %v2434, %v2430
        %v2539 = vpack.c.b16 %v2435, %v2431
        %v2540 = vpack.c.b16 %v2440, %v2436
        %v2541 = vpack.c.b16 %v2441, %v2437
        %v2542 = vpack.c.b16 %v2442, %v2438
        %v2543 = vpack.c.b16 %v2443, %v2439
        %v2544 = vpack.c.b16 %v2448, %v2444
        %v2545 = vpack.c.b16 %v2449, %v2445
        %v2546 = vpack.c.b16 %v2450, %v2446
        %v2547 = vpack.c.b16 %v2451, %v2447
        %v2548 = vpack.c.b16 %v2456, %v2452
        %v2549 = vpack.c.b16 %v2457, %v2453
        %v2550 = vpack.c.b16 %v2458, %v2454
        %v2551 = vpack.c.b16 %v2459, %v2455
        %v2552 = vpack.c.b16 %v2464, %v2460
        %v2553 = vpack.c.b16 %v2465, %v2461
        %v2554 = vpack.c.b16 %v2466, %v2462
        %v2555 = vpack.c.b16 %v2467, %v2463
        %v2556 = vpack.c.b16 %v2472, %v2468
        %v2557 = vpack.c.b16 %v2473, %v2469
        %v2558 = vpack.c.b16 %v2474, %v2470
        %v2559 = vpack.c.b16 %v2475, %v2471
        %v2560 = vpack.c.b16 %v2480, %v2476
        %v2561 = vpack.c.b16 %v2481, %v2477
        %v2562 = vpack.c.b16 %v2482, %v2478
        %v2563 = vpack.c.b16 %v2483, %v2479
        %v2564 = vpack.c.b16 %v2488, %v2484
        %v2565 = vpack.c.b16 %v2489, %v2485
        %v2566 = vpack.c.b16 %v2490, %v2486
        %v2567 = vpack.c.b16 %v2491, %v2487
        %v2568 = vpack.c.b16 %v2496, %v2492
        %v2569 = vpack.c.b16 %v2497, %v2493
        %v2570 = vpack.c.b16 %v2498, %v2494
        %v2571 = vpack.c.b16 %v2499, %v2495
        %v2572 = vpack.c.b16 %v2504, %v2500
        %v2573 = vpack.c.b16 %v2505, %v2501
        %v2574 = vpack.c.b16 %v2506, %v2502
        %v2575 = vpack.c.b16 %v2507, %v2503
        %v2576 = vpack.c.b16 %v2512, %v2508
        %v2577 = vpack.c.b16 %v2513, %v2509
        %v2578 = vpack.c.b16 %v2514, %v2510
        %v2579 = vpack.c.b16 %v2515, %v2511
        %2644 = vmatprep.subr.bf16.mxu0 %v2545
        %2645 = vmatpush1.bf16.msra.mxu0 %v2544
        %2646 = vmatprep.subr.bf16.mxu0 %v2541
        %2647 = vmatpush1.bf16.msra.mxu0 %v2540
        %2648 = vmatprep.subr.bf16.mxu0 %v2537
        %2649 = vmatpush1.bf16.msra.mxu0 %v2536
        %2650 = vmatprep.subr.bf16.mxu0 %v2533
        %2651 = vmatpush1.bf16.msra.mxu0 %v2532
        %2652 = vmatprep.subr.bf16.mxu0 %v2529
        %2653 = vmatpush1.bf16.msra.mxu0 %v2528
        %2654 = vmatprep.subr.bf16.mxu0 %v2525
        %2655 = vmatpush1.bf16.msra.mxu0 %v2524
        %2656 = vmatprep.subr.bf16.mxu0 %v2521
        %2657 = vmatpush1.bf16.msra.mxu0 %v2520
        %2658 = vmatprep.subr.bf16.mxu0 %v2517
        %2659 = vmatpush1.bf16.msra.mxu0 %v2516
        %2660 = vmatprep.subr.bf16.mxu0 %v2577
        %2661 = vmatpush2.bf16.msra.mxu0 %v2576
        %2662 = vmatprep.subr.bf16.mxu0 %v2573
        %2663 = vmatpush2.bf16.msra.mxu0 %v2572
        %2664 = vmatprep.subr.bf16.mxu0 %v2569
        %2665 = vmatpush2.bf16.msra.mxu0 %v2568
        %2666 = vmatprep.subr.bf16.mxu0 %v2565
        %2667 = vmatpush2.bf16.msra.mxu0 %v2564
        %2668 = vmatprep.subr.bf16.mxu0 %v2561
        %2669 = vmatpush2.bf16.msra.mxu0 %v2560
        %2670 = vmatprep.subr.bf16.mxu0 %v2557
        %2671 = vmatpush2.bf16.msra.mxu0 %v2556
        %2672 = vmatprep.subr.bf16.mxu0 %v2553
        %2673 = vmatpush2.bf16.msra.mxu0 %v2552
        %2674 = vmatprep.subr.bf16.mxu0 %v2549
        %2675 = vmatpush2.bf16.msra.mxu0 %v2548
        %2676 = vmatprep.mubr.bf16.mxu0 %v2237
        %2677 = vmatmul.mubr.bf16.gmra.mxu0 %v2236
        %v2678 = vpop.f32.mrf.mxu0
        %v2679 = vadd.f32 %v2307, %v2678
        %v2680 = vpop.f32.mrf.mxu0
        %v2681 = vadd.f32 %v2311, %v2680
        %v2682 = vpop.f32.mrf.mxu0
        %v2683 = vadd.f32 %v2307, %v2682
        %v2684 = vpop.f32.mrf.mxu0
        %v2685 = vadd.f32 %v2311, %v2684
        %2686 = vdwg.mxu0
        %2687 = vmatprep.subr.bf16.mxu0 %v2547
        %2688 = vmatpush1.bf16.msra.mxu0 %v2546
        %2689 = vmatprep.subr.bf16.mxu0 %v2543
        %2690 = vmatpush1.bf16.msra.mxu0 %v2542
        %2691 = vmatprep.subr.bf16.mxu0 %v2539
        %2692 = vmatpush1.bf16.msra.mxu0 %v2538
        %2693 = vmatprep.subr.bf16.mxu0 %v2535
        %2694 = vmatpush1.bf16.msra.mxu0 %v2534
        %2695 = vmatprep.subr.bf16.mxu0 %v2531
        %2696 = vmatpush1.bf16.msra.mxu0 %v2530
        %2697 = vmatprep.subr.bf16.mxu0 %v2527
        %2698 = vmatpush1.bf16.msra.mxu0 %v2526
        %2699 = vmatprep.subr.bf16.mxu0 %v2523
        %2700 = vmatpush1.bf16.msra.mxu0 %v2522
        %2701 = vmatprep.subr.bf16.mxu0 %v2519
        %2702 = vmatpush1.bf16.msra.mxu0 %v2518
        %2703 = vmatprep.subr.bf16.mxu0 %v2579
        %2704 = vmatpush2.bf16.msra.mxu0 %v2578
        %2705 = vmatprep.subr.bf16.mxu0 %v2575
        %2706 = vmatpush2.bf16.msra.mxu0 %v2574
        %2707 = vmatprep.subr.bf16.mxu0 %v2571
        %2708 = vmatpush2.bf16.msra.mxu0 %v2570
        %2709 = vmatprep.subr.bf16.mxu0 %v2567
        %2710 = vmatpush2.bf16.msra.mxu0 %v2566
        %2711 = vmatprep.subr.bf16.mxu0 %v2563
        %2712 = vmatpush2.bf16.msra.mxu0 %v2562
        %2713 = vmatprep.subr.bf16.mxu0 %v2559
        %2714 = vmatpush2.bf16.msra.mxu0 %v2558
        %2715 = vmatprep.subr.bf16.mxu0 %v2555
        %2716 = vmatpush2.bf16.msra.mxu0 %v2554
        %2717 = vmatprep.subr.bf16.mxu0 %v2551
        %2718 = vmatpush2.bf16.msra.mxu0 %v2550
        %2719 = vmatprep.mubr.bf16.mxu0 %v2237
        %2720 = vmatmul.mubr.bf16.gmra.mxu0 %v2236
        %v2721 = vpop.f32.mrf.mxu0
        %v2722 = vadd.f32 %v2315, %v2721
        %v2723 = vpop.f32.mrf.mxu0
        %v2724 = vadd.f32 %v2319, %v2723
        %v2725 = vpop.f32.mrf.mxu0
        %v2726 = vadd.f32 %v2315, %v2725
        %v2727 = vpop.f32.mrf.mxu0
        %v2728 = vadd.f32 %v2319, %v2727
        %2729 = vdwg.mxu0
        %v2730 = vmul.f32 %v2679, 1.702
        %v2731 = vmul.f32 %v2681, 1.702
        %v2732 = vmul.f32 %v2722, 1.702
        %v2733 = vmul.f32 %v2724, 1.702
        %v2734 = vmul.f32 %v2683, 1.702
        %v2735 = vmul.f32 %v2685, 1.702
        %v2736 = vmul.f32 %v2726, 1.702
        %v2737 = vmul.f32 %v2728, 1.702
        %v2738 = vxor.u32 %v2730, 2147483648
        %v2739 = vxor.u32 %v2731, 2147483648
        %v2740 = vxor.u32 %v2732, 2147483648
        %v2741 = vxor.u32 %v2733, 2147483648
        %v2742 = vxor.u32 %v2734, 2147483648
        %v2743 = vxor.u32 %v2735, 2147483648
        %v2744 = vxor.u32 %v2736, 2147483648
        %v2745 = vxor.u32 %v2737, 2147483648
        %v2746 = vmul.f32 %v2738, 1.442695
        %v2747 = vpow.pop %v2746
        %v2748 = vmul.f32 %v2739, 1.442695
        %v2749 = vpow.pop %v2748
        %v2750 = vmul.f32 %v2740, 1.442695
        %v2751 = vpow.pop %v2750
        %v2752 = vmul.f32 %v2741, 1.442695
        %v2753 = vpow.pop %v2752
        %v2754 = vmul.f32 %v2742, 1.442695
        %v2755 = vpow.pop %v2754
        %v2756 = vmul.f32 %v2743, 1.442695
        %v2757 = vpow.pop %v2756
        %v2758 = vmul.f32 %v2744, 1.442695
        %v2759 = vpow.pop %v2758
        %v2760 = vmul.f32 %v2745, 1.442695
        %v2761 = vpow.pop %v2760
        %v2762 = vadd.f32 %v2747, 1.0
        %v2763 = vadd.f32 %v2749, 1.0
        %v2764 = vadd.f32 %v2751, 1.0
        %v2765 = vadd.f32 %v2753, 1.0
        %v2766 = vadd.f32 %v2755, 1.0
        %v2767 = vadd.f32 %v2757, 1.0
        %v2768 = vadd.f32 %v2759, 1.0
        %v2769 = vadd.f32 %v2761, 1.0
        %v2770 = vrcp.pop %v2762
        %v2771 = vmul.f32 1.0, %v2770
        %v2772 = vrcp.pop %v2763
        %v2773 = vmul.f32 1.0, %v2772
        %v2774 = vrcp.pop %v2764
        %v2775 = vmul.f32 1.0, %v2774
        %v2776 = vrcp.pop %v2765
        %v2777 = vmul.f32 1.0, %v2776
        %v2778 = vrcp.pop %v2766
        %v2779 = vmul.f32 1.0, %v2778
        %v2780 = vrcp.pop %v2767
        %v2781 = vmul.f32 1.0, %v2780
        %v2782 = vrcp.pop %v2768
        %v2783 = vmul.f32 1.0, %v2782
        %v2784 = vrcp.pop %v2769
        %v2785 = vmul.f32 1.0, %v2784
        %v2786 = vmul.f32 %v2679, %v2771
        %v2787 = vmul.f32 %v2681, %v2773
        %v2788 = vmul.f32 %v2722, %v2775
        %v2789 = vmul.f32 %v2724, %v2777
        %v2790 = vmul.f32 %v2683, %v2779
        %v2791 = vmul.f32 %v2685, %v2781
        %v2792 = vmul.f32 %v2726, %v2783
        %v2793 = vmul.f32 %v2728, %v2785
        %v2794 = vpack.c.bf16 %v2790, %v2786
        %v2795 = vpack.c.bf16 %v2791, %v2787
        %v2796 = vpack.c.bf16 %v2792, %v2788
        %v2797 = vpack.c.bf16 %v2793, %v2789
        %v2798 = vld [vmem:[%s545] sm:$0xff]
        %v2799 = vld [vmem:[%s545 + $0x8] sm:$0xff]
        %v2800 = vld [vmem:[%s545 + $0x10] sm:$0xff]
        %v2801 = vld [vmem:[%s545 + $0x18] sm:$0xff]
        %v2802 = vld [vmem:[%s545 + $0x20] sm:$0xff]
        %v2803 = vld [vmem:[%s545 + $0x28] sm:$0xff]
        %v2804 = vld [vmem:[%s545 + $0x30] sm:$0xff]
        %v2805 = vld [vmem:[%s545 + $0x38] sm:$0xff]
        %v2806 = vld [vmem:[%s545 + $0x40] sm:$0xff]
        %v2807 = vld [vmem:[%s545 + $0x48] sm:$0xff]
        %v2808 = vld [vmem:[%s545 + $0x50] sm:$0xff]
        %v2809 = vld [vmem:[%s545 + $0x58] sm:$0xff]
        %v2810 = vld [vmem:[%s545 + $0x60] sm:$0xff]
        %v2811 = vld [vmem:[%s545 + $0x68] sm:$0xff]
        %v2812 = vld [vmem:[%s545 + $0x70] sm:$0xff]
        %v2813 = vld [vmem:[%s545 + $0x78] sm:$0xff]
        %v2814 = vld [vmem:[%s545 + $0x80] sm:$0xff]
        %v2815 = vld [vmem:[%s545 + $0x88] sm:$0xff]
        %v2816 = vld [vmem:[%s545 + $0x90] sm:$0xff]
        %v2817 = vld [vmem:[%s545 + $0x98] sm:$0xff]
        %v2818 = vld [vmem:[%s545 + $0xa0] sm:$0xff]
        %v2819 = vld [vmem:[%s545 + $0xa8] sm:$0xff]
        %v2820 = vld [vmem:[%s545 + $0xb0] sm:$0xff]
        %v2821 = vld [vmem:[%s545 + $0xb8] sm:$0xff]
        %v2822 = vld [vmem:[%s545 + $0xc0] sm:$0xff]
        %v2823 = vld [vmem:[%s545 + $0xc8] sm:$0xff]
        %v2824 = vld [vmem:[%s545 + $0xd0] sm:$0xff]
        %v2825 = vld [vmem:[%s545 + $0xd8] sm:$0xff]
        %v2826 = vld [vmem:[%s545 + $0xe0] sm:$0xff]
        %v2827 = vld [vmem:[%s545 + $0xe8] sm:$0xff]
        %v2828 = vld [vmem:[%s545 + $0xf0] sm:$0xff]
        %v2829 = vld [vmem:[%s545 + $0xf8] sm:$0xff]
        %v2830 = vld [vmem:[%s545 + $0x100] sm:$0xff]
        %v2831 = vld [vmem:[%s545 + $0x108] sm:$0xff]
        %v2832 = vld [vmem:[%s545 + $0x110] sm:$0xff]
        %v2833 = vld [vmem:[%s545 + $0x118] sm:$0xff]
        %v2834 = vld [vmem:[%s545 + $0x120] sm:$0xff]
        %v2835 = vld [vmem:[%s545 + $0x128] sm:$0xff]
        %v2836 = vld [vmem:[%s545 + $0x130] sm:$0xff]
        %v2837 = vld [vmem:[%s545 + $0x138] sm:$0xff]
        %v2838 = vld [vmem:[%s545 + $0x140] sm:$0xff]
        %v2839 = vld [vmem:[%s545 + $0x148] sm:$0xff]
        %v2840 = vld [vmem:[%s545 + $0x150] sm:$0xff]
        %v2841 = vld [vmem:[%s545 + $0x158] sm:$0xff]
        %v2842 = vld [vmem:[%s545 + $0x160] sm:$0xff]
        %v2843 = vld [vmem:[%s545 + $0x168] sm:$0xff]
        %v2844 = vld [vmem:[%s545 + $0x170] sm:$0xff]
        %v2845 = vld [vmem:[%s545 + $0x178] sm:$0xff]
        %v2846 = vld [vmem:[%s545 + $0x180] sm:$0xff]
        %v2847 = vld [vmem:[%s545 + $0x188] sm:$0xff]
        %v2848 = vld [vmem:[%s545 + $0x190] sm:$0xff]
        %v2849 = vld [vmem:[%s545 + $0x198] sm:$0xff]
        %v2850 = vld [vmem:[%s545 + $0x1a0] sm:$0xff]
        %v2851 = vld [vmem:[%s545 + $0x1a8] sm:$0xff]
        %v2852 = vld [vmem:[%s545 + $0x1b0] sm:$0xff]
        %v2853 = vld [vmem:[%s545 + $0x1b8] sm:$0xff]
        %v2854 = vld [vmem:[%s545 + $0x1c0] sm:$0xff]
        %v2855 = vld [vmem:[%s545 + $0x1c8] sm:$0xff]
        %v2856 = vld [vmem:[%s545 + $0x1d0] sm:$0xff]
        %v2857 = vld [vmem:[%s545 + $0x1d8] sm:$0xff]
        %v2858 = vld [vmem:[%s545 + $0x1e0] sm:$0xff]
        %v2859 = vld [vmem:[%s545 + $0x1e8] sm:$0xff]
        %v2860 = vld [vmem:[%s545 + $0x1f0] sm:$0xff]
        %v2861 = vld [vmem:[%s545 + $0x1f8] sm:$0xff]
        %v2862 = vld [vmem:[%s670] sm:$0x3]
        %v2864 = vlaneseq
        %v2865 = vshrl.u32 %v2864, 7
        %v2866 = vsub.s32 0, %v2865
        %v2867 = vrot.slane %v2862, %v2866
        %v2868 = vlaneseq
        %v2869 = vshrl.u32 %v2868, 7
        %v2870 = vsub.s32 1, %v2869
        %v2871 = vrot.slane %v2862, %v2870
        %v2938 = vunpack.c.l.b16 %v2798
        %v2939 = vunpack.c.h.b16 %v2798
        %v2940 = vunpack.c.l.b16 %v2799
        %v2941 = vunpack.c.h.b16 %v2799
        %v2942 = vunpack.c.l.b16 %v2800
        %v2943 = vunpack.c.h.b16 %v2800
        %v2944 = vunpack.c.l.b16 %v2801
        %v2945 = vunpack.c.h.b16 %v2801
        %v2946 = vunpack.c.l.b16 %v2802
        %v2947 = vunpack.c.h.b16 %v2802
        %v2948 = vunpack.c.l.b16 %v2803
        %v2949 = vunpack.c.h.b16 %v2803
        %v2950 = vunpack.c.l.b16 %v2804
        %v2951 = vunpack.c.h.b16 %v2804
        %v2952 = vunpack.c.l.b16 %v2805
        %v2953 = vunpack.c.h.b16 %v2805
        %v2954 = vunpack.c.l.b16 %v2806
        %v2955 = vunpack.c.h.b16 %v2806
        %v2956 = vunpack.c.l.b16 %v2807
        %v2957 = vunpack.c.h.b16 %v2807
        %v2958 = vunpack.c.l.b16 %v2808
        %v2959 = vunpack.c.h.b16 %v2808
        %v2960 = vunpack.c.l.b16 %v2809
        %v2961 = vunpack.c.h.b16 %v2809
        %v2962 = vunpack.c.l.b16 %v2810
        %v2963 = vunpack.c.h.b16 %v2810
        %v2964 = vunpack.c.l.b16 %v2811
        %v2965 = vunpack.c.h.b16 %v2811
        %v2966 = vunpack.c.l.b16 %v2812
        %v2967 = vunpack.c.h.b16 %v2812
        %v2968 = vunpack.c.l.b16 %v2813
        %v2969 = vunpack.c.h.b16 %v2813
        %v2970 = vunpack.c.l.b16 %v2814
        %v2971 = vunpack.c.h.b16 %v2814
        %v2972 = vunpack.c.l.b16 %v2815
        %v2973 = vunpack.c.h.b16 %v2815
        %v2974 = vunpack.c.l.b16 %v2816
        %v2975 = vunpack.c.h.b16 %v2816
        %v2976 = vunpack.c.l.b16 %v2817
        %v2977 = vunpack.c.h.b16 %v2817
        %v2978 = vunpack.c.l.b16 %v2818
        %v2979 = vunpack.c.h.b16 %v2818
        %v2980 = vunpack.c.l.b16 %v2819
        %v2981 = vunpack.c.h.b16 %v2819
        %v2982 = vunpack.c.l.b16 %v2820
        %v2983 = vunpack.c.h.b16 %v2820
        %v2984 = vunpack.c.l.b16 %v2821
        %v2985 = vunpack.c.h.b16 %v2821
        %v2986 = vunpack.c.l.b16 %v2822
        %v2987 = vunpack.c.h.b16 %v2822
        %v2988 = vunpack.c.l.b16 %v2823
        %v2989 = vunpack.c.h.b16 %v2823
        %v2990 = vunpack.c.l.b16 %v2824
        %v2991 = vunpack.c.h.b16 %v2824
        %v2992 = vunpack.c.l.b16 %v2825
        %v2993 = vunpack.c.h.b16 %v2825
        %v2994 = vunpack.c.l.b16 %v2826
        %v2995 = vunpack.c.h.b16 %v2826
        %v2996 = vunpack.c.l.b16 %v2827
        %v2997 = vunpack.c.h.b16 %v2827
        %v2998 = vunpack.c.l.b16 %v2828
        %v2999 = vunpack.c.h.b16 %v2828
        %v3000 = vunpack.c.l.b16 %v2829
        %v3001 = vunpack.c.h.b16 %v2829
        %v3002 = vunpack.c.l.b16 %v2830
        %v3003 = vunpack.c.h.b16 %v2830
        %v3004 = vunpack.c.l.b16 %v2831
        %v3005 = vunpack.c.h.b16 %v2831
        %v3006 = vunpack.c.l.b16 %v2832
        %v3007 = vunpack.c.h.b16 %v2832
        %v3008 = vunpack.c.l.b16 %v2833
        %v3009 = vunpack.c.h.b16 %v2833
        %v3010 = vunpack.c.l.b16 %v2834
        %v3011 = vunpack.c.h.b16 %v2834
        %v3012 = vunpack.c.l.b16 %v2835
        %v3013 = vunpack.c.h.b16 %v2835
        %v3014 = vunpack.c.l.b16 %v2836
        %v3015 = vunpack.c.h.b16 %v2836
        %v3016 = vunpack.c.l.b16 %v2837
        %v3017 = vunpack.c.h.b16 %v2837
        %v3018 = vunpack.c.l.b16 %v2838
        %v3019 = vunpack.c.h.b16 %v2838
        %v3020 = vunpack.c.l.b16 %v2839
        %v3021 = vunpack.c.h.b16 %v2839
        %v3022 = vunpack.c.l.b16 %v2840
        %v3023 = vunpack.c.h.b16 %v2840
        %v3024 = vunpack.c.l.b16 %v2841
        %v3025 = vunpack.c.h.b16 %v2841
        %v3026 = vunpack.c.l.b16 %v2842
        %v3027 = vunpack.c.h.b16 %v2842
        %v3028 = vunpack.c.l.b16 %v2843
        %v3029 = vunpack.c.h.b16 %v2843
        %v3030 = vunpack.c.l.b16 %v2844
        %v3031 = vunpack.c.h.b16 %v2844
        %v3032 = vunpack.c.l.b16 %v2845
        %v3033 = vunpack.c.h.b16 %v2845
        %v3034 = vunpack.c.l.b16 %v2846
        %v3035 = vunpack.c.h.b16 %v2846
        %v3036 = vunpack.c.l.b16 %v2847
        %v3037 = vunpack.c.h.b16 %v2847
        %v3038 = vunpack.c.l.b16 %v2848
        %v3039 = vunpack.c.h.b16 %v2848
        %v3040 = vunpack.c.l.b16 %v2849
        %v3041 = vunpack.c.h.b16 %v2849
        %v3042 = vunpack.c.l.b16 %v2850
        %v3043 = vunpack.c.h.b16 %v2850
        %v3044 = vunpack.c.l.b16 %v2851
        %v3045 = vunpack.c.h.b16 %v2851
        %v3046 = vunpack.c.l.b16 %v2852
        %v3047 = vunpack.c.h.b16 %v2852
        %v3048 = vunpack.c.l.b16 %v2853
        %v3049 = vunpack.c.h.b16 %v2853
        %v3050 = vunpack.c.l.b16 %v2854
        %v3051 = vunpack.c.h.b16 %v2854
        %v3052 = vunpack.c.l.b16 %v2855
        %v3053 = vunpack.c.h.b16 %v2855
        %v3054 = vunpack.c.l.b16 %v2856
        %v3055 = vunpack.c.h.b16 %v2856
        %v3056 = vunpack.c.l.b16 %v2857
        %v3057 = vunpack.c.h.b16 %v2857
        %v3058 = vunpack.c.l.b16 %v2858
        %v3059 = vunpack.c.h.b16 %v2858
        %v3060 = vunpack.c.l.b16 %v2859
        %v3061 = vunpack.c.h.b16 %v2859
        %v3062 = vunpack.c.l.b16 %v2860
        %v3063 = vunpack.c.h.b16 %v2860
        %v3064 = vunpack.c.l.b16 %v2861
        %v3065 = vunpack.c.h.b16 %v2861
        %v3066 = vpack.c.b16 %v2940, %v2938
        %v3067 = vpack.c.b16 %v2941, %v2939
        %v3068 = vpack.c.b16 %v2944, %v2942
        %v3069 = vpack.c.b16 %v2945, %v2943
        %v3070 = vpack.c.b16 %v2948, %v2946
        %v3071 = vpack.c.b16 %v2949, %v2947
        %v3072 = vpack.c.b16 %v2952, %v2950
        %v3073 = vpack.c.b16 %v2953, %v2951
        %v3074 = vpack.c.b16 %v2956, %v2954
        %v3075 = vpack.c.b16 %v2957, %v2955
        %v3076 = vpack.c.b16 %v2960, %v2958
        %v3077 = vpack.c.b16 %v2961, %v2959
        %v3078 = vpack.c.b16 %v2964, %v2962
        %v3079 = vpack.c.b16 %v2965, %v2963
        %v3080 = vpack.c.b16 %v2968, %v2966
        %v3081 = vpack.c.b16 %v2969, %v2967
        %v3082 = vpack.c.b16 %v2972, %v2970
        %v3083 = vpack.c.b16 %v2973, %v2971
        %v3084 = vpack.c.b16 %v2976, %v2974
        %v3085 = vpack.c.b16 %v2977, %v2975
        %v3086 = vpack.c.b16 %v2980, %v2978
        %v3087 = vpack.c.b16 %v2981, %v2979
        %v3088 = vpack.c.b16 %v2984, %v2982
        %v3089 = vpack.c.b16 %v2985, %v2983
        %v3090 = vpack.c.b16 %v2988, %v2986
        %v3091 = vpack.c.b16 %v2989, %v2987
        %v3092 = vpack.c.b16 %v2992, %v2990
        %v3093 = vpack.c.b16 %v2993, %v2991
        %v3094 = vpack.c.b16 %v2996, %v2994
        %v3095 = vpack.c.b16 %v2997, %v2995
        %v3096 = vpack.c.b16 %v3000, %v2998
        %v3097 = vpack.c.b16 %v3001, %v2999
        %v3098 = vpack.c.b16 %v3004, %v3002
        %v3099 = vpack.c.b16 %v3005, %v3003
        %v3100 = vpack.c.b16 %v3008, %v3006
        %v3101 = vpack.c.b16 %v3009, %v3007
        %v3102 = vpack.c.b16 %v3012, %v3010
        %v3103 = vpack.c.b16 %v3013, %v3011
        %v3104 = vpack.c.b16 %v3016, %v3014
        %v3105 = vpack.c.b16 %v3017, %v3015
        %v3106 = vpack.c.b16 %v3020, %v3018
        %v3107 = vpack.c.b16 %v3021, %v3019
        %v3108 = vpack.c.b16 %v3024, %v3022
        %v3109 = vpack.c.b16 %v3025, %v3023
        %v3110 = vpack.c.b16 %v3028, %v3026
        %v3111 = vpack.c.b16 %v3029, %v3027
        %v3112 = vpack.c.b16 %v3032, %v3030
        %v3113 = vpack.c.b16 %v3033, %v3031
        %v3114 = vpack.c.b16 %v3036, %v3034
        %v3115 = vpack.c.b16 %v3037, %v3035
        %v3116 = vpack.c.b16 %v3040, %v3038
        %v3117 = vpack.c.b16 %v3041, %v3039
        %v3118 = vpack.c.b16 %v3044, %v3042
        %v3119 = vpack.c.b16 %v3045, %v3043
        %v3120 = vpack.c.b16 %v3048, %v3046
        %v3121 = vpack.c.b16 %v3049, %v3047
        %v3122 = vpack.c.b16 %v3052, %v3050
        %v3123 = vpack.c.b16 %v3053, %v3051
        %v3124 = vpack.c.b16 %v3056, %v3054
        %v3125 = vpack.c.b16 %v3057, %v3055
        %v3126 = vpack.c.b16 %v3060, %v3058
        %v3127 = vpack.c.b16 %v3061, %v3059
        %v3128 = vpack.c.b16 %v3064, %v3062
        %v3129 = vpack.c.b16 %v3065, %v3063
        %3194 = vmatprep.subr.bf16.mxu0 %v3081
        %3195 = vmatpush1.bf16.msra.mxu0 %v3080
        %3196 = vmatprep.subr.bf16.mxu0 %v3079
        %3197 = vmatpush1.bf16.msra.mxu0 %v3078
        %3198 = vmatprep.subr.bf16.mxu0 %v3077
        %3199 = vmatpush1.bf16.msra.mxu0 %v3076
        %3200 = vmatprep.subr.bf16.mxu0 %v3075
        %3201 = vmatpush1.bf16.msra.mxu0 %v3074
        %3202 = vmatprep.subr.bf16.mxu0 %v3073
        %3203 = vmatpush1.bf16.msra.mxu0 %v3072
        %3204 = vmatprep.subr.bf16.mxu0 %v3071
        %3205 = vmatpush1.bf16.msra.mxu0 %v3070
        %3206 = vmatprep.subr.bf16.mxu0 %v3069
        %3207 = vmatpush1.bf16.msra.mxu0 %v3068
        %3208 = vmatprep.subr.bf16.mxu0 %v3067
        %3209 = vmatpush1.bf16.msra.mxu0 %v3066
        %3210 = vmatprep.subr.bf16.mxu0 %v3097
        %3211 = vmatpush2.bf16.msra.mxu0 %v3096
        %3212 = vmatprep.subr.bf16.mxu0 %v3095
        %3213 = vmatpush2.bf16.msra.mxu0 %v3094
        %3214 = vmatprep.subr.bf16.mxu0 %v3093
        %3215 = vmatpush2.bf16.msra.mxu0 %v3092
        %3216 = vmatprep.subr.bf16.mxu0 %v3091
        %3217 = vmatpush2.bf16.msra.mxu0 %v3090
        %3218 = vmatprep.subr.bf16.mxu0 %v3089
        %3219 = vmatpush2.bf16.msra.mxu0 %v3088
        %3220 = vmatprep.subr.bf16.mxu0 %v3087
        %3221 = vmatpush2.bf16.msra.mxu0 %v3086
        %3222 = vmatprep.subr.bf16.mxu0 %v3085
        %3223 = vmatpush2.bf16.msra.mxu0 %v3084
        %3224 = vmatprep.subr.bf16.mxu0 %v3083
        %3225 = vmatpush2.bf16.msra.mxu0 %v3082
        %3226 = vmatprep.mubr.bf16.mxu0 %v2795
        %3227 = vmatmul.mubr.bf16.gmra.mxu0 %v2794
        %v3228 = vpop.f32.mrf.mxu0
        %v3229 = vadd.f32 %v2867, %v3228
        %v3230 = vpop.f32.mrf.mxu0
        %v3231 = vadd.f32 %v2871, %v3230
        %v3232 = vpop.f32.mrf.mxu0
        %v3233 = vadd.f32 %v2867, %v3232
        %v3234 = vpop.f32.mrf.mxu0
        %v3235 = vadd.f32 %v2871, %v3234
        %3236 = vdwg.mxu0
        %3237 = vmatprep.subr.bf16.mxu0 %v3113
        %3238 = vmatpush1.bf16.msra.mxu0 %v3112
        %3239 = vmatprep.subr.bf16.mxu0 %v3111
        %3240 = vmatpush1.bf16.msra.mxu0 %v3110
        %3241 = vmatprep.subr.bf16.mxu0 %v3109
        %3242 = vmatpush1.bf16.msra.mxu0 %v3108
        %3243 = vmatprep.subr.bf16.mxu0 %v3107
        %3244 = vmatpush1.bf16.msra.mxu0 %v3106
        %3245 = vmatprep.subr.bf16.mxu0 %v3105
        %3246 = vmatpush1.bf16.msra.mxu0 %v3104
        %3247 = vmatprep.subr.bf16.mxu0 %v3103
        %3248 = vmatpush1.bf16.msra.mxu0 %v3102
        %3249 = vmatprep.subr.bf16.mxu0 %v3101
        %3250 = vmatpush1.bf16.msra.mxu0 %v3100
        %3251 = vmatprep.subr.bf16.mxu0 %v3099
        %3252 = vmatpush1.bf16.msra.mxu0 %v3098
        %3253 = vmatprep.subr.bf16.mxu0 %v3129
        %3254 = vmatpush2.bf16.msra.mxu0 %v3128
        %3255 = vmatprep.subr.bf16.mxu0 %v3127
        %3256 = vmatpush2.bf16.msra.mxu0 %v3126
        %3257 = vmatprep.subr.bf16.mxu0 %v3125
        %3258 = vmatpush2.bf16.msra.mxu0 %v3124
        %3259 = vmatprep.subr.bf16.mxu0 %v3123
        %3260 = vmatpush2.bf16.msra.mxu0 %v3122
        %3261 = vmatprep.subr.bf16.mxu0 %v3121
        %3262 = vmatpush2.bf16.msra.mxu0 %v3120
        %3263 = vmatprep.subr.bf16.mxu0 %v3119
        %3264 = vmatpush2.bf16.msra.mxu0 %v3118
        %3265 = vmatprep.subr.bf16.mxu0 %v3117
        %3266 = vmatpush2.bf16.msra.mxu0 %v3116
        %3267 = vmatprep.subr.bf16.mxu0 %v3115
        %3268 = vmatpush2.bf16.msra.mxu0 %v3114
        %3269 = vmatprep.mubr.bf16.mxu0 %v2797
        %3270 = vmatmul.mubr.bf16.gmra.mxu0 %v2796
        %v3271 = vpop.f32.mrf.mxu0
        %v3272 = vadd.f32 %v3229, %v3271
        %v3273 = vpop.f32.mrf.mxu0
        %v3274 = vadd.f32 %v3231, %v3273
        %v3275 = vpop.f32.mrf.mxu0
        %v3276 = vadd.f32 %v3233, %v3275
        %v3277 = vpop.f32.mrf.mxu0
        %v3278 = vadd.f32 %v3235, %v3277
        %3279 = vdwg.mxu0
        %v3280 = vadd.f32 %v2167, %v3272
        %v3281 = vadd.f32 %v2168, %v3274
        %v3282 = vadd.f32 %v2169, %v3276
        %v3283 = vadd.f32 %v2170, %v3278
        %3284 = vst [vmem:[#allocation2] sm:$0xff] %v3280
        %3285 = vst [vmem:[#allocation2 + $0x8] sm:$0xff] %v3281
        %3286 = vst [vmem:[#allocation2 + $0x10] sm:$0xff] %v3282
        %3287 = vst [vmem:[#allocation2 + $0x18] sm:$0xff] %v3283
        %p3288 = scmp.eq.s32.totalorder %s34, 1
        // Predicated region
        $region85: #{clip_multimodal_forward.3} parent=67 // pred_check
          %p3289 = pneg %p3288
        $region86: #{clip_multimodal_forward.3} parent=67 // pred_check_branch
          %3291 = sbr.rel (%p3289) target = $region88
        $region87: #{clip_multimodal_forward.3} parent=67 // pred_region
          %v3292 = vld [vmem:[%s11] ss:$2 sm:$0x3]
          %s3293 = scalar_lea.vmem %s11, 1
          %v3294 = vld [vmem:[%s3293] ss:$2 sm:$0x3]
          %v3299 = vrot.slane %v3282, 7
          %vm3300 = vcmask 1041409
          %v3301 = vsel %vm3300, %v3299, %v3280
          %v3302 = vrot.slane %v3283, 7
          %v3303 = vsel %vm3300, %v3302, %v3281
          %vm3306 = vcmask 1041408
          %v3307 = vsel %vm3306, %v3301, 0.0
          %v3308 = vsel %vm3306, %v3303, 0.0
          %v3309 = vadd.f32 %v3307, %v3308
          %3310 = vadd.xlane.f32.xlu0 %v3309
          %v3311 = vpop.xlane.xlu0 %3310
          %v3312 = vmul.f32 %v3311, %v712
          %v3314 = vrot.slane %v3312, 1
          %v3317 = vsub.f32 %v3280, %v3312
          %v3318 = vsub.f32 %v3281, %v3312
          %v3319 = vsub.f32 %v3282, %v3314
          %v3320 = vsub.f32 %v3283, %v3314
          %v3321 = vmul.f32 %v3317, %v3317
          %v3322 = vmul.f32 %v3318, %v3318
          %v3323 = vmul.f32 %v3319, %v3319
          %v3324 = vmul.f32 %v3320, %v3320
          %v3329 = vrot.slane %v3323, 7
          %v3330 = vsel %vm3300, %v3329, %v3321
          %v3331 = vrot.slane %v3324, 7
          %v3332 = vsel %vm3300, %v3331, %v3322
          %v3335 = vsel %vm3306, %v3330, 0.0
          %v3336 = vsel %vm3306, %v3332, 0.0
          %v3337 = vadd.f32 %v3335, %v3336
          %3338 = vadd.xlane.f32.xlu0 %v3337
          %v3339 = vpop.xlane.xlu0 %3338
          %v3340 = vmul.f32 %v3339, %v712
          %v3341 = vadd.f32 %v3340, 1e-05
          %v3342 = vrsqrt.pop %v3341
          %v3344 = vrot.slane %v3342, 1
          %v3347 = vmul.f32 %v3317, %v3342
          %v3348 = vmul.f32 %v3318, %v3342
          %v3349 = vmul.f32 %v3319, %v3344
          %v3350 = vmul.f32 %v3320, %v3344
          %v3352 = vlaneseq
          %v3353 = vshrl.u32 %v3352, 7
          %v3354 = vsub.s32 0, %v3353
          %v3355 = vrot.slane %v3292, %v3354
          %v3356 = vlaneseq
          %v3357 = vshrl.u32 %v3356, 7
          %v3358 = vsub.s32 1, %v3357
          %v3359 = vrot.slane %v3292, %v3358
          %v3362 = vmul.f32 %v3347, %v3355
          %v3363 = vmul.f32 %v3348, %v3359
          %v3364 = vmul.f32 %v3349, %v3355
          %v3365 = vmul.f32 %v3350, %v3359
          %v3367 = vlaneseq
          %v3368 = vshrl.u32 %v3367, 7
          %v3369 = vsub.s32 0, %v3368
          %v3370 = vrot.slane %v3294, %v3369
          %v3371 = vlaneseq
          %v3372 = vshrl.u32 %v3371, 7
          %v3373 = vsub.s32 1, %v3372
          %v3374 = vrot.slane %v3294, %v3373
          %v3377 = vadd.f32 %v3362, %v3370
          %v3378 = vadd.f32 %v3363, %v3374
          %v3379 = vadd.f32 %v3364, %v3370
          %v3380 = vadd.f32 %v3365, %v3374
          %v3385 = vcombine.low %v3377, %v3378
          %v3387 = vunpack.c.l.s4 1966171168
          %v3388 = vunpack.c.0.s8 %v3387
          %v3389 = vlaneseq
          %v3390 = vshrl.u32 %v3389, 7
          %v3391 = vsub.s32 %v3388, %v3390
          %v3392 = vrot.slane %v3385, %v3391
          %v3394 = vunpack.c.l.s4 1966171168
          %v3395 = vunpack.c.0.s8 %v3394
          %v3396 = vlaneseq
          %v3397 = vshrl.u32 %v3396, 7
          %v3398 = vsub.s32 %v3395, %v3397
          %v3399 = vrot.slane %v3392, %v3398
          %v3400 = vcombine.low %v3379, %v3380
          %v3402 = vunpack.c.l.s4 1966171168
          %v3403 = vunpack.c.0.s8 %v3402
          %v3404 = vlaneseq
          %v3405 = vshrl.u32 %v3404, 7
          %v3406 = vsub.s32 %v3403, %v3405
          %v3407 = vrot.slane %v3400, %v3406
          %v3409 = vunpack.c.l.s4 1966171168
          %v3410 = vunpack.c.0.s8 %v3409
          %v3411 = vlaneseq
          %v3412 = vshrl.u32 %v3411, 7
          %v3413 = vsub.s32 %v3410, %v3412
          %v3414 = vrot.slane %v3407, %v3413
          %v3417 = vlaneseq
          %vm3418 = vcmp.ge.s32.totalorder %v3417, 0
          %vm3419 = vcmp.lt.s32.totalorder %v3417, 256
          %vm3420 = vmand %vm3418, %vm3419
          %3421 = vst.msk [vmem:[%s675] sm:$0x3] %vm3420, %v3399
          %3422 = vst.msk [vmem:[%s675 + $0x2] sm:$0x3] %vm3420, %v3414
        $region88: #{clip_multimodal_forward.3} parent=67 // pred_fallthru
          _
        %s3423 = smul.u32 2, %s33
        %p3424 = scmp.lt.s32.totalorder %s3423, 1
        %s3425 = scalar_select %p3424, %s3423, 1
        %s3426 = smul.addr %s3425, 2
        %s3427 = scalar_lea.vmem %s12, %s3426
        // Predicated region
        $region89: #{clip_multimodal_forward.3} parent=67 // pred_check
          %p3428 = pneg %p366
        $region90: #{clip_multimodal_forward.3} parent=67 // pred_check_branch
          %3430 = sbr.rel (%p3428) target = $region92
        $region91: #{clip_multimodal_forward.3} parent=67 // pred_region
          %s3431 = smul.u32 2, %s33
        $region92: #{clip_multimodal_forward.3} parent=67 // pred_fallthru
          _
        // Predicated region
        $region93: #{clip_multimodal_forward.3} parent=67 // pred_check
          %p3432 = pneg %p366
        $region94: #{clip_multimodal_forward.3} parent=67 // pred_check_branch
          %3434 = sbr.rel (%p3432) target = $region96
        $region95: #{clip_multimodal_forward.3} parent=67 // pred_region
          %s3435 = smul.u32 2, %s33
          %p3436 = scmp.lt.s32.totalorder %s3435, 1
          %s3437 = scalar_select %p3436, %s3435, 1
          %s3438 = smul.addr %s3437, 2
          %s3439 = scalar_lea.vmem %s12, %s3438
        $region96: #{clip_multimodal_forward.3} parent=67 // pred_fallthru
          _
      $region68: #{clip_multimodal_forward.3} parent=5 // pred_fallthru
        _
      %p3440 = scmp.le.s32.totalorder 2, %s24
      // Predicated region
      $region97: #{clip_multimodal_forward.3} parent=5 // pred_check
        %p3441 = pneg %p3440
      $region98: #{clip_multimodal_forward.3} parent=5 // pred_check_branch
        %3443 = sbr.rel (%p3441) target = $region100
      $region99: #{clip_multimodal_forward.3} parent=5 // pred_region
        %s3444 = ssub.s32 %s24, 2
      $region100: #{clip_multimodal_forward.3} parent=5 // pred_fallthru
        _
    $region6: #{clip_multimodal_forward.3} parent=1 // loop_footer
      %s28 = sadd.s32 1, %s24
    $region7: #{clip_multimodal_forward.3} parent=1 // loop_footer_branch
      %23 = sbr.rel target = $region3
    $region8: #{clip_multimodal_forward.3} parent=1 // loop_exit
      _
    %3445 = vsyncpa [#allocation5], 1
    %s3446 = scalar_lea.sflag [#allocation5], 1
    %3447 = vsyncpa %s3446, 1
    %3448 = vsyncpa [#allocation7], 1
    %s3449 = scalar_lea.sflag [#allocation7], 1
    %3450 = vsyncpa %s3449, 1

// kernel: clip_multimodal_forward.4
$region0: #{clip_multimodal_forward.4}
  #allocation0 [shape = 'u32[]', space=smem, size = 0x4, offset = 0x4, fixed_abs, tag = 'smem constant byte address 0x4 - core index']
  #allocation1 [shape = 'u32[144,128]{1,0:T(1,128)}', space=vmem, size = 0x12000, scoped, tag = 'internal scratch']
  #allocation2 [shape = 'f32[2,8,256]{2,1,0:T(8,128)}', space=vmem, size = 0x4000, scoped, tag = 'scratch operand']
  #allocation3 [shape = 'f32[2,8,8]{2,1,0:T(8,128)}', space=vmem, size = 0x2000, scoped, tag = 'scratch operand']
  %s0 = inlined_call_operand.vmem [shape: f32[2,8,256], index: 0, kind: input, shape index: {}]
  %s1 = inlined_call_operand.vmem [shape: f32[2,1,8], index: 1, kind: input, shape index: {}]
  %s2 = inlined_call_operand.vmem [shape: f32[2,8,1], index: 2, kind: input, shape index: {}]
  %s3 = inlined_call_operand.vmem [shape: f32[2,2,256], index: 3, kind: input, shape index: {}]
  %s4 = inlined_call_operand.vmem [shape: bf16[2,256,768], index: 4, kind: input, shape index: {}]
  %s5 = inlined_call_operand.vmem [shape: f32[2,1,768], index: 5, kind: input, shape index: {}]
  %s6 = inlined_call_operand.vmem [shape: bf16[2,256,256], index: 6, kind: input, shape index: {}]
  %s7 = inlined_call_operand.vmem [shape: f32[2,1,256], index: 7, kind: input, shape index: {}]
  %s8 = inlined_call_operand.vmem [shape: f32[2,2,256], index: 8, kind: input, shape index: {}]
  %s9 = inlined_call_operand.vmem [shape: bf16[2,256,512], index: 9, kind: input, shape index: {}]
  %s10 = inlined_call_operand.vmem [shape: f32[2,1,512], index: 10, kind: input, shape index: {}]
  %s11 = inlined_call_operand.vmem [shape: bf16[2,512,256], index: 11, kind: input, shape index: {}]
  %s12 = inlined_call_operand.vmem [shape: f32[2,1,256], index: 12, kind: input, shape index: {}]
  %s13 = inlined_call_operand.vmem [shape: f32[2,256], index: 13, kind: input, shape index: {}]
  %s14 = inlined_call_operand.vmem [shape: f32[2,1,256], index: 14, kind: output, shape index: {}]
  %s15 = sld [smem:[#allocation0]]
  $region97: #{clip_multimodal_forward.4} parent=0
    _
  %s17 = ssub.s32 1, %s15
  %s18 = scalar_select 0, %s17, %s15
  loop: start=0, step=1, limit=4
  $region2: #{clip_multimodal_forward.4} parent=0 // loop_pre_header
    _
  $region3: #{clip_multimodal_forward.4} parent=0 // loop_header
    %s20 = sphi 0, %s24
    %p21 = scmp.ge.s32.totalorder %s20, 4
    %s27 = sphi 0, %s39
    %s28 = sphi 0, %s35
    %s29 = sphi 0, %s27
    %s30 = sphi 0, %s28
    %s31 = sphi 0, %s29
    %s32 = sphi 0, %s30
    %s42 = sphi 0, %s44
    %s45 = sphi 0, %s42
    %s46 = sphi 0, %s45
    %s62 = sphi 0, %s46
    %s68 = sphi 0, %s70
    %s71 = sphi 0, %s68
    %s72 = sphi 0, %s71
    %s88 = sphi 0, %s72
    %s94 = sphi 0, %s96
    %s97 = sphi 0, %s94
    %s98 = sphi 0, %s97
    %s114 = sphi 0, %s98
    %s120 = sphi 0, %s122
    %s123 = sphi 0, %s120
    %s124 = sphi 0, %s123
    %s140 = sphi 0, %s124
    %s146 = sphi 0, %s148
    %s149 = sphi 0, %s146
    %s150 = sphi 0, %s149
    %s166 = sphi 0, %s150
    %s172 = sphi 0, %s174
    %s175 = sphi 0, %s172
    %s176 = sphi 0, %s175
    %s192 = sphi 0, %s176
    %s198 = sphi 0, %s200
    %s201 = sphi 0, %s198
    %s202 = sphi 0, %s201
    %s218 = sphi 0, %s202
    %s224 = sphi 0, %s226
    %s227 = sphi 0, %s224
    %s228 = sphi 0, %s227
    %s244 = sphi 0, %s228
    %s250 = sphi 0, %s252
    %s253 = sphi 0, %s250
    %s254 = sphi 0, %s253
    %s270 = sphi 0, %s254
    %s276 = sphi 0, %s278
    %s279 = sphi 0, %s276
    %s280 = sphi 0, %s279
    %s296 = sphi 0, %s280
    %s302 = sphi 0, %s304
    %s305 = sphi 0, %s302
    %s306 = sphi 0, %s305
    %s322 = sphi 0, %s306
    %s328 = sphi 0, %s330
    %s331 = sphi 0, %s328
    %s332 = sphi 0, %s331
    %s348 = sphi 0, %s332
    %s354 = sphi 0, %s356
    %s357 = sphi 0, %s354
    %s358 = sphi 0, %s357
    %s374 = sphi 0, %s358
    %s378 = sphi 0, %s378
    %s380 = sphi 0, %s378
    %s381 = sphi 0, %s380
    %s395 = sphi 0, %s381
    %s401 = sphi 0, %s403
    %s404 = sphi 0, %s401
    %s405 = sphi 0, %s404
    %s421 = sphi 0, %s405
  $region4: #{clip_multimodal_forward.4} parent=0 // loop_header_branch
    %23 = sbr.rel (%p21) target = $region8
  $region5: #{clip_multimodal_forward.4} parent=0 // loop_body
    %s25 = ssub.s32 %s20, 1
    %s26 = ssub.s32 %s20, 2
    %s33 = sadd.s32 1, %s28
    %p34 = scmp.ge.s32.totalorder %s33, 2
    %s35 = scalar_select %p34, 0, %s33
    %s36 = sadd.s32 1, %s27
    %s37 = scalar_select %p34, %s36, %s27
    %p38 = scmp.ge.s32.totalorder %s37, 1
    %s39 = scalar_select %p38, 0, %s37
    %s40 = ssub.s32 %s27, %s39
    %p41 = scmp.eq.s32.totalorder %s40, 0
    %s43 = sadd.s32 %s42, 1
    %s44 = scalar_select %p41, %s42, %s43
    %p47 = pneg %p41
    %p48 = scmp.eq.s32.totalorder %s20, 1
    %p49 = por %p47, %p48
    %p50 = scmp.ne.s32.totalorder %s42, %s45
    %p51 = scmp.eq.s32.totalorder %s20, 0
    %p52 = por %p50, %p51
    %p53 = scmp.ne.s32.totalorder %s42, %s45
    %p54 = scmp.eq.s32.totalorder %s25, 1
    %p55 = por %p53, %p54
    %p56 = scmp.ne.s32.totalorder %s45, %s46
    %p57 = scmp.eq.s32.totalorder %s25, 0
    %p58 = por %p56, %p57
    %p59 = scmp.ne.s32.totalorder %s45, %s46
    %p60 = scmp.eq.s32.totalorder %s26, 1
    %p61 = por %p59, %p60
    %p63 = scmp.ne.s32.totalorder %s46, %s62
    %p64 = scmp.eq.s32.totalorder %s26, 0
    %p65 = por %p63, %p64
    %s66 = ssub.s32 %s27, %s39
    %p67 = scmp.eq.s32.totalorder %s66, 0
    %s69 = sadd.s32 %s68, 1
    %s70 = scalar_select %p67, %s68, %s69
    %p73 = pneg %p67
    %p74 = scmp.eq.s32.totalorder %s20, 1
    %p75 = por %p73, %p74
    %p76 = scmp.ne.s32.totalorder %s68, %s71
    %p77 = scmp.eq.s32.totalorder %s20, 0
    %p78 = por %p76, %p77
    %p79 = scmp.ne.s32.totalorder %s68, %s71
    %p80 = scmp.eq.s32.totalorder %s25, 1
    %p81 = por %p79, %p80
    %p82 = scmp.ne.s32.totalorder %s71, %s72
    %p83 = scmp.eq.s32.totalorder %s25, 0
    %p84 = por %p82, %p83
    %p85 = scmp.ne.s32.totalorder %s71, %s72
    %p86 = scmp.eq.s32.totalorder %s26, 1
    %p87 = por %p85, %p86
    %p89 = scmp.ne.s32.totalorder %s72, %s88
    %p90 = scmp.eq.s32.totalorder %s26, 0
    %p91 = por %p89, %p90
    %s92 = ssub.s32 %s27, %s39
    %p93 = scmp.eq.s32.totalorder %s92, 0
    %s95 = sadd.s32 %s94, 1
    %s96 = scalar_select %p93, %s94, %s95
    %p99 = pneg %p93
    %p100 = scmp.eq.s32.totalorder %s20, 1
    %p101 = por %p99, %p100
    %p102 = scmp.ne.s32.totalorder %s94, %s97
    %p103 = scmp.eq.s32.totalorder %s20, 0
    %p104 = por %p102, %p103
    %p105 = scmp.ne.s32.totalorder %s94, %s97
    %p106 = scmp.eq.s32.totalorder %s25, 1
    %p107 = por %p105, %p106
    %p108 = scmp.ne.s32.totalorder %s97, %s98
    %p109 = scmp.eq.s32.totalorder %s25, 0
    %p110 = por %p108, %p109
    %p111 = scmp.ne.s32.totalorder %s97, %s98
    %p112 = scmp.eq.s32.totalorder %s26, 1
    %p113 = por %p111, %p112
    %p115 = scmp.ne.s32.totalorder %s98, %s114
    %p116 = scmp.eq.s32.totalorder %s26, 0
    %p117 = por %p115, %p116
    %s118 = ssub.s32 %s28, %s35
    %p119 = scmp.eq.s32.totalorder %s118, 0
    %s121 = sadd.s32 %s120, 1
    %s122 = scalar_select %p119, %s120, %s121
    %p125 = pneg %p119
    %p126 = scmp.eq.s32.totalorder %s20, 1
    %p127 = por %p125, %p126
    %p128 = scmp.ne.s32.totalorder %s120, %s123
    %p129 = scmp.eq.s32.totalorder %s20, 0
    %p130 = por %p128, %p129
    %p131 = scmp.ne.s32.totalorder %s120, %s123
    %p132 = scmp.eq.s32.totalorder %s25, 1
    %p133 = por %p131, %p132
    %p134 = scmp.ne.s32.totalorder %s123, %s124
    %p135 = scmp.eq.s32.totalorder %s25, 0
    %p136 = por %p134, %p135
    %p137 = scmp.ne.s32.totalorder %s123, %s124
    %p138 = scmp.eq.s32.totalorder %s26, 1
    %p139 = por %p137, %p138
    %p141 = scmp.ne.s32.totalorder %s124, %s140
    %p142 = scmp.eq.s32.totalorder %s26, 0
    %p143 = por %p141, %p142
    %s144 = ssub.s32 %s28, %s35
    %p145 = scmp.eq.s32.totalorder %s144, 0
    %s147 = sadd.s32 %s146, 1
    %s148 = scalar_select %p145, %s146, %s147
    %p151 = pneg %p145
    %p152 = scmp.eq.s32.totalorder %s20, 1
    %p153 = por %p151, %p152
    %p154 = scmp.ne.s32.totalorder %s146, %s149
    %p155 = scmp.eq.s32.totalorder %s20, 0
    %p156 = por %p154, %p155
    %p157 = scmp.ne.s32.totalorder %s146, %s149
    %p158 = scmp.eq.s32.totalorder %s25, 1
    %p159 = por %p157, %p158
    %p160 = scmp.ne.s32.totalorder %s149, %s150
    %p161 = scmp.eq.s32.totalorder %s25, 0
    %p162 = por %p160, %p161
    %p163 = scmp.ne.s32.totalorder %s149, %s150
    %p164 = scmp.eq.s32.totalorder %s26, 1
    %p165 = por %p163, %p164
    %p167 = scmp.ne.s32.totalorder %s150, %s166
    %p168 = scmp.eq.s32.totalorder %s26, 0
    %p169 = por %p167, %p168
    %s170 = ssub.s32 %s28, %s35
    %p171 = scmp.eq.s32.totalorder %s170, 0
    %s173 = sadd.s32 %s172, 1
    %s174 = scalar_select %p171, %s172, %s173
    %p177 = pneg %p171
    %p178 = scmp.eq.s32.totalorder %s20, 1
    %p179 = por %p177, %p178
    %p180 = scmp.ne.s32.totalorder %s172, %s175
    %p181 = scmp.eq.s32.totalorder %s20, 0
    %p182 = por %p180, %p181
    %p183 = scmp.ne.s32.totalorder %s172, %s175
    %p184 = scmp.eq.s32.totalorder %s25, 1
    %p185 = por %p183, %p184
    %p186 = scmp.ne.s32.totalorder %s175, %s176
    %p187 = scmp.eq.s32.totalorder %s25, 0
    %p188 = por %p186, %p187
    %p189 = scmp.ne.s32.totalorder %s175, %s176
    %p190 = scmp.eq.s32.totalorder %s26, 1
    %p191 = por %p189, %p190
    %p193 = scmp.ne.s32.totalorder %s176, %s192
    %p194 = scmp.eq.s32.totalorder %s26, 0
    %p195 = por %p193, %p194
    %s196 = ssub.s32 %s28, %s35
    %p197 = scmp.eq.s32.totalorder %s196, 0
    %s199 = sadd.s32 %s198, 1
    %s200 = scalar_select %p197, %s198, %s199
    %p203 = pneg %p197
    %p204 = scmp.eq.s32.totalorder %s20, 1
    %p205 = por %p203, %p204
    %p206 = scmp.ne.s32.totalorder %s198, %s201
    %p207 = scmp.eq.s32.totalorder %s20, 0
    %p208 = por %p206, %p207
    %p209 = scmp.ne.s32.totalorder %s198, %s201
    %p210 = scmp.eq.s32.totalorder %s25, 1
    %p211 = por %p209, %p210
    %p212 = scmp.ne.s32.totalorder %s201, %s202
    %p213 = scmp.eq.s32.totalorder %s25, 0
    %p214 = por %p212, %p213
    %p215 = scmp.ne.s32.totalorder %s201, %s202
    %p216 = scmp.eq.s32.totalorder %s26, 1
    %p217 = por %p215, %p216
    %p219 = scmp.ne.s32.totalorder %s202, %s218
    %p220 = scmp.eq.s32.totalorder %s26, 0
    %p221 = por %p219, %p220
    %s222 = ssub.s32 %s28, %s35
    %p223 = scmp.eq.s32.totalorder %s222, 0
    %s225 = sadd.s32 %s224, 1
    %s226 = scalar_select %p223, %s224, %s225
    %p229 = pneg %p223
    %p230 = scmp.eq.s32.totalorder %s20, 1
    %p231 = por %p229, %p230
    %p232 = scmp.ne.s32.totalorder %s224, %s227
    %p233 = scmp.eq.s32.totalorder %s20, 0
    %p234 = por %p232, %p233
    %p235 = scmp.ne.s32.totalorder %s224, %s227
    %p236 = scmp.eq.s32.totalorder %s25, 1
    %p237 = por %p235, %p236
    %p238 = scmp.ne.s32.totalorder %s227, %s228
    %p239 = scmp.eq.s32.totalorder %s25, 0
    %p240 = por %p238, %p239
    %p241 = scmp.ne.s32.totalorder %s227, %s228
    %p242 = scmp.eq.s32.totalorder %s26, 1
    %p243 = por %p241, %p242
    %p245 = scmp.ne.s32.totalorder %s228, %s244
    %p246 = scmp.eq.s32.totalorder %s26, 0
    %p247 = por %p245, %p246
    %s248 = ssub.s32 %s28, %s35
    %p249 = scmp.eq.s32.totalorder %s248, 0
    %s251 = sadd.s32 %s250, 1
    %s252 = scalar_select %p249, %s250, %s251
    %p255 = pneg %p249
    %p256 = scmp.eq.s32.totalorder %s20, 1
    %p257 = por %p255, %p256
    %p258 = scmp.ne.s32.totalorder %s250, %s253
    %p259 = scmp.eq.s32.totalorder %s20, 0
    %p260 = por %p258, %p259
    %p261 = scmp.ne.s32.totalorder %s250, %s253
    %p262 = scmp.eq.s32.totalorder %s25, 1
    %p263 = por %p261, %p262
    %p264 = scmp.ne.s32.totalorder %s253, %s254
    %p265 = scmp.eq.s32.totalorder %s25, 0
    %p266 = por %p264, %p265
    %p267 = scmp.ne.s32.totalorder %s253, %s254
    %p268 = scmp.eq.s32.totalorder %s26, 1
    %p269 = por %p267, %p268
    %p271 = scmp.ne.s32.totalorder %s254, %s270
    %p272 = scmp.eq.s32.totalorder %s26, 0
    %p273 = por %p271, %p272
    %s274 = ssub.s32 %s28, %s35
    %p275 = scmp.eq.s32.totalorder %s274, 0
    %s277 = sadd.s32 %s276, 1
    %s278 = scalar_select %p275, %s276, %s277
    %p281 = pneg %p275
    %p282 = scmp.eq.s32.totalorder %s20, 1
    %p283 = por %p281, %p282
    %p284 = scmp.ne.s32.totalorder %s276, %s279
    %p285 = scmp.eq.s32.totalorder %s20, 0
    %p286 = por %p284, %p285
    %p287 = scmp.ne.s32.totalorder %s276, %s279
    %p288 = scmp.eq.s32.totalorder %s25, 1
    %p289 = por %p287, %p288
    %p290 = scmp.ne.s32.totalorder %s279, %s280
    %p291 = scmp.eq.s32.totalorder %s25, 0
    %p292 = por %p290, %p291
    %p293 = scmp.ne.s32.totalorder %s279, %s280
    %p294 = scmp.eq.s32.totalorder %s26, 1
    %p295 = por %p293, %p294
    %p297 = scmp.ne.s32.totalorder %s280, %s296
    %p298 = scmp.eq.s32.totalorder %s26, 0
    %p299 = por %p297, %p298
    %s300 = ssub.s32 %s28, %s35
    %p301 = scmp.eq.s32.totalorder %s300, 0
    %s303 = sadd.s32 %s302, 1
    %s304 = scalar_select %p301, %s302, %s303
    %p307 = pneg %p301
    %p308 = scmp.eq.s32.totalorder %s20, 1
    %p309 = por %p307, %p308
    %p310 = scmp.ne.s32.totalorder %s302, %s305
    %p311 = scmp.eq.s32.totalorder %s20, 0
    %p312 = por %p310, %p311
    %p313 = scmp.ne.s32.totalorder %s302, %s305
    %p314 = scmp.eq.s32.totalorder %s25, 1
    %p315 = por %p313, %p314
    %p316 = scmp.ne.s32.totalorder %s305, %s306
    %p317 = scmp.eq.s32.totalorder %s25, 0
    %p318 = por %p316, %p317
    %p319 = scmp.ne.s32.totalorder %s305, %s306
    %p320 = scmp.eq.s32.totalorder %s26, 1
    %p321 = por %p319, %p320
    %p323 = scmp.ne.s32.totalorder %s306, %s322
    %p324 = scmp.eq.s32.totalorder %s26, 0
    %p325 = por %p323, %p324
    %s326 = ssub.s32 %s28, %s35
    %p327 = scmp.eq.s32.totalorder %s326, 0
    %s329 = sadd.s32 %s328, 1
    %s330 = scalar_select %p327, %s328, %s329
    %p333 = pneg %p327
    %p334 = scmp.eq.s32.totalorder %s20, 1
    %p335 = por %p333, %p334
    %p336 = scmp.ne.s32.totalorder %s328, %s331
    %p337 = scmp.eq.s32.totalorder %s20, 0
    %p338 = por %p336, %p337
    %p339 = scmp.ne.s32.totalorder %s328, %s331
    %p340 = scmp.eq.s32.totalorder %s25, 1
    %p341 = por %p339, %p340
    %p342 = scmp.ne.s32.totalorder %s331, %s332
    %p343 = scmp.eq.s32.totalorder %s25, 0
    %p344 = por %p342, %p343
    %p345 = scmp.ne.s32.totalorder %s331, %s332
    %p346 = scmp.eq.s32.totalorder %s26, 1
    %p347 = por %p345, %p346
    %p349 = scmp.ne.s32.totalorder %s332, %s348
    %p350 = scmp.eq.s32.totalorder %s26, 0
    %p351 = por %p349, %p350
    %s352 = ssub.s32 %s28, %s35
    %p353 = scmp.eq.s32.totalorder %s352, 0
    %s355 = sadd.s32 %s354, 1
    %s356 = scalar_select %p353, %s354, %s355
    %p359 = pneg %p353
    %p360 = scmp.eq.s32.totalorder %s20, 1
    %p361 = por %p359, %p360
    %p362 = scmp.ne.s32.totalorder %s354, %s357
    %p363 = scmp.eq.s32.totalorder %s20, 0
    %p364 = por %p362, %p363
    %p365 = scmp.ne.s32.totalorder %s354, %s357
    %p366 = scmp.eq.s32.totalorder %s25, 1
    %p367 = por %p365, %p366
    %p368 = scmp.ne.s32.totalorder %s357, %s358
    %p369 = scmp.eq.s32.totalorder %s25, 0
    %p370 = por %p368, %p369
    %p371 = scmp.ne.s32.totalorder %s357, %s358
    %p372 = scmp.eq.s32.totalorder %s26, 1
    %p373 = por %p371, %p372
    %p375 = scmp.ne.s32.totalorder %s358, %s374
    %p376 = scmp.eq.s32.totalorder %s26, 0
    %p377 = por %p375, %p376
    %s379 = sadd.s32 %s378, 1
    %p382 = scmp.eq.s32.totalorder %s20, 1
    %p383 = scmp.ne.s32.totalorder %s378, %s380
    %p384 = scmp.eq.s32.totalorder %s20, 0
    %p385 = por %p383, %p384
    %p386 = scmp.ne.s32.totalorder %s378, %s380
    %p387 = scmp.eq.s32.totalorder %s25, 1
    %p388 = por %p386, %p387
    %p389 = scmp.ne.s32.totalorder %s380, %s381
    %p390 = scmp.eq.s32.totalorder %s25, 0
    %p391 = por %p389, %p390
    %p392 = scmp.ne.s32.totalorder %s380, %s381
    %p393 = scmp.eq.s32.totalorder %s26, 1
    %p394 = por %p392, %p393
    %p396 = scmp.ne.s32.totalorder %s381, %s395
    %p397 = scmp.eq.s32.totalorder %s26, 0
    %p398 = por %p396, %p397
    %s399 = ssub.s32 %s27, %s39
    %p400 = scmp.eq.s32.totalorder %s399, 0
    %s402 = sadd.s32 %s401, 1
    %s403 = scalar_select %p400, %s401, %s402
    %p406 = pneg %p400
    %p407 = scmp.eq.s32.totalorder %s20, 1
    %p408 = por %p406, %p407
    %p409 = scmp.ne.s32.totalorder %s401, %s404
    %p410 = scmp.eq.s32.totalorder %s20, 0
    %p411 = por %p409, %p410
    %p412 = scmp.ne.s32.totalorder %s401, %s404
    %p413 = scmp.eq.s32.totalorder %s25, 1
    %p414 = por %p412, %p413
    %p415 = scmp.ne.s32.totalorder %s404, %s405
    %p416 = scmp.eq.s32.totalorder %s25, 0
    %p417 = por %p415, %p416
    %p418 = scmp.ne.s32.totalorder %s404, %s405
    %p419 = scmp.eq.s32.totalorder %s26, 1
    %p420 = por %p418, %p419
    %p422 = scmp.ne.s32.totalorder %s405, %s421
    %p423 = scmp.eq.s32.totalorder %s26, 0
    %p424 = por %p422, %p423
    %p425 = scmp.le.s32.totalorder 1, %s20
    %p426 = scmp.lt.s32.totalorder %s20, 3
    %p427 = pnand %p425, %p426
    %p428 = pneg %p427
    // Predicated region
    $region9: #{clip_multimodal_forward.4} parent=5 // pred_check
      _
    $region10: #{clip_multimodal_forward.4} parent=5 // pred_check_branch
      %430 = sbr.rel (%p427) target = $region12
    $region11: #{clip_multimodal_forward.4} parent=5 // pred_region
      %s431 = ssub.s32 %s20, 1
      // Predicated region
      $region13: #{clip_multimodal_forward.4} parent=11 // pred_check
        %p432 = pneg %p58
      $region14: #{clip_multimodal_forward.4} parent=11 // pred_check_branch
        %434 = sbr.rel (%p432) target = $region16
      $region15: #{clip_multimodal_forward.4} parent=11 // pred_region
        %s435 = smul.u32 2, %s29
        %p436 = scmp.lt.s32.totalorder %s435, 1
        %s437 = scalar_select %p436, %s435, 1
        %s438 = smul.addr %s437, 2
        %s439 = smul.addr %s438, 8
        %s440 = scalar_lea.vmem %s0, %s439
        %s441 = smul.u32 2, %s29
      $region16: #{clip_multimodal_forward.4} parent=11 // pred_fallthru
        _
      // Predicated region
      $region17: #{clip_multimodal_forward.4} parent=11 // pred_check
        %p442 = pneg %p84
      $region18: #{clip_multimodal_forward.4} parent=11 // pred_check_branch
        %444 = sbr.rel (%p442) target = $region20
      $region19: #{clip_multimodal_forward.4} parent=11 // pred_region
        %s445 = smul.u32 2, %s29
        %p446 = scmp.lt.s32.totalorder %s445, 1
        %s447 = scalar_select %p446, %s445, 1
        %s448 = scalar_lea.vmem %s1, %s447
        %s449 = smul.u32 2, %s29
      $region20: #{clip_multimodal_forward.4} parent=11 // pred_fallthru
        _
      // Predicated region
      $region21: #{clip_multimodal_forward.4} parent=11 // pred_check
        %p450 = pneg %p110
      $region22: #{clip_multimodal_forward.4} parent=11 // pred_check_branch
        %452 = sbr.rel (%p450) target = $region24
      $region23: #{clip_multimodal_forward.4} parent=11 // pred_region
        %s453 = smul.u32 2, %s29
        %p454 = scmp.lt.s32.totalorder %s453, 1
        %s455 = scalar_select %p454, %s453, 1
        %s456 = smul.addr %s455, 8
        %s457 = scalar_lea.vmem %s2, %s456
        %s458 = smul.u32 2, %s29
      $region24: #{clip_multimodal_forward.4} parent=11 // pred_fallthru
        _
      // Predicated region
      $region25: #{clip_multimodal_forward.4} parent=11 // pred_check
        %p459 = pneg %p391
      $region26: #{clip_multimodal_forward.4} parent=11 // pred_check_branch
        %461 = sbr.rel (%p459) target = $region28
      $region27: #{clip_multimodal_forward.4} parent=11 // pred_region
        _
      $region28: #{clip_multimodal_forward.4} parent=11 // pred_fallthru
        _
    $region12: #{clip_multimodal_forward.4} parent=5 // pred_fallthru
      _
    %p462 = scmp.lt.s32.totalorder %s20, 2
    // Predicated region
    $region29: #{clip_multimodal_forward.4} parent=5 // pred_check
      %p463 = pneg %p462
    $region30: #{clip_multimodal_forward.4} parent=5 // pred_check_branch
      %465 = sbr.rel (%p463) target = $region32
    $region31: #{clip_multimodal_forward.4} parent=5 // pred_region
      // Predicated region
      $region33: #{clip_multimodal_forward.4} parent=31 // pred_check
        %p466 = pneg %p130
      $region34: #{clip_multimodal_forward.4} parent=31 // pred_check_branch
        %468 = sbr.rel (%p466) target = $region36
      $region35: #{clip_multimodal_forward.4} parent=31 // pred_region
        %p469 = scmp.lt.s32.totalorder %s28, 1
        %s470 = scalar_select %p469, %s28, 1
        %s471 = smul.addr %s470, 2
        %s472 = smul.addr %s471, 2
        %s473 = scalar_lea.vmem %s3, %s472
      $region36: #{clip_multimodal_forward.4} parent=31 // pred_fallthru
        _
      // Predicated region
      $region37: #{clip_multimodal_forward.4} parent=31 // pred_check
        %p474 = pneg %p156
      $region38: #{clip_multimodal_forward.4} parent=31 // pred_check_branch
        %476 = sbr.rel (%p474) target = $region40
      $region39: #{clip_multimodal_forward.4} parent=31 // pred_region
        %p477 = scmp.lt.s32.totalorder %s28, 1
        %s478 = scalar_select %p477, %s28, 1
        %s479 = smul.addr %s478, 192
        %s480 = smul.addr %s479, 4
        %s481 = scalar_lea.vmem %s4, %s480
      $region40: #{clip_multimodal_forward.4} parent=31 // pred_fallthru
        _
      // Predicated region
      $region41: #{clip_multimodal_forward.4} parent=31 // pred_check
        %p482 = pneg %p182
      $region42: #{clip_multimodal_forward.4} parent=31 // pred_check_branch
        %484 = sbr.rel (%p482) target = $region44
      $region43: #{clip_multimodal_forward.4} parent=31 // pred_region
        %p485 = scmp.lt.s32.totalorder %s28, 1
        %s486 = scalar_select %p485, %s28, 1
        %s487 = smul.addr %s486, 6
        %s488 = scalar_lea.vmem %s5, %s487
      $region44: #{clip_multimodal_forward.4} parent=31 // pred_fallthru
        _
      // Predicated region
      $region45: #{clip_multimodal_forward.4} parent=31 // pred_check
        %p489 = pneg %p208
      $region46: #{clip_multimodal_forward.4} parent=31 // pred_check_branch
        %491 = sbr.rel (%p489) target = $region48
      $region47: #{clip_multimodal_forward.4} parent=31 // pred_region
        %p492 = scmp.lt.s32.totalorder %s28, 1
        %s493 = scalar_select %p492, %s28, 1
        %s494 = smul.addr %s493, 64
        %s495 = smul.addr %s494, 4
        %s496 = scalar_lea.vmem %s6, %s495
      $region48: #{clip_multimodal_forward.4} parent=31 // pred_fallthru
        _
      // Predicated region
      $region49: #{clip_multimodal_forward.4} parent=31 // pred_check
        %p497 = pneg %p234
      $region50: #{clip_multimodal_forward.4} parent=31 // pred_check_branch
        %499 = sbr.rel (%p497) target = $region52
      $region51: #{clip_multimodal_forward.4} parent=31 // pred_region
        %p500 = scmp.lt.s32.totalorder %s28, 1
        %s501 = scalar_select %p500, %s28, 1
        %s502 = smul.addr %s501, 2
        %s503 = scalar_lea.vmem %s7, %s502
      $region52: #{clip_multimodal_forward.4} parent=31 // pred_fallthru
        _
      // Predicated region
      $region53: #{clip_multimodal_forward.4} parent=31 // pred_check
        %p504 = pneg %p260
      $region54: #{clip_multimodal_forward.4} parent=31 // pred_check_branch
        %506 = sbr.rel (%p504) target = $region56
      $region55: #{clip_multimodal_forward.4} parent=31 // pred_region
        %p507 = scmp.lt.s32.totalorder %s28, 1
        %s508 = scalar_select %p507, %s28, 1
        %s509 = smul.addr %s508, 2
        %s510 = smul.addr %s509, 2
        %s511 = scalar_lea.vmem %s8, %s510
      $region56: #{clip_multimodal_forward.4} parent=31 // pred_fallthru
        _
      // Predicated region
      $region57: #{clip_multimodal_forward.4} parent=31 // pred_check
        %p512 = pneg %p286
      $region58: #{clip_multimodal_forward.4} parent=31 // pred_check_branch
        %514 = sbr.rel (%p512) target = $region60
      $region59: #{clip_multimodal_forward.4} parent=31 // pred_region
        %p515 = scmp.lt.s32.totalorder %s28, 1
        %s516 = scalar_select %p515, %s28, 1
        %s517 = smul.addr %s516, 128
        %s518 = smul.addr %s517, 4
        %s519 = scalar_lea.vmem %s9, %s518
      $region60: #{clip_multimodal_forward.4} parent=31 // pred_fallthru
        _
      // Predicated region
      $region61: #{clip_multimodal_forward.4} parent=31 // pred_check
        %p520 = pneg %p312
      $region62: #{clip_multimodal_forward.4} parent=31 // pred_check_branch
        %522 = sbr.rel (%p520) target = $region64
      $region63: #{clip_multimodal_forward.4} parent=31 // pred_region
        %p523 = scmp.lt.s32.totalorder %s28, 1
        %s524 = scalar_select %p523, %s28, 1
        %s525 = smul.addr %s524, 4
        %s526 = scalar_lea.vmem %s10, %s525
      $region64: #{clip_multimodal_forward.4} parent=31 // pred_fallthru
        _
      // Predicated region
      $region65: #{clip_multimodal_forward.4} parent=31 // pred_check
        %p527 = pneg %p338
      $region66: #{clip_multimodal_forward.4} parent=31 // pred_check_branch
        %529 = sbr.rel (%p527) target = $region68
      $region67: #{clip_multimodal_forward.4} parent=31 // pred_region
        %p530 = scmp.lt.s32.totalorder %s28, 1
        %s531 = scalar_select %p530, %s28, 1
        %s532 = smul.addr %s531, 128
        %s533 = smul.addr %s532, 4
        %s534 = scalar_lea.vmem %s11, %s533
      $region68: #{clip_multimodal_forward.4} parent=31 // pred_fallthru
        _
      // Predicated region
      $region69: #{clip_multimodal_forward.4} parent=31 // pred_check
        %p535 = pneg %p364
      $region70: #{clip_multimodal_forward.4} parent=31 // pred_check_branch
        %537 = sbr.rel (%p535) target = $region72
      $region71: #{clip_multimodal_forward.4} parent=31 // pred_region
        %p538 = scmp.lt.s32.totalorder %s28, 1
        %s539 = scalar_select %p538, %s28, 1
        %s540 = smul.addr %s539, 2
        %s541 = scalar_lea.vmem %s12, %s540
      $region72: #{clip_multimodal_forward.4} parent=31 // pred_fallthru
        _
    $region32: #{clip_multimodal_forward.4} parent=5 // pred_fallthru
      _
    %p542 = scmp.le.s32.totalorder 1, %s20
    %p543 = scmp.lt.s32.totalorder %s20, 3
    %p544 = pnand %p542, %p543
    %p545 = pneg %p544
    // Predicated region
    $region73: #{clip_multimodal_forward.4} parent=5 // pred_check
      _
    $region74: #{clip_multimodal_forward.4} parent=5 // pred_check_branch
      %547 = sbr.rel (%p544) target = $region76
    $region75: #{clip_multimodal_forward.4} parent=5 // pred_region
      %s548 = ssub.s32 %s20, 1
      %s549 = smul.u32 2, %s29
      %p550 = scmp.lt.s32.totalorder %s549, 1
      %s551 = scalar_select %p550, %s549, 1
      %s552 = smul.addr %s551, 2
      %s553 = smul.addr %s552, 8
      %s554 = scalar_lea.vmem %s0, %s553
      %p555 = pneg %p58
      %p556 = pneg %p55
      %s557 = smul.u32 2, %s29
      %p558 = scmp.lt.s32.totalorder %s557, 1
      %s559 = scalar_select %p558, %s557, 1
      %s560 = scalar_lea.vmem %s1, %s559
      %p561 = pneg %p84
      %p562 = pneg %p81
      %s563 = smul.u32 2, %s29
      %p564 = scmp.lt.s32.totalorder %s563, 1
      %s565 = scalar_select %p564, %s563, 1
      %s566 = smul.addr %s565, 8
      %s567 = scalar_lea.vmem %s2, %s566
      %p568 = pneg %p110
      %p569 = pneg %p107
      %p570 = scmp.lt.s32.totalorder %s30, 1
      %s571 = scalar_select %p570, %s30, 1
      %s572 = smul.addr %s571, 2
      %s573 = smul.addr %s572, 2
      %s574 = scalar_lea.vmem %s3, %s573
      %p575 = pneg %p136
      %p576 = pneg %p133
      %p577 = scmp.lt.s32.totalorder %s30, 1
      %s578 = scalar_select %p577, %s30, 1
      %s579 = smul.addr %s578, 192
      %s580 = smul.addr %s579, 4
      %s581 = scalar_lea.vmem %s4, %s580
      %p582 = pneg %p162
      %p583 = pneg %p159
      %p584 = scmp.lt.s32.totalorder %s30, 1
      %s585 = scalar_select %p584, %s30, 1
      %s586 = smul.addr %s585, 6
      %s587 = scalar_lea.vmem %s5, %s586
      %p588 = pneg %p188
      %p589 = pneg %p185
      %p590 = scmp.lt.s32.totalorder %s30, 1
      %s591 = scalar_select %p590, %s30, 1
      %s592 = smul.addr %s591, 64
      %s593 = smul.addr %s592, 4
      %s594 = scalar_lea.vmem %s6, %s593
      %p595 = pneg %p214
      %p596 = pneg %p211
      %p597 = scmp.lt.s32.totalorder %s30, 1
      %s598 = scalar_select %p597, %s30, 1
      %s599 = smul.addr %s598, 2
      %s600 = scalar_lea.vmem %s7, %s599
      %p601 = pneg %p240
      %p602 = pneg %p237
      %p603 = scmp.lt.s32.totalorder %s30, 1
      %s604 = scalar_select %p603, %s30, 1
      %s605 = smul.addr %s604, 2
      %s606 = smul.addr %s605, 2
      %s607 = scalar_lea.vmem %s8, %s606
      %p608 = pneg %p266
      %p609 = pneg %p263
      %p610 = scmp.lt.s32.totalorder %s30, 1
      %s611 = scalar_select %p610, %s30, 1
      %s612 = smul.addr %s611, 128
      %s613 = smul.addr %s612, 4
      %s614 = scalar_lea.vmem %s9, %s613
      %p615 = pneg %p292
      %p616 = pneg %p289
      %p617 = scmp.lt.s32.totalorder %s30, 1
      %s618 = scalar_select %p617, %s30, 1
      %s619 = smul.addr %s618, 4
      %s620 = scalar_lea.vmem %s10, %s619
      %p621 = pneg %p318
      %p622 = pneg %p315
      %p623 = scmp.lt.s32.totalorder %s30, 1
      %s624 = scalar_select %p623, %s30, 1
      %s625 = smul.addr %s624, 128
      %s626 = smul.addr %s625, 4
      %s627 = scalar_lea.vmem %s11, %s626
      %p628 = pneg %p344
      %p629 = pneg %p341
      %p630 = scmp.lt.s32.totalorder %s30, 1
      %s631 = scalar_select %p630, %s30, 1
      %s632 = smul.addr %s631, 2
      %s633 = scalar_lea.vmem %s12, %s632
      %p634 = pneg %p370
      %p635 = pneg %p367
      %p636 = pneg %p391
      %p637 = pneg %p388
      %p638 = pneg %p417
      %p639 = pneg %p414
      %s640 = smul.u32 2, %s29
      %p641 = scmp.lt.s32.totalorder %s640, 1
      %s642 = scalar_select %p641, %s640, 1
      %s643 = smul.addr %s642, 2
      %s644 = scalar_lea.vmem %s14, %s643
      %s645 = smul.u32 2, %s29
      %p646 = scmp.lt.s32.totalorder %s645, 1
      %s647 = scalar_select %p646, %s645, 1
      %s648 = smul.addr %s647, 2
      %s649 = smul.addr %s648, 8
      %s650 = scalar_lea.vmem %s0, %s649
      %s651 = smul.u32 2, %s29
      %s652 = smul.u32 2, %s29
      %p653 = scmp.lt.s32.totalorder %s652, 1
      %s654 = scalar_select %p653, %s652, 1
      %s655 = scalar_lea.vmem %s1, %s654
      %s656 = smul.u32 2, %s29
      %s657 = smul.u32 2, %s29
      %p658 = scmp.lt.s32.totalorder %s657, 1
      %s659 = scalar_select %p658, %s657, 1
      %s660 = smul.addr %s659, 8
      %s661 = scalar_lea.vmem %s2, %s660
      %s662 = smul.u32 2, %s29
      %p663 = scmp.lt.s32.totalorder %s30, 1
      %s664 = scalar_select %p663, %s30, 1
      %s665 = smul.addr %s664, 2
      %s666 = smul.addr %s665, 2
      %s667 = scalar_lea.vmem %s3, %s666
      %p668 = scmp.lt.s32.totalorder %s30, 1
      %s669 = scalar_select %p668, %s30, 1
      %s670 = smul.addr %s669, 192
      %s671 = smul.addr %s670, 4
      %s672 = scalar_lea.vmem %s4, %s671
      %p673 = scmp.lt.s32.totalorder %s30, 1
      %s674 = scalar_select %p673, %s30, 1
      %s675 = smul.addr %s674, 6
      %s676 = scalar_lea.vmem %s5, %s675
      %p677 = scmp.lt.s32.totalorder %s30, 1
      %s678 = scalar_select %p677, %s30, 1
      %s679 = smul.addr %s678, 64
      %s680 = smul.addr %s679, 4
      %s681 = scalar_lea.vmem %s6, %s680
      %p682 = scmp.lt.s32.totalorder %s30, 1
      %s683 = scalar_select %p682, %s30, 1
      %s684 = smul.addr %s683, 2
      %s685 = scalar_lea.vmem %s7, %s684
      %p686 = scmp.lt.s32.totalorder %s30, 1
      %s687 = scalar_select %p686, %s30, 1
      %s688 = smul.addr %s687, 2
      %s689 = smul.addr %s688, 2
      %s690 = scalar_lea.vmem %s8, %s689
      %p691 = scmp.lt.s32.totalorder %s30, 1
      %s692 = scalar_select %p691, %s30, 1
      %s693 = smul.addr %s692, 128
      %s694 = smul.addr %s693, 4
      %s695 = scalar_lea.vmem %s9, %s694
      %p696 = scmp.lt.s32.totalorder %s30, 1
      %s697 = scalar_select %p696, %s30, 1
      %s698 = smul.addr %s697, 4
      %s699 = scalar_lea.vmem %s10, %s698
      %p700 = scmp.lt.s32.totalorder %s30, 1
      %s701 = scalar_select %p700, %s30, 1
      %s702 = smul.addr %s701, 128
      %s703 = smul.addr %s702, 4
      %s704 = scalar_lea.vmem %s11, %s703
      %p705 = scmp.lt.s32.totalorder %s30, 1
      %s706 = scalar_select %p705, %s30, 1
      %s707 = smul.addr %s706, 2
      %s708 = scalar_lea.vmem %s12, %s707
      %s709 = smul.u32 2, %s29
      %p710 = scmp.lt.s32.totalorder %s709, 1
      %s711 = scalar_select %p710, %s709, 1
      %s712 = smul.addr %s711, 2
      %s713 = scalar_lea.vmem %s14, %s712
      %s714 = smul.u32 2, %s29
      %p716 = scmp.eq.s32.totalorder %s30, 0
      // Predicated region
      $region77: #{clip_multimodal_forward.4} parent=75 // pred_check
        %p717 = pneg %p716
      $region78: #{clip_multimodal_forward.4} parent=75 // pred_check_branch
        %719 = sbr.rel (%p717) target = $region80
      $region79: #{clip_multimodal_forward.4} parent=75 // pred_region
        %v720 = vld [vmem:[%s650] sm:$0xff]
        %v721 = vld [vmem:[%s650 + $0x8] sm:$0xff]
        %v722 = vld [vmem:[%s650 + $0x10] sm:$0xff]
        %v723 = vld [vmem:[%s650 + $0x18] sm:$0xff]
        %724 = vst [vmem:[#allocation2] sm:$0xff] %v720
        %725 = vst [vmem:[#allocation2 + $0x8] sm:$0xff] %v721
        %726 = vst [vmem:[#allocation2 + $0x10] sm:$0xff] %v722
        %727 = vst [vmem:[#allocation2 + $0x18] sm:$0xff] %v723
        %v728 = vlaneseq
        %v729 = vshrl.u32 %v728, 7
        %v730 = vlaneseq
        %v731 = vand.u32 %v730, 127
        %vm732 = vcmp.le.s32.totalorder %v731, %v729
        %v733 = vsel %vm732, 0.0, -1e+09
        %v734 = vld [vmem:[%s655] sm:$0x1]
        %v735 = vld [vmem:[%s655 + $0x1] sm:$0x1]
        %v736 = vsub.f32 1.0, %v734
        %v737 = vsub.f32 1.0, %v735
        %v738 = vmul.f32 %v736, -1e+09
        %v739 = vmul.f32 %v737, -1e+09
        %v742 = vlaneseq
        %v743 = vshrl.u32 %v742, 7
        %v744 = vsub.s32 0, %v743
        %v745 = vrot.slane %v738, %v744
        %v746 = vlaneseq
        %v747 = vshrl.u32 %v746, 7
        %v748 = vsub.s32 0, %v747
        %v749 = vrot.slane %v739, %v748
        %v752 = vadd.f32 %v733, %v745
        %v753 = vadd.f32 %v733, %v749
        %vm754 = vcmask 64512
        %755 = vst.msk [vmem:[#allocation3] sm:$0xff] %vm754, %v752
        %756 = vst.msk [vmem:[#allocation3 + $0x8] sm:$0xff] %vm754, %v753
      $region80: #{clip_multimodal_forward.4} parent=75 // pred_fallthru
        _
      %v757 = vld [vmem:[#allocation2] sm:$0xff]
      %v758 = vld [vmem:[#allocation2 + $0x8] sm:$0xff]
      %v759 = vld [vmem:[#allocation2 + $0x10] sm:$0xff]
      %v760 = vld [vmem:[#allocation2 + $0x18] sm:$0xff]
      %v761 = vld [vmem:[#allocation3] sm:$0xff]
      %v762 = vld [vmem:[#allocation3 + $0x8] sm:$0xff]
      %v763 = vld [vmem:[%s667] ss:$2 sm:$0x3]
      %s764 = scalar_lea.vmem %s667, 1
      %v765 = vld [vmem:[%s764] ss:$2 sm:$0x3]
      %v766 = vadd.f32 %v757, %v758
      %767 = vadd.xlane.f32.xlu0 %v766
      %v768 = vpop.xlane.xlu0 %767
      %v769 = vadd.f32 %v759, %v760
      %770 = vadd.xlane.f32.xlu0 %v769
      %v771 = vpop.xlane.xlu0 %770
      %v772 = vrcp.pop 256.0
      %v773 = vmul.f32 %v768, %v772
      %v774 = vmul.f32 %v771, %v772
      %v775 = vsub.f32 %v757, %v773
      %v776 = vsub.f32 %v758, %v773
      %v777 = vsub.f32 %v759, %v774
      %v778 = vsub.f32 %v760, %v774
      %v779 = vmul.f32 %v775, %v775
      %v780 = vmul.f32 %v776, %v776
      %v781 = vmul.f32 %v777, %v777
      %v782 = vmul.f32 %v778, %v778
      %v783 = vadd.f32 %v779, %v780
      %784 = vadd.xlane.f32.xlu0 %v783
      %v785 = vpop.xlane.xlu0 %784
      %v786 = vadd.f32 %v781, %v782
      %787 = vadd.xlane.f32.xlu0 %v786
      %v788 = vpop.xlane.xlu0 %787
      %v789 = vmul.f32 %v785, %v772
      %v790 = vmul.f32 %v788, %v772
      %v791 = vadd.f32 %v789, 1e-05
      %v792 = vadd.f32 %v790, 1e-05
      %v793 = vrsqrt.pop %v791
      %v794 = vrsqrt.pop %v792
      %v795 = vmul.f32 %v775, %v793
      %v796 = vmul.f32 %v776, %v793
      %v797 = vmul.f32 %v777, %v794
      %v798 = vmul.f32 %v778, %v794
      %v800 = vlaneseq
      %v801 = vshrl.u32 %v800, 7
      %v802 = vsub.s32 0, %v801
      %v803 = vrot.slane %v763, %v802
      %v804 = vlaneseq
      %v805 = vshrl.u32 %v804, 7
      %v806 = vsub.s32 1, %v805
      %v807 = vrot.slane %v763, %v806
      %v810 = vmul.f32 %v795, %v803
      %v811 = vmul.f32 %v796, %v807
      %v812 = vmul.f32 %v797, %v803
      %v813 = vmul.f32 %v798, %v807
      %v815 = vlaneseq
      %v816 = vshrl.u32 %v815, 7
      %v817 = vsub.s32 0, %v816
      %v818 = vrot.slane %v765, %v817
      %v819 = vlaneseq
      %v820 = vshrl.u32 %v819, 7
      %v821 = vsub.s32 1, %v820
      %v822 = vrot.slane %v765, %v821
      %v825 = vadd.f32 %v810, %v818
      %v826 = vadd.f32 %v811, %v822
      %v827 = vadd.f32 %v812, %v818
      %v828 = vadd.f32 %v813, %v822
      %v829 = vpack.c.bf16 %v827, %v825
      %v830 = vpack.c.bf16 %v828, %v826
      %v831 = vld [vmem:[%s672] sm:$0xff]
      %v832 = vld [vmem:[%s672 + $0x8] sm:$0xff]
      %v833 = vld [vmem:[%s672 + $0x10] sm:$0xff]
      %v834 = vld [vmem:[%s672 + $0x18] sm:$0xff]
      %v835 = vld [vmem:[%s672 + $0x20] sm:$0xff]
      %v836 = vld [vmem:[%s672 + $0x28] sm:$0xff]
      %v837 = vld [vmem:[%s672 + $0x30] sm:$0xff]
      %v838 = vld [vmem:[%s672 + $0x38] sm:$0xff]
      %v839 = vld [vmem:[%s672 + $0x40] sm:$0xff]
      %v840 = vld [vmem:[%s672 + $0x48] sm:$0xff]
      %v841 = vld [vmem:[%s672 + $0x50] sm:$0xff]
      %v842 = vld [vmem:[%s672 + $0x58] sm:$0xff]
      %v843 = vld [vmem:[%s672 + $0x60] sm:$0xff]
      %v844 = vld [vmem:[%s672 + $0x68] sm:$0xff]
      %v845 = vld [vmem:[%s672 + $0x70] sm:$0xff]
      %v846 = vld [vmem:[%s672 + $0x78] sm:$0xff]
      %v847 = vld [vmem:[%s672 + $0x80] sm:$0xff]
      %v848 = vld [vmem:[%s672 + $0x88] sm:$0xff]
      %v849 = vld [vmem:[%s672 + $0x90] sm:$0xff]
      %v850 = vld [vmem:[%s672 + $0x98] sm:$0xff]
      %v851 = vld [vmem:[%s672 + $0xa0] sm:$0xff]
      %v852 = vld [vmem:[%s672 + $0xa8] sm:$0xff]
      %v853 = vld [vmem:[%s672 + $0xb0] sm:$0xff]
      %v854 = vld [vmem:[%s672 + $0xb8] sm:$0xff]
      %v855 = vld [vmem:[%s672 + $0xc0] sm:$0xff]
      %v856 = vld [vmem:[%s672 + $0xc8] sm:$0xff]
      %v857 = vld [vmem:[%s672 + $0xd0] sm:$0xff]
      %v858 = vld [vmem:[%s672 + $0xd8] sm:$0xff]
      %v859 = vld [vmem:[%s672 + $0xe0] sm:$0xff]
      %v860 = vld [vmem:[%s672 + $0xe8] sm:$0xff]
      %v861 = vld [vmem:[%s672 + $0xf0] sm:$0xff]
      %v862 = vld [vmem:[%s672 + $0xf8] sm:$0xff]
      %v863 = vld [vmem:[%s672 + $0x100] sm:$0xff]
      %v864 = vld [vmem:[%s672 + $0x108] sm:$0xff]
      %v865 = vld [vmem:[%s672 + $0x110] sm:$0xff]
      %v866 = vld [vmem:[%s672 + $0x118] sm:$0xff]
      %v867 = vld [vmem:[%s672 + $0x120] sm:$0xff]
      %v868 = vld [vmem:[%s672 + $0x128] sm:$0xff]
      %v869 = vld [vmem:[%s672 + $0x130] sm:$0xff]
      %v870 = vld [vmem:[%s672 + $0x138] sm:$0xff]
      %v871 = vld [vmem:[%s672 + $0x140] sm:$0xff]
      %v872 = vld [vmem:[%s672 + $0x148] sm:$0xff]
      %v873 = vld [vmem:[%s672 + $0x150] sm:$0xff]
      %v874 = vld [vmem:[%s672 + $0x158] sm:$0xff]
      %v875 = vld [vmem:[%s672 + $0x160] sm:$0xff]
      %v876 = vld [vmem:[%s672 + $0x168] sm:$0xff]
      %v877 = vld [vmem:[%s672 + $0x170] sm:$0xff]
      %v878 = vld [vmem:[%s672 + $0x178] sm:$0xff]
      %v879 = vld [vmem:[%s672 + $0x180] sm:$0xff]
      %v880 = vld [vmem:[%s672 + $0x188] sm:$0xff]
      %v881 = vld [vmem:[%s672 + $0x190] sm:$0xff]
      %v882 = vld [vmem:[%s672 + $0x198] sm:$0xff]
      %v883 = vld [vmem:[%s672 + $0x1a0] sm:$0xff]
      %v884 = vld [vmem:[%s672 + $0x1a8] sm:$0xff]
      %v885 = vld [vmem:[%s672 + $0x1b0] sm:$0xff]
      %v886 = vld [vmem:[%s672 + $0x1b8] sm:$0xff]
      %v887 = vld [vmem:[%s672 + $0x1c0] sm:$0xff]
      %v888 = vld [vmem:[%s672 + $0x1c8] sm:$0xff]
      %v889 = vld [vmem:[%s672 + $0x1d0] sm:$0xff]
      %v890 = vld [vmem:[%s672 + $0x1d8] sm:$0xff]
      %v891 = vld [vmem:[%s672 + $0x1e0] sm:$0xff]
      %v892 = vld [vmem:[%s672 + $0x1e8] sm:$0xff]
      %v893 = vld [vmem:[%s672 + $0x1f0] sm:$0xff]
      %v894 = vld [vmem:[%s672 + $0x1f8] sm:$0xff]
      %v895 = vld [vmem:[%s672 + $0x200] sm:$0xff]
      %v896 = vld [vmem:[%s672 + $0x208] sm:$0xff]
      %v897 = vld [vmem:[%s672 + $0x210] sm:$0xff]
      %v898 = vld [vmem:[%s672 + $0x218] sm:$0xff]
      %v899 = vld [vmem:[%s672 + $0x220] sm:$0xff]
      %v900 = vld [vmem:[%s672 + $0x228] sm:$0xff]
      %v901 = vld [vmem:[%s672 + $0x230] sm:$0xff]
      %v902 = vld [vmem:[%s672 + $0x238] sm:$0xff]
      %v903 = vld [vmem:[%s672 + $0x240] sm:$0xff]
      %v904 = vld [vmem:[%s672 + $0x248] sm:$0xff]
      %v905 = vld [vmem:[%s672 + $0x250] sm:$0xff]
      %v906 = vld [vmem:[%s672 + $0x258] sm:$0xff]
      %v907 = vld [vmem:[%s672 + $0x260] sm:$0xff]
      %v908 = vld [vmem:[%s672 + $0x268] sm:$0xff]
      %v909 = vld [vmem:[%s672 + $0x270] sm:$0xff]
      %v910 = vld [vmem:[%s672 + $0x278] sm:$0xff]
      %v911 = vld [vmem:[%s672 + $0x280] sm:$0xff]
      %v912 = vld [vmem:[%s672 + $0x288] sm:$0xff]
      %v913 = vld [vmem:[%s672 + $0x290] sm:$0xff]
      %v914 = vld [vmem:[%s672 + $0x298] sm:$0xff]
      %v915 = vld [vmem:[%s672 + $0x2a0] sm:$0xff]
      %v916 = vld [vmem:[%s672 + $0x2a8] sm:$0xff]
      %v917 = vld [vmem:[%s672 + $0x2b0] sm:$0xff]
      %v918 = vld [vmem:[%s672 + $0x2b8] sm:$0xff]
      %v919 = vld [vmem:[%s672 + $0x2c0] sm:$0xff]
      %v920 = vld [vmem:[%s672 + $0x2c8] sm:$0xff]
      %v921 = vld [vmem:[%s672 + $0x2d0] sm:$0xff]
      %v922 = vld [vmem:[%s672 + $0x2d8] sm:$0xff]
      %v923 = vld [vmem:[%s672 + $0x2e0] sm:$0xff]
      %v924 = vld [vmem:[%s672 + $0x2e8] sm:$0xff]
      %v925 = vld [vmem:[%s672 + $0x2f0] sm:$0xff]
      %v926 = vld [vmem:[%s672 + $0x2f8] sm:$0xff]
      %v927 = vld [vmem:[%s676] sm:$0x3f]
      %v929 = vlaneseq
      %v930 = vshrl.u32 %v929, 7
      %v931 = vsub.s32 0, %v930
      %v932 = vrot.slane %v927, %v931
      %v933 = vlaneseq
      %v934 = vshrl.u32 %v933, 7
      %v935 = vsub.s32 1, %v934
      %v936 = vrot.slane %v927, %v935
      %v937 = vlaneseq
      %v938 = vshrl.u32 %v937, 7
      %v939 = vsub.s32 2, %v938
      %v940 = vrot.slane %v927, %v939
      %v941 = vlaneseq
      %v942 = vshrl.u32 %v941, 7
      %v943 = vsub.s32 3, %v942
      %v944 = vrot.slane %v927, %v943
      %v945 = vlaneseq
      %v946 = vshrl.u32 %v945, 7
      %v947 = vsub.s32 4, %v946
      %v948 = vrot.slane %v927, %v947
      %v949 = vlaneseq
      %v950 = vshrl.u32 %v949, 7
      %v951 = vsub.s32 5, %v950
      %v952 = vrot.slane %v927, %v951
      %v1055 = vunpack.c.l.b16 %v831
      %v1056 = vunpack.c.h.b16 %v831
      %v1057 = vunpack.c.l.b16 %v832
      %v1058 = vunpack.c.h.b16 %v832
      %v1059 = vunpack.c.l.b16 %v833
      %v1060 = vunpack.c.h.b16 %v833
      %v1061 = vunpack.c.l.b16 %v834
      %v1062 = vunpack.c.h.b16 %v834
      %v1063 = vunpack.c.l.b16 %v835
      %v1064 = vunpack.c.h.b16 %v835
      %v1065 = vunpack.c.l.b16 %v836
      %v1066 = vunpack.c.h.b16 %v836
      %v1067 = vunpack.c.l.b16 %v837
      %v1068 = vunpack.c.h.b16 %v837
      %v1069 = vunpack.c.l.b16 %v838
      %v1070 = vunpack.c.h.b16 %v838
      %v1071 = vunpack.c.l.b16 %v839
      %v1072 = vunpack.c.h.b16 %v839
      %v1073 = vunpack.c.l.b16 %v840
      %v1074 = vunpack.c.h.b16 %v840
      %v1075 = vunpack.c.l.b16 %v841
      %v1076 = vunpack.c.h.b16 %v841
      %v1077 = vunpack.c.l.b16 %v842
      %v1078 = vunpack.c.h.b16 %v842
      %v1079 = vunpack.c.l.b16 %v843
      %v1080 = vunpack.c.h.b16 %v843
      %v1081 = vunpack.c.l.b16 %v844
      %v1082 = vunpack.c.h.b16 %v844
      %v1083 = vunpack.c.l.b16 %v845
      %v1084 = vunpack.c.h.b16 %v845
      %v1085 = vunpack.c.l.b16 %v846
      %v1086 = vunpack.c.h.b16 %v846
      %v1087 = vunpack.c.l.b16 %v847
      %v1088 = vunpack.c.h.b16 %v847
      %v1089 = vunpack.c.l.b16 %v848
      %v1090 = vunpack.c.h.b16 %v848
      %v1091 = vunpack.c.l.b16 %v849
      %v1092 = vunpack.c.h.b16 %v849
      %v1093 = vunpack.c.l.b16 %v850
      %v1094 = vunpack.c.h.b16 %v850
      %v1095 = vunpack.c.l.b16 %v851
      %v1096 = vunpack.c.h.b16 %v851
      %v1097 = vunpack.c.l.b16 %v852
      %v1098 = vunpack.c.h.b16 %v852
      %v1099 = vunpack.c.l.b16 %v853
      %v1100 = vunpack.c.h.b16 %v853
      %v1101 = vunpack.c.l.b16 %v854
      %v1102 = vunpack.c.h.b16 %v854
      %v1103 = vunpack.c.l.b16 %v855
      %v1104 = vunpack.c.h.b16 %v855
      %v1105 = vunpack.c.l.b16 %v856
      %v1106 = vunpack.c.h.b16 %v856
      %v1107 = vunpack.c.l.b16 %v857
      %v1108 = vunpack.c.h.b16 %v857
      %v1109 = vunpack.c.l.b16 %v858
      %v1110 = vunpack.c.h.b16 %v858
      %v1111 = vunpack.c.l.b16 %v859
      %v1112 = vunpack.c.h.b16 %v859
      %v1113 = vunpack.c.l.b16 %v860
      %v1114 = vunpack.c.h.b16 %v860
      %v1115 = vunpack.c.l.b16 %v861
      %v1116 = vunpack.c.h.b16 %v861
      %v1117 = vunpack.c.l.b16 %v862
      %v1118 = vunpack.c.h.b16 %v862
      %v1119 = vunpack.c.l.b16 %v863
      %v1120 = vunpack.c.h.b16 %v863
      %v1121 = vunpack.c.l.b16 %v864
      %v1122 = vunpack.c.h.b16 %v864
      %v1123 = vunpack.c.l.b16 %v865
      %v1124 = vunpack.c.h.b16 %v865
      %v1125 = vunpack.c.l.b16 %v866
      %v1126 = vunpack.c.h.b16 %v866
      %v1127 = vunpack.c.l.b16 %v867
      %v1128 = vunpack.c.h.b16 %v867
      %v1129 = vunpack.c.l.b16 %v868
      %v1130 = vunpack.c.h.b16 %v868
      %v1131 = vunpack.c.l.b16 %v869
      %v1132 = vunpack.c.h.b16 %v869
      %v1133 = vunpack.c.l.b16 %v870
      %v1134 = vunpack.c.h.b16 %v870
      %v1135 = vunpack.c.l.b16 %v871
      %v1136 = vunpack.c.h.b16 %v871
      %v1137 = vunpack.c.l.b16 %v872
      %v1138 = vunpack.c.h.b16 %v872
      %v1139 = vunpack.c.l.b16 %v873
      %v1140 = vunpack.c.h.b16 %v873
      %v1141 = vunpack.c.l.b16 %v874
      %v1142 = vunpack.c.h.b16 %v874
      %v1143 = vunpack.c.l.b16 %v875
      %v1144 = vunpack.c.h.b16 %v875
      %v1145 = vunpack.c.l.b16 %v876
      %v1146 = vunpack.c.h.b16 %v876
      %v1147 = vunpack.c.l.b16 %v877
      %v1148 = vunpack.c.h.b16 %v877
      %v1149 = vunpack.c.l.b16 %v878
      %v1150 = vunpack.c.h.b16 %v878
      %v1151 = vunpack.c.l.b16 %v879
      %v1152 = vunpack.c.h.b16 %v879
      %v1153 = vunpack.c.l.b16 %v880
      %v1154 = vunpack.c.h.b16 %v880
      %v1155 = vunpack.c.l.b16 %v881
      %v1156 = vunpack.c.h.b16 %v881
      %v1157 = vunpack.c.l.b16 %v882
      %v1158 = vunpack.c.h.b16 %v882
      %v1159 = vunpack.c.l.b16 %v883
      %v1160 = vunpack.c.h.b16 %v883
      %v1161 = vunpack.c.l.b16 %v884
      %v1162 = vunpack.c.h.b16 %v884
      %v1163 = vunpack.c.l.b16 %v885
      %v1164 = vunpack.c.h.b16 %v885
      %v1165 = vunpack.c.l.b16 %v886
      %v1166 = vunpack.c.h.b16 %v886
      %v1167 = vunpack.c.l.b16 %v887
      %v1168 = vunpack.c.h.b16 %v887
      %v1169 = vunpack.c.l.b16 %v888
      %v1170 = vunpack.c.h.b16 %v888
      %v1171 = vunpack.c.l.b16 %v889
      %v1172 = vunpack.c.h.b16 %v889
      %v1173 = vunpack.c.l.b16 %v890
      %v1174 = vunpack.c.h.b16 %v890
      %v1175 = vunpack.c.l.b16 %v891
      %v1176 = vunpack.c.h.b16 %v891
      %v1177 = vunpack.c.l.b16 %v892
      %v1178 = vunpack.c.h.b16 %v892
      %v1179 = vunpack.c.l.b16 %v893
      %v1180 = vunpack.c.h.b16 %v893
      %v1181 = vunpack.c.l.b16 %v894
      %v1182 = vunpack.c.h.b16 %v894
      %v1183 = vunpack.c.l.b16 %v895
      %v1184 = vunpack.c.h.b16 %v895
      %v1185 = vunpack.c.l.b16 %v896
      %v1186 = vunpack.c.h.b16 %v896
      %v1187 = vunpack.c.l.b16 %v897
      %v1188 = vunpack.c.h.b16 %v897
      %v1189 = vunpack.c.l.b16 %v898
      %v1190 = vunpack.c.h.b16 %v898
      %v1191 = vunpack.c.l.b16 %v899
      %v1192 = vunpack.c.h.b16 %v899
      %v1193 = vunpack.c.l.b16 %v900
      %v1194 = vunpack.c.h.b16 %v900
      %v1195 = vunpack.c.l.b16 %v901
      %v1196 = vunpack.c.h.b16 %v901
      %v1197 = vunpack.c.l.b16 %v902
      %v1198 = vunpack.c.h.b16 %v902
      %v1199 = vunpack.c.l.b16 %v903
      %v1200 = vunpack.c.h.b16 %v903
      %v1201 = vunpack.c.l.b16 %v904
      %v1202 = vunpack.c.h.b16 %v904
      %v1203 = vunpack.c.l.b16 %v905
      %v1204 = vunpack.c.h.b16 %v905
      %v1205 = vunpack.c.l.b16 %v906
      %v1206 = vunpack.c.h.b16 %v906
      %v1207 = vunpack.c.l.b16 %v907
      %v1208 = vunpack.c.h.b16 %v907
      %v1209 = vunpack.c.l.b16 %v908
      %v1210 = vunpack.c.h.b16 %v908
      %v1211 = vunpack.c.l.b16 %v909
      %v1212 = vunpack.c.h.b16 %v909
      %v1213 = vunpack.c.l.b16 %v910
      %v1214 = vunpack.c.h.b16 %v910
      %v1215 = vunpack.c.l.b16 %v911
      %v1216 = vunpack.c.h.b16 %v911
      %v1217 = vunpack.c.l.b16 %v912
      %v1218 = vunpack.c.h.b16 %v912
      %v1219 = vunpack.c.l.b16 %v913
      %v1220 = vunpack.c.h.b16 %v913
      %v1221 = vunpack.c.l.b16 %v914
      %v1222 = vunpack.c.h.b16 %v914
      %v1223 = vunpack.c.l.b16 %v915
      %v1224 = vunpack.c.h.b16 %v915
      %v1225 = vunpack.c.l.b16 %v916
      %v1226 = vunpack.c.h.b16 %v916
      %v1227 = vunpack.c.l.b16 %v917
      %v1228 = vunpack.c.h.b16 %v917
      %v1229 = vunpack.c.l.b16 %v918
      %v1230 = vunpack.c.h.b16 %v918
      %v1231 = vunpack.c.l.b16 %v919
      %v1232 = vunpack.c.h.b16 %v919
      %v1233 = vunpack.c.l.b16 %v920
      %v1234 = vunpack.c.h.b16 %v920
      %v1235 = vunpack.c.l.b16 %v921
      %v1236 = vunpack.c.h.b16 %v921
      %v1237 = vunpack.c.l.b16 %v922
      %v1238 = vunpack.c.h.b16 %v922
      %v1239 = vunpack.c.l.b16 %v923
      %v1240 = vunpack.c.h.b16 %v923
      %v1241 = vunpack.c.l.b16 %v924
      %v1242 = vunpack.c.h.b16 %v924
      %v1243 = vunpack.c.l.b16 %v925
      %v1244 = vunpack.c.h.b16 %v925
      %v1245 = vunpack.c.l.b16 %v926
      %v1246 = vunpack.c.h.b16 %v926
      %v1247 = vpack.c.b16 %v1061, %v1055
      %v1248 = vpack.c.b16 %v1062, %v1056
      %v1249 = vpack.c.b16 %v1063, %v1057
      %v1250 = vpack.c.b16 %v1064, %v1058
      %v1251 = vpack.c.b16 %v1065, %v1059
      %v1252 = vpack.c.b16 %v1066, %v1060
      %v1253 = vpack.c.b16 %v1073, %v1067
      %v1254 = vpack.c.b16 %v1074, %v1068
      %v1255 = vpack.c.b16 %v1075, %v1069
      %v1256 = vpack.c.b16 %v1076, %v1070
      %v1257 = vpack.c.b16 %v1077, %v1071
      %v1258 = vpack.c.b16 %v1078, %v1072
      %v1259 = vpack.c.b16 %v1085, %v1079
      %v1260 = vpack.c.b16 %v1086, %v1080
      %v1261 = vpack.c.b16 %v1087, %v1081
      %v1262 = vpack.c.b16 %v1088, %v1082
      %v1263 = vpack.c.b16 %v1089, %v1083
      %v1264 = vpack.c.b16 %v1090, %v1084
      %v1265 = vpack.c.b16 %v1097, %v1091
      %v1266 = vpack.c.b16 %v1098, %v1092
      %v1267 = vpack.c.b16 %v1099, %v1093
      %v1268 = vpack.c.b16 %v1100, %v1094
      %v1269 = vpack.c.b16 %v1101, %v1095
      %v1270 = vpack.c.b16 %v1102, %v1096
      %v1271 = vpack.c.b16 %v1109, %v1103
      %v1272 = vpack.c.b16 %v1110, %v1104
      %v1273 = vpack.c.b16 %v1111, %v1105
      %v1274 = vpack.c.b16 %v1112, %v1106
      %v1275 = vpack.c.b16 %v1113, %v1107
      %v1276 = vpack.c.b16 %v1114, %v1108
      %v1277 = vpack.c.b16 %v1121, %v1115
      %v1278 = vpack.c.b16 %v1122, %v1116
      %v1279 = vpack.c.b16 %v1123, %v1117
      %v1280 = vpack.c.b16 %v1124, %v1118
      %v1281 = vpack.c.b16 %v1125, %v1119
      %v1282 = vpack.c.b16 %v1126, %v1120
      %v1283 = vpack.c.b16 %v1133, %v1127
      %v1284 = vpack.c.b16 %v1134, %v1128
      %v1285 = vpack.c.b16 %v1135, %v1129
      %v1286 = vpack.c.b16 %v1136, %v1130
      %v1287 = vpack.c.b16 %v1137, %v1131
      %v1288 = vpack.c.b16 %v1138, %v1132
      %v1289 = vpack.c.b16 %v1145, %v1139
      %v1290 = vpack.c.b16 %v1146, %v1140
      %v1291 = vpack.c.b16 %v1147, %v1141
      %v1292 = vpack.c.b16 %v1148, %v1142
      %v1293 = vpack.c.b16 %v1149, %v1143
      %v1294 = vpack.c.b16 %v1150, %v1144
      %v1295 = vpack.c.b16 %v1157, %v1151
      %v1296 = vpack.c.b16 %v1158, %v1152
      %v1297 = vpack.c.b16 %v1159, %v1153
      %v1298 = vpack.c.b16 %v1160, %v1154
      %v1299 = vpack.c.b16 %v1161, %v1155
      %v1300 = vpack.c.b16 %v1162, %v1156
      %v1301 = vpack.c.b16 %v1169, %v1163
      %v1302 = vpack.c.b16 %v1170, %v1164
      %v1303 = vpack.c.b16 %v1171, %v1165
      %v1304 = vpack.c.b16 %v1172, %v1166
      %v1305 = vpack.c.b16 %v1173, %v1167
      %v1306 = vpack.c.b16 %v1174, %v1168
      %v1307 = vpack.c.b16 %v1181, %v1175
      %v1308 = vpack.c.b16 %v1182, %v1176
      %v1309 = vpack.c.b16 %v1183, %v1177
      %v1310 = vpack.c.b16 %v1184, %v1178
      %v1311 = vpack.c.b16 %v1185, %v1179
      %v1312 = vpack.c.b16 %v1186, %v1180
      %v1313 = vpack.c.b16 %v1193, %v1187
      %v1314 = vpack.c.b16 %v1194, %v1188
      %v1315 = vpack.c.b16 %v1195, %v1189
      %v1316 = vpack.c.b16 %v1196, %v1190
      %v1317 = vpack.c.b16 %v1197, %v1191
      %v1318 = vpack.c.b16 %v1198, %v1192
      %v1319 = vpack.c.b16 %v1205, %v1199
      %v1320 = vpack.c.b16 %v1206, %v1200
      %v1321 = vpack.c.b16 %v1207, %v1201
      %v1322 = vpack.c.b16 %v1208, %v1202
      %v1323 = vpack.c.b16 %v1209, %v1203
      %v1324 = vpack.c.b16 %v1210, %v1204
      %v1325 = vpack.c.b16 %v1217, %v1211
      %v1326 = vpack.c.b16 %v1218, %v1212
      %v1327 = vpack.c.b16 %v1219, %v1213
      %v1328 = vpack.c.b16 %v1220, %v1214
      %v1329 = vpack.c.b16 %v1221, %v1215
      %v1330 = vpack.c.b16 %v1222, %v1216
      %v1331 = vpack.c.b16 %v1229, %v1223
      %v1332 = vpack.c.b16 %v1230, %v1224
      %v1333 = vpack.c.b16 %v1231, %v1225
      %v1334 = vpack.c.b16 %v1232, %v1226
      %v1335 = vpack.c.b16 %v1233, %v1227
      %v1336 = vpack.c.b16 %v1234, %v1228
      %v1337 = vpack.c.b16 %v1241, %v1235
      %v1338 = vpack.c.b16 %v1242, %v1236
      %v1339 = vpack.c.b16 %v1243, %v1237
      %v1340 = vpack.c.b16 %v1244, %v1238
      %v1341 = vpack.c.b16 %v1245, %v1239
      %v1342 = vpack.c.b16 %v1246, %v1240
      %1439 = vmatprep.subr.bf16.mxu0 %v1290
      %1440 = vmatpush1.bf16.msra.mxu0 %v1289
      %1441 = vmatprep.subr.bf16.mxu0 %v1284
      %1442 = vmatpush1.bf16.msra.mxu0 %v1283
      %1443 = vmatprep.subr.bf16.mxu0 %v1278
      %1444 = vmatpush1.bf16.msra.mxu0 %v1277
      %1445 = vmatprep.subr.bf16.mxu0 %v1272
      %1446 = vmatpush1.bf16.msra.mxu0 %v1271
      %1447 = vmatprep.subr.bf16.mxu0 %v1266
      %1448 = vmatpush1.bf16.msra.mxu0 %v1265
      %1449 = vmatprep.subr.bf16.mxu0 %v1260
      %1450 = vmatpush1.bf16.msra.mxu0 %v1259
      %1451 = vmatprep.subr.bf16.mxu0 %v1254
      %1452 = vmatpush1.bf16.msra.mxu0 %v1253
      %1453 = vmatprep.subr.bf16.mxu0 %v1248
      %1454 = vmatpush1.bf16.msra.mxu0 %v1247
      %1455 = vmatprep.subr.bf16.mxu0 %v1338
      %1456 = vmatpush2.bf16.msra.mxu0 %v1337
      %1457 = vmatprep.subr.bf16.mxu0 %v1332
      %1458 = vmatpush2.bf16.msra.mxu0 %v1331
      %1459 = vmatprep.subr.bf16.mxu0 %v1326
      %1460 = vmatpush2.bf16.msra.mxu0 %v1325
      %1461 = vmatprep.subr.bf16.mxu0 %v1320
      %1462 = vmatpush2.bf16.msra.mxu0 %v1319
      %1463 = vmatprep.subr.bf16.mxu0 %v1314
      %1464 = vmatpush2.bf16.msra.mxu0 %v1313
      %1465 = vmatprep.subr.bf16.mxu0 %v1308
      %1466 = vmatpush2.bf16.msra.mxu0 %v1307
      %1467 = vmatprep.subr.bf16.mxu0 %v1302
      %1468 = vmatpush2.bf16.msra.mxu0 %v1301
      %1469 = vmatprep.subr.bf16.mxu0 %v1296
      %1470 = vmatpush2.bf16.msra.mxu0 %v1295
      %1471 = vmatprep.mubr.bf16.mxu0 %v830
      %1472 = vmatmul.mubr.bf16.gmra.mxu0 %v829
      %v1473 = vpop.f32.mrf.mxu0
      %v1474 = vadd.f32 %v932, %v1473
      %v1475 = vpop.f32.mrf.mxu0
      %v1476 = vadd.f32 %v936, %v1475
      %v1477 = vpop.f32.mrf.mxu0
      %v1478 = vadd.f32 %v932, %v1477
      %v1479 = vpop.f32.mrf.mxu0
      %v1480 = vadd.f32 %v936, %v1479
      %1481 = vdwg.mxu0
      %1482 = vmatprep.subr.bf16.mxu0 %v1292
      %1483 = vmatpush1.bf16.msra.mxu0 %v1291
      %1484 = vmatprep.subr.bf16.mxu0 %v1286
      %1485 = vmatpush1.bf16.msra.mxu0 %v1285
      %1486 = vmatprep.subr.bf16.mxu0 %v1280
      %1487 = vmatpush1.bf16.msra.mxu0 %v1279
      %1488 = vmatprep.subr.bf16.mxu0 %v1274
      %1489 = vmatpush1.bf16.msra.mxu0 %v1273
      %1490 = vmatprep.subr.bf16.mxu0 %v1268
      %1491 = vmatpush1.bf16.msra.mxu0 %v1267
      %1492 = vmatprep.subr.bf16.mxu0 %v1262
      %1493 = vmatpush1.bf16.msra.mxu0 %v1261
      %1494 = vmatprep.subr.bf16.mxu0 %v1256
      %1495 = vmatpush1.bf16.msra.mxu0 %v1255
      %1496 = vmatprep.subr.bf16.mxu0 %v1250
      %1497 = vmatpush1.bf16.msra.mxu0 %v1249
      %1498 = vmatprep.subr.bf16.mxu0 %v1340
      %1499 = vmatpush2.bf16.msra.mxu0 %v1339
      %1500 = vmatprep.subr.bf16.mxu0 %v1334
      %1501 = vmatpush2.bf16.msra.mxu0 %v1333
      %1502 = vmatprep.subr.bf16.mxu0 %v1328
      %1503 = vmatpush2.bf16.msra.mxu0 %v1327
      %1504 = vmatprep.subr.bf16.mxu0 %v1322
      %1505 = vmatpush2.bf16.msra.mxu0 %v1321
      %1506 = vmatprep.subr.bf16.mxu0 %v1316
      %1507 = vmatpush2.bf16.msra.mxu0 %v1315
      %1508 = vmatprep.subr.bf16.mxu0 %v1310
      %1509 = vmatpush2.bf16.msra.mxu0 %v1309
      %1510 = vmatprep.subr.bf16.mxu0 %v1304
      %1511 = vmatpush2.bf16.msra.mxu0 %v1303
      %1512 = vmatprep.subr.bf16.mxu0 %v1298
      %1513 = vmatpush2.bf16.msra.mxu0 %v1297
      %1514 = vmatprep.mubr.bf16.mxu0 %v830
      %1515 = vmatmul.mubr.bf16.gmra.mxu0 %v829
      %v1516 = vpop.f32.mrf.mxu0
      %v1517 = vadd.f32 %v940, %v1516
      %v1518 = vpop.f32.mrf.mxu0
      %v1519 = vadd.f32 %v944, %v1518
      %v1520 = vpop.f32.mrf.mxu0
      %v1521 = vadd.f32 %v940, %v1520
      %v1522 = vpop.f32.mrf.mxu0
      %v1523 = vadd.f32 %v944, %v1522
      %1524 = vdwg.mxu0
      %1525 = vmatprep.subr.bf16.mxu0 %v1294
      %1526 = vmatpush1.bf16.msra.mxu0 %v1293
      %1527 = vmatprep.subr.bf16.mxu0 %v1288
      %1528 = vmatpush1.bf16.msra.mxu0 %v1287
      %1529 = vmatprep.subr.bf16.mxu0 %v1282
      %1530 = vmatpush1.bf16.msra.mxu0 %v1281
      %1531 = vmatprep.subr.bf16.mxu0 %v1276
      %1532 = vmatpush1.bf16.msra.mxu0 %v1275
      %1533 = vmatprep.subr.bf16.mxu0 %v1270
      %1534 = vmatpush1.bf16.msra.mxu0 %v1269
      %1535 = vmatprep.subr.bf16.mxu0 %v1264
      %1536 = vmatpush1.bf16.msra.mxu0 %v1263
      %1537 = vmatprep.subr.bf16.mxu0 %v1258
      %1538 = vmatpush1.bf16.msra.mxu0 %v1257
      %1539 = vmatprep.subr.bf16.mxu0 %v1252
      %1540 = vmatpush1.bf16.msra.mxu0 %v1251
      %1541 = vmatprep.subr.bf16.mxu0 %v1342
      %1542 = vmatpush2.bf16.msra.mxu0 %v1341
      %1543 = vmatprep.subr.bf16.mxu0 %v1336
      %1544 = vmatpush2.bf16.msra.mxu0 %v1335
      %1545 = vmatprep.subr.bf16.mxu0 %v1330
      %1546 = vmatpush2.bf16.msra.mxu0 %v1329
      %1547 = vmatprep.subr.bf16.mxu0 %v1324
      %1548 = vmatpush2.bf16.msra.mxu0 %v1323
      %1549 = vmatprep.subr.bf16.mxu0 %v1318
      %1550 = vmatpush2.bf16.msra.mxu0 %v1317
      %1551 = vmatprep.subr.bf16.mxu0 %v1312
      %1552 = vmatpush2.bf16.msra.mxu0 %v1311
      %1553 = vmatprep.subr.bf16.mxu0 %v1306
      %1554 = vmatpush2.bf16.msra.mxu0 %v1305
      %1555 = vmatprep.subr.bf16.mxu0 %v1300
      %1556 = vmatpush2.bf16.msra.mxu0 %v1299
      %1557 = vmatprep.mubr.bf16.mxu0 %v830
      %1558 = vmatmul.mubr.bf16.gmra.mxu0 %v829
      %v1559 = vpop.f32.mrf.mxu0
      %v1560 = vadd.f32 %v948, %v1559
      %v1561 = vpop.f32.mrf.mxu0
      %v1562 = vadd.f32 %v952, %v1561
      %v1563 = vpop.f32.mrf.mxu0
      %v1564 = vadd.f32 %v948, %v1563
      %v1565 = vpop.f32.mrf.mxu0
      %v1566 = vadd.f32 %v952, %v1565
      %1567 = vdwg.mxu0
      %v1568 = vmul.f32 %v1474, 0.088388346
      %v1569 = vmul.f32 %v1478, 0.088388346
      %v1570 = vpack.c.bf16 %v1568, %v1568
      %v1571 = vpack.c.bf16 %v1569, %v1569
      %v1572 = vpack.c.bf16 %v1517, %v1517
      %v1573 = vpack.c.bf16 %v1521, %v1521
      %1574 = vmatprep.subr.bf16.mxu0 0
      %1575 = vmatpush1.bf16.xpose.msra.mxu0 0
      %1576 = vmatprep.subr.bf16.mxu0 0
      %1577 = vmatpush1.bf16.xpose.msra.mxu0 0
      %1578 = vmatprep.subr.bf16.mxu0 0
      %1579 = vmatpush1.bf16.xpose.msra.mxu0 0
      %1580 = vmatprep.subr.bf16.mxu0 0
      %1581 = vmatpush1.bf16.xpose.msra.mxu0 0
      %1582 = vmatprep.subr.bf16.mxu0 0
      %1583 = vmatpush1.bf16.xpose.msra.mxu0 0
      %1584 = vmatprep.subr.bf16.mxu0 0
      %1585 = vmatpush1.bf16.xpose.msra.mxu0 0
      %1586 = vmatprep.subr.bf16.mxu0 0
      %1587 = vmatpush1.bf16.xpose.msra.mxu0 0
      %1588 = vmatprep.subr.bf16.mxu0 0
      %1589 = vmatpush1.bf16.xpose.msra.mxu0 %v1572
      %1590 = vmatprep.subr.bf16.mxu0 0
      %1591 = vmatpush2.bf16.xpose.msra.mxu0 0
      %1592 = vmatprep.subr.bf16.mxu0 0
      %1593 = vmatpush2.bf16.xpose.msra.mxu0 0
      %1594 = vmatprep.subr.bf16.mxu0 0
      %1595 = vmatpush2.bf16.xpose.msra.mxu0 0
      %1596 = vmatprep.subr.bf16.mxu0 0
      %1597 = vmatpush2.bf16.xpose.msra.mxu0 0
      %1598 = vmatprep.subr.bf16.mxu0 0
      %1599 = vmatpush2.bf16.xpose.msra.mxu0 0
      %1600 = vmatprep.subr.bf16.mxu0 0
      %1601 = vmatpush2.bf16.xpose.msra.mxu0 0
      %1602 = vmatprep.subr.bf16.mxu0 0
      %1603 = vmatpush2.bf16.xpose.msra.mxu0 0
      %1604 = vmatprep.subr.bf16.mxu0 0
      %1605 = vmatpush2.bf16.xpose.msra.mxu0 0
      %1606 = vmatprep.mubr.bf16.mxu0 0
      %1607 = vmatmul.mubr.bf16.gmra.mxu0 %v1570
      %v1608 = vpop.f32.mrf.mxu0
      %v1609 = vadd.f32 %v761, %v1608
      %v1610 = vpop.f32.mrf.mxu0
      %v1611 = vpop.f32.mrf.mxu0
      %v1612 = vpop.f32.mrf.mxu0
      %1613 = vdwg.mxu0
      %1614 = vmatprep.subr.bf16.mxu0 0
      %1615 = vmatpush1.bf16.xpose.msra.mxu0 0
      %1616 = vmatprep.subr.bf16.mxu0 0
      %1617 = vmatpush1.bf16.xpose.msra.mxu0 0
      %1618 = vmatprep.subr.bf16.mxu0 0
      %1619 = vmatpush1.bf16.xpose.msra.mxu0 0
      %1620 = vmatprep.subr.bf16.mxu0 0
      %1621 = vmatpush1.bf16.xpose.msra.mxu0 0
      %1622 = vmatprep.subr.bf16.mxu0 0
      %1623 = vmatpush1.bf16.xpose.msra.mxu0 0
      %1624 = vmatprep.subr.bf16.mxu0 0
      %1625 = vmatpush1.bf16.xpose.msra.mxu0 0
      %1626 = vmatprep.subr.bf16.mxu0 0
      %1627 = vmatpush1.bf16.xpose.msra.mxu0 0
      %1628 = vmatprep.subr.bf16.mxu0 0
      %1629 = vmatpush1.bf16.xpose.msra.mxu0 %v1573
      %1630 = vmatprep.subr.bf16.mxu0 0
      %1631 = vmatpush2.bf16.xpose.msra.mxu0 0
      %1632 = vmatprep.subr.bf16.mxu0 0
      %1633 = vmatpush2.bf16.xpose.msra.mxu0 0
      %1634 = vmatprep.subr.bf16.mxu0 0
      %1635 = vmatpush2.bf16.xpose.msra.mxu0 0
      %1636 = vmatprep.subr.bf16.mxu0 0
      %1637 = vmatpush2.bf16.xpose.msra.mxu0 0
      %1638 = vmatprep.subr.bf16.mxu0 0
      %1639 = vmatpush2.bf16.xpose.msra.mxu0 0
      %1640 = vmatprep.subr.bf16.mxu0 0
      %1641 = vmatpush2.bf16.xpose.msra.mxu0 0
      %1642 = vmatprep.subr.bf16.mxu0 0
      %1643 = vmatpush2.bf16.xpose.msra.mxu0 0
      %1644 = vmatprep.subr.bf16.mxu0 0
      %1645 = vmatpush2.bf16.xpose.msra.mxu0 0
      %1646 = vmatprep.mubr.bf16.mxu0 0
      %1647 = vmatmul.mubr.bf16.gmra.mxu0 %v1571
      %v1648 = vpop.f32.mrf.mxu0
      %v1649 = vadd.f32 %v762, %v1648
      %v1650 = vpop.f32.mrf.mxu0
      %v1651 = vpop.f32.mrf.mxu0
      %v1652 = vpop.f32.mrf.mxu0
      %1653 = vdwg.mxu0
      %vm1654 = vcmask 64512
      %v1655 = vsel %vm1654, %v1609, -inf
      %1656 = vmax.xlane.f32.xlu0 %v1655
      %v1657 = vpop.xlane.xlu0 %1656
      %v1658 = vsel %vm1654, %v1649, -inf
      %1659 = vmax.xlane.f32.xlu0 %v1658
      %v1660 = vpop.xlane.xlu0 %1659
      %v1661 = vsub.f32 %v1609, %v1657
      %v1662 = vsub.f32 %v1649, %v1660
      %v1663 = vmul.f32 %v1661, 1.442695
      %v1664 = vpow.pop %v1663
      %v1665 = vmul.f32 %v1662, 1.442695
      %v1666 = vpow.pop %v1665
      %v1667 = vsel %vm1654, %v1664, 0.0
      %1668 = vadd.xlane.f32.xlu0 %v1667
      %v1669 = vpop.xlane.xlu0 %1668
      %v1670 = vsel %vm1654, %v1666, 0.0
      %1671 = vadd.xlane.f32.xlu0 %v1670
      %v1672 = vpop.xlane.xlu0 %1671
      %v1673 = vrcp.pop %v1669
      %v1674 = vrcp.pop %v1672
      %v1675 = vmul.f32 %v1664, %v1673
      %v1676 = vmul.f32 %v1666, %v1674
      %v1677 = vpack.c.bf16 %v1675, %v1675
      %v1678 = vpack.c.bf16 %v1676, %v1676
      %v1679 = vpack.c.bf16 %v1560, %v1560
      %v1680 = vpack.c.bf16 %v1564, %v1564
      %v1682 = vsel %vm1654, %v1677, 0
      %vm1684 = vcmask 1043456
      %v1686 = vsel %vm1684, %v1679, 0
      %1688 = vmatprep.subr.bf16.mxu0 0
      %1689 = vmatpush1.bf16.msra.mxu0 0
      %1690 = vmatprep.subr.bf16.mxu0 0
      %1691 = vmatpush1.bf16.msra.mxu0 0
      %1692 = vmatprep.subr.bf16.mxu0 0
      %1693 = vmatpush1.bf16.msra.mxu0 0
      %1694 = vmatprep.subr.bf16.mxu0 0
      %1695 = vmatpush1.bf16.msra.mxu0 0
      %1696 = vmatprep.subr.bf16.mxu0 0
      %1697 = vmatpush1.bf16.msra.mxu0 0
      %1698 = vmatprep.subr.bf16.mxu0 0
      %1699 = vmatpush1.bf16.msra.mxu0 0
      %1700 = vmatprep.subr.bf16.mxu0 0
      %1701 = vmatpush1.bf16.msra.mxu0 0
      %1702 = vmatprep.subr.bf16.mxu0 0
      %1703 = vmatpush1.bf16.msra.mxu0 %v1686
      %1704 = vmatprep.subr.bf16.mxu0 0
      %1705 = vmatpush2.bf16.msra.mxu0 0
      %1706 = vmatprep.subr.bf16.mxu0 0
      %1707 = vmatpush2.bf16.msra.mxu0 0
      %1708 = vmatprep.subr.bf16.mxu0 0
      %1709 = vmatpush2.bf16.msra.mxu0 0
      %1710 = vmatprep.subr.bf16.mxu0 0
      %1711 = vmatpush2.bf16.msra.mxu0 0
      %1712 = vmatprep.subr.bf16.mxu0 0
      %1713 = vmatpush2.bf16.msra.mxu0 0
      %1714 = vmatprep.subr.bf16.mxu0 0
      %1715 = vmatpush2.bf16.msra.mxu0 0
      %1716 = vmatprep.subr.bf16.mxu0 0
      %1717 = vmatpush2.bf16.msra.mxu0 0
      %1718 = vmatprep.subr.bf16.mxu0 0
      %1719 = vmatpush2.bf16.msra.mxu0 0
      %1720 = vmatprep.mubr.bf16.mxu0 0
      %1721 = vmatmul.mubr.bf16.gmra.mxu0 %v1682
      %v1722 = vpop.f32.mrf.mxu0
      %v1723 = vadd.f32 0.0, %v1722
      %v1724 = vpop.f32.mrf.mxu0
      %v1725 = vpop.f32.mrf.mxu0
      %v1726 = vpop.f32.mrf.mxu0
      %1727 = vdwg.mxu0
      %v1729 = vsel %vm1654, %v1678, 0
      %v1732 = vsel %vm1684, %v1680, 0
      %1734 = vmatprep.subr.bf16.mxu0 0
      %1735 = vmatpush1.bf16.msra.mxu0 0
      %1736 = vmatprep.subr.bf16.mxu0 0
      %1737 = vmatpush1.bf16.msra.mxu0 0
      %1738 = vmatprep.subr.bf16.mxu0 0
      %1739 = vmatpush1.bf16.msra.mxu0 0
      %1740 = vmatprep.subr.bf16.mxu0 0
      %1741 = vmatpush1.bf16.msra.mxu0 0
      %1742 = vmatprep.subr.bf16.mxu0 0
      %1743 = vmatpush1.bf16.msra.mxu0 0
      %1744 = vmatprep.subr.bf16.mxu0 0
      %1745 = vmatpush1.bf16.msra.mxu0 0
      %1746 = vmatprep.subr.bf16.mxu0 0
      %1747 = vmatpush1.bf16.msra.mxu0 0
      %1748 = vmatprep.subr.bf16.mxu0 0
      %1749 = vmatpush1.bf16.msra.mxu0 %v1732
      %1750 = vmatprep.subr.bf16.mxu0 0
      %1751 = vmatpush2.bf16.msra.mxu0 0
      %1752 = vmatprep.subr.bf16.mxu0 0
      %1753 = vmatpush2.bf16.msra.mxu0 0
      %1754 = vmatprep.subr.bf16.mxu0 0
      %1755 = vmatpush2.bf16.msra.mxu0 0
      %1756 = vmatprep.subr.bf16.mxu0 0
      %1757 = vmatpush2.bf16.msra.mxu0 0
      %1758 = vmatprep.subr.bf16.mxu0 0
      %1759 = vmatpush2.bf16.msra.mxu0 0
      %1760 = vmatprep.subr.bf16.mxu0 0
      %1761 = vmatpush2.bf16.msra.mxu0 0
      %1762 = vmatprep.subr.bf16.mxu0 0
      %1763 = vmatpush2.bf16.msra.mxu0 0
      %1764 = vmatprep.subr.bf16.mxu0 0
      %1765 = vmatpush2.bf16.msra.mxu0 0
      %1766 = vmatprep.mubr.bf16.mxu0 0
      %1767 = vmatmul.mubr.bf16.gmra.mxu0 %v1729
      %v1768 = vpop.f32.mrf.mxu0
      %v1769 = vadd.f32 0.0, %v1768
      %v1770 = vpop.f32.mrf.mxu0
      %v1771 = vpop.f32.mrf.mxu0
      %v1772 = vpop.f32.mrf.mxu0
      %1773 = vdwg.mxu0
      %v1774 = vmul.f32 %v1476, 0.088388346
      %v1775 = vmul.f32 %v1480, 0.088388346
      %v1776 = vpack.c.bf16 %v1774, %v1774
      %v1777 = vpack.c.bf16 %v1775, %v1775
      %v1778 = vpack.c.bf16 %v1519, %v1519
      %v1779 = vpack.c.bf16 %v1523, %v1523
      %1780 = vmatprep.subr.bf16.mxu0 0
      %1781 = vmatpush1.bf16.xpose.msra.mxu0 0
      %1782 = vmatprep.subr.bf16.mxu0 0
      %1783 = vmatpush1.bf16.xpose.msra.mxu0 0
      %1784 = vmatprep.subr.bf16.mxu0 0
      %1785 = vmatpush1.bf16.xpose.msra.mxu0 0
      %1786 = vmatprep.subr.bf16.mxu0 0
      %1787 = vmatpush1.bf16.xpose.msra.mxu0 0
      %1788 = vmatprep.subr.bf16.mxu0 0
      %1789 = vmatpush1.bf16.xpose.msra.mxu0 0
      %1790 = vmatprep.subr.bf16.mxu0 0
      %1791 = vmatpush1.bf16.xpose.msra.mxu0 0
      %1792 = vmatprep.subr.bf16.mxu0 0
      %1793 = vmatpush1.bf16.xpose.msra.mxu0 0
      %1794 = vmatprep.subr.bf16.mxu0 0
      %1795 = vmatpush1.bf16.xpose.msra.mxu0 %v1778
      %1796 = vmatprep.subr.bf16.mxu0 0
      %1797 = vmatpush2.bf16.xpose.msra.mxu0 0
      %1798 = vmatprep.subr.bf16.mxu0 0
      %1799 = vmatpush2.bf16.xpose.msra.mxu0 0
      %1800 = vmatprep.subr.bf16.mxu0 0
      %1801 = vmatpush2.bf16.xpose.msra.mxu0 0
      %1802 = vmatprep.subr.bf16.mxu0 0
      %1803 = vmatpush2.bf16.xpose.msra.mxu0 0
      %1804 = vmatprep.subr.bf16.mxu0 0
      %1805 = vmatpush2.bf16.xpose.msra.mxu0 0
      %1806 = vmatprep.subr.bf16.mxu0 0
      %1807 = vmatpush2.bf16.xpose.msra.mxu0 0
      %1808 = vmatprep.subr.bf16.mxu0 0
      %1809 = vmatpush2.bf16.xpose.msra.mxu0 0
      %1810 = vmatprep.subr.bf16.mxu0 0
      %1811 = vmatpush2.bf16.xpose.msra.mxu0 0
      %1812 = vmatprep.mubr.bf16.mxu0 0
      %1813 = vmatmul.mubr.bf16.gmra.mxu0 %v1776
      %v1814 = vpop.f32.mrf.mxu0
      %v1815 = vadd.f32 %v761, %v1814
      %v1816 = vpop.f32.mrf.mxu0
      %v1817 = vpop.f32.mrf.mxu0
      %v1818 = vpop.f32.mrf.mxu0
      %1819 = vdwg.mxu0
      %1820 = vmatprep.subr.bf16.mxu0 0
      %1821 = vmatpush1.bf16.xpose.msra.mxu0 0
      %1822 = vmatprep.subr.bf16.mxu0 0
      %1823 = vmatpush1.bf16.xpose.msra.mxu0 0
      %1824 = vmatprep.subr.bf16.mxu0 0
      %1825 = vmatpush1.bf16.xpose.msra.mxu0 0
      %1826 = vmatprep.subr.bf16.mxu0 0
      %1827 = vmatpush1.bf16.xpose.msra.mxu0 0
      %1828 = vmatprep.subr.bf16.mxu0 0
      %1829 = vmatpush1.bf16.xpose.msra.mxu0 0
      %1830 = vmatprep.subr.bf16.mxu0 0
      %1831 = vmatpush1.bf16.xpose.msra.mxu0 0
      %1832 = vmatprep.subr.bf16.mxu0 0
      %1833 = vmatpush1.bf16.xpose.msra.mxu0 0
      %1834 = vmatprep.subr.bf16.mxu0 0
      %1835 = vmatpush1.bf16.xpose.msra.mxu0 %v1779
      %1836 = vmatprep.subr.bf16.mxu0 0
      %1837 = vmatpush2.bf16.xpose.msra.mxu0 0
      %1838 = vmatprep.subr.bf16.mxu0 0
      %1839 = vmatpush2.bf16.xpose.msra.mxu0 0
      %1840 = vmatprep.subr.bf16.mxu0 0
      %1841 = vmatpush2.bf16.xpose.msra.mxu0 0
      %1842 = vmatprep.subr.bf16.mxu0 0
      %1843 = vmatpush2.bf16.xpose.msra.mxu0 0
      %1844 = vmatprep.subr.bf16.mxu0 0
      %1845 = vmatpush2.bf16.xpose.msra.mxu0 0
      %1846 = vmatprep.subr.bf16.mxu0 0
      %1847 = vmatpush2.bf16.xpose.msra.mxu0 0
      %1848 = vmatprep.subr.bf16.mxu0 0
      %1849 = vmatpush2.bf16.xpose.msra.mxu0 0
      %1850 = vmatprep.subr.bf16.mxu0 0
      %1851 = vmatpush2.bf16.xpose.msra.mxu0 0
      %1852 = vmatprep.mubr.bf16.mxu0 0
      %1853 = vmatmul.mubr.bf16.gmra.mxu0 %v1777
      %v1854 = vpop.f32.mrf.mxu0
      %v1855 = vadd.f32 %v762, %v1854
      %v1856 = vpop.f32.mrf.mxu0
      %v1857 = vpop.f32.mrf.mxu0
      %v1858 = vpop.f32.mrf.mxu0
      %1859 = vdwg.mxu0
      %v1860 = vsel %vm1654, %v1815, -inf
      %1861 = vmax.xlane.f32.xlu0 %v1860
      %v1862 = vpop.xlane.xlu0 %1861
      %v1863 = vsel %vm1654, %v1855, -inf
      %1864 = vmax.xlane.f32.xlu0 %v1863
      %v1865 = vpop.xlane.xlu0 %1864
      %v1866 = vsub.f32 %v1815, %v1862
      %v1867 = vsub.f32 %v1855, %v1865
      %v1868 = vmul.f32 %v1866, 1.442695
      %v1869 = vpow.pop %v1868
      %v1870 = vmul.f32 %v1867, 1.442695
      %v1871 = vpow.pop %v1870
      %v1872 = vsel %vm1654, %v1869, 0.0
      %1873 = vadd.xlane.f32.xlu0 %v1872
      %v1874 = vpop.xlane.xlu0 %1873
      %v1875 = vsel %vm1654, %v1871, 0.0
      %1876 = vadd.xlane.f32.xlu0 %v1875
      %v1877 = vpop.xlane.xlu0 %1876
      %v1878 = vrcp.pop %v1874
      %v1879 = vrcp.pop %v1877
      %v1880 = vmul.f32 %v1869, %v1878
      %v1881 = vmul.f32 %v1871, %v1879
      %v1882 = vpack.c.bf16 %v1880, %v1880
      %v1883 = vpack.c.bf16 %v1881, %v1881
      %v1884 = vpack.c.bf16 %v1562, %v1562
      %v1885 = vpack.c.bf16 %v1566, %v1566
      %v1887 = vsel %vm1654, %v1882, 0
      %v1890 = vsel %vm1684, %v1884, 0
      %1892 = vmatprep.subr.bf16.mxu0 0
      %1893 = vmatpush1.bf16.msra.mxu0 0
      %1894 = vmatprep.subr.bf16.mxu0 0
      %1895 = vmatpush1.bf16.msra.mxu0 0
      %1896 = vmatprep.subr.bf16.mxu0 0
      %1897 = vmatpush1.bf16.msra.mxu0 0
      %1898 = vmatprep.subr.bf16.mxu0 0
      %1899 = vmatpush1.bf16.msra.mxu0 0
      %1900 = vmatprep.subr.bf16.mxu0 0
      %1901 = vmatpush1.bf16.msra.mxu0 0
      %1902 = vmatprep.subr.bf16.mxu0 0
      %1903 = vmatpush1.bf16.msra.mxu0 0
      %1904 = vmatprep.subr.bf16.mxu0 0
      %1905 = vmatpush1.bf16.msra.mxu0 0
      %1906 = vmatprep.subr.bf16.mxu0 0
      %1907 = vmatpush1.bf16.msra.mxu0 %v1890
      %1908 = vmatprep.subr.bf16.mxu0 0
      %1909 = vmatpush2.bf16.msra.mxu0 0
      %1910 = vmatprep.subr.bf16.mxu0 0
      %1911 = vmatpush2.bf16.msra.mxu0 0
      %1912 = vmatprep.subr.bf16.mxu0 0
      %1913 = vmatpush2.bf16.msra.mxu0 0
      %1914 = vmatprep.subr.bf16.mxu0 0
      %1915 = vmatpush2.bf16.msra.mxu0 0
      %1916 = vmatprep.subr.bf16.mxu0 0
      %1917 = vmatpush2.bf16.msra.mxu0 0
      %1918 = vmatprep.subr.bf16.mxu0 0
      %1919 = vmatpush2.bf16.msra.mxu0 0
      %1920 = vmatprep.subr.bf16.mxu0 0
      %1921 = vmatpush2.bf16.msra.mxu0 0
      %1922 = vmatprep.subr.bf16.mxu0 0
      %1923 = vmatpush2.bf16.msra.mxu0 0
      %1924 = vmatprep.mubr.bf16.mxu0 0
      %1925 = vmatmul.mubr.bf16.gmra.mxu0 %v1887
      %v1926 = vpop.f32.mrf.mxu0
      %v1927 = vadd.f32 0.0, %v1926
      %v1928 = vpop.f32.mrf.mxu0
      %v1929 = vpop.f32.mrf.mxu0
      %v1930 = vpop.f32.mrf.mxu0
      %1931 = vdwg.mxu0
      %v1933 = vsel %vm1654, %v1883, 0
      %v1936 = vsel %vm1684, %v1885, 0
      %1938 = vmatprep.subr.bf16.mxu0 0
      %1939 = vmatpush1.bf16.msra.mxu0 0
      %1940 = vmatprep.subr.bf16.mxu0 0
      %1941 = vmatpush1.bf16.msra.mxu0 0
      %1942 = vmatprep.subr.bf16.mxu0 0
      %1943 = vmatpush1.bf16.msra.mxu0 0
      %1944 = vmatprep.subr.bf16.mxu0 0
      %1945 = vmatpush1.bf16.msra.mxu0 0
      %1946 = vmatprep.subr.bf16.mxu0 0
      %1947 = vmatpush1.bf16.msra.mxu0 0
      %1948 = vmatprep.subr.bf16.mxu0 0
      %1949 = vmatpush1.bf16.msra.mxu0 0
      %1950 = vmatprep.subr.bf16.mxu0 0
      %1951 = vmatpush1.bf16.msra.mxu0 0
      %1952 = vmatprep.subr.bf16.mxu0 0
      %1953 = vmatpush1.bf16.msra.mxu0 %v1936
      %1954 = vmatprep.subr.bf16.mxu0 0
      %1955 = vmatpush2.bf16.msra.mxu0 0
      %1956 = vmatprep.subr.bf16.mxu0 0
      %1957 = vmatpush2.bf16.msra.mxu0 0
      %1958 = vmatprep.subr.bf16.mxu0 0
      %1959 = vmatpush2.bf16.msra.mxu0 0
      %1960 = vmatprep.subr.bf16.mxu0 0
      %1961 = vmatpush2.bf16.msra.mxu0 0
      %1962 = vmatprep.subr.bf16.mxu0 0
      %1963 = vmatpush2.bf16.msra.mxu0 0
      %1964 = vmatprep.subr.bf16.mxu0 0
      %1965 = vmatpush2.bf16.msra.mxu0 0
      %1966 = vmatprep.subr.bf16.mxu0 0
      %1967 = vmatpush2.bf16.msra.mxu0 0
      %1968 = vmatprep.subr.bf16.mxu0 0
      %1969 = vmatpush2.bf16.msra.mxu0 0
      %1970 = vmatprep.mubr.bf16.mxu0 0
      %1971 = vmatmul.mubr.bf16.gmra.mxu0 %v1933
      %v1972 = vpop.f32.mrf.mxu0
      %v1973 = vadd.f32 0.0, %v1972
      %v1974 = vpop.f32.mrf.mxu0
      %v1975 = vpop.f32.mrf.mxu0
      %v1976 = vpop.f32.mrf.mxu0
      %1977 = vdwg.mxu0
      %v1978 = vpack.c.bf16 %v1769, %v1723
      %v1979 = vpack.c.bf16 %v1973, %v1927
      %v1980 = vld [vmem:[%s681] sm:$0xff]
      %v1981 = vld [vmem:[%s681 + $0x8] sm:$0xff]
      %v1982 = vld [vmem:[%s681 + $0x10] sm:$0xff]
      %v1983 = vld [vmem:[%s681 + $0x18] sm:$0xff]
      %v1984 = vld [vmem:[%s681 + $0x20] sm:$0xff]
      %v1985 = vld [vmem:[%s681 + $0x28] sm:$0xff]
      %v1986 = vld [vmem:[%s681 + $0x30] sm:$0xff]
      %v1987 = vld [vmem:[%s681 + $0x38] sm:$0xff]
      %v1988 = vld [vmem:[%s681 + $0x40] sm:$0xff]
      %v1989 = vld [vmem:[%s681 + $0x48] sm:$0xff]
      %v1990 = vld [vmem:[%s681 + $0x50] sm:$0xff]
      %v1991 = vld [vmem:[%s681 + $0x58] sm:$0xff]
      %v1992 = vld [vmem:[%s681 + $0x60] sm:$0xff]
      %v1993 = vld [vmem:[%s681 + $0x68] sm:$0xff]
      %v1994 = vld [vmem:[%s681 + $0x70] sm:$0xff]
      %v1995 = vld [vmem:[%s681 + $0x78] sm:$0xff]
      %v1996 = vld [vmem:[%s681 + $0x80] sm:$0xff]
      %v1997 = vld [vmem:[%s681 + $0x88] sm:$0xff]
      %v1998 = vld [vmem:[%s681 + $0x90] sm:$0xff]
      %v1999 = vld [vmem:[%s681 + $0x98] sm:$0xff]
      %v2000 = vld [vmem:[%s681 + $0xa0] sm:$0xff]
      %v2001 = vld [vmem:[%s681 + $0xa8] sm:$0xff]
      %v2002 = vld [vmem:[%s681 + $0xb0] sm:$0xff]
      %v2003 = vld [vmem:[%s681 + $0xb8] sm:$0xff]
      %v2004 = vld [vmem:[%s681 + $0xc0] sm:$0xff]
      %v2005 = vld [vmem:[%s681 + $0xc8] sm:$0xff]
      %v2006 = vld [vmem:[%s681 + $0xd0] sm:$0xff]
      %v2007 = vld [vmem:[%s681 + $0xd8] sm:$0xff]
      %v2008 = vld [vmem:[%s681 + $0xe0] sm:$0xff]
      %v2009 = vld [vmem:[%s681 + $0xe8] sm:$0xff]
      %v2010 = vld [vmem:[%s681 + $0xf0] sm:$0xff]
      %v2011 = vld [vmem:[%s681 + $0xf8] sm:$0xff]
      %v2012 = vld [vmem:[%s685] sm:$0x3]
      %v2014 = vlaneseq
      %v2015 = vshrl.u32 %v2014, 7
      %v2016 = vsub.s32 0, %v2015
      %v2017 = vrot.slane %v2012, %v2016
      %v2018 = vlaneseq
      %v2019 = vshrl.u32 %v2018, 7
      %v2020 = vsub.s32 1, %v2019
      %v2021 = vrot.slane %v2012, %v2020
      %v2056 = vunpack.c.l.b16 %v1980
      %v2057 = vunpack.c.h.b16 %v1980
      %v2058 = vunpack.c.l.b16 %v1981
      %v2059 = vunpack.c.h.b16 %v1981
      %v2060 = vunpack.c.l.b16 %v1982
      %v2061 = vunpack.c.h.b16 %v1982
      %v2062 = vunpack.c.l.b16 %v1983
      %v2063 = vunpack.c.h.b16 %v1983
      %v2064 = vunpack.c.l.b16 %v1984
      %v2065 = vunpack.c.h.b16 %v1984
      %v2066 = vunpack.c.l.b16 %v1985
      %v2067 = vunpack.c.h.b16 %v1985
      %v2068 = vunpack.c.l.b16 %v1986
      %v2069 = vunpack.c.h.b16 %v1986
      %v2070 = vunpack.c.l.b16 %v1987
      %v2071 = vunpack.c.h.b16 %v1987
      %v2072 = vunpack.c.l.b16 %v1988
      %v2073 = vunpack.c.h.b16 %v1988
      %v2074 = vunpack.c.l.b16 %v1989
      %v2075 = vunpack.c.h.b16 %v1989
      %v2076 = vunpack.c.l.b16 %v1990
      %v2077 = vunpack.c.h.b16 %v1990
      %v2078 = vunpack.c.l.b16 %v1991
      %v2079 = vunpack.c.h.b16 %v1991
      %v2080 = vunpack.c.l.b16 %v1992
      %v2081 = vunpack.c.h.b16 %v1992
      %v2082 = vunpack.c.l.b16 %v1993
      %v2083 = vunpack.c.h.b16 %v1993
      %v2084 = vunpack.c.l.b16 %v1994
      %v2085 = vunpack.c.h.b16 %v1994
      %v2086 = vunpack.c.l.b16 %v1995
      %v2087 = vunpack.c.h.b16 %v1995
      %v2088 = vunpack.c.l.b16 %v1996
      %v2089 = vunpack.c.h.b16 %v1996
      %v2090 = vunpack.c.l.b16 %v1997
      %v2091 = vunpack.c.h.b16 %v1997
      %v2092 = vunpack.c.l.b16 %v1998
      %v2093 = vunpack.c.h.b16 %v1998
      %v2094 = vunpack.c.l.b16 %v1999
      %v2095 = vunpack.c.h.b16 %v1999
      %v2096 = vunpack.c.l.b16 %v2000
      %v2097 = vunpack.c.h.b16 %v2000
      %v2098 = vunpack.c.l.b16 %v2001
      %v2099 = vunpack.c.h.b16 %v2001
      %v2100 = vunpack.c.l.b16 %v2002
      %v2101 = vunpack.c.h.b16 %v2002
      %v2102 = vunpack.c.l.b16 %v2003
      %v2103 = vunpack.c.h.b16 %v2003
      %v2104 = vunpack.c.l.b16 %v2004
      %v2105 = vunpack.c.h.b16 %v2004
      %v2106 = vunpack.c.l.b16 %v2005
      %v2107 = vunpack.c.h.b16 %v2005
      %v2108 = vunpack.c.l.b16 %v2006
      %v2109 = vunpack.c.h.b16 %v2006
      %v2110 = vunpack.c.l.b16 %v2007
      %v2111 = vunpack.c.h.b16 %v2007
      %v2112 = vunpack.c.l.b16 %v2008
      %v2113 = vunpack.c.h.b16 %v2008
      %v2114 = vunpack.c.l.b16 %v2009
      %v2115 = vunpack.c.h.b16 %v2009
      %v2116 = vunpack.c.l.b16 %v2010
      %v2117 = vunpack.c.h.b16 %v2010
      %v2118 = vunpack.c.l.b16 %v2011
      %v2119 = vunpack.c.h.b16 %v2011
      %v2120 = vpack.c.b16 %v2058, %v2056
      %v2121 = vpack.c.b16 %v2059, %v2057
      %v2122 = vpack.c.b16 %v2062, %v2060
      %v2123 = vpack.c.b16 %v2063, %v2061
      %v2124 = vpack.c.b16 %v2066, %v2064
      %v2125 = vpack.c.b16 %v2067, %v2065
      %v2126 = vpack.c.b16 %v2070, %v2068
      %v2127 = vpack.c.b16 %v2071, %v2069
      %v2128 = vpack.c.b16 %v2074, %v2072
      %v2129 = vpack.c.b16 %v2075, %v2073
      %v2130 = vpack.c.b16 %v2078, %v2076
      %v2131 = vpack.c.b16 %v2079, %v2077
      %v2132 = vpack.c.b16 %v2082, %v2080
      %v2133 = vpack.c.b16 %v2083, %v2081
      %v2134 = vpack.c.b16 %v2086, %v2084
      %v2135 = vpack.c.b16 %v2087, %v2085
      %v2136 = vpack.c.b16 %v2090, %v2088
      %v2137 = vpack.c.b16 %v2091, %v2089
      %v2138 = vpack.c.b16 %v2094, %v2092
      %v2139 = vpack.c.b16 %v2095, %v2093
      %v2140 = vpack.c.b16 %v2098, %v2096
      %v2141 = vpack.c.b16 %v2099, %v2097
      %v2142 = vpack.c.b16 %v2102, %v2100
      %v2143 = vpack.c.b16 %v2103, %v2101
      %v2144 = vpack.c.b16 %v2106, %v2104
      %v2145 = vpack.c.b16 %v2107, %v2105
      %v2146 = vpack.c.b16 %v2110, %v2108
      %v2147 = vpack.c.b16 %v2111, %v2109
      %v2148 = vpack.c.b16 %v2114, %v2112
      %v2149 = vpack.c.b16 %v2115, %v2113
      %v2150 = vpack.c.b16 %v2118, %v2116
      %v2151 = vpack.c.b16 %v2119, %v2117
      %2184 = vmatprep.subr.bf16.mxu0 %v2135
      %2185 = vmatpush1.bf16.msra.mxu0 %v2134
      %2186 = vmatprep.subr.bf16.mxu0 %v2133
      %2187 = vmatpush1.bf16.msra.mxu0 %v2132
      %2188 = vmatprep.subr.bf16.mxu0 %v2131
      %2189 = vmatpush1.bf16.msra.mxu0 %v2130
      %2190 = vmatprep.subr.bf16.mxu0 %v2129
      %2191 = vmatpush1.bf16.msra.mxu0 %v2128
      %2192 = vmatprep.subr.bf16.mxu0 %v2127
      %2193 = vmatpush1.bf16.msra.mxu0 %v2126
      %2194 = vmatprep.subr.bf16.mxu0 %v2125
      %2195 = vmatpush1.bf16.msra.mxu0 %v2124
      %2196 = vmatprep.subr.bf16.mxu0 %v2123
      %2197 = vmatpush1.bf16.msra.mxu0 %v2122
      %2198 = vmatprep.subr.bf16.mxu0 %v2121
      %2199 = vmatpush1.bf16.msra.mxu0 %v2120
      %2200 = vmatprep.subr.bf16.mxu0 %v2151
      %2201 = vmatpush2.bf16.msra.mxu0 %v2150
      %2202 = vmatprep.subr.bf16.mxu0 %v2149
      %2203 = vmatpush2.bf16.msra.mxu0 %v2148
      %2204 = vmatprep.subr.bf16.mxu0 %v2147
      %2205 = vmatpush2.bf16.msra.mxu0 %v2146
      %2206 = vmatprep.subr.bf16.mxu0 %v2145
      %2207 = vmatpush2.bf16.msra.mxu0 %v2144
      %2208 = vmatprep.subr.bf16.mxu0 %v2143
      %2209 = vmatpush2.bf16.msra.mxu0 %v2142
      %2210 = vmatprep.subr.bf16.mxu0 %v2141
      %2211 = vmatpush2.bf16.msra.mxu0 %v2140
      %2212 = vmatprep.subr.bf16.mxu0 %v2139
      %2213 = vmatpush2.bf16.msra.mxu0 %v2138
      %2214 = vmatprep.subr.bf16.mxu0 %v2137
      %2215 = vmatpush2.bf16.msra.mxu0 %v2136
      %2216 = vmatprep.mubr.bf16.mxu0 %v1979
      %2217 = vmatmul.mubr.bf16.gmra.mxu0 %v1978
      %v2218 = vpop.f32.mrf.mxu0
      %v2219 = vadd.f32 %v2017, %v2218
      %v2220 = vpop.f32.mrf.mxu0
      %v2221 = vadd.f32 %v2021, %v2220
      %v2222 = vpop.f32.mrf.mxu0
      %v2223 = vadd.f32 %v2017, %v2222
      %v2224 = vpop.f32.mrf.mxu0
      %v2225 = vadd.f32 %v2021, %v2224
      %2226 = vdwg.mxu0
      %v2227 = vadd.f32 %v757, %v2219
      %v2228 = vadd.f32 %v758, %v2221
      %v2229 = vadd.f32 %v759, %v2223
      %v2230 = vadd.f32 %v760, %v2225
      %v2231 = vld [vmem:[%s690] ss:$2 sm:$0x3]
      %s2232 = scalar_lea.vmem %s690, 1
      %v2233 = vld [vmem:[%s2232] ss:$2 sm:$0x3]
      %v2234 = vadd.f32 %v2227, %v2228
      %2235 = vadd.xlane.f32.xlu0 %v2234
      %v2236 = vpop.xlane.xlu0 %2235
      %v2237 = vadd.f32 %v2229, %v2230
      %2238 = vadd.xlane.f32.xlu0 %v2237
      %v2239 = vpop.xlane.xlu0 %2238
      %v2240 = vmul.f32 %v2236, %v772
      %v2241 = vmul.f32 %v2239, %v772
      %v2242 = vsub.f32 %v2227, %v2240
      %v2243 = vsub.f32 %v2228, %v2240
      %v2244 = vsub.f32 %v2229, %v2241
      %v2245 = vsub.f32 %v2230, %v2241
      %v2246 = vmul.f32 %v2242, %v2242
      %v2247 = vmul.f32 %v2243, %v2243
      %v2248 = vmul.f32 %v2244, %v2244
      %v2249 = vmul.f32 %v2245, %v2245
      %v2250 = vadd.f32 %v2246, %v2247
      %2251 = vadd.xlane.f32.xlu0 %v2250
      %v2252 = vpop.xlane.xlu0 %2251
      %v2253 = vadd.f32 %v2248, %v2249
      %2254 = vadd.xlane.f32.xlu0 %v2253
      %v2255 = vpop.xlane.xlu0 %2254
      %v2256 = vmul.f32 %v2252, %v772
      %v2257 = vmul.f32 %v2255, %v772
      %v2258 = vadd.f32 %v2256, 1e-05
      %v2259 = vadd.f32 %v2257, 1e-05
      %v2260 = vrsqrt.pop %v2258
      %v2261 = vrsqrt.pop %v2259
      %v2262 = vmul.f32 %v2242, %v2260
      %v2263 = vmul.f32 %v2243, %v2260
      %v2264 = vmul.f32 %v2244, %v2261
      %v2265 = vmul.f32 %v2245, %v2261
      %v2267 = vlaneseq
      %v2268 = vshrl.u32 %v2267, 7
      %v2269 = vsub.s32 0, %v2268
      %v2270 = vrot.slane %v2231, %v2269
      %v2271 = vlaneseq
      %v2272 = vshrl.u32 %v2271, 7
      %v2273 = vsub.s32 1, %v2272
      %v2274 = vrot.slane %v2231, %v2273
      %v2277 = vmul.f32 %v2262, %v2270
      %v2278 = vmul.f32 %v2263, %v2274
      %v2279 = vmul.f32 %v2264, %v2270
      %v2280 = vmul.f32 %v2265, %v2274
      %v2282 = vlaneseq
      %v2283 = vshrl.u32 %v2282, 7
      %v2284 = vsub.s32 0, %v2283
      %v2285 = vrot.slane %v2233, %v2284
      %v2286 = vlaneseq
      %v2287 = vshrl.u32 %v2286, 7
      %v2288 = vsub.s32 1, %v2287
      %v2289 = vrot.slane %v2233, %v2288
      %v2292 = vadd.f32 %v2277, %v2285
      %v2293 = vadd.f32 %v2278, %v2289
      %v2294 = vadd.f32 %v2279, %v2285
      %v2295 = vadd.f32 %v2280, %v2289
      %v2296 = vpack.c.bf16 %v2294, %v2292
      %v2297 = vpack.c.bf16 %v2295, %v2293
      %v2298 = vld [vmem:[%s695] sm:$0xff]
      %v2299 = vld [vmem:[%s695 + $0x8] sm:$0xff]
      %v2300 = vld [vmem:[%s695 + $0x10] sm:$0xff]
      %v2301 = vld [vmem:[%s695 + $0x18] sm:$0xff]
      %v2302 = vld [vmem:[%s695 + $0x20] sm:$0xff]
      %v2303 = vld [vmem:[%s695 + $0x28] sm:$0xff]
      %v2304 = vld [vmem:[%s695 + $0x30] sm:$0xff]
      %v2305 = vld [vmem:[%s695 + $0x38] sm:$0xff]
      %v2306 = vld [vmem:[%s695 + $0x40] sm:$0xff]
      %v2307 = vld [vmem:[%s695 + $0x48] sm:$0xff]
      %v2308 = vld [vmem:[%s695 + $0x50] sm:$0xff]
      %v2309 = vld [vmem:[%s695 + $0x58] sm:$0xff]
      %v2310 = vld [vmem:[%s695 + $0x60] sm:$0xff]
      %v2311 = vld [vmem:[%s695 + $0x68] sm:$0xff]
      %v2312 = vld [vmem:[%s695 + $0x70] sm:$0xff]
      %v2313 = vld [vmem:[%s695 + $0x78] sm:$0xff]
      %v2314 = vld [vmem:[%s695 + $0x80] sm:$0xff]
      %v2315 = vld [vmem:[%s695 + $0x88] sm:$0xff]
      %v2316 = vld [vmem:[%s695 + $0x90] sm:$0xff]
      %v2317 = vld [vmem:[%s695 + $0x98] sm:$0xff]
      %v2318 = vld [vmem:[%s695 + $0xa0] sm:$0xff]
      %v2319 = vld [vmem:[%s695 + $0xa8] sm:$0xff]
      %v2320 = vld [vmem:[%s695 + $0xb0] sm:$0xff]
      %v2321 = vld [vmem:[%s695 + $0xb8] sm:$0xff]
      %v2322 = vld [vmem:[%s695 + $0xc0] sm:$0xff]
      %v2323 = vld [vmem:[%s695 + $0xc8] sm:$0xff]
      %v2324 = vld [vmem:[%s695 + $0xd0] sm:$0xff]
      %v2325 = vld [vmem:[%s695 + $0xd8] sm:$0xff]
      %v2326 = vld [vmem:[%s695 + $0xe0] sm:$0xff]
      %v2327 = vld [vmem:[%s695 + $0xe8] sm:$0xff]
      %v2328 = vld [vmem:[%s695 + $0xf0] sm:$0xff]
      %v2329 = vld [vmem:[%s695 + $0xf8] sm:$0xff]
      %v2330 = vld [vmem:[%s695 + $0x100] sm:$0xff]
      %v2331 = vld [vmem:[%s695 + $0x108] sm:$0xff]
      %v2332 = vld [vmem:[%s695 + $0x110] sm:$0xff]
      %v2333 = vld [vmem:[%s695 + $0x118] sm:$0xff]
      %v2334 = vld [vmem:[%s695 + $0x120] sm:$0xff]
      %v2335 = vld [vmem:[%s695 + $0x128] sm:$0xff]
      %v2336 = vld [vmem:[%s695 + $0x130] sm:$0xff]
      %v2337 = vld [vmem:[%s695 + $0x138] sm:$0xff]
      %v2338 = vld [vmem:[%s695 + $0x140] sm:$0xff]
      %v2339 = vld [vmem:[%s695 + $0x148] sm:$0xff]
      %v2340 = vld [vmem:[%s695 + $0x150] sm:$0xff]
      %v2341 = vld [vmem:[%s695 + $0x158] sm:$0xff]
      %v2342 = vld [vmem:[%s695 + $0x160] sm:$0xff]
      %v2343 = vld [vmem:[%s695 + $0x168] sm:$0xff]
      %v2344 = vld [vmem:[%s695 + $0x170] sm:$0xff]
      %v2345 = vld [vmem:[%s695 + $0x178] sm:$0xff]
      %v2346 = vld [vmem:[%s695 + $0x180] sm:$0xff]
      %v2347 = vld [vmem:[%s695 + $0x188] sm:$0xff]
      %v2348 = vld [vmem:[%s695 + $0x190] sm:$0xff]
      %v2349 = vld [vmem:[%s695 + $0x198] sm:$0xff]
      %v2350 = vld [vmem:[%s695 + $0x1a0] sm:$0xff]
      %v2351 = vld [vmem:[%s695 + $0x1a8] sm:$0xff]
      %v2352 = vld [vmem:[%s695 + $0x1b0] sm:$0xff]
      %v2353 = vld [vmem:[%s695 + $0x1b8] sm:$0xff]
      %v2354 = vld [vmem:[%s695 + $0x1c0] sm:$0xff]
      %v2355 = vld [vmem:[%s695 + $0x1c8] sm:$0xff]
      %v2356 = vld [vmem:[%s695 + $0x1d0] sm:$0xff]
      %v2357 = vld [vmem:[%s695 + $0x1d8] sm:$0xff]
      %v2358 = vld [vmem:[%s695 + $0x1e0] sm:$0xff]
      %v2359 = vld [vmem:[%s695 + $0x1e8] sm:$0xff]
      %v2360 = vld [vmem:[%s695 + $0x1f0] sm:$0xff]
      %v2361 = vld [vmem:[%s695 + $0x1f8] sm:$0xff]
      %v2362 = vld [vmem:[%s699] sm:$0xf]
      %v2364 = vlaneseq
      %v2365 = vshrl.u32 %v2364, 7
      %v2366 = vsub.s32 0, %v2365
      %v2367 = vrot.slane %v2362, %v2366
      %v2368 = vlaneseq
      %v2369 = vshrl.u32 %v2368, 7
      %v2370 = vsub.s32 1, %v2369
      %v2371 = vrot.slane %v2362, %v2370
      %v2372 = vlaneseq
      %v2373 = vshrl.u32 %v2372, 7
      %v2374 = vsub.s32 2, %v2373
      %v2375 = vrot.slane %v2362, %v2374
      %v2376 = vlaneseq
      %v2377 = vshrl.u32 %v2376, 7
      %v2378 = vsub.s32 3, %v2377
      %v2379 = vrot.slane %v2362, %v2378
      %v2448 = vunpack.c.l.b16 %v2298
      %v2449 = vunpack.c.h.b16 %v2298
      %v2450 = vunpack.c.l.b16 %v2299
      %v2451 = vunpack.c.h.b16 %v2299
      %v2452 = vunpack.c.l.b16 %v2300
      %v2453 = vunpack.c.h.b16 %v2300
      %v2454 = vunpack.c.l.b16 %v2301
      %v2455 = vunpack.c.h.b16 %v2301
      %v2456 = vunpack.c.l.b16 %v2302
      %v2457 = vunpack.c.h.b16 %v2302
      %v2458 = vunpack.c.l.b16 %v2303
      %v2459 = vunpack.c.h.b16 %v2303
      %v2460 = vunpack.c.l.b16 %v2304
      %v2461 = vunpack.c.h.b16 %v2304
      %v2462 = vunpack.c.l.b16 %v2305
      %v2463 = vunpack.c.h.b16 %v2305
      %v2464 = vunpack.c.l.b16 %v2306
      %v2465 = vunpack.c.h.b16 %v2306
      %v2466 = vunpack.c.l.b16 %v2307
      %v2467 = vunpack.c.h.b16 %v2307
      %v2468 = vunpack.c.l.b16 %v2308
      %v2469 = vunpack.c.h.b16 %v2308
      %v2470 = vunpack.c.l.b16 %v2309
      %v2471 = vunpack.c.h.b16 %v2309
      %v2472 = vunpack.c.l.b16 %v2310
      %v2473 = vunpack.c.h.b16 %v2310
      %v2474 = vunpack.c.l.b16 %v2311
      %v2475 = vunpack.c.h.b16 %v2311
      %v2476 = vunpack.c.l.b16 %v2312
      %v2477 = vunpack.c.h.b16 %v2312
      %v2478 = vunpack.c.l.b16 %v2313
      %v2479 = vunpack.c.h.b16 %v2313
      %v2480 = vunpack.c.l.b16 %v2314
      %v2481 = vunpack.c.h.b16 %v2314
      %v2482 = vunpack.c.l.b16 %v2315
      %v2483 = vunpack.c.h.b16 %v2315
      %v2484 = vunpack.c.l.b16 %v2316
      %v2485 = vunpack.c.h.b16 %v2316
      %v2486 = vunpack.c.l.b16 %v2317
      %v2487 = vunpack.c.h.b16 %v2317
      %v2488 = vunpack.c.l.b16 %v2318
      %v2489 = vunpack.c.h.b16 %v2318
      %v2490 = vunpack.c.l.b16 %v2319
      %v2491 = vunpack.c.h.b16 %v2319
      %v2492 = vunpack.c.l.b16 %v2320
      %v2493 = vunpack.c.h.b16 %v2320
      %v2494 = vunpack.c.l.b16 %v2321
      %v2495 = vunpack.c.h.b16 %v2321
      %v2496 = vunpack.c.l.b16 %v2322
      %v2497 = vunpack.c.h.b16 %v2322
      %v2498 = vunpack.c.l.b16 %v2323
      %v2499 = vunpack.c.h.b16 %v2323
      %v2500 = vunpack.c.l.b16 %v2324
      %v2501 = vunpack.c.h.b16 %v2324
      %v2502 = vunpack.c.l.b16 %v2325
      %v2503 = vunpack.c.h.b16 %v2325
      %v2504 = vunpack.c.l.b16 %v2326
      %v2505 = vunpack.c.h.b16 %v2326
      %v2506 = vunpack.c.l.b16 %v2327
      %v2507 = vunpack.c.h.b16 %v2327
      %v2508 = vunpack.c.l.b16 %v2328
      %v2509 = vunpack.c.h.b16 %v2328
      %v2510 = vunpack.c.l.b16 %v2329
      %v2511 = vunpack.c.h.b16 %v2329
      %v2512 = vunpack.c.l.b16 %v2330
      %v2513 = vunpack.c.h.b16 %v2330
      %v2514 = vunpack.c.l.b16 %v2331
      %v2515 = vunpack.c.h.b16 %v2331
      %v2516 = vunpack.c.l.b16 %v2332
      %v2517 = vunpack.c.h.b16 %v2332
      %v2518 = vunpack.c.l.b16 %v2333
      %v2519 = vunpack.c.h.b16 %v2333
      %v2520 = vunpack.c.l.b16 %v2334
      %v2521 = vunpack.c.h.b16 %v2334
      %v2522 = vunpack.c.l.b16 %v2335
      %v2523 = vunpack.c.h.b16 %v2335
      %v2524 = vunpack.c.l.b16 %v2336
      %v2525 = vunpack.c.h.b16 %v2336
      %v2526 = vunpack.c.l.b16 %v2337
      %v2527 = vunpack.c.h.b16 %v2337
      %v2528 = vunpack.c.l.b16 %v2338
      %v2529 = vunpack.c.h.b16 %v2338
      %v2530 = vunpack.c.l.b16 %v2339
      %v2531 = vunpack.c.h.b16 %v2339
      %v2532 = vunpack.c.l.b16 %v2340
      %v2533 = vunpack.c.h.b16 %v2340
      %v2534 = vunpack.c.l.b16 %v2341
      %v2535 = vunpack.c.h.b16 %v2341
      %v2536 = vunpack.c.l.b16 %v2342
      %v2537 = vunpack.c.h.b16 %v2342
      %v2538 = vunpack.c.l.b16 %v2343
      %v2539 = vunpack.c.h.b16 %v2343
      %v2540 = vunpack.c.l.b16 %v2344
      %v2541 = vunpack.c.h.b16 %v2344
      %v2542 = vunpack.c.l.b16 %v2345
      %v2543 = vunpack.c.h.b16 %v2345
      %v2544 = vunpack.c.l.b16 %v2346
      %v2545 = vunpack.c.h.b16 %v2346
      %v2546 = vunpack.c.l.b16 %v2347
      %v2547 = vunpack.c.h.b16 %v2347
      %v2548 = vunpack.c.l.b16 %v2348
      %v2549 = vunpack.c.h.b16 %v2348
      %v2550 = vunpack.c.l.b16 %v2349
      %v2551 = vunpack.c.h.b16 %v2349
      %v2552 = vunpack.c.l.b16 %v2350
      %v2553 = vunpack.c.h.b16 %v2350
      %v2554 = vunpack.c.l.b16 %v2351
      %v2555 = vunpack.c.h.b16 %v2351
      %v2556 = vunpack.c.l.b16 %v2352
      %v2557 = vunpack.c.h.b16 %v2352
      %v2558 = vunpack.c.l.b16 %v2353
      %v2559 = vunpack.c.h.b16 %v2353
      %v2560 = vunpack.c.l.b16 %v2354
      %v2561 = vunpack.c.h.b16 %v2354
      %v2562 = vunpack.c.l.b16 %v2355
      %v2563 = vunpack.c.h.b16 %v2355
      %v2564 = vunpack.c.l.b16 %v2356
      %v2565 = vunpack.c.h.b16 %v2356
      %v2566 = vunpack.c.l.b16 %v2357
      %v2567 = vunpack.c.h.b16 %v2357
      %v2568 = vunpack.c.l.b16 %v2358
      %v2569 = vunpack.c.h.b16 %v2358
      %v2570 = vunpack.c.l.b16 %v2359
      %v2571 = vunpack.c.h.b16 %v2359
      %v2572 = vunpack.c.l.b16 %v2360
      %v2573 = vunpack.c.h.b16 %v2360
      %v2574 = vunpack.c.l.b16 %v2361
      %v2575 = vunpack.c.h.b16 %v2361
      %v2576 = vpack.c.b16 %v2452, %v2448
      %v2577 = vpack.c.b16 %v2453, %v2449
      %v2578 = vpack.c.b16 %v2454, %v2450
      %v2579 = vpack.c.b16 %v2455, %v2451
      %v2580 = vpack.c.b16 %v2460, %v2456
      %v2581 = vpack.c.b16 %v2461, %v2457
      %v2582 = vpack.c.b16 %v2462, %v2458
      %v2583 = vpack.c.b16 %v2463, %v2459
      %v2584 = vpack.c.b16 %v2468, %v2464
      %v2585 = vpack.c.b16 %v2469, %v2465
      %v2586 = vpack.c.b16 %v2470, %v2466
      %v2587 = vpack.c.b16 %v2471, %v2467
      %v2588 = vpack.c.b16 %v2476, %v2472
      %v2589 = vpack.c.b16 %v2477, %v2473
      %v2590 = vpack.c.b16 %v2478, %v2474
      %v2591 = vpack.c.b16 %v2479, %v2475
      %v2592 = vpack.c.b16 %v2484, %v2480
      %v2593 = vpack.c.b16 %v2485, %v2481
      %v2594 = vpack.c.b16 %v2486, %v2482
      %v2595 = vpack.c.b16 %v2487, %v2483
      %v2596 = vpack.c.b16 %v2492, %v2488
      %v2597 = vpack.c.b16 %v2493, %v2489
      %v2598 = vpack.c.b16 %v2494, %v2490
      %v2599 = vpack.c.b16 %v2495, %v2491
      %v2600 = vpack.c.b16 %v2500, %v2496
      %v2601 = vpack.c.b16 %v2501, %v2497
      %v2602 = vpack.c.b16 %v2502, %v2498
      %v2603 = vpack.c.b16 %v2503, %v2499
      %v2604 = vpack.c.b16 %v2508, %v2504
      %v2605 = vpack.c.b16 %v2509, %v2505
      %v2606 = vpack.c.b16 %v2510, %v2506
      %v2607 = vpack.c.b16 %v2511, %v2507
      %v2608 = vpack.c.b16 %v2516, %v2512
      %v2609 = vpack.c.b16 %v2517, %v2513
      %v2610 = vpack.c.b16 %v2518, %v2514
      %v2611 = vpack.c.b16 %v2519, %v2515
      %v2612 = vpack.c.b16 %v2524, %v2520
      %v2613 = vpack.c.b16 %v2525, %v2521
      %v2614 = vpack.c.b16 %v2526, %v2522
      %v2615 = vpack.c.b16 %v2527, %v2523
      %v2616 = vpack.c.b16 %v2532, %v2528
      %v2617 = vpack.c.b16 %v2533, %v2529
      %v2618 = vpack.c.b16 %v2534, %v2530
      %v2619 = vpack.c.b16 %v2535, %v2531
      %v2620 = vpack.c.b16 %v2540, %v2536
      %v2621 = vpack.c.b16 %v2541, %v2537
      %v2622 = vpack.c.b16 %v2542, %v2538
      %v2623 = vpack.c.b16 %v2543, %v2539
      %v2624 = vpack.c.b16 %v2548, %v2544
      %v2625 = vpack.c.b16 %v2549, %v2545
      %v2626 = vpack.c.b16 %v2550, %v2546
      %v2627 = vpack.c.b16 %v2551, %v2547
      %v2628 = vpack.c.b16 %v2556, %v2552
      %v2629 = vpack.c.b16 %v2557, %v2553
      %v2630 = vpack.c.b16 %v2558, %v2554
      %v2631 = vpack.c.b16 %v2559, %v2555
      %v2632 = vpack.c.b16 %v2564, %v2560
      %v2633 = vpack.c.b16 %v2565, %v2561
      %v2634 = vpack.c.b16 %v2566, %v2562
      %v2635 = vpack.c.b16 %v2567, %v2563
      %v2636 = vpack.c.b16 %v2572, %v2568
      %v2637 = vpack.c.b16 %v2573, %v2569
      %v2638 = vpack.c.b16 %v2574, %v2570
      %v2639 = vpack.c.b16 %v2575, %v2571
      %2704 = vmatprep.subr.bf16.mxu0 %v2605
      %2705 = vmatpush1.bf16.msra.mxu0 %v2604
      %2706 = vmatprep.subr.bf16.mxu0 %v2601
      %2707 = vmatpush1.bf16.msra.mxu0 %v2600
      %2708 = vmatprep.subr.bf16.mxu0 %v2597
      %2709 = vmatpush1.bf16.msra.mxu0 %v2596
      %2710 = vmatprep.subr.bf16.mxu0 %v2593
      %2711 = vmatpush1.bf16.msra.mxu0 %v2592
      %2712 = vmatprep.subr.bf16.mxu0 %v2589
      %2713 = vmatpush1.bf16.msra.mxu0 %v2588
      %2714 = vmatprep.subr.bf16.mxu0 %v2585
      %2715 = vmatpush1.bf16.msra.mxu0 %v2584
      %2716 = vmatprep.subr.bf16.mxu0 %v2581
      %2717 = vmatpush1.bf16.msra.mxu0 %v2580
      %2718 = vmatprep.subr.bf16.mxu0 %v2577
      %2719 = vmatpush1.bf16.msra.mxu0 %v2576
      %2720 = vmatprep.subr.bf16.mxu0 %v2637
      %2721 = vmatpush2.bf16.msra.mxu0 %v2636
      %2722 = vmatprep.subr.bf16.mxu0 %v2633
      %2723 = vmatpush2.bf16.msra.mxu0 %v2632
      %2724 = vmatprep.subr.bf16.mxu0 %v2629
      %2725 = vmatpush2.bf16.msra.mxu0 %v2628
      %2726 = vmatprep.subr.bf16.mxu0 %v2625
      %2727 = vmatpush2.bf16.msra.mxu0 %v2624
      %2728 = vmatprep.subr.bf16.mxu0 %v2621
      %2729 = vmatpush2.bf16.msra.mxu0 %v2620
      %2730 = vmatprep.subr.bf16.mxu0 %v2617
      %2731 = vmatpush2.bf16.msra.mxu0 %v2616
      %2732 = vmatprep.subr.bf16.mxu0 %v2613
      %2733 = vmatpush2.bf16.msra.mxu0 %v2612
      %2734 = vmatprep.subr.bf16.mxu0 %v2609
      %2735 = vmatpush2.bf16.msra.mxu0 %v2608
      %2736 = vmatprep.mubr.bf16.mxu0 %v2297
      %2737 = vmatmul.mubr.bf16.gmra.mxu0 %v2296
      %v2738 = vpop.f32.mrf.mxu0
      %v2739 = vadd.f32 %v2367, %v2738
      %v2740 = vpop.f32.mrf.mxu0
      %v2741 = vadd.f32 %v2371, %v2740
      %v2742 = vpop.f32.mrf.mxu0
      %v2743 = vadd.f32 %v2367, %v2742
      %v2744 = vpop.f32.mrf.mxu0
      %v2745 = vadd.f32 %v2371, %v2744
      %2746 = vdwg.mxu0
      %2747 = vmatprep.subr.bf16.mxu0 %v2607
      %2748 = vmatpush1.bf16.msra.mxu0 %v2606
      %2749 = vmatprep.subr.bf16.mxu0 %v2603
      %2750 = vmatpush1.bf16.msra.mxu0 %v2602
      %2751 = vmatprep.subr.bf16.mxu0 %v2599
      %2752 = vmatpush1.bf16.msra.mxu0 %v2598
      %2753 = vmatprep.subr.bf16.mxu0 %v2595
      %2754 = vmatpush1.bf16.msra.mxu0 %v2594
      %2755 = vmatprep.subr.bf16.mxu0 %v2591
      %2756 = vmatpush1.bf16.msra.mxu0 %v2590
      %2757 = vmatprep.subr.bf16.mxu0 %v2587
      %2758 = vmatpush1.bf16.msra.mxu0 %v2586
      %2759 = vmatprep.subr.bf16.mxu0 %v2583
      %2760 = vmatpush1.bf16.msra.mxu0 %v2582
      %2761 = vmatprep.subr.bf16.mxu0 %v2579
      %2762 = vmatpush1.bf16.msra.mxu0 %v2578
      %2763 = vmatprep.subr.bf16.mxu0 %v2639
      %2764 = vmatpush2.bf16.msra.mxu0 %v2638
      %2765 = vmatprep.subr.bf16.mxu0 %v2635
      %2766 = vmatpush2.bf16.msra.mxu0 %v2634
      %2767 = vmatprep.subr.bf16.mxu0 %v2631
      %2768 = vmatpush2.bf16.msra.mxu0 %v2630
      %2769 = vmatprep.subr.bf16.mxu0 %v2627
      %2770 = vmatpush2.bf16.msra.mxu0 %v2626
      %2771 = vmatprep.subr.bf16.mxu0 %v2623
      %2772 = vmatpush2.bf16.msra.mxu0 %v2622
      %2773 = vmatprep.subr.bf16.mxu0 %v2619
      %2774 = vmatpush2.bf16.msra.mxu0 %v2618
      %2775 = vmatprep.subr.bf16.mxu0 %v2615
      %2776 = vmatpush2.bf16.msra.mxu0 %v2614
      %2777 = vmatprep.subr.bf16.mxu0 %v2611
      %2778 = vmatpush2.bf16.msra.mxu0 %v2610
      %2779 = vmatprep.mubr.bf16.mxu0 %v2297
      %2780 = vmatmul.mubr.bf16.gmra.mxu0 %v2296
      %v2781 = vpop.f32.mrf.mxu0
      %v2782 = vadd.f32 %v2375, %v2781
      %v2783 = vpop.f32.mrf.mxu0
      %v2784 = vadd.f32 %v2379, %v2783
      %v2785 = vpop.f32.mrf.mxu0
      %v2786 = vadd.f32 %v2375, %v2785
      %v2787 = vpop.f32.mrf.mxu0
      %v2788 = vadd.f32 %v2379, %v2787
      %2789 = vdwg.mxu0
      %v2790 = vmul.f32 %v2739, 1.702
      %v2791 = vmul.f32 %v2741, 1.702
      %v2792 = vmul.f32 %v2782, 1.702
      %v2793 = vmul.f32 %v2784, 1.702
      %v2794 = vmul.f32 %v2743, 1.702
      %v2795 = vmul.f32 %v2745, 1.702
      %v2796 = vmul.f32 %v2786, 1.702
      %v2797 = vmul.f32 %v2788, 1.702
      %v2798 = vxor.u32 %v2790, 2147483648
      %v2799 = vxor.u32 %v2791, 2147483648
      %v2800 = vxor.u32 %v2792, 2147483648
      %v2801 = vxor.u32 %v2793, 2147483648
      %v2802 = vxor.u32 %v2794, 2147483648
      %v2803 = vxor.u32 %v2795, 2147483648
      %v2804 = vxor.u32 %v2796, 2147483648
      %v2805 = vxor.u32 %v2797, 2147483648
      %v2806 = vmul.f32 %v2798, 1.442695
      %v2807 = vpow.pop %v2806
      %v2808 = vmul.f32 %v2799, 1.442695
      %v2809 = vpow.pop %v2808
      %v2810 = vmul.f32 %v2800, 1.442695
      %v2811 = vpow.pop %v2810
      %v2812 = vmul.f32 %v2801, 1.442695
      %v2813 = vpow.pop %v2812
      %v2814 = vmul.f32 %v2802, 1.442695
      %v2815 = vpow.pop %v2814
      %v2816 = vmul.f32 %v2803, 1.442695
      %v2817 = vpow.pop %v2816
      %v2818 = vmul.f32 %v2804, 1.442695
      %v2819 = vpow.pop %v2818
      %v2820 = vmul.f32 %v2805, 1.442695
      %v2821 = vpow.pop %v2820
      %v2822 = vadd.f32 %v2807, 1.0
      %v2823 = vadd.f32 %v2809, 1.0
      %v2824 = vadd.f32 %v2811, 1.0
      %v2825 = vadd.f32 %v2813, 1.0
      %v2826 = vadd.f32 %v2815, 1.0
      %v2827 = vadd.f32 %v2817, 1.0
      %v2828 = vadd.f32 %v2819, 1.0
      %v2829 = vadd.f32 %v2821, 1.0
      %v2830 = vrcp.pop %v2822
      %v2831 = vmul.f32 1.0, %v2830
      %v2832 = vrcp.pop %v2823
      %v2833 = vmul.f32 1.0, %v2832
      %v2834 = vrcp.pop %v2824
      %v2835 = vmul.f32 1.0, %v2834
      %v2836 = vrcp.pop %v2825
      %v2837 = vmul.f32 1.0, %v2836
      %v2838 = vrcp.pop %v2826
      %v2839 = vmul.f32 1.0, %v2838
      %v2840 = vrcp.pop %v2827
      %v2841 = vmul.f32 1.0, %v2840
      %v2842 = vrcp.pop %v2828
      %v2843 = vmul.f32 1.0, %v2842
      %v2844 = vrcp.pop %v2829
      %v2845 = vmul.f32 1.0, %v2844
      %v2846 = vmul.f32 %v2739, %v2831
      %v2847 = vmul.f32 %v2741, %v2833
      %v2848 = vmul.f32 %v2782, %v2835
      %v2849 = vmul.f32 %v2784, %v2837
      %v2850 = vmul.f32 %v2743, %v2839
      %v2851 = vmul.f32 %v2745, %v2841
      %v2852 = vmul.f32 %v2786, %v2843
      %v2853 = vmul.f32 %v2788, %v2845
      %v2854 = vpack.c.bf16 %v2850, %v2846
      %v2855 = vpack.c.bf16 %v2851, %v2847
      %v2856 = vpack.c.bf16 %v2852, %v2848
      %v2857 = vpack.c.bf16 %v2853, %v2849
      %v2858 = vld [vmem:[%s704] sm:$0xff]
      %v2859 = vld [vmem:[%s704 + $0x8] sm:$0xff]
      %v2860 = vld [vmem:[%s704 + $0x10] sm:$0xff]
      %v2861 = vld [vmem:[%s704 + $0x18] sm:$0xff]
      %v2862 = vld [vmem:[%s704 + $0x20] sm:$0xff]
      %v2863 = vld [vmem:[%s704 + $0x28] sm:$0xff]
      %v2864 = vld [vmem:[%s704 + $0x30] sm:$0xff]
      %v2865 = vld [vmem:[%s704 + $0x38] sm:$0xff]
      %v2866 = vld [vmem:[%s704 + $0x40] sm:$0xff]
      %v2867 = vld [vmem:[%s704 + $0x48] sm:$0xff]
      %v2868 = vld [vmem:[%s704 + $0x50] sm:$0xff]
      %v2869 = vld [vmem:[%s704 + $0x58] sm:$0xff]
      %v2870 = vld [vmem:[%s704 + $0x60] sm:$0xff]
      %v2871 = vld [vmem:[%s704 + $0x68] sm:$0xff]
      %v2872 = vld [vmem:[%s704 + $0x70] sm:$0xff]
      %v2873 = vld [vmem:[%s704 + $0x78] sm:$0xff]
      %v2874 = vld [vmem:[%s704 + $0x80] sm:$0xff]
      %v2875 = vld [vmem:[%s704 + $0x88] sm:$0xff]
      %v2876 = vld [vmem:[%s704 + $0x90] sm:$0xff]
      %v2877 = vld [vmem:[%s704 + $0x98] sm:$0xff]
      %v2878 = vld [vmem:[%s704 + $0xa0] sm:$0xff]
      %v2879 = vld [vmem:[%s704 + $0xa8] sm:$0xff]
      %v2880 = vld [vmem:[%s704 + $0xb0] sm:$0xff]
      %v2881 = vld [vmem:[%s704 + $0xb8] sm:$0xff]
      %v2882 = vld [vmem:[%s704 + $0xc0] sm:$0xff]
      %v2883 = vld [vmem:[%s704 + $0xc8] sm:$0xff]
      %v2884 = vld [vmem:[%s704 + $0xd0] sm:$0xff]
      %v2885 = vld [vmem:[%s704 + $0xd8] sm:$0xff]
      %v2886 = vld [vmem:[%s704 + $0xe0] sm:$0xff]
      %v2887 = vld [vmem:[%s704 + $0xe8] sm:$0xff]
      %v2888 = vld [vmem:[%s704 + $0xf0] sm:$0xff]
      %v2889 = vld [vmem:[%s704 + $0xf8] sm:$0xff]
      %v2890 = vld [vmem:[%s704 + $0x100] sm:$0xff]
      %v2891 = vld [vmem:[%s704 + $0x108] sm:$0xff]
      %v2892 = vld [vmem:[%s704 + $0x110] sm:$0xff]
      %v2893 = vld [vmem:[%s704 + $0x118] sm:$0xff]
      %v2894 = vld [vmem:[%s704 + $0x120] sm:$0xff]
      %v2895 = vld [vmem:[%s704 + $0x128] sm:$0xff]
      %v2896 = vld [vmem:[%s704 + $0x130] sm:$0xff]
      %v2897 = vld [vmem:[%s704 + $0x138] sm:$0xff]
      %v2898 = vld [vmem:[%s704 + $0x140] sm:$0xff]
      %v2899 = vld [vmem:[%s704 + $0x148] sm:$0xff]
      %v2900 = vld [vmem:[%s704 + $0x150] sm:$0xff]
      %v2901 = vld [vmem:[%s704 + $0x158] sm:$0xff]
      %v2902 = vld [vmem:[%s704 + $0x160] sm:$0xff]
      %v2903 = vld [vmem:[%s704 + $0x168] sm:$0xff]
      %v2904 = vld [vmem:[%s704 + $0x170] sm:$0xff]
      %v2905 = vld [vmem:[%s704 + $0x178] sm:$0xff]
      %v2906 = vld [vmem:[%s704 + $0x180] sm:$0xff]
      %v2907 = vld [vmem:[%s704 + $0x188] sm:$0xff]
      %v2908 = vld [vmem:[%s704 + $0x190] sm:$0xff]
      %v2909 = vld [vmem:[%s704 + $0x198] sm:$0xff]
      %v2910 = vld [vmem:[%s704 + $0x1a0] sm:$0xff]
      %v2911 = vld [vmem:[%s704 + $0x1a8] sm:$0xff]
      %v2912 = vld [vmem:[%s704 + $0x1b0] sm:$0xff]
      %v2913 = vld [vmem:[%s704 + $0x1b8] sm:$0xff]
      %v2914 = vld [vmem:[%s704 + $0x1c0] sm:$0xff]
      %v2915 = vld [vmem:[%s704 + $0x1c8] sm:$0xff]
      %v2916 = vld [vmem:[%s704 + $0x1d0] sm:$0xff]
      %v2917 = vld [vmem:[%s704 + $0x1d8] sm:$0xff]
      %v2918 = vld [vmem:[%s704 + $0x1e0] sm:$0xff]
      %v2919 = vld [vmem:[%s704 + $0x1e8] sm:$0xff]
      %v2920 = vld [vmem:[%s704 + $0x1f0] sm:$0xff]
      %v2921 = vld [vmem:[%s704 + $0x1f8] sm:$0xff]
      %v2922 = vld [vmem:[%s708] sm:$0x3]
      %v2924 = vlaneseq
      %v2925 = vshrl.u32 %v2924, 7
      %v2926 = vsub.s32 0, %v2925
      %v2927 = vrot.slane %v2922, %v2926
      %v2928 = vlaneseq
      %v2929 = vshrl.u32 %v2928, 7
      %v2930 = vsub.s32 1, %v2929
      %v2931 = vrot.slane %v2922, %v2930
      %v2998 = vunpack.c.l.b16 %v2858
      %v2999 = vunpack.c.h.b16 %v2858
      %v3000 = vunpack.c.l.b16 %v2859
      %v3001 = vunpack.c.h.b16 %v2859
      %v3002 = vunpack.c.l.b16 %v2860
      %v3003 = vunpack.c.h.b16 %v2860
      %v3004 = vunpack.c.l.b16 %v2861
      %v3005 = vunpack.c.h.b16 %v2861
      %v3006 = vunpack.c.l.b16 %v2862
      %v3007 = vunpack.c.h.b16 %v2862
      %v3008 = vunpack.c.l.b16 %v2863
      %v3009 = vunpack.c.h.b16 %v2863
      %v3010 = vunpack.c.l.b16 %v2864
      %v3011 = vunpack.c.h.b16 %v2864
      %v3012 = vunpack.c.l.b16 %v2865
      %v3013 = vunpack.c.h.b16 %v2865
      %v3014 = vunpack.c.l.b16 %v2866
      %v3015 = vunpack.c.h.b16 %v2866
      %v3016 = vunpack.c.l.b16 %v2867
      %v3017 = vunpack.c.h.b16 %v2867
      %v3018 = vunpack.c.l.b16 %v2868
      %v3019 = vunpack.c.h.b16 %v2868
      %v3020 = vunpack.c.l.b16 %v2869
      %v3021 = vunpack.c.h.b16 %v2869
      %v3022 = vunpack.c.l.b16 %v2870
      %v3023 = vunpack.c.h.b16 %v2870
      %v3024 = vunpack.c.l.b16 %v2871
      %v3025 = vunpack.c.h.b16 %v2871
      %v3026 = vunpack.c.l.b16 %v2872
      %v3027 = vunpack.c.h.b16 %v2872
      %v3028 = vunpack.c.l.b16 %v2873
      %v3029 = vunpack.c.h.b16 %v2873
      %v3030 = vunpack.c.l.b16 %v2874
      %v3031 = vunpack.c.h.b16 %v2874
      %v3032 = vunpack.c.l.b16 %v2875
      %v3033 = vunpack.c.h.b16 %v2875
      %v3034 = vunpack.c.l.b16 %v2876
      %v3035 = vunpack.c.h.b16 %v2876
      %v3036 = vunpack.c.l.b16 %v2877
      %v3037 = vunpack.c.h.b16 %v2877
      %v3038 = vunpack.c.l.b16 %v2878
      %v3039 = vunpack.c.h.b16 %v2878
      %v3040 = vunpack.c.l.b16 %v2879
      %v3041 = vunpack.c.h.b16 %v2879
      %v3042 = vunpack.c.l.b16 %v2880
      %v3043 = vunpack.c.h.b16 %v2880
      %v3044 = vunpack.c.l.b16 %v2881
      %v3045 = vunpack.c.h.b16 %v2881
      %v3046 = vunpack.c.l.b16 %v2882
      %v3047 = vunpack.c.h.b16 %v2882
      %v3048 = vunpack.c.l.b16 %v2883
      %v3049 = vunpack.c.h.b16 %v2883
      %v3050 = vunpack.c.l.b16 %v2884
      %v3051 = vunpack.c.h.b16 %v2884
      %v3052 = vunpack.c.l.b16 %v2885
      %v3053 = vunpack.c.h.b16 %v2885
      %v3054 = vunpack.c.l.b16 %v2886
      %v3055 = vunpack.c.h.b16 %v2886
      %v3056 = vunpack.c.l.b16 %v2887
      %v3057 = vunpack.c.h.b16 %v2887
      %v3058 = vunpack.c.l.b16 %v2888
      %v3059 = vunpack.c.h.b16 %v2888
      %v3060 = vunpack.c.l.b16 %v2889
      %v3061 = vunpack.c.h.b16 %v2889
      %v3062 = vunpack.c.l.b16 %v2890
      %v3063 = vunpack.c.h.b16 %v2890
      %v3064 = vunpack.c.l.b16 %v2891
      %v3065 = vunpack.c.h.b16 %v2891
      %v3066 = vunpack.c.l.b16 %v2892
      %v3067 = vunpack.c.h.b16 %v2892
      %v3068 = vunpack.c.l.b16 %v2893
      %v3069 = vunpack.c.h.b16 %v2893
      %v3070 = vunpack.c.l.b16 %v2894
      %v3071 = vunpack.c.h.b16 %v2894
      %v3072 = vunpack.c.l.b16 %v2895
      %v3073 = vunpack.c.h.b16 %v2895
      %v3074 = vunpack.c.l.b16 %v2896
      %v3075 = vunpack.c.h.b16 %v2896
      %v3076 = vunpack.c.l.b16 %v2897
      %v3077 = vunpack.c.h.b16 %v2897
      %v3078 = vunpack.c.l.b16 %v2898
      %v3079 = vunpack.c.h.b16 %v2898
      %v3080 = vunpack.c.l.b16 %v2899
      %v3081 = vunpack.c.h.b16 %v2899
      %v3082 = vunpack.c.l.b16 %v2900
      %v3083 = vunpack.c.h.b16 %v2900
      %v3084 = vunpack.c.l.b16 %v2901
      %v3085 = vunpack.c.h.b16 %v2901
      %v3086 = vunpack.c.l.b16 %v2902
      %v3087 = vunpack.c.h.b16 %v2902
      %v3088 = vunpack.c.l.b16 %v2903
      %v3089 = vunpack.c.h.b16 %v2903
      %v3090 = vunpack.c.l.b16 %v2904
      %v3091 = vunpack.c.h.b16 %v2904
      %v3092 = vunpack.c.l.b16 %v2905
      %v3093 = vunpack.c.h.b16 %v2905
      %v3094 = vunpack.c.l.b16 %v2906
      %v3095 = vunpack.c.h.b16 %v2906
      %v3096 = vunpack.c.l.b16 %v2907
      %v3097 = vunpack.c.h.b16 %v2907
      %v3098 = vunpack.c.l.b16 %v2908
      %v3099 = vunpack.c.h.b16 %v2908
      %v3100 = vunpack.c.l.b16 %v2909
      %v3101 = vunpack.c.h.b16 %v2909
      %v3102 = vunpack.c.l.b16 %v2910
      %v3103 = vunpack.c.h.b16 %v2910
      %v3104 = vunpack.c.l.b16 %v2911
      %v3105 = vunpack.c.h.b16 %v2911
      %v3106 = vunpack.c.l.b16 %v2912
      %v3107 = vunpack.c.h.b16 %v2912
      %v3108 = vunpack.c.l.b16 %v2913
      %v3109 = vunpack.c.h.b16 %v2913
      %v3110 = vunpack.c.l.b16 %v2914
      %v3111 = vunpack.c.h.b16 %v2914
      %v3112 = vunpack.c.l.b16 %v2915
      %v3113 = vunpack.c.h.b16 %v2915
      %v3114 = vunpack.c.l.b16 %v2916
      %v3115 = vunpack.c.h.b16 %v2916
      %v3116 = vunpack.c.l.b16 %v2917
      %v3117 = vunpack.c.h.b16 %v2917
      %v3118 = vunpack.c.l.b16 %v2918
      %v3119 = vunpack.c.h.b16 %v2918
      %v3120 = vunpack.c.l.b16 %v2919
      %v3121 = vunpack.c.h.b16 %v2919
      %v3122 = vunpack.c.l.b16 %v2920
      %v3123 = vunpack.c.h.b16 %v2920
      %v3124 = vunpack.c.l.b16 %v2921
      %v3125 = vunpack.c.h.b16 %v2921
      %v3126 = vpack.c.b16 %v3000, %v2998
      %v3127 = vpack.c.b16 %v3001, %v2999
      %v3128 = vpack.c.b16 %v3004, %v3002
      %v3129 = vpack.c.b16 %v3005, %v3003
      %v3130 = vpack.c.b16 %v3008, %v3006
      %v3131 = vpack.c.b16 %v3009, %v3007
      %v3132 = vpack.c.b16 %v3012, %v3010
      %v3133 = vpack.c.b16 %v3013, %v3011
      %v3134 = vpack.c.b16 %v3016, %v3014
      %v3135 = vpack.c.b16 %v3017, %v3015
      %v3136 = vpack.c.b16 %v3020, %v3018
      %v3137 = vpack.c.b16 %v3021, %v3019
      %v3138 = vpack.c.b16 %v3024, %v3022
      %v3139 = vpack.c.b16 %v3025, %v3023
      %v3140 = vpack.c.b16 %v3028, %v3026
      %v3141 = vpack.c.b16 %v3029, %v3027
      %v3142 = vpack.c.b16 %v3032, %v3030
      %v3143 = vpack.c.b16 %v3033, %v3031
      %v3144 = vpack.c.b16 %v3036, %v3034
      %v3145 = vpack.c.b16 %v3037, %v3035
      %v3146 = vpack.c.b16 %v3040, %v3038
      %v3147 = vpack.c.b16 %v3041, %v3039
      %v3148 = vpack.c.b16 %v3044, %v3042
      %v3149 = vpack.c.b16 %v3045, %v3043
      %v3150 = vpack.c.b16 %v3048, %v3046
      %v3151 = vpack.c.b16 %v3049, %v3047
      %v3152 = vpack.c.b16 %v3052, %v3050
      %v3153 = vpack.c.b16 %v3053, %v3051
      %v3154 = vpack.c.b16 %v3056, %v3054
      %v3155 = vpack.c.b16 %v3057, %v3055
      %v3156 = vpack.c.b16 %v3060, %v3058
      %v3157 = vpack.c.b16 %v3061, %v3059
      %v3158 = vpack.c.b16 %v3064, %v3062
      %v3159 = vpack.c.b16 %v3065, %v3063
      %v3160 = vpack.c.b16 %v3068, %v3066
      %v3161 = vpack.c.b16 %v3069, %v3067
      %v3162 = vpack.c.b16 %v3072, %v3070
      %v3163 = vpack.c.b16 %v3073, %v3071
      %v3164 = vpack.c.b16 %v3076, %v3074
      %v3165 = vpack.c.b16 %v3077, %v3075
      %v3166 = vpack.c.b16 %v3080, %v3078
      %v3167 = vpack.c.b16 %v3081, %v3079
      %v3168 = vpack.c.b16 %v3084, %v3082
      %v3169 = vpack.c.b16 %v3085, %v3083
      %v3170 = vpack.c.b16 %v3088, %v3086
      %v3171 = vpack.c.b16 %v3089, %v3087
      %v3172 = vpack.c.b16 %v3092, %v3090
      %v3173 = vpack.c.b16 %v3093, %v3091
      %v3174 = vpack.c.b16 %v3096, %v3094
      %v3175 = vpack.c.b16 %v3097, %v3095
      %v3176 = vpack.c.b16 %v3100, %v3098
      %v3177 = vpack.c.b16 %v3101, %v3099
      %v3178 = vpack.c.b16 %v3104, %v3102
      %v3179 = vpack.c.b16 %v3105, %v3103
      %v3180 = vpack.c.b16 %v3108, %v3106
      %v3181 = vpack.c.b16 %v3109, %v3107
      %v3182 = vpack.c.b16 %v3112, %v3110
      %v3183 = vpack.c.b16 %v3113, %v3111
      %v3184 = vpack.c.b16 %v3116, %v3114
      %v3185 = vpack.c.b16 %v3117, %v3115
      %v3186 = vpack.c.b16 %v3120, %v3118
      %v3187 = vpack.c.b16 %v3121, %v3119
      %v3188 = vpack.c.b16 %v3124, %v3122
      %v3189 = vpack.c.b16 %v3125, %v3123
      %3254 = vmatprep.subr.bf16.mxu0 %v3141
      %3255 = vmatpush1.bf16.msra.mxu0 %v3140
      %3256 = vmatprep.subr.bf16.mxu0 %v3139
      %3257 = vmatpush1.bf16.msra.mxu0 %v3138
      %3258 = vmatprep.subr.bf16.mxu0 %v3137
      %3259 = vmatpush1.bf16.msra.mxu0 %v3136
      %3260 = vmatprep.subr.bf16.mxu0 %v3135
      %3261 = vmatpush1.bf16.msra.mxu0 %v3134
      %3262 = vmatprep.subr.bf16.mxu0 %v3133
      %3263 = vmatpush1.bf16.msra.mxu0 %v3132
      %3264 = vmatprep.subr.bf16.mxu0 %v3131
      %3265 = vmatpush1.bf16.msra.mxu0 %v3130
      %3266 = vmatprep.subr.bf16.mxu0 %v3129
      %3267 = vmatpush1.bf16.msra.mxu0 %v3128
      %3268 = vmatprep.subr.bf16.mxu0 %v3127
      %3269 = vmatpush1.bf16.msra.mxu0 %v3126
      %3270 = vmatprep.subr.bf16.mxu0 %v3157
      %3271 = vmatpush2.bf16.msra.mxu0 %v3156
      %3272 = vmatprep.subr.bf16.mxu0 %v3155
      %3273 = vmatpush2.bf16.msra.mxu0 %v3154
      %3274 = vmatprep.subr.bf16.mxu0 %v3153
      %3275 = vmatpush2.bf16.msra.mxu0 %v3152
      %3276 = vmatprep.subr.bf16.mxu0 %v3151
      %3277 = vmatpush2.bf16.msra.mxu0 %v3150
      %3278 = vmatprep.subr.bf16.mxu0 %v3149
      %3279 = vmatpush2.bf16.msra.mxu0 %v3148
      %3280 = vmatprep.subr.bf16.mxu0 %v3147
      %3281 = vmatpush2.bf16.msra.mxu0 %v3146
      %3282 = vmatprep.subr.bf16.mxu0 %v3145
      %3283 = vmatpush2.bf16.msra.mxu0 %v3144
      %3284 = vmatprep.subr.bf16.mxu0 %v3143
      %3285 = vmatpush2.bf16.msra.mxu0 %v3142
      %3286 = vmatprep.mubr.bf16.mxu0 %v2855
      %3287 = vmatmul.mubr.bf16.gmra.mxu0 %v2854
      %v3288 = vpop.f32.mrf.mxu0
      %v3289 = vadd.f32 %v2927, %v3288
      %v3290 = vpop.f32.mrf.mxu0
      %v3291 = vadd.f32 %v2931, %v3290
      %v3292 = vpop.f32.mrf.mxu0
      %v3293 = vadd.f32 %v2927, %v3292
      %v3294 = vpop.f32.mrf.mxu0
      %v3295 = vadd.f32 %v2931, %v3294
      %3296 = vdwg.mxu0
      %3297 = vmatprep.subr.bf16.mxu0 %v3173
      %3298 = vmatpush1.bf16.msra.mxu0 %v3172
      %3299 = vmatprep.subr.bf16.mxu0 %v3171
      %3300 = vmatpush1.bf16.msra.mxu0 %v3170
      %3301 = vmatprep.subr.bf16.mxu0 %v3169
      %3302 = vmatpush1.bf16.msra.mxu0 %v3168
      %3303 = vmatprep.subr.bf16.mxu0 %v3167
      %3304 = vmatpush1.bf16.msra.mxu0 %v3166
      %3305 = vmatprep.subr.bf16.mxu0 %v3165
      %3306 = vmatpush1.bf16.msra.mxu0 %v3164
      %3307 = vmatprep.subr.bf16.mxu0 %v3163
      %3308 = vmatpush1.bf16.msra.mxu0 %v3162
      %3309 = vmatprep.subr.bf16.mxu0 %v3161
      %3310 = vmatpush1.bf16.msra.mxu0 %v3160
      %3311 = vmatprep.subr.bf16.mxu0 %v3159
      %3312 = vmatpush1.bf16.msra.mxu0 %v3158
      %3313 = vmatprep.subr.bf16.mxu0 %v3189
      %3314 = vmatpush2.bf16.msra.mxu0 %v3188
      %3315 = vmatprep.subr.bf16.mxu0 %v3187
      %3316 = vmatpush2.bf16.msra.mxu0 %v3186
      %3317 = vmatprep.subr.bf16.mxu0 %v3185
      %3318 = vmatpush2.bf16.msra.mxu0 %v3184
      %3319 = vmatprep.subr.bf16.mxu0 %v3183
      %3320 = vmatpush2.bf16.msra.mxu0 %v3182
      %3321 = vmatprep.subr.bf16.mxu0 %v3181
      %3322 = vmatpush2.bf16.msra.mxu0 %v3180
      %3323 = vmatprep.subr.bf16.mxu0 %v3179
      %3324 = vmatpush2.bf16.msra.mxu0 %v3178
      %3325 = vmatprep.subr.bf16.mxu0 %v3177
      %3326 = vmatpush2.bf16.msra.mxu0 %v3176
      %3327 = vmatprep.subr.bf16.mxu0 %v3175
      %3328 = vmatpush2.bf16.msra.mxu0 %v3174
      %3329 = vmatprep.mubr.bf16.mxu0 %v2857
      %3330 = vmatmul.mubr.bf16.gmra.mxu0 %v2856
      %v3331 = vpop.f32.mrf.mxu0
      %v3332 = vadd.f32 %v3289, %v3331
      %v3333 = vpop.f32.mrf.mxu0
      %v3334 = vadd.f32 %v3291, %v3333
      %v3335 = vpop.f32.mrf.mxu0
      %v3336 = vadd.f32 %v3293, %v3335
      %v3337 = vpop.f32.mrf.mxu0
      %v3338 = vadd.f32 %v3295, %v3337
      %3339 = vdwg.mxu0
      %v3340 = vadd.f32 %v2227, %v3332
      %v3341 = vadd.f32 %v2228, %v3334
      %v3342 = vadd.f32 %v2229, %v3336
      %v3343 = vadd.f32 %v2230, %v3338
      %3344 = vst [vmem:[#allocation2] sm:$0xff] %v3340
      %3345 = vst [vmem:[#allocation2 + $0x8] sm:$0xff] %v3341
      %3346 = vst [vmem:[#allocation2 + $0x10] sm:$0xff] %v3342
      %3347 = vst [vmem:[#allocation2 + $0x18] sm:$0xff] %v3343
      %p3348 = scmp.eq.s32.totalorder %s30, 1
      // Predicated region
      $region81: #{clip_multimodal_forward.4} parent=75 // pred_check
        %p3349 = pneg %p3348
      $region82: #{clip_multimodal_forward.4} parent=75 // pred_check_branch
        %3351 = sbr.rel (%p3349) target = $region84
      $region83: #{clip_multimodal_forward.4} parent=75 // pred_region
        %v3352 = vld [vmem:[%s13] ss:$2 sm:$0x3]
        %s3353 = scalar_lea.vmem %s13, 1
        %v3354 = vld [vmem:[%s3353] ss:$2 sm:$0x3]
        %v3355 = vadd.f32 %v3340, %v3341
        %3356 = vadd.xlane.f32.xlu0 %v3355
        %v3357 = vpop.xlane.xlu0 %3356
        %v3358 = vadd.f32 %v3342, %v3343
        %3359 = vadd.xlane.f32.xlu0 %v3358
        %v3360 = vpop.xlane.xlu0 %3359
        %v3361 = vmul.f32 %v3357, %v772
        %v3362 = vmul.f32 %v3360, %v772
        %v3363 = vsub.f32 %v3340, %v3361
        %v3364 = vsub.f32 %v3341, %v3361
        %v3365 = vsub.f32 %v3342, %v3362
        %v3366 = vsub.f32 %v3343, %v3362
        %v3367 = vmul.f32 %v3363, %v3363
        %v3368 = vmul.f32 %v3364, %v3364
        %v3369 = vmul.f32 %v3365, %v3365
        %v3370 = vmul.f32 %v3366, %v3366
        %v3371 = vadd.f32 %v3367, %v3368
        %3372 = vadd.xlane.f32.xlu0 %v3371
        %v3373 = vpop.xlane.xlu0 %3372
        %v3374 = vadd.f32 %v3369, %v3370
        %3375 = vadd.xlane.f32.xlu0 %v3374
        %v3376 = vpop.xlane.xlu0 %3375
        %v3377 = vmul.f32 %v3373, %v772
        %v3378 = vmul.f32 %v3376, %v772
        %v3379 = vadd.f32 %v3377, 1e-05
        %v3380 = vadd.f32 %v3378, 1e-05
        %v3381 = vrsqrt.pop %v3379
        %v3382 = vrsqrt.pop %v3380
        %v3383 = vmul.f32 %v3363, %v3381
        %v3384 = vmul.f32 %v3364, %v3381
        %v3385 = vmul.f32 %v3365, %v3382
        %v3386 = vmul.f32 %v3366, %v3382
        %v3388 = vlaneseq
        %v3389 = vshrl.u32 %v3388, 7
        %v3390 = vsub.s32 0, %v3389
        %v3391 = vrot.slane %v3352, %v3390
        %v3392 = vlaneseq
        %v3393 = vshrl.u32 %v3392, 7
        %v3394 = vsub.s32 1, %v3393
        %v3395 = vrot.slane %v3352, %v3394
        %v3398 = vmul.f32 %v3383, %v3391
        %v3399 = vmul.f32 %v3384, %v3395
        %v3400 = vmul.f32 %v3385, %v3391
        %v3401 = vmul.f32 %v3386, %v3395
        %v3403 = vlaneseq
        %v3404 = vshrl.u32 %v3403, 7
        %v3405 = vsub.s32 0, %v3404
        %v3406 = vrot.slane %v3354, %v3405
        %v3407 = vlaneseq
        %v3408 = vshrl.u32 %v3407, 7
        %v3409 = vsub.s32 1, %v3408
        %v3410 = vrot.slane %v3354, %v3409
        %v3413 = vadd.f32 %v3398, %v3406
        %v3414 = vadd.f32 %v3399, %v3410
        %v3415 = vadd.f32 %v3400, %v3406
        %v3416 = vadd.f32 %v3401, %v3410
        %v3417 = vld [vmem:[%s661] sm:$0xff]
        %v3418 = vld [vmem:[%s661 + $0x8] sm:$0xff]
        %3420 = vset.pattern.permute.xlu0 0
        %3421 = vperm.xlu0 %3420, %v3417
        %v3422 = vpop.permute.xlu0 %3421
        %3425 = vset.pattern.permute.xlu0 0
        %3426 = vperm.xlu0 %3425, %v3418
        %v3427 = vpop.permute.xlu0 %3426
        %v3429 = vmul.f32 %v3413, %v3422
        %v3430 = vmul.f32 %v3414, %v3422
        %v3431 = vmul.f32 %v3415, %v3427
        %v3432 = vmul.f32 %v3416, %v3427
        %v3433 = vrot.slane %v3429, 4
        %v3434 = vadd.f32 %v3429, %v3433
        %v3435 = vrot.slane %v3434, 2
        %v3436 = vadd.f32 %v3434, %v3435
        %v3437 = vrot.slane %v3436, 1
        %v3438 = vadd.f32 %v3436, %v3437
        %v3439 = vrot.slane %v3430, 4
        %v3440 = vadd.f32 %v3430, %v3439
        %v3441 = vrot.slane %v3440, 2
        %v3442 = vadd.f32 %v3440, %v3441
        %v3443 = vrot.slane %v3442, 1
        %v3444 = vadd.f32 %v3442, %v3443
        %v3445 = vrot.slane %v3431, 4
        %v3446 = vadd.f32 %v3431, %v3445
        %v3447 = vrot.slane %v3446, 2
        %v3448 = vadd.f32 %v3446, %v3447
        %v3449 = vrot.slane %v3448, 1
        %v3450 = vadd.f32 %v3448, %v3449
        %v3451 = vrot.slane %v3432, 4
        %v3452 = vadd.f32 %v3432, %v3451
        %v3453 = vrot.slane %v3452, 2
        %v3454 = vadd.f32 %v3452, %v3453
        %v3455 = vrot.slane %v3454, 1
        %v3456 = vadd.f32 %v3454, %v3455
        %vm3457 = vcmask 7168
        %v3458 = vsel %vm3457, %v3417, 0.0
        %v3459 = vrot.slane %v3458, 4
        %v3460 = vadd.f32 %v3458, %v3459
        %v3461 = vrot.slane %v3460, 2
        %v3462 = vadd.f32 %v3460, %v3461
        %v3463 = vrot.slane %v3462, 1
        %v3464 = vadd.f32 %v3462, %v3463
        %v3465 = vsel %vm3457, %v3418, 0.0
        %v3466 = vrot.slane %v3465, 4
        %v3467 = vadd.f32 %v3465, %v3466
        %v3468 = vrot.slane %v3467, 2
        %v3469 = vadd.f32 %v3467, %v3468
        %v3470 = vrot.slane %v3469, 1
        %v3471 = vadd.f32 %v3469, %v3470
        %v3472 = vmax.f32 %v3464, 1e-09
        %v3473 = vmax.f32 %v3471, 1e-09
        %3475 = vset.pattern.permute.xlu0 0
        %3476 = vperm.xlu0 %3475, %v3472
        %v3477 = vpop.permute.xlu0 %3476
        %3480 = vset.pattern.permute.xlu0 0
        %3481 = vperm.xlu0 %3480, %v3473
        %v3482 = vpop.permute.xlu0 %3481
        %v3484 = vrcp.pop %v3477
        %v3485 = vmul.f32 %v3438, %v3484
        %v3486 = vmul.f32 %v3444, %v3484
        %v3487 = vrcp.pop %v3482
        %v3488 = vmul.f32 %v3450, %v3487
        %v3489 = vmul.f32 %v3456, %v3487
        %v3494 = vcombine.low %v3485, %v3486
        %v3496 = vunpack.c.l.s4 1966171168
        %v3497 = vunpack.c.0.s8 %v3496
        %v3498 = vlaneseq
        %v3499 = vshrl.u32 %v3498, 7
        %v3500 = vsub.s32 %v3497, %v3499
        %v3501 = vrot.slane %v3494, %v3500
        %v3503 = vunpack.c.l.s4 1966171168
        %v3504 = vunpack.c.0.s8 %v3503
        %v3505 = vlaneseq
        %v3506 = vshrl.u32 %v3505, 7
        %v3507 = vsub.s32 %v3504, %v3506
        %v3508 = vrot.slane %v3501, %v3507
        %v3509 = vcombine.low %v3488, %v3489
        %v3511 = vunpack.c.l.s4 1966171168
        %v3512 = vunpack.c.0.s8 %v3511
        %v3513 = vlaneseq
        %v3514 = vshrl.u32 %v3513, 7
        %v3515 = vsub.s32 %v3512, %v3514
        %v3516 = vrot.slane %v3509, %v3515
        %v3518 = vunpack.c.l.s4 1966171168
        %v3519 = vunpack.c.0.s8 %v3518
        %v3520 = vlaneseq
        %v3521 = vshrl.u32 %v3520, 7
        %v3522 = vsub.s32 %v3519, %v3521
        %v3523 = vrot.slane %v3516, %v3522
        %v3526 = vlaneseq
        %vm3527 = vcmp.ge.s32.totalorder %v3526, 0
        %vm3528 = vcmp.lt.s32.totalorder %v3526, 256
        %vm3529 = vmand %vm3527, %vm3528
        %3530 = vst.msk [vmem:[%s713] sm:$0x3] %vm3529, %v3508
        %3531 = vst.msk [vmem:[%s713 + $0x2] sm:$0x3] %vm3529, %v3523
      $region84: #{clip_multimodal_forward.4} parent=75 // pred_fallthru
        _
      %s3532 = smul.u32 2, %s29
      %p3533 = scmp.lt.s32.totalorder %s3532, 1
      %s3534 = scalar_select %p3533, %s3532, 1
      %s3535 = smul.addr %s3534, 2
      %s3536 = scalar_lea.vmem %s14, %s3535
      // Predicated region
      $region85: #{clip_multimodal_forward.4} parent=75 // pred_check
        %p3537 = pneg %p414
      $region86: #{clip_multimodal_forward.4} parent=75 // pred_check_branch
        %3539 = sbr.rel (%p3537) target = $region88
      $region87: #{clip_multimodal_forward.4} parent=75 // pred_region
        %s3540 = smul.u32 2, %s29
      $region88: #{clip_multimodal_forward.4} parent=75 // pred_fallthru
        _
      // Predicated region
      $region89: #{clip_multimodal_forward.4} parent=75 // pred_check
        %p3541 = pneg %p414
      $region90: #{clip_multimodal_forward.4} parent=75 // pred_check_branch
        %3543 = sbr.rel (%p3541) target = $region92
      $region91: #{clip_multimodal_forward.4} parent=75 // pred_region
        %s3544 = smul.u32 2, %s29
        %p3545 = scmp.lt.s32.totalorder %s3544, 1
        %s3546 = scalar_select %p3545, %s3544, 1
        %s3547 = smul.addr %s3546, 2
        %s3548 = scalar_lea.vmem %s14, %s3547
      $region92: #{clip_multimodal_forward.4} parent=75 // pred_fallthru
        _
    $region76: #{clip_multimodal_forward.4} parent=5 // pred_fallthru
      _
    %p3549 = scmp.le.s32.totalorder 2, %s20
    // Predicated region
    $region93: #{clip_multimodal_forward.4} parent=5 // pred_check
      %p3550 = pneg %p3549
    $region94: #{clip_multimodal_forward.4} parent=5 // pred_check_branch
      %3552 = sbr.rel (%p3550) target = $region96
    $region95: #{clip_multimodal_forward.4} parent=5 // pred_region
      %s3553 = ssub.s32 %s20, 2
    $region96: #{clip_multimodal_forward.4} parent=5 // pred_fallthru
      _
  $region6: #{clip_multimodal_forward.4} parent=0 // loop_footer
    %s24 = sadd.s32 1, %s20
  $region7: #{clip_multimodal_forward.4} parent=0 // loop_footer_branch
    %19 = sbr.rel target = $region3
  $region8: #{clip_multimodal_forward.4} parent=0 // loop_exit
    _

</llo_original>
